<compile_context>
chip_gen: v6e
topology: v6e:2x2x1
jax: 0.10.0
libtpu: 0.0.40
codegen_flags: <defaults>
</compile_context>

<pallas_src>
import jax
import jax.numpy as jnp
from jax.experimental import pallas as pl
from jax.experimental.pallas import tpu as pltpu


# ---------------------------------------------------------------------------
# Fused kernel: conv1 + ReLU + conv2 + ReLU + Dense(128)+ReLU + Dense(1),
# both Q-branches, one batch tile per grid step.
# ---------------------------------------------------------------------------
def _critic_fused_kernel(xph_ref, u_ref, w1_ref, b1_ref, w2_ref, b2_ref,
                         fw1x1_ref, fw1x2_ref, fw1u_ref, fb1_ref,
                         fw2_ref, fb2_ref, out_ref, h1ph_ref):
    TB = xph_ref.shape[0]

    # Zero the conv1-output scratch; untouched slots are conv2's zero padding.
    # Layout: h1ph[ph=2p+q, b, h', w', c] == pad(conv1_out)[b, 2h'+p, 2w'+q, c]
    h1ph_ref[...] = jnp.zeros_like(h1ph_ref)

    xv = xph_ref[...]                                    # [TB, 9, 9, 96]
    w1 = w1_ref[...]                                     # [150, 32]  (q1|q2)
    b1 = b1_ref[...]                                     # [1, 32]

    # ---- conv1: four output-parity classes (r,s); each is an in-kernel
    #      im2col (25 unit-stride slices of the phase-packed input) + 1 matmul.
    for r in range(2):
        for s in range(2):
            pieces = []
            for di in range(5):
                t = 2 * r + di
                m, cr = t % 4, t // 4
                for dj in range(5):
                    tt = 2 * s + dj
                    n, cc = tt % 4, tt // 4
                    base = (m * 4 + n) * 6
                    sl = xv[:, cr:cr + 8, cc:cc + 8, base:base + 6]  # [TB,8,8,6]
                    pieces.append(sl.reshape(TB * 64, 6))
            cols = jnp.concatenate(pieces, axis=1)        # [TB*64, 150]
            o = jnp.dot(cols, w1, preferred_element_type=jnp.float32) + b1
            o = jnp.maximum(o, 0.0)                       # [TB*64, 32]
            # class (r,s) holds conv1 outputs at rows 2h+r / cols 2w+s; after
            # conv2's pad-by-1 they land in phase (1-r, 1-s) at offset (r, s).
            ph = (1 - r) * 2 + (1 - s)
            h1ph_ref[ph, :, r:r + 8, s:s + 8, :] = o.reshape(TB, 8, 8, 32)

    # ---- conv2: in-kernel im2col over the phase scratch (both branches via a
    #      block-structured [800,32] weight), single matmul.
    w2 = w2_ref[...]                                      # [800, 32]
    b2 = b2_ref[...]                                      # [1, 32]
    pieces = []
    for di in range(5):
        p, a = di % 2, di // 2
        for dj in range(5):
            q, bb = dj % 2, dj // 2
            sl = h1ph_ref[2 * p + q, :, a:a + 8, bb:bb + 8, :]   # [TB,8,8,32]
            pieces.append(sl.reshape(TB * 64, 32))
    cols2 = jnp.concatenate(pieces, axis=1)               # [TB*64, 800]
    y2 = jnp.dot(cols2, w2, preferred_element_type=jnp.float32) + b2
    y2 = jnp.maximum(y2, 0.0)          # rows = (b, ho, wo), lanes = [q1 16 | q2 16]

    # ---- flatten to the reference (h, w, c) order per branch: [TB, 1024].
    #      Done as explicit 2D lane-concats (pure slice/concat, no relayout
    #      reshapes); this is the only sublane->lane data movement and is tiny.
    def flat(lo, hi):
        rows = []
        for b in range(TB):
            base = b * 64
            rows.append(jnp.concatenate(
                [y2[base + k:base + k + 1, lo:hi] for k in range(64)], axis=1))
        return jnp.concatenate(rows, axis=0)              # [TB, 1024]

    f1 = flat(0, 16)
    f2 = flat(16, 32)

    # ---- dense head, both branches fused; action term is a separate K=A dot.
    hid = jnp.concatenate(
        [jnp.dot(f1, fw1x1_ref[...], preferred_element_type=jnp.float32),
         jnp.dot(f2, fw1x2_ref[...], preferred_element_type=jnp.float32)],
        axis=1)                                           # [TB, 256]
    hid = hid + jnp.dot(u_ref[...], fw1u_ref[...],
                        preferred_element_type=jnp.float32)
    hid = jnp.maximum(hid + fb1_ref[...], 0.0)
    q = jnp.dot(hid, fw2_ref[...], preferred_element_type=jnp.float32)
    q = q + fb2_ref[...]                                  # [TB, 2] = (q1, q2)
    out_ref[...] = q.astype(out_ref.dtype)


# ---------------------------------------------------------------------------
# Host-side glue (cheap, runs on tiny tensors)
# ---------------------------------------------------------------------------
def _phase_images(x):
    """[B, 6144] -> 4x4 phase decomposition of the SAME-padded 32x32x6 image.

    out[b, i, j, (m*4+n)*6 + c] == pad(x_img)[b, 4*i + m, 4*j + n, c]
    with TF-'SAME' padding of conv1 (1 before / 2 after; padded to 36 so every
    phase image is a clean 9x9).  ~1.27x the input bytes.
    """
    B = x.shape[0]
    xi = x.reshape(B, 32, 32, 6)
    xp = jnp.pad(xi, ((0, 0), (1, 3), (1, 3), (0, 0)))    # [B, 36, 36, 6]
    xp = xp.reshape(B, 9, 4, 9, 4, 6)
    xp = jnp.transpose(xp, (0, 1, 3, 2, 4, 5))            # [B, 9, 9, 4, 4, 6]
    return xp.reshape(B, 9, 9, 96)


def init_critic_params(key, action_dim):
    """Canonical (per-branch) parameters, HWIO conv weights, (h,w,c)+action fw1."""
    def branch(k):
        ks = jax.random.split(k, 4)
        scale = 0.05
        return {
            "cw1": scale * jax.random.normal(ks[0], (5, 5, 6, 16), jnp.float32),
            "cb1": jnp.zeros((16,), jnp.float32),
            "cw2": scale * jax.random.normal(ks[1], (5, 5, 16, 16), jnp.float32),
            "cb2": jnp.zeros((16,), jnp.float32),
            "fw1": scale * jax.random.normal(
                ks[2], (8 * 8 * 16 + action_dim, 128), jnp.float32),
            "fb1": jnp.zeros((128,), jnp.float32),
            "fw2": scale * jax.random.normal(ks[3], (128, 1), jnp.float32),
            "fb2": jnp.zeros((1,), jnp.float32),
        }

    k1, k2 = jax.random.split(key)
    return {"q1": branch(k1), "q2": branch(k2)}


def pack_critic_params(params):
    """One-time repack of canonical params into the branch-fused kernel layout."""
    q1, q2 = params["q1"], params["q2"]

    # conv1: concat Cout -> [150, 32] (rows ordered (di, dj, ci) = HWIO reshape)
    w1 = jnp.concatenate([q1["cw1"].reshape(150, 16),
                          q2["cw1"].reshape(150, 16)], axis=1)
    b1 = jnp.concatenate([q1["cb1"], q2["cb1"]]).reshape(1, 32)

    # conv2: block-structured [25*32, 32]; rows (tap, cin[q1|q2]) -> cols [q1|q2]
    w2a = q1["cw2"].reshape(25, 16, 16)
    w2b = q2["cw2"].reshape(25, 16, 16)
    z = jnp.zeros_like(w2a)
    w2 = jnp.concatenate([jnp.concatenate([w2a, z], axis=2),
                          jnp.concatenate([z, w2b], axis=2)], axis=1)
    w2 = w2.reshape(800, 32)
    b2 = jnp.concatenate([q1["cb2"], q2["cb2"]]).reshape(1, 32)

    # dense1: split conv-feature rows (K=1024, per branch) from action rows
    fw1x1 = q1["fw1"][:1024]
    fw1x2 = q2["fw1"][:1024]
    fw1u = jnp.concatenate([q1["fw1"][1024:], q2["fw1"][1024:]], axis=1)  # [A,256]
    fb1 = jnp.concatenate([q1["fb1"], q2["fb1"]]).reshape(1, 256)

    # dense2: block-diagonal [256, 2] so the output is a single lane-dense [B,2]
    z1 = jnp.zeros((128, 1), jnp.float32)
    fw2 = jnp.concatenate([jnp.concatenate([q1["fw2"], z1], axis=1),
                           jnp.concatenate([z1, q2["fw2"]], axis=1)], axis=0)
    fb2 = jnp.concatenate([q1["fb2"], q2["fb2"]]).reshape(1, 2)

    return dict(w1=w1, b1=b1, w2=w2, b2=b2, fw1x1=fw1x1, fw1x2=fw1x2,
                fw1u=fw1u, fb1=fb1, fw2=fw2, fb2=fb2)


def critic_forward(packed, x, u):
    """Critic forward: returns (q1, q2), each [B, 1]."""
    B = x.shape[0]
    A = u.shape[1]
    TB = B if B <= 8 else 8                 # batch tile (grid axis is parallel)
    nb = -(-B // TB)
    Bp = nb * TB
    if Bp != B:
        x = jnp.pad(x, ((0, Bp - B), (0, 0)))
        u = jnp.pad(u, ((0, Bp - B), (0, 0)))
    xph = _phase_images(x)

    flops = 2 * Bp * (4 * 64 * 150 * 32 + 64 * 800 * 32
                      + 2 * 1024 * 128 + A * 256 + 256 * 2)
    w_bytes = 4 * (150 * 32 + 32 + 800 * 32 + 32 + 2 * 1024 * 128
                   + A * 256 + 256 + 256 * 2 + 2)
    bytes_accessed = (Bp * 9 * 9 * 96 * 4 + Bp * A * 4
                      + nb * w_bytes + Bp * 2 * 4)

    full2 = lambda i: (0, 0)
    out = pl.pallas_call(
        _critic_fused_kernel,
        out_shape=jax.ShapeDtypeStruct((Bp, 2), jnp.float32),
        grid=(nb,),
        in_specs=[
            pl.BlockSpec((TB, 9, 9, 96), lambda i: (i, 0, 0, 0)),   # phase-packed x
            pl.BlockSpec((TB, A), lambda i: (i, 0)),                # action
            pl.BlockSpec((150, 32), full2),                         # conv1 W
            pl.BlockSpec((1, 32), full2),                           # conv1 b
            pl.BlockSpec((800, 32), full2),                         # conv2 W
            pl.BlockSpec((1, 32), full2),                           # conv2 b
            pl.BlockSpec((1024, 128), full2),                       # fc1 W (q1, x-part)
            pl.BlockSpec((1024, 128), full2),                       # fc1 W (q2, x-part)
            pl.BlockSpec((A, 256), full2),                          # fc1 W (u-part, both)
            pl.BlockSpec((1, 256), full2),                          # fc1 b
            pl.BlockSpec((256, 2), full2),                          # fc2 W (block-diag)
            pl.BlockSpec((1, 2), full2),                            # fc2 b
        ],
        out_specs=pl.BlockSpec((TB, 2), lambda i: (i, 0)),
        scratch_shapes=[pltpu.VMEM((4, TB, 10, 10, 32), jnp.float32)],
        compiler_params=pltpu.CompilerParams(
            dimension_semantics=("parallel",)),
        cost_estimate=pl.CostEstimate(
            flops=int(flops), transcendentals=0,
            bytes_accessed=int(bytes_accessed)),
    )(xph, u, packed["w1"], packed["b1"], packed["w2"], packed["b2"],
      packed["fw1x1"], packed["fw1x2"], packed["fw1u"], packed["fb1"],
      packed["fw2"], packed["fb2"])

    q = out[:B]
    return q[:, 0:1], q[:, 1:2]


# ---------------------------------------------------------------------------
# Pure-JAX reference (for correctness check only)
# ---------------------------------------------------------------------------
def critic_reference(params, x, u):
    B = x.shape[0]
    hp = jax.lax.Precision.HIGHEST

    def branch(p):
        h = x.reshape(B, 32, 32, 6)
        h = jax.lax.conv_general_dilated(
            h, p["cw1"], window_strides=(2, 2), padding="SAME",
            dimension_numbers=("NHWC", "HWIO", "NHWC"), precision=hp)
        h = jnp.maximum(h + p["cb1"], 0.0)
        h = jax.lax.conv_general_dilated(
            h, p["cw2"], window_strides=(2, 2), padding="SAME",
            dimension_numbers=("NHWC", "HWIO", "NHWC"), precision=hp)
        h = jnp.maximum(h + p["cb2"], 0.0)
        h = h.reshape(B, 8 * 8 * 16)
        hu = jnp.concatenate([h, u], axis=1)
        h1 = jnp.maximum(jnp.dot(hu, p["fw1"], precision=hp) + p["fb1"], 0.0)
        return jnp.dot(h1, p["fw2"], precision=hp) + p["fb2"]

    return branch(params["q1"]), branch(params["q2"])


if __name__ == "__main__":
    key = jax.random.PRNGKey(0)
    kp, kx, ku = jax.random.split(key, 3)

    batch = 2
    state_dim = 32 * 32 * 6          # fixed by the module's Reshape([32,32,6])
    action_dim = 4

    params = init_critic_params(kp, action_dim)
    packed = pack_critic_params(params)          # one-time weight repack

    x = jax.random.normal(kx, (batch, state_dim), jnp.float32)
    u = jax.random.normal(ku, (batch, action_dim), jnp.float32)

    fwd = jax.jit(critic_forward)
    q1, q2 = fwd(packed, x, u)
    jax.block_until_ready((q1, q2))
    assert q1.shape == (batch, 1) and q2.shape == (batch, 1)

    r1, r2 = critic_reference(params, x, u)
    assert jnp.allclose(q1, r1, rtol=2e-3, atol=2e-3), (q1, r1)
    assert jnp.allclose(q2, r2, rtol=2e-3, atol=2e-3), (q2, r2)

    print("KERNEL_OK")
</pallas_src>

<mosaic_0001>
module attributes {stable_mosaic.version = 11 : i64} {
  func.func @_critic_fused_kernel(%arg0: i32, %arg1: memref<2x9x9x96xf32, #tpu.memory_space<vmem>>, %arg2: memref<2x4xf32, #tpu.memory_space<vmem>>, %arg3: memref<150x32xf32, #tpu.memory_space<vmem>>, %arg4: memref<1x32xf32, #tpu.memory_space<vmem>>, %arg5: memref<800x32xf32, #tpu.memory_space<vmem>>, %arg6: memref<1x32xf32, #tpu.memory_space<vmem>>, %arg7: memref<1024x128xf32, #tpu.memory_space<vmem>>, %arg8: memref<1024x128xf32, #tpu.memory_space<vmem>>, %arg9: memref<4x256xf32, #tpu.memory_space<vmem>>, %arg10: memref<1x256xf32, #tpu.memory_space<vmem>>, %arg11: memref<256x2xf32, #tpu.memory_space<vmem>>, %arg12: memref<1x2xf32, #tpu.memory_space<vmem>>, %arg13: memref<2x2xf32, #tpu.memory_space<vmem>>, %arg14: memref<4x2x10x10x32xf32, #tpu.memory_space<vmem>>) attributes {dimension_semantics = [#tpu.dimension_semantics<parallel>], iteration_bounds = array<i64: 1>, scalar_prefetch = 0 : i64, scratch_operands = 1 : i64, tpu.core_type = #tpu.core_type<tc>, window_params = [{transform_indices = @transform_0, window_bounds = array<i64: 2, 9, 9, 96>}, {transform_indices = @transform_1, window_bounds = array<i64: 2, 4>}, {pipeline_mode = #tpu.pipeline_mode<synchronous>, transform_indices = @transform_2, window_bounds = array<i64: 150, 32>}, {pipeline_mode = #tpu.pipeline_mode<synchronous>, transform_indices = @transform_3, window_bounds = array<i64: 1, 32>}, {pipeline_mode = #tpu.pipeline_mode<synchronous>, transform_indices = @transform_4, window_bounds = array<i64: 800, 32>}, {pipeline_mode = #tpu.pipeline_mode<synchronous>, transform_indices = @transform_5, window_bounds = array<i64: 1, 32>}, {pipeline_mode = #tpu.pipeline_mode<synchronous>, transform_indices = @transform_6, window_bounds = array<i64: 1024, 128>}, {pipeline_mode = #tpu.pipeline_mode<synchronous>, transform_indices = @transform_7, window_bounds = array<i64: 1024, 128>}, {pipeline_mode = #tpu.pipeline_mode<synchronous>, transform_indices = @transform_8, window_bounds = array<i64: 4, 256>}, {pipeline_mode = #tpu.pipeline_mode<synchronous>, transform_indices = @transform_9, window_bounds = array<i64: 1, 256>}, {pipeline_mode = #tpu.pipeline_mode<synchronous>, transform_indices = @transform_10, window_bounds = array<i64: 256, 2>}, {pipeline_mode = #tpu.pipeline_mode<synchronous>, transform_indices = @transform_11, window_bounds = array<i64: 1, 2>}, {transform_indices = @transform_12, window_bounds = array<i64: 2, 2>}]} {
    %cst = arith.constant 0.000000e+00 : f32
    %0 = vector.broadcast %cst : f32 to vector<4x2x10x10x32xf32>
    %c0 = arith.constant 0 : index
    %c0_0 = arith.constant 0 : index
    %c0_1 = arith.constant 0 : index
    %c0_2 = arith.constant 0 : index
    %c0_3 = arith.constant 0 : index
    %1 = vector.load %arg14[%c0, %c0_0, %c0_1, %c0_2, %c0_3] : memref<4x2x10x10x32xf32, #tpu.memory_space<vmem>>, vector<4x2x10x10x32xf32>
    tpu.vector_store %arg14[%c0, %c0_0, %c0_1, %c0_2, %c0_3], %0 {strides = array<i32>} : memref<4x2x10x10x32xf32, #tpu.memory_space<vmem>>, vector<4x2x10x10x32xf32>,
    %c0_4 = arith.constant 0 : index
    %c0_5 = arith.constant 0 : index
    %c0_6 = arith.constant 0 : index
    %c0_7 = arith.constant 0 : index
    %2 = vector.load %arg1[%c0_4, %c0_5, %c0_6, %c0_7] : memref<2x9x9x96xf32, #tpu.memory_space<vmem>>, vector<2x9x9x96xf32>
    %c0_8 = arith.constant 0 : index
    %c0_9 = arith.constant 0 : index
    %3 = vector.load %arg3[%c0_8, %c0_9] : memref<150x32xf32, #tpu.memory_space<vmem>>, vector<150x32xf32>
    %c0_10 = arith.constant 0 : index
    %c0_11 = arith.constant 0 : index
    %4 = vector.load %arg4[%c0_10, %c0_11] : memref<1x32xf32, #tpu.memory_space<vmem>>, vector<1x32xf32>
    %5 = vector.extract_strided_slice %2 {offsets = [0, 0, 0, 0], sizes = [2, 8, 8, 6], strides = [1, 1, 1, 1]} : vector<2x9x9x96xf32> to vector<2x8x8x6xf32>
    %6 = vector.shape_cast %5 : vector<2x8x8x6xf32> to vector<128x6xf32>
    %7 = vector.extract_strided_slice %2 {offsets = [0, 0, 0, 6], sizes = [2, 8, 8, 6], strides = [1, 1, 1, 1]} : vector<2x9x9x96xf32> to vector<2x8x8x6xf32>
    %8 = vector.shape_cast %7 : vector<2x8x8x6xf32> to vector<128x6xf32>
    %9 = vector.extract_strided_slice %2 {offsets = [0, 0, 0, 12], sizes = [2, 8, 8, 6], strides = [1, 1, 1, 1]} : vector<2x9x9x96xf32> to vector<2x8x8x6xf32>
    %10 = vector.shape_cast %9 : vector<2x8x8x6xf32> to vector<128x6xf32>
    %11 = vector.extract_strided_slice %2 {offsets = [0, 0, 0, 18], sizes = [2, 8, 8, 6], strides = [1, 1, 1, 1]} : vector<2x9x9x96xf32> to vector<2x8x8x6xf32>
    %12 = vector.shape_cast %11 : vector<2x8x8x6xf32> to vector<128x6xf32>
    %13 = vector.extract_strided_slice %2 {offsets = [0, 0, 1, 0], sizes = [2, 8, 8, 6], strides = [1, 1, 1, 1]} : vector<2x9x9x96xf32> to vector<2x8x8x6xf32>
    %14 = vector.shape_cast %13 : vector<2x8x8x6xf32> to vector<128x6xf32>
    %15 = vector.extract_strided_slice %2 {offsets = [0, 0, 0, 24], sizes = [2, 8, 8, 6], strides = [1, 1, 1, 1]} : vector<2x9x9x96xf32> to vector<2x8x8x6xf32>
    %16 = vector.shape_cast %15 : vector<2x8x8x6xf32> to vector<128x6xf32>
    %17 = vector.extract_strided_slice %2 {offsets = [0, 0, 0, 30], sizes = [2, 8, 8, 6], strides = [1, 1, 1, 1]} : vector<2x9x9x96xf32> to vector<2x8x8x6xf32>
    %18 = vector.shape_cast %17 : vector<2x8x8x6xf32> to vector<128x6xf32>
    %19 = vector.extract_strided_slice %2 {offsets = [0, 0, 0, 36], sizes = [2, 8, 8, 6], strides = [1, 1, 1, 1]} : vector<2x9x9x96xf32> to vector<2x8x8x6xf32>
    %20 = vector.shape_cast %19 : vector<2x8x8x6xf32> to vector<128x6xf32>
    %21 = vector.extract_strided_slice %2 {offsets = [0, 0, 0, 42], sizes = [2, 8, 8, 6], strides = [1, 1, 1, 1]} : vector<2x9x9x96xf32> to vector<2x8x8x6xf32>
    %22 = vector.shape_cast %21 : vector<2x8x8x6xf32> to vector<128x6xf32>
    %23 = vector.extract_strided_slice %2 {offsets = [0, 0, 1, 24], sizes = [2, 8, 8, 6], strides = [1, 1, 1, 1]} : vector<2x9x9x96xf32> to vector<2x8x8x6xf32>
    %24 = vector.shape_cast %23 : vector<2x8x8x6xf32> to vector<128x6xf32>
    %25 = vector.extract_strided_slice %2 {offsets = [0, 0, 0, 48], sizes = [2, 8, 8, 6], strides = [1, 1, 1, 1]} : vector<2x9x9x96xf32> to vector<2x8x8x6xf32>
    %26 = vector.shape_cast %25 : vector<2x8x8x6xf32> to vector<128x6xf32>
    %27 = vector.extract_strided_slice %2 {offsets = [0, 0, 0, 54], sizes = [2, 8, 8, 6], strides = [1, 1, 1, 1]} : vector<2x9x9x96xf32> to vector<2x8x8x6xf32>
    %28 = vector.shape_cast %27 : vector<2x8x8x6xf32> to vector<128x6xf32>
    %29 = vector.extract_strided_slice %2 {offsets = [0, 0, 0, 60], sizes = [2, 8, 8, 6], strides = [1, 1, 1, 1]} : vector<2x9x9x96xf32> to vector<2x8x8x6xf32>
    %30 = vector.shape_cast %29 : vector<2x8x8x6xf32> to vector<128x6xf32>
    %31 = vector.extract_strided_slice %2 {offsets = [0, 0, 0, 66], sizes = [2, 8, 8, 6], strides = [1, 1, 1, 1]} : vector<2x9x9x96xf32> to vector<2x8x8x6xf32>
    %32 = vector.shape_cast %31 : vector<2x8x8x6xf32> to vector<128x6xf32>
    %33 = vector.extract_strided_slice %2 {offsets = [0, 0, 1, 48], sizes = [2, 8, 8, 6], strides = [1, 1, 1, 1]} : vector<2x9x9x96xf32> to vector<2x8x8x6xf32>
    %34 = vector.shape_cast %33 : vector<2x8x8x6xf32> to vector<128x6xf32>
    %35 = vector.extract_strided_slice %2 {offsets = [0, 0, 0, 72], sizes = [2, 8, 8, 6], strides = [1, 1, 1, 1]} : vector<2x9x9x96xf32> to vector<2x8x8x6xf32>
    %36 = vector.shape_cast %35 : vector<2x8x8x6xf32> to vector<128x6xf32>
    %37 = vector.extract_strided_slice %2 {offsets = [0, 0, 0, 78], sizes = [2, 8, 8, 6], strides = [1, 1, 1, 1]} : vector<2x9x9x96xf32> to vector<2x8x8x6xf32>
    %38 = vector.shape_cast %37 : vector<2x8x8x6xf32> to vector<128x6xf32>
    %39 = vector.extract_strided_slice %2 {offsets = [0, 0, 0, 84], sizes = [2, 8, 8, 6], strides = [1, 1, 1, 1]} : vector<2x9x9x96xf32> to vector<2x8x8x6xf32>
    %40 = vector.shape_cast %39 : vector<2x8x8x6xf32> to vector<128x6xf32>
    %41 = vector.extract_strided_slice %2 {offsets = [0, 0, 0, 90], sizes = [2, 8, 8, 6], strides = [1, 1, 1, 1]} : vector<2x9x9x96xf32> to vector<2x8x8x6xf32>
    %42 = vector.shape_cast %41 : vector<2x8x8x6xf32> to vector<128x6xf32>
    %43 = vector.extract_strided_slice %2 {offsets = [0, 0, 1, 72], sizes = [2, 8, 8, 6], strides = [1, 1, 1, 1]} : vector<2x9x9x96xf32> to vector<2x8x8x6xf32>
    %44 = vector.shape_cast %43 : vector<2x8x8x6xf32> to vector<128x6xf32>
    %45 = vector.extract_strided_slice %2 {offsets = [0, 1, 0, 0], sizes = [2, 8, 8, 6], strides = [1, 1, 1, 1]} : vector<2x9x9x96xf32> to vector<2x8x8x6xf32>
    %46 = vector.shape_cast %45 : vector<2x8x8x6xf32> to vector<128x6xf32>
    %47 = vector.extract_strided_slice %2 {offsets = [0, 1, 0, 6], sizes = [2, 8, 8, 6], strides = [1, 1, 1, 1]} : vector<2x9x9x96xf32> to vector<2x8x8x6xf32>
    %48 = vector.shape_cast %47 : vector<2x8x8x6xf32> to vector<128x6xf32>
    %49 = vector.extract_strided_slice %2 {offsets = [0, 1, 0, 12], sizes = [2, 8, 8, 6], strides = [1, 1, 1, 1]} : vector<2x9x9x96xf32> to vector<2x8x8x6xf32>
    %50 = vector.shape_cast %49 : vector<2x8x8x6xf32> to vector<128x6xf32>
    %51 = vector.extract_strided_slice %2 {offsets = [0, 1, 0, 18], sizes = [2, 8, 8, 6], strides = [1, 1, 1, 1]} : vector<2x9x9x96xf32> to vector<2x8x8x6xf32>
    %52 = vector.shape_cast %51 : vector<2x8x8x6xf32> to vector<128x6xf32>
    %53 = vector.extract_strided_slice %2 {offsets = [0, 1, 1, 0], sizes = [2, 8, 8, 6], strides = [1, 1, 1, 1]} : vector<2x9x9x96xf32> to vector<2x8x8x6xf32>
    %54 = vector.shape_cast %53 : vector<2x8x8x6xf32> to vector<128x6xf32>
    %55 = tpu.concatenate %6, %8, %10, %12, %14, %16, %18, %20, %22, %24, %26, %28, %30, %32, %34, %36 in 1 : vector<128x6xf32>, vector<128x6xf32>, vector<128x6xf32>, vector<128x6xf32>, vector<128x6xf32>, vector<128x6xf32>, vector<128x6xf32>, vector<128x6xf32>, vector<128x6xf32>, vector<128x6xf32>, vector<128x6xf32>, vector<128x6xf32>, vector<128x6xf32>, vector<128x6xf32>, vector<128x6xf32>, vector<128x6xf32> -> vector<128x96xf32>
    %56 = tpu.concatenate %38, %40, %42, %44, %46, %48, %50, %52, %54 in 1 : vector<128x6xf32>, vector<128x6xf32>, vector<128x6xf32>, vector<128x6xf32>, vector<128x6xf32>, vector<128x6xf32>, vector<128x6xf32>, vector<128x6xf32>, vector<128x6xf32> -> vector<128x54xf32>
    %57 = tpu.concatenate %55, %56 in 1 : vector<128x96xf32>, vector<128x54xf32> -> vector<128x150xf32>
    %cst_12 = arith.constant dense<0.000000e+00> : vector<128x32xf32>
    %58 = tpu.matmul %57, %3, %cst_12 {dimension_numbers = #tpu.dot_dimension_numbers<[1], [0], [0], [1], [0, 0, 1, 1], [], []>} : vector<128x150xf32>, vector<150x32xf32>, vector<128x32xf32> -> vector<128x32xf32>
    %59 = vector.broadcast %4 : vector<1x32xf32> to vector<128x32xf32>
    %60 = arith.addf %58, %59 : vector<128x32xf32>
    %cst_13 = arith.constant 0.000000e+00 : f32
    %61 = vector.broadcast %cst_13 : f32 to vector<128x32xf32>
    %62 = arith.maximumf %60, %61 : vector<128x32xf32>
    %63 = vector.shape_cast %62 : vector<128x32xf32> to vector<2x8x8x32xf32>
    %c3 = arith.constant 3 : index
    %c0_14 = arith.constant 0 : index
    %c0_15 = arith.constant 0 : index
    %c0_16 = arith.constant 0 : index
    %c0_17 = arith.constant 0 : index
    %64 = vector.load %arg14[%c3, %c0_14, %c0_15, %c0_16, %c0_17] : memref<4x2x10x10x32xf32, #tpu.memory_space<vmem>>, vector<1x2x8x8x32xf32>
    %65 = vector.shape_cast %64 : vector<1x2x8x8x32xf32> to vector<2x8x8x32xf32>
    %66 = vector.shape_cast %63 : vector<2x8x8x32xf32> to vector<1x2x8x8x32xf32>
    tpu.vector_store %arg14[%c3, %c0_14, %c0_15, %c0_16, %c0_17], %66 {strides = array<i32>} : memref<4x2x10x10x32xf32, #tpu.memory_space<vmem>>, vector<1x2x8x8x32xf32>,
    %67 = vector.extract_strided_slice %2 {offsets = [0, 0, 0, 12], sizes = [2, 8, 8, 6], strides = [1, 1, 1, 1]} : vector<2x9x9x96xf32> to vector<2x8x8x6xf32>
    %68 = vector.shape_cast %67 : vector<2x8x8x6xf32> to vector<128x6xf32>
    %69 = vector.extract_strided_slice %2 {offsets = [0, 0, 0, 18], sizes = [2, 8, 8, 6], strides = [1, 1, 1, 1]} : vector<2x9x9x96xf32> to vector<2x8x8x6xf32>
    %70 = vector.shape_cast %69 : vector<2x8x8x6xf32> to vector<128x6xf32>
    %71 = vector.extract_strided_slice %2 {offsets = [0, 0, 1, 0], sizes = [2, 8, 8, 6], strides = [1, 1, 1, 1]} : vector<2x9x9x96xf32> to vector<2x8x8x6xf32>
    %72 = vector.shape_cast %71 : vector<2x8x8x6xf32> to vector<128x6xf32>
    %73 = vector.extract_strided_slice %2 {offsets = [0, 0, 1, 6], sizes = [2, 8, 8, 6], strides = [1, 1, 1, 1]} : vector<2x9x9x96xf32> to vector<2x8x8x6xf32>
    %74 = vector.shape_cast %73 : vector<2x8x8x6xf32> to vector<128x6xf32>
    %75 = vector.extract_strided_slice %2 {offsets = [0, 0, 1, 12], sizes = [2, 8, 8, 6], strides = [1, 1, 1, 1]} : vector<2x9x9x96xf32> to vector<2x8x8x6xf32>
    %76 = vector.shape_cast %75 : vector<2x8x8x6xf32> to vector<128x6xf32>
    %77 = vector.extract_strided_slice %2 {offsets = [0, 0, 0, 36], sizes = [2, 8, 8, 6], strides = [1, 1, 1, 1]} : vector<2x9x9x96xf32> to vector<2x8x8x6xf32>
    %78 = vector.shape_cast %77 : vector<2x8x8x6xf32> to vector<128x6xf32>
    %79 = vector.extract_strided_slice %2 {offsets = [0, 0, 0, 42], sizes = [2, 8, 8, 6], strides = [1, 1, 1, 1]} : vector<2x9x9x96xf32> to vector<2x8x8x6xf32>
    %80 = vector.shape_cast %79 : vector<2x8x8x6xf32> to vector<128x6xf32>
    %81 = vector.extract_strided_slice %2 {offsets = [0, 0, 1, 24], sizes = [2, 8, 8, 6], strides = [1, 1, 1, 1]} : vector<2x9x9x96xf32> to vector<2x8x8x6xf32>
    %82 = vector.shape_cast %81 : vector<2x8x8x6xf32> to vector<128x6xf32>
    %83 = vector.extract_strided_slice %2 {offsets = [0, 0, 1, 30], sizes = [2, 8, 8, 6], strides = [1, 1, 1, 1]} : vector<2x9x9x96xf32> to vector<2x8x8x6xf32>
    %84 = vector.shape_cast %83 : vector<2x8x8x6xf32> to vector<128x6xf32>
    %85 = vector.extract_strided_slice %2 {offsets = [0, 0, 1, 36], sizes = [2, 8, 8, 6], strides = [1, 1, 1, 1]} : vector<2x9x9x96xf32> to vector<2x8x8x6xf32>
    %86 = vector.shape_cast %85 : vector<2x8x8x6xf32> to vector<128x6xf32>
    %87 = vector.extract_strided_slice %2 {offsets = [0, 0, 0, 60], sizes = [2, 8, 8, 6], strides = [1, 1, 1, 1]} : vector<2x9x9x96xf32> to vector<2x8x8x6xf32>
    %88 = vector.shape_cast %87 : vector<2x8x8x6xf32> to vector<128x6xf32>
    %89 = vector.extract_strided_slice %2 {offsets = [0, 0, 0, 66], sizes = [2, 8, 8, 6], strides = [1, 1, 1, 1]} : vector<2x9x9x96xf32> to vector<2x8x8x6xf32>
    %90 = vector.shape_cast %89 : vector<2x8x8x6xf32> to vector<128x6xf32>
    %91 = vector.extract_strided_slice %2 {offsets = [0, 0, 1, 48], sizes = [2, 8, 8, 6], strides = [1, 1, 1, 1]} : vector<2x9x9x96xf32> to vector<2x8x8x6xf32>
    %92 = vector.shape_cast %91 : vector<2x8x8x6xf32> to vector<128x6xf32>
    %93 = vector.extract_strided_slice %2 {offsets = [0, 0, 1, 54], sizes = [2, 8, 8, 6], strides = [1, 1, 1, 1]} : vector<2x9x9x96xf32> to vector<2x8x8x6xf32>
    %94 = vector.shape_cast %93 : vector<2x8x8x6xf32> to vector<128x6xf32>
    %95 = vector.extract_strided_slice %2 {offsets = [0, 0, 1, 60], sizes = [2, 8, 8, 6], strides = [1, 1, 1, 1]} : vector<2x9x9x96xf32> to vector<2x8x8x6xf32>
    %96 = vector.shape_cast %95 : vector<2x8x8x6xf32> to vector<128x6xf32>
    %97 = vector.extract_strided_slice %2 {offsets = [0, 0, 0, 84], sizes = [2, 8, 8, 6], strides = [1, 1, 1, 1]} : vector<2x9x9x96xf32> to vector<2x8x8x6xf32>
    %98 = vector.shape_cast %97 : vector<2x8x8x6xf32> to vector<128x6xf32>
    %99 = vector.extract_strided_slice %2 {offsets = [0, 0, 0, 90], sizes = [2, 8, 8, 6], strides = [1, 1, 1, 1]} : vector<2x9x9x96xf32> to vector<2x8x8x6xf32>
    %100 = vector.shape_cast %99 : vector<2x8x8x6xf32> to vector<128x6xf32>
    %101 = vector.extract_strided_slice %2 {offsets = [0, 0, 1, 72], sizes = [2, 8, 8, 6], strides = [1, 1, 1, 1]} : vector<2x9x9x96xf32> to vector<2x8x8x6xf32>
    %102 = vector.shape_cast %101 : vector<2x8x8x6xf32> to vector<128x6xf32>
    %103 = vector.extract_strided_slice %2 {offsets = [0, 0, 1, 78], sizes = [2, 8, 8, 6], strides = [1, 1, 1, 1]} : vector<2x9x9x96xf32> to vector<2x8x8x6xf32>
    %104 = vector.shape_cast %103 : vector<2x8x8x6xf32> to vector<128x6xf32>
    %105 = vector.extract_strided_slice %2 {offsets = [0, 0, 1, 84], sizes = [2, 8, 8, 6], strides = [1, 1, 1, 1]} : vector<2x9x9x96xf32> to vector<2x8x8x6xf32>
    %106 = vector.shape_cast %105 : vector<2x8x8x6xf32> to vector<128x6xf32>
    %107 = vector.extract_strided_slice %2 {offsets = [0, 1, 0, 12], sizes = [2, 8, 8, 6], strides = [1, 1, 1, 1]} : vector<2x9x9x96xf32> to vector<2x8x8x6xf32>
    %108 = vector.shape_cast %107 : vector<2x8x8x6xf32> to vector<128x6xf32>
    %109 = vector.extract_strided_slice %2 {offsets = [0, 1, 0, 18], sizes = [2, 8, 8, 6], strides = [1, 1, 1, 1]} : vector<2x9x9x96xf32> to vector<2x8x8x6xf32>
    %110 = vector.shape_cast %109 : vector<2x8x8x6xf32> to vector<128x6xf32>
    %111 = vector.extract_strided_slice %2 {offsets = [0, 1, 1, 0], sizes = [2, 8, 8, 6], strides = [1, 1, 1, 1]} : vector<2x9x9x96xf32> to vector<2x8x8x6xf32>
    %112 = vector.shape_cast %111 : vector<2x8x8x6xf32> to vector<128x6xf32>
    %113 = vector.extract_strided_slice %2 {offsets = [0, 1, 1, 6], sizes = [2, 8, 8, 6], strides = [1, 1, 1, 1]} : vector<2x9x9x96xf32> to vector<2x8x8x6xf32>
    %114 = vector.shape_cast %113 : vector<2x8x8x6xf32> to vector<128x6xf32>
    %115 = vector.extract_strided_slice %2 {offsets = [0, 1, 1, 12], sizes = [2, 8, 8, 6], strides = [1, 1, 1, 1]} : vector<2x9x9x96xf32> to vector<2x8x8x6xf32>
    %116 = vector.shape_cast %115 : vector<2x8x8x6xf32> to vector<128x6xf32>
    %117 = tpu.concatenate %68, %70, %72, %74, %76, %78, %80, %82, %84, %86, %88, %90, %92, %94, %96, %98 in 1 : vector<128x6xf32>, vector<128x6xf32>, vector<128x6xf32>, vector<128x6xf32>, vector<128x6xf32>, vector<128x6xf32>, vector<128x6xf32>, vector<128x6xf32>, vector<128x6xf32>, vector<128x6xf32>, vector<128x6xf32>, vector<128x6xf32>, vector<128x6xf32>, vector<128x6xf32>, vector<128x6xf32>, vector<128x6xf32> -> vector<128x96xf32>
    %118 = tpu.concatenate %100, %102, %104, %106, %108, %110, %112, %114, %116 in 1 : vector<128x6xf32>, vector<128x6xf32>, vector<128x6xf32>, vector<128x6xf32>, vector<128x6xf32>, vector<128x6xf32>, vector<128x6xf32>, vector<128x6xf32>, vector<128x6xf32> -> vector<128x54xf32>
    %119 = tpu.concatenate %117, %118 in 1 : vector<128x96xf32>, vector<128x54xf32> -> vector<128x150xf32>
    %cst_18 = arith.constant dense<0.000000e+00> : vector<128x32xf32>
    %120 = tpu.matmul %119, %3, %cst_18 {dimension_numbers = #tpu.dot_dimension_numbers<[1], [0], [0], [1], [0, 0, 1, 1], [], []>} : vector<128x150xf32>, vector<150x32xf32>, vector<128x32xf32> -> vector<128x32xf32>
    %121 = vector.broadcast %4 : vector<1x32xf32> to vector<128x32xf32>
    %122 = arith.addf %120, %121 : vector<128x32xf32>
    %cst_19 = arith.constant 0.000000e+00 : f32
    %123 = vector.broadcast %cst_19 : f32 to vector<128x32xf32>
    %124 = arith.maximumf %122, %123 : vector<128x32xf32>
    %125 = vector.shape_cast %124 : vector<128x32xf32> to vector<2x8x8x32xf32>
    %c2 = arith.constant 2 : index
    %c0_20 = arith.constant 0 : index
    %c0_21 = arith.constant 0 : index
    %c1 = arith.constant 1 : index
    %c0_22 = arith.constant 0 : index
    %126 = vector.load %arg14[%c2, %c0_20, %c0_21, %c1, %c0_22] : memref<4x2x10x10x32xf32, #tpu.memory_space<vmem>>, vector<1x2x8x8x32xf32>
    %127 = vector.shape_cast %126 : vector<1x2x8x8x32xf32> to vector<2x8x8x32xf32>
    %128 = vector.shape_cast %125 : vector<2x8x8x32xf32> to vector<1x2x8x8x32xf32>
    tpu.vector_store %arg14[%c2, %c0_20, %c0_21, %c1, %c0_22], %128 {strides = array<i32>} : memref<4x2x10x10x32xf32, #tpu.memory_space<vmem>>, vector<1x2x8x8x32xf32>,
    %129 = vector.extract_strided_slice %2 {offsets = [0, 0, 0, 48], sizes = [2, 8, 8, 6], strides = [1, 1, 1, 1]} : vector<2x9x9x96xf32> to vector<2x8x8x6xf32>
    %130 = vector.shape_cast %129 : vector<2x8x8x6xf32> to vector<128x6xf32>
    %131 = vector.extract_strided_slice %2 {offsets = [0, 0, 0, 54], sizes = [2, 8, 8, 6], strides = [1, 1, 1, 1]} : vector<2x9x9x96xf32> to vector<2x8x8x6xf32>
    %132 = vector.shape_cast %131 : vector<2x8x8x6xf32> to vector<128x6xf32>
    %133 = vector.extract_strided_slice %2 {offsets = [0, 0, 0, 60], sizes = [2, 8, 8, 6], strides = [1, 1, 1, 1]} : vector<2x9x9x96xf32> to vector<2x8x8x6xf32>
    %134 = vector.shape_cast %133 : vector<2x8x8x6xf32> to vector<128x6xf32>
    %135 = vector.extract_strided_slice %2 {offsets = [0, 0, 0, 66], sizes = [2, 8, 8, 6], strides = [1, 1, 1, 1]} : vector<2x9x9x96xf32> to vector<2x8x8x6xf32>
    %136 = vector.shape_cast %135 : vector<2x8x8x6xf32> to vector<128x6xf32>
    %137 = vector.extract_strided_slice %2 {offsets = [0, 0, 1, 48], sizes = [2, 8, 8, 6], strides = [1, 1, 1, 1]} : vector<2x9x9x96xf32> to vector<2x8x8x6xf32>
    %138 = vector.shape_cast %137 : vector<2x8x8x6xf32> to vector<128x6xf32>
    %139 = vector.extract_strided_slice %2 {offsets = [0, 0, 0, 72], sizes = [2, 8, 8, 6], strides = [1, 1, 1, 1]} : vector<2x9x9x96xf32> to vector<2x8x8x6xf32>
    %140 = vector.shape_cast %139 : vector<2x8x8x6xf32> to vector<128x6xf32>
    %141 = vector.extract_strided_slice %2 {offsets = [0, 0, 0, 78], sizes = [2, 8, 8, 6], strides = [1, 1, 1, 1]} : vector<2x9x9x96xf32> to vector<2x8x8x6xf32>
    %142 = vector.shape_cast %141 : vector<2x8x8x6xf32> to vector<128x6xf32>
    %143 = vector.extract_strided_slice %2 {offsets = [0, 0, 0, 84], sizes = [2, 8, 8, 6], strides = [1, 1, 1, 1]} : vector<2x9x9x96xf32> to vector<2x8x8x6xf32>
    %144 = vector.shape_cast %143 : vector<2x8x8x6xf32> to vector<128x6xf32>
    %145 = vector.extract_strided_slice %2 {offsets = [0, 0, 0, 90], sizes = [2, 8, 8, 6], strides = [1, 1, 1, 1]} : vector<2x9x9x96xf32> to vector<2x8x8x6xf32>
    %146 = vector.shape_cast %145 : vector<2x8x8x6xf32> to vector<128x6xf32>
    %147 = vector.extract_strided_slice %2 {offsets = [0, 0, 1, 72], sizes = [2, 8, 8, 6], strides = [1, 1, 1, 1]} : vector<2x9x9x96xf32> to vector<2x8x8x6xf32>
    %148 = vector.shape_cast %147 : vector<2x8x8x6xf32> to vector<128x6xf32>
    %149 = vector.extract_strided_slice %2 {offsets = [0, 1, 0, 0], sizes = [2, 8, 8, 6], strides = [1, 1, 1, 1]} : vector<2x9x9x96xf32> to vector<2x8x8x6xf32>
    %150 = vector.shape_cast %149 : vector<2x8x8x6xf32> to vector<128x6xf32>
    %151 = vector.extract_strided_slice %2 {offsets = [0, 1, 0, 6], sizes = [2, 8, 8, 6], strides = [1, 1, 1, 1]} : vector<2x9x9x96xf32> to vector<2x8x8x6xf32>
    %152 = vector.shape_cast %151 : vector<2x8x8x6xf32> to vector<128x6xf32>
    %153 = vector.extract_strided_slice %2 {offsets = [0, 1, 0, 12], sizes = [2, 8, 8, 6], strides = [1, 1, 1, 1]} : vector<2x9x9x96xf32> to vector<2x8x8x6xf32>
    %154 = vector.shape_cast %153 : vector<2x8x8x6xf32> to vector<128x6xf32>
    %155 = vector.extract_strided_slice %2 {offsets = [0, 1, 0, 18], sizes = [2, 8, 8, 6], strides = [1, 1, 1, 1]} : vector<2x9x9x96xf32> to vector<2x8x8x6xf32>
    %156 = vector.shape_cast %155 : vector<2x8x8x6xf32> to vector<128x6xf32>
    %157 = vector.extract_strided_slice %2 {offsets = [0, 1, 1, 0], sizes = [2, 8, 8, 6], strides = [1, 1, 1, 1]} : vector<2x9x9x96xf32> to vector<2x8x8x6xf32>
    %158 = vector.shape_cast %157 : vector<2x8x8x6xf32> to vector<128x6xf32>
    %159 = vector.extract_strided_slice %2 {offsets = [0, 1, 0, 24], sizes = [2, 8, 8, 6], strides = [1, 1, 1, 1]} : vector<2x9x9x96xf32> to vector<2x8x8x6xf32>
    %160 = vector.shape_cast %159 : vector<2x8x8x6xf32> to vector<128x6xf32>
    %161 = vector.extract_strided_slice %2 {offsets = [0, 1, 0, 30], sizes = [2, 8, 8, 6], strides = [1, 1, 1, 1]} : vector<2x9x9x96xf32> to vector<2x8x8x6xf32>
    %162 = vector.shape_cast %161 : vector<2x8x8x6xf32> to vector<128x6xf32>
    %163 = vector.extract_strided_slice %2 {offsets = [0, 1, 0, 36], sizes = [2, 8, 8, 6], strides = [1, 1, 1, 1]} : vector<2x9x9x96xf32> to vector<2x8x8x6xf32>
    %164 = vector.shape_cast %163 : vector<2x8x8x6xf32> to vector<128x6xf32>
    %165 = vector.extract_strided_slice %2 {offsets = [0, 1, 0, 42], sizes = [2, 8, 8, 6], strides = [1, 1, 1, 1]} : vector<2x9x9x96xf32> to vector<2x8x8x6xf32>
    %166 = vector.shape_cast %165 : vector<2x8x8x6xf32> to vector<128x6xf32>
    %167 = vector.extract_strided_slice %2 {offsets = [0, 1, 1, 24], sizes = [2, 8, 8, 6], strides = [1, 1, 1, 1]} : vector<2x9x9x96xf32> to vector<2x8x8x6xf32>
    %168 = vector.shape_cast %167 : vector<2x8x8x6xf32> to vector<128x6xf32>
    %169 = vector.extract_strided_slice %2 {offsets = [0, 1, 0, 48], sizes = [2, 8, 8, 6], strides = [1, 1, 1, 1]} : vector<2x9x9x96xf32> to vector<2x8x8x6xf32>
    %170 = vector.shape_cast %169 : vector<2x8x8x6xf32> to vector<128x6xf32>
    %171 = vector.extract_strided_slice %2 {offsets = [0, 1, 0, 54], sizes = [2, 8, 8, 6], strides = [1, 1, 1, 1]} : vector<2x9x9x96xf32> to vector<2x8x8x6xf32>
    %172 = vector.shape_cast %171 : vector<2x8x8x6xf32> to vector<128x6xf32>
    %173 = vector.extract_strided_slice %2 {offsets = [0, 1, 0, 60], sizes = [2, 8, 8, 6], strides = [1, 1, 1, 1]} : vector<2x9x9x96xf32> to vector<2x8x8x6xf32>
    %174 = vector.shape_cast %173 : vector<2x8x8x6xf32> to vector<128x6xf32>
    %175 = vector.extract_strided_slice %2 {offsets = [0, 1, 0, 66], sizes = [2, 8, 8, 6], strides = [1, 1, 1, 1]} : vector<2x9x9x96xf32> to vector<2x8x8x6xf32>
    %176 = vector.shape_cast %175 : vector<2x8x8x6xf32> to vector<128x6xf32>
    %177 = vector.extract_strided_slice %2 {offsets = [0, 1, 1, 48], sizes = [2, 8, 8, 6], strides = [1, 1, 1, 1]} : vector<2x9x9x96xf32> to vector<2x8x8x6xf32>
    %178 = vector.shape_cast %177 : vector<2x8x8x6xf32> to vector<128x6xf32>
    %179 = tpu.concatenate %130, %132, %134, %136, %138, %140, %142, %144, %146, %148, %150, %152, %154, %156, %158, %160 in 1 : vector<128x6xf32>, vector<128x6xf32>, vector<128x6xf32>, vector<128x6xf32>, vector<128x6xf32>, vector<128x6xf32>, vector<128x6xf32>, vector<128x6xf32>, vector<128x6xf32>, vector<128x6xf32>, vector<128x6xf32>, vector<128x6xf32>, vector<128x6xf32>, vector<128x6xf32>, vector<128x6xf32>, vector<128x6xf32> -> vector<128x96xf32>
    %180 = tpu.concatenate %162, %164, %166, %168, %170, %172, %174, %176, %178 in 1 : vector<128x6xf32>, vector<128x6xf32>, vector<128x6xf32>, vector<128x6xf32>, vector<128x6xf32>, vector<128x6xf32>, vector<128x6xf32>, vector<128x6xf32>, vector<128x6xf32> -> vector<128x54xf32>
    %181 = tpu.concatenate %179, %180 in 1 : vector<128x96xf32>, vector<128x54xf32> -> vector<128x150xf32>
    %cst_23 = arith.constant dense<0.000000e+00> : vector<128x32xf32>
    %182 = tpu.matmul %181, %3, %cst_23 {dimension_numbers = #tpu.dot_dimension_numbers<[1], [0], [0], [1], [0, 0, 1, 1], [], []>} : vector<128x150xf32>, vector<150x32xf32>, vector<128x32xf32> -> vector<128x32xf32>
    %183 = vector.broadcast %4 : vector<1x32xf32> to vector<128x32xf32>
    %184 = arith.addf %182, %183 : vector<128x32xf32>
    %cst_24 = arith.constant 0.000000e+00 : f32
    %185 = vector.broadcast %cst_24 : f32 to vector<128x32xf32>
    %186 = arith.maximumf %184, %185 : vector<128x32xf32>
    %187 = vector.shape_cast %186 : vector<128x32xf32> to vector<2x8x8x32xf32>
    %c1_25 = arith.constant 1 : index
    %c0_26 = arith.constant 0 : index
    %c1_27 = arith.constant 1 : index
    %c0_28 = arith.constant 0 : index
    %c0_29 = arith.constant 0 : index
    %188 = vector.load %arg14[%c1_25, %c0_26, %c1_27, %c0_28, %c0_29] : memref<4x2x10x10x32xf32, #tpu.memory_space<vmem>>, vector<1x2x8x8x32xf32>
    %189 = vector.shape_cast %188 : vector<1x2x8x8x32xf32> to vector<2x8x8x32xf32>
    %190 = vector.shape_cast %187 : vector<2x8x8x32xf32> to vector<1x2x8x8x32xf32>
    tpu.vector_store %arg14[%c1_25, %c0_26, %c1_27, %c0_28, %c0_29], %190 {strides = array<i32>} : memref<4x2x10x10x32xf32, #tpu.memory_space<vmem>>, vector<1x2x8x8x32xf32>,
    %191 = vector.extract_strided_slice %2 {offsets = [0, 0, 0, 60], sizes = [2, 8, 8, 6], strides = [1, 1, 1, 1]} : vector<2x9x9x96xf32> to vector<2x8x8x6xf32>
    %192 = vector.shape_cast %191 : vector<2x8x8x6xf32> to vector<128x6xf32>
    %193 = vector.extract_strided_slice %2 {offsets = [0, 0, 0, 66], sizes = [2, 8, 8, 6], strides = [1, 1, 1, 1]} : vector<2x9x9x96xf32> to vector<2x8x8x6xf32>
    %194 = vector.shape_cast %193 : vector<2x8x8x6xf32> to vector<128x6xf32>
    %195 = vector.extract_strided_slice %2 {offsets = [0, 0, 1, 48], sizes = [2, 8, 8, 6], strides = [1, 1, 1, 1]} : vector<2x9x9x96xf32> to vector<2x8x8x6xf32>
    %196 = vector.shape_cast %195 : vector<2x8x8x6xf32> to vector<128x6xf32>
    %197 = vector.extract_strided_slice %2 {offsets = [0, 0, 1, 54], sizes = [2, 8, 8, 6], strides = [1, 1, 1, 1]} : vector<2x9x9x96xf32> to vector<2x8x8x6xf32>
    %198 = vector.shape_cast %197 : vector<2x8x8x6xf32> to vector<128x6xf32>
    %199 = vector.extract_strided_slice %2 {offsets = [0, 0, 1, 60], sizes = [2, 8, 8, 6], strides = [1, 1, 1, 1]} : vector<2x9x9x96xf32> to vector<2x8x8x6xf32>
    %200 = vector.shape_cast %199 : vector<2x8x8x6xf32> to vector<128x6xf32>
    %201 = vector.extract_strided_slice %2 {offsets = [0, 0, 0, 84], sizes = [2, 8, 8, 6], strides = [1, 1, 1, 1]} : vector<2x9x9x96xf32> to vector<2x8x8x6xf32>
    %202 = vector.shape_cast %201 : vector<2x8x8x6xf32> to vector<128x6xf32>
    %203 = vector.extract_strided_slice %2 {offsets = [0, 0, 0, 90], sizes = [2, 8, 8, 6], strides = [1, 1, 1, 1]} : vector<2x9x9x96xf32> to vector<2x8x8x6xf32>
    %204 = vector.shape_cast %203 : vector<2x8x8x6xf32> to vector<128x6xf32>
    %205 = vector.extract_strided_slice %2 {offsets = [0, 0, 1, 72], sizes = [2, 8, 8, 6], strides = [1, 1, 1, 1]} : vector<2x9x9x96xf32> to vector<2x8x8x6xf32>
    %206 = vector.shape_cast %205 : vector<2x8x8x6xf32> to vector<128x6xf32>
    %207 = vector.extract_strided_slice %2 {offsets = [0, 0, 1, 78], sizes = [2, 8, 8, 6], strides = [1, 1, 1, 1]} : vector<2x9x9x96xf32> to vector<2x8x8x6xf32>
    %208 = vector.shape_cast %207 : vector<2x8x8x6xf32> to vector<128x6xf32>
    %209 = vector.extract_strided_slice %2 {offsets = [0, 0, 1, 84], sizes = [2, 8, 8, 6], strides = [1, 1, 1, 1]} : vector<2x9x9x96xf32> to vector<2x8x8x6xf32>
    %210 = vector.shape_cast %209 : vector<2x8x8x6xf32> to vector<128x6xf32>
    %211 = vector.extract_strided_slice %2 {offsets = [0, 1, 0, 12], sizes = [2, 8, 8, 6], strides = [1, 1, 1, 1]} : vector<2x9x9x96xf32> to vector<2x8x8x6xf32>
    %212 = vector.shape_cast %211 : vector<2x8x8x6xf32> to vector<128x6xf32>
    %213 = vector.extract_strided_slice %2 {offsets = [0, 1, 0, 18], sizes = [2, 8, 8, 6], strides = [1, 1, 1, 1]} : vector<2x9x9x96xf32> to vector<2x8x8x6xf32>
    %214 = vector.shape_cast %213 : vector<2x8x8x6xf32> to vector<128x6xf32>
    %215 = vector.extract_strided_slice %2 {offsets = [0, 1, 1, 0], sizes = [2, 8, 8, 6], strides = [1, 1, 1, 1]} : vector<2x9x9x96xf32> to vector<2x8x8x6xf32>
    %216 = vector.shape_cast %215 : vector<2x8x8x6xf32> to vector<128x6xf32>
    %217 = vector.extract_strided_slice %2 {offsets = [0, 1, 1, 6], sizes = [2, 8, 8, 6], strides = [1, 1, 1, 1]} : vector<2x9x9x96xf32> to vector<2x8x8x6xf32>
    %218 = vector.shape_cast %217 : vector<2x8x8x6xf32> to vector<128x6xf32>
    %219 = vector.extract_strided_slice %2 {offsets = [0, 1, 1, 12], sizes = [2, 8, 8, 6], strides = [1, 1, 1, 1]} : vector<2x9x9x96xf32> to vector<2x8x8x6xf32>
    %220 = vector.shape_cast %219 : vector<2x8x8x6xf32> to vector<128x6xf32>
    %221 = vector.extract_strided_slice %2 {offsets = [0, 1, 0, 36], sizes = [2, 8, 8, 6], strides = [1, 1, 1, 1]} : vector<2x9x9x96xf32> to vector<2x8x8x6xf32>
    %222 = vector.shape_cast %221 : vector<2x8x8x6xf32> to vector<128x6xf32>
    %223 = vector.extract_strided_slice %2 {offsets = [0, 1, 0, 42], sizes = [2, 8, 8, 6], strides = [1, 1, 1, 1]} : vector<2x9x9x96xf32> to vector<2x8x8x6xf32>
    %224 = vector.shape_cast %223 : vector<2x8x8x6xf32> to vector<128x6xf32>
    %225 = vector.extract_strided_slice %2 {offsets = [0, 1, 1, 24], sizes = [2, 8, 8, 6], strides = [1, 1, 1, 1]} : vector<2x9x9x96xf32> to vector<2x8x8x6xf32>
    %226 = vector.shape_cast %225 : vector<2x8x8x6xf32> to vector<128x6xf32>
    %227 = vector.extract_strided_slice %2 {offsets = [0, 1, 1, 30], sizes = [2, 8, 8, 6], strides = [1, 1, 1, 1]} : vector<2x9x9x96xf32> to vector<2x8x8x6xf32>
    %228 = vector.shape_cast %227 : vector<2x8x8x6xf32> to vector<128x6xf32>
    %229 = vector.extract_strided_slice %2 {offsets = [0, 1, 1, 36], sizes = [2, 8, 8, 6], strides = [1, 1, 1, 1]} : vector<2x9x9x96xf32> to vector<2x8x8x6xf32>
    %230 = vector.shape_cast %229 : vector<2x8x8x6xf32> to vector<128x6xf32>
    %231 = vector.extract_strided_slice %2 {offsets = [0, 1, 0, 60], sizes = [2, 8, 8, 6], strides = [1, 1, 1, 1]} : vector<2x9x9x96xf32> to vector<2x8x8x6xf32>
    %232 = vector.shape_cast %231 : vector<2x8x8x6xf32> to vector<128x6xf32>
    %233 = vector.extract_strided_slice %2 {offsets = [0, 1, 0, 66], sizes = [2, 8, 8, 6], strides = [1, 1, 1, 1]} : vector<2x9x9x96xf32> to vector<2x8x8x6xf32>
    %234 = vector.shape_cast %233 : vector<2x8x8x6xf32> to vector<128x6xf32>
    %235 = vector.extract_strided_slice %2 {offsets = [0, 1, 1, 48], sizes = [2, 8, 8, 6], strides = [1, 1, 1, 1]} : vector<2x9x9x96xf32> to vector<2x8x8x6xf32>
    %236 = vector.shape_cast %235 : vector<2x8x8x6xf32> to vector<128x6xf32>
    %237 = vector.extract_strided_slice %2 {offsets = [0, 1, 1, 54], sizes = [2, 8, 8, 6], strides = [1, 1, 1, 1]} : vector<2x9x9x96xf32> to vector<2x8x8x6xf32>
    %238 = vector.shape_cast %237 : vector<2x8x8x6xf32> to vector<128x6xf32>
    %239 = vector.extract_strided_slice %2 {offsets = [0, 1, 1, 60], sizes = [2, 8, 8, 6], strides = [1, 1, 1, 1]} : vector<2x9x9x96xf32> to vector<2x8x8x6xf32>
    %240 = vector.shape_cast %239 : vector<2x8x8x6xf32> to vector<128x6xf32>
    %241 = tpu.concatenate %192, %194, %196, %198, %200, %202, %204, %206, %208, %210, %212, %214, %216, %218, %220, %222 in 1 : vector<128x6xf32>, vector<128x6xf32>, vector<128x6xf32>, vector<128x6xf32>, vector<128x6xf32>, vector<128x6xf32>, vector<128x6xf32>, vector<128x6xf32>, vector<128x6xf32>, vector<128x6xf32>, vector<128x6xf32>, vector<128x6xf32>, vector<128x6xf32>, vector<128x6xf32>, vector<128x6xf32>, vector<128x6xf32> -> vector<128x96xf32>
    %242 = tpu.concatenate %224, %226, %228, %230, %232, %234, %236, %238, %240 in 1 : vector<128x6xf32>, vector<128x6xf32>, vector<128x6xf32>, vector<128x6xf32>, vector<128x6xf32>, vector<128x6xf32>, vector<128x6xf32>, vector<128x6xf32>, vector<128x6xf32> -> vector<128x54xf32>
    %243 = tpu.concatenate %241, %242 in 1 : vector<128x96xf32>, vector<128x54xf32> -> vector<128x150xf32>
    %cst_30 = arith.constant dense<0.000000e+00> : vector<128x32xf32>
    %244 = tpu.matmul %243, %3, %cst_30 {dimension_numbers = #tpu.dot_dimension_numbers<[1], [0], [0], [1], [0, 0, 1, 1], [], []>} : vector<128x150xf32>, vector<150x32xf32>, vector<128x32xf32> -> vector<128x32xf32>
    %245 = vector.broadcast %4 : vector<1x32xf32> to vector<128x32xf32>
    %246 = arith.addf %244, %245 : vector<128x32xf32>
    %cst_31 = arith.constant 0.000000e+00 : f32
    %247 = vector.broadcast %cst_31 : f32 to vector<128x32xf32>
    %248 = arith.maximumf %246, %247 : vector<128x32xf32>
    %249 = vector.shape_cast %248 : vector<128x32xf32> to vector<2x8x8x32xf32>
    %c0_32 = arith.constant 0 : index
    %c0_33 = arith.constant 0 : index
    %c1_34 = arith.constant 1 : index
    %c1_35 = arith.constant 1 : index
    %c0_36 = arith.constant 0 : index
    %250 = vector.load %arg14[%c0_32, %c0_33, %c1_34, %c1_35, %c0_36] : memref<4x2x10x10x32xf32, #tpu.memory_space<vmem>>, vector<1x2x8x8x32xf32>
    %251 = vector.shape_cast %250 : vector<1x2x8x8x32xf32> to vector<2x8x8x32xf32>
    %252 = vector.shape_cast %249 : vector<2x8x8x32xf32> to vector<1x2x8x8x32xf32>
    tpu.vector_store %arg14[%c0_32, %c0_33, %c1_34, %c1_35, %c0_36], %252 {strides = array<i32>} : memref<4x2x10x10x32xf32, #tpu.memory_space<vmem>>, vector<1x2x8x8x32xf32>,
    %c0_37 = arith.constant 0 : index
    %c0_38 = arith.constant 0 : index
    %253 = vector.load %arg5[%c0_37, %c0_38] : memref<800x32xf32, #tpu.memory_space<vmem>>, vector<800x32xf32>
    %c0_39 = arith.constant 0 : index
    %c0_40 = arith.constant 0 : index
    %254 = vector.load %arg6[%c0_39, %c0_40] : memref<1x32xf32, #tpu.memory_space<vmem>>, vector<1x32xf32>
    %c0_41 = arith.constant 0 : index
    %c0_42 = arith.constant 0 : index
    %c0_43 = arith.constant 0 : index
    %c0_44 = arith.constant 0 : index
    %c0_45 = arith.constant 0 : index
    %255 = vector.load %arg14[%c0_41, %c0_42, %c0_43, %c0_44, %c0_45] : memref<4x2x10x10x32xf32, #tpu.memory_space<vmem>>, vector<1x2x8x8x32xf32>
    %256 = vector.shape_cast %255 : vector<1x2x8x8x32xf32> to vector<2x8x8x32xf32>
    %257 = vector.shape_cast %256 : vector<2x8x8x32xf32> to vector<128x32xf32>
    %c1_46 = arith.constant 1 : index
    %c0_47 = arith.constant 0 : index
    %c0_48 = arith.constant 0 : index
    %c0_49 = arith.constant 0 : index
    %c0_50 = arith.constant 0 : index
    %258 = vector.load %arg14[%c1_46, %c0_47, %c0_48, %c0_49, %c0_50] : memref<4x2x10x10x32xf32, #tpu.memory_space<vmem>>, vector<1x2x8x8x32xf32>
    %259 = vector.shape_cast %258 : vector<1x2x8x8x32xf32> to vector<2x8x8x32xf32>
    %260 = vector.shape_cast %259 : vector<2x8x8x32xf32> to vector<128x32xf32>
    %c0_51 = arith.constant 0 : index
    %c0_52 = arith.constant 0 : index
    %c0_53 = arith.constant 0 : index
    %c1_54 = arith.constant 1 : index
    %c0_55 = arith.constant 0 : index
    %261 = vector.load %arg14[%c0_51, %c0_52, %c0_53, %c1_54, %c0_55] : memref<4x2x10x10x32xf32, #tpu.memory_space<vmem>>, vector<1x2x8x8x32xf32>
    %262 = vector.shape_cast %261 : vector<1x2x8x8x32xf32> to vector<2x8x8x32xf32>
    %263 = vector.shape_cast %262 : vector<2x8x8x32xf32> to vector<128x32xf32>
    %c1_56 = arith.constant 1 : index
    %c0_57 = arith.constant 0 : index
    %c0_58 = arith.constant 0 : index
    %c1_59 = arith.constant 1 : index
    %c0_60 = arith.constant 0 : index
    %264 = vector.load %arg14[%c1_56, %c0_57, %c0_58, %c1_59, %c0_60] : memref<4x2x10x10x32xf32, #tpu.memory_space<vmem>>, vector<1x2x8x8x32xf32>
    %265 = vector.shape_cast %264 : vector<1x2x8x8x32xf32> to vector<2x8x8x32xf32>
    %266 = vector.shape_cast %265 : vector<2x8x8x32xf32> to vector<128x32xf32>
    %c0_61 = arith.constant 0 : index
    %c0_62 = arith.constant 0 : index
    %c0_63 = arith.constant 0 : index
    %c2_64 = arith.constant 2 : index
    %c0_65 = arith.constant 0 : index
    %267 = vector.load %arg14[%c0_61, %c0_62, %c0_63, %c2_64, %c0_65] : memref<4x2x10x10x32xf32, #tpu.memory_space<vmem>>, vector<1x2x8x8x32xf32>
    %268 = vector.shape_cast %267 : vector<1x2x8x8x32xf32> to vector<2x8x8x32xf32>
    %269 = vector.shape_cast %268 : vector<2x8x8x32xf32> to vector<128x32xf32>
    %c2_66 = arith.constant 2 : index
    %c0_67 = arith.constant 0 : index
    %c0_68 = arith.constant 0 : index
    %c0_69 = arith.constant 0 : index
    %c0_70 = arith.constant 0 : index
    %270 = vector.load %arg14[%c2_66, %c0_67, %c0_68, %c0_69, %c0_70] : memref<4x2x10x10x32xf32, #tpu.memory_space<vmem>>, vector<1x2x8x8x32xf32>
    %271 = vector.shape_cast %270 : vector<1x2x8x8x32xf32> to vector<2x8x8x32xf32>
    %272 = vector.shape_cast %271 : vector<2x8x8x32xf32> to vector<128x32xf32>
    %c3_71 = arith.constant 3 : index
    %c0_72 = arith.constant 0 : index
    %c0_73 = arith.constant 0 : index
    %c0_74 = arith.constant 0 : index
    %c0_75 = arith.constant 0 : index
    %273 = vector.load %arg14[%c3_71, %c0_72, %c0_73, %c0_74, %c0_75] : memref<4x2x10x10x32xf32, #tpu.memory_space<vmem>>, vector<1x2x8x8x32xf32>
    %274 = vector.shape_cast %273 : vector<1x2x8x8x32xf32> to vector<2x8x8x32xf32>
    %275 = vector.shape_cast %274 : vector<2x8x8x32xf32> to vector<128x32xf32>
    %c2_76 = arith.constant 2 : index
    %c0_77 = arith.constant 0 : index
    %c0_78 = arith.constant 0 : index
    %c1_79 = arith.constant 1 : index
    %c0_80 = arith.constant 0 : index
    %276 = vector.load %arg14[%c2_76, %c0_77, %c0_78, %c1_79, %c0_80] : memref<4x2x10x10x32xf32, #tpu.memory_space<vmem>>, vector<1x2x8x8x32xf32>
    %277 = vector.shape_cast %276 : vector<1x2x8x8x32xf32> to vector<2x8x8x32xf32>
    %278 = vector.shape_cast %277 : vector<2x8x8x32xf32> to vector<128x32xf32>
    %c3_81 = arith.constant 3 : index
    %c0_82 = arith.constant 0 : index
    %c0_83 = arith.constant 0 : index
    %c1_84 = arith.constant 1 : index
    %c0_85 = arith.constant 0 : index
    %279 = vector.load %arg14[%c3_81, %c0_82, %c0_83, %c1_84, %c0_85] : memref<4x2x10x10x32xf32, #tpu.memory_space<vmem>>, vector<1x2x8x8x32xf32>
    %280 = vector.shape_cast %279 : vector<1x2x8x8x32xf32> to vector<2x8x8x32xf32>
    %281 = vector.shape_cast %280 : vector<2x8x8x32xf32> to vector<128x32xf32>
    %c2_86 = arith.constant 2 : index
    %c0_87 = arith.constant 0 : index
    %c0_88 = arith.constant 0 : index
    %c2_89 = arith.constant 2 : index
    %c0_90 = arith.constant 0 : index
    %282 = vector.load %arg14[%c2_86, %c0_87, %c0_88, %c2_89, %c0_90] : memref<4x2x10x10x32xf32, #tpu.memory_space<vmem>>, vector<1x2x8x8x32xf32>
    %283 = vector.shape_cast %282 : vector<1x2x8x8x32xf32> to vector<2x8x8x32xf32>
    %284 = vector.shape_cast %283 : vector<2x8x8x32xf32> to vector<128x32xf32>
    %c0_91 = arith.constant 0 : index
    %c0_92 = arith.constant 0 : index
    %c1_93 = arith.constant 1 : index
    %c0_94 = arith.constant 0 : index
    %c0_95 = arith.constant 0 : index
    %285 = vector.load %arg14[%c0_91, %c0_92, %c1_93, %c0_94, %c0_95] : memref<4x2x10x10x32xf32, #tpu.memory_space<vmem>>, vector<1x2x8x8x32xf32>
    %286 = vector.shape_cast %285 : vector<1x2x8x8x32xf32> to vector<2x8x8x32xf32>
    %287 = vector.shape_cast %286 : vector<2x8x8x32xf32> to vector<128x32xf32>
    %c1_96 = arith.constant 1 : index
    %c0_97 = arith.constant 0 : index
    %c1_98 = arith.constant 1 : index
    %c0_99 = arith.constant 0 : index
    %c0_100 = arith.constant 0 : index
    %288 = vector.load %arg14[%c1_96, %c0_97, %c1_98, %c0_99, %c0_100] : memref<4x2x10x10x32xf32, #tpu.memory_space<vmem>>, vector<1x2x8x8x32xf32>
    %289 = vector.shape_cast %288 : vector<1x2x8x8x32xf32> to vector<2x8x8x32xf32>
    %290 = vector.shape_cast %289 : vector<2x8x8x32xf32> to vector<128x32xf32>
    %c0_101 = arith.constant 0 : index
    %c0_102 = arith.constant 0 : index
    %c1_103 = arith.constant 1 : index
    %c1_104 = arith.constant 1 : index
    %c0_105 = arith.constant 0 : index
    %291 = vector.load %arg14[%c0_101, %c0_102, %c1_103, %c1_104, %c0_105] : memref<4x2x10x10x32xf32, #tpu.memory_space<vmem>>, vector<1x2x8x8x32xf32>
    %292 = vector.shape_cast %291 : vector<1x2x8x8x32xf32> to vector<2x8x8x32xf32>
    %293 = vector.shape_cast %292 : vector<2x8x8x32xf32> to vector<128x32xf32>
    %c1_106 = arith.constant 1 : index
    %c0_107 = arith.constant 0 : index
    %c1_108 = arith.constant 1 : index
    %c1_109 = arith.constant 1 : index
    %c0_110 = arith.constant 0 : index
    %294 = vector.load %arg14[%c1_106, %c0_107, %c1_108, %c1_109, %c0_110] : memref<4x2x10x10x32xf32, #tpu.memory_space<vmem>>, vector<1x2x8x8x32xf32>
    %295 = vector.shape_cast %294 : vector<1x2x8x8x32xf32> to vector<2x8x8x32xf32>
    %296 = vector.shape_cast %295 : vector<2x8x8x32xf32> to vector<128x32xf32>
    %c0_111 = arith.constant 0 : index
    %c0_112 = arith.constant 0 : index
    %c1_113 = arith.constant 1 : index
    %c2_114 = arith.constant 2 : index
    %c0_115 = arith.constant 0 : index
    %297 = vector.load %arg14[%c0_111, %c0_112, %c1_113, %c2_114, %c0_115] : memref<4x2x10x10x32xf32, #tpu.memory_space<vmem>>, vector<1x2x8x8x32xf32>
    %298 = vector.shape_cast %297 : vector<1x2x8x8x32xf32> to vector<2x8x8x32xf32>
    %299 = vector.shape_cast %298 : vector<2x8x8x32xf32> to vector<128x32xf32>
    %c2_116 = arith.constant 2 : index
    %c0_117 = arith.constant 0 : index
    %c1_118 = arith.constant 1 : index
    %c0_119 = arith.constant 0 : index
    %c0_120 = arith.constant 0 : index
    %300 = vector.load %arg14[%c2_116, %c0_117, %c1_118, %c0_119, %c0_120] : memref<4x2x10x10x32xf32, #tpu.memory_space<vmem>>, vector<1x2x8x8x32xf32>
    %301 = vector.shape_cast %300 : vector<1x2x8x8x32xf32> to vector<2x8x8x32xf32>
    %302 = vector.shape_cast %301 : vector<2x8x8x32xf32> to vector<128x32xf32>
    %c3_121 = arith.constant 3 : index
    %c0_122 = arith.constant 0 : index
    %c1_123 = arith.constant 1 : index
    %c0_124 = arith.constant 0 : index
    %c0_125 = arith.constant 0 : index
    %303 = vector.load %arg14[%c3_121, %c0_122, %c1_123, %c0_124, %c0_125] : memref<4x2x10x10x32xf32, #tpu.memory_space<vmem>>, vector<1x2x8x8x32xf32>
    %304 = vector.shape_cast %303 : vector<1x2x8x8x32xf32> to vector<2x8x8x32xf32>
    %305 = vector.shape_cast %304 : vector<2x8x8x32xf32> to vector<128x32xf32>
    %c2_126 = arith.constant 2 : index
    %c0_127 = arith.constant 0 : index
    %c1_128 = arith.constant 1 : index
    %c1_129 = arith.constant 1 : index
    %c0_130 = arith.constant 0 : index
    %306 = vector.load %arg14[%c2_126, %c0_127, %c1_128, %c1_129, %c0_130] : memref<4x2x10x10x32xf32, #tpu.memory_space<vmem>>, vector<1x2x8x8x32xf32>
    %307 = vector.shape_cast %306 : vector<1x2x8x8x32xf32> to vector<2x8x8x32xf32>
    %308 = vector.shape_cast %307 : vector<2x8x8x32xf32> to vector<128x32xf32>
    %c3_131 = arith.constant 3 : index
    %c0_132 = arith.constant 0 : index
    %c1_133 = arith.constant 1 : index
    %c1_134 = arith.constant 1 : index
    %c0_135 = arith.constant 0 : index
    %309 = vector.load %arg14[%c3_131, %c0_132, %c1_133, %c1_134, %c0_135] : memref<4x2x10x10x32xf32, #tpu.memory_space<vmem>>, vector<1x2x8x8x32xf32>
    %310 = vector.shape_cast %309 : vector<1x2x8x8x32xf32> to vector<2x8x8x32xf32>
    %311 = vector.shape_cast %310 : vector<2x8x8x32xf32> to vector<128x32xf32>
    %c2_136 = arith.constant 2 : index
    %c0_137 = arith.constant 0 : index
    %c1_138 = arith.constant 1 : index
    %c2_139 = arith.constant 2 : index
    %c0_140 = arith.constant 0 : index
    %312 = vector.load %arg14[%c2_136, %c0_137, %c1_138, %c2_139, %c0_140] : memref<4x2x10x10x32xf32, #tpu.memory_space<vmem>>, vector<1x2x8x8x32xf32>
    %313 = vector.shape_cast %312 : vector<1x2x8x8x32xf32> to vector<2x8x8x32xf32>
    %314 = vector.shape_cast %313 : vector<2x8x8x32xf32> to vector<128x32xf32>
    %c0_141 = arith.constant 0 : index
    %c0_142 = arith.constant 0 : index
    %c2_143 = arith.constant 2 : index
    %c0_144 = arith.constant 0 : index
    %c0_145 = arith.constant 0 : index
    %315 = vector.load %arg14[%c0_141, %c0_142, %c2_143, %c0_144, %c0_145] : memref<4x2x10x10x32xf32, #tpu.memory_space<vmem>>, vector<1x2x8x8x32xf32>
    %316 = vector.shape_cast %315 : vector<1x2x8x8x32xf32> to vector<2x8x8x32xf32>
    %317 = vector.shape_cast %316 : vector<2x8x8x32xf32> to vector<128x32xf32>
    %c1_146 = arith.constant 1 : index
    %c0_147 = arith.constant 0 : index
    %c2_148 = arith.constant 2 : index
    %c0_149 = arith.constant 0 : index
    %c0_150 = arith.constant 0 : index
    %318 = vector.load %arg14[%c1_146, %c0_147, %c2_148, %c0_149, %c0_150] : memref<4x2x10x10x32xf32, #tpu.memory_space<vmem>>, vector<1x2x8x8x32xf32>
    %319 = vector.shape_cast %318 : vector<1x2x8x8x32xf32> to vector<2x8x8x32xf32>
    %320 = vector.shape_cast %319 : vector<2x8x8x32xf32> to vector<128x32xf32>
    %c0_151 = arith.constant 0 : index
    %c0_152 = arith.constant 0 : index
    %c2_153 = arith.constant 2 : index
    %c1_154 = arith.constant 1 : index
    %c0_155 = arith.constant 0 : index
    %321 = vector.load %arg14[%c0_151, %c0_152, %c2_153, %c1_154, %c0_155] : memref<4x2x10x10x32xf32, #tpu.memory_space<vmem>>, vector<1x2x8x8x32xf32>
    %322 = vector.shape_cast %321 : vector<1x2x8x8x32xf32> to vector<2x8x8x32xf32>
    %323 = vector.shape_cast %322 : vector<2x8x8x32xf32> to vector<128x32xf32>
    %c1_156 = arith.constant 1 : index
    %c0_157 = arith.constant 0 : index
    %c2_158 = arith.constant 2 : index
    %c1_159 = arith.constant 1 : index
    %c0_160 = arith.constant 0 : index
    %324 = vector.load %arg14[%c1_156, %c0_157, %c2_158, %c1_159, %c0_160] : memref<4x2x10x10x32xf32, #tpu.memory_space<vmem>>, vector<1x2x8x8x32xf32>
    %325 = vector.shape_cast %324 : vector<1x2x8x8x32xf32> to vector<2x8x8x32xf32>
    %326 = vector.shape_cast %325 : vector<2x8x8x32xf32> to vector<128x32xf32>
    %c0_161 = arith.constant 0 : index
    %c0_162 = arith.constant 0 : index
    %c2_163 = arith.constant 2 : index
    %c2_164 = arith.constant 2 : index
    %c0_165 = arith.constant 0 : index
    %327 = vector.load %arg14[%c0_161, %c0_162, %c2_163, %c2_164, %c0_165] : memref<4x2x10x10x32xf32, #tpu.memory_space<vmem>>, vector<1x2x8x8x32xf32>
    %328 = vector.shape_cast %327 : vector<1x2x8x8x32xf32> to vector<2x8x8x32xf32>
    %329 = vector.shape_cast %328 : vector<2x8x8x32xf32> to vector<128x32xf32>
    %330 = tpu.concatenate %257, %260, %263, %266, %269, %272, %275, %278, %281, %284, %287, %290, %293, %296, %299, %302 in 1 : vector<128x32xf32>, vector<128x32xf32>, vector<128x32xf32>, vector<128x32xf32>, vector<128x32xf32>, vector<128x32xf32>, vector<128x32xf32>, vector<128x32xf32>, vector<128x32xf32>, vector<128x32xf32>, vector<128x32xf32>, vector<128x32xf32>, vector<128x32xf32>, vector<128x32xf32>, vector<128x32xf32>, vector<128x32xf32> -> vector<128x512xf32>
    %331 = tpu.concatenate %305, %308, %311, %314, %317, %320, %323, %326, %329 in 1 : vector<128x32xf32>, vector<128x32xf32>, vector<128x32xf32>, vector<128x32xf32>, vector<128x32xf32>, vector<128x32xf32>, vector<128x32xf32>, vector<128x32xf32>, vector<128x32xf32> -> vector<128x288xf32>
    %332 = tpu.concatenate %330, %331 in 1 : vector<128x512xf32>, vector<128x288xf32> -> vector<128x800xf32>
    %cst_166 = arith.constant dense<0.000000e+00> : vector<128x32xf32>
    %333 = tpu.matmul %332, %253, %cst_166 {dimension_numbers = #tpu.dot_dimension_numbers<[1], [0], [0], [1], [0, 0, 1, 1], [], []>} : vector<128x800xf32>, vector<800x32xf32>, vector<128x32xf32> -> vector<128x32xf32>
    %334 = vector.broadcast %254 : vector<1x32xf32> to vector<128x32xf32>
    %335 = arith.addf %333, %334 : vector<128x32xf32>
    %cst_167 = arith.constant 0.000000e+00 : f32
    %336 = vector.broadcast %cst_167 : f32 to vector<128x32xf32>
    %337 = arith.maximumf %335, %336 : vector<128x32xf32>
    %338 = vector.extract_strided_slice %337 {offsets = [0, 0], sizes = [1, 16], strides = [1, 1]} : vector<128x32xf32> to vector<1x16xf32>
    %339 = vector.extract_strided_slice %337 {offsets = [1, 0], sizes = [1, 16], strides = [1, 1]} : vector<128x32xf32> to vector<1x16xf32>
    %340 = vector.extract_strided_slice %337 {offsets = [2, 0], sizes = [1, 16], strides = [1, 1]} : vector<128x32xf32> to vector<1x16xf32>
    %341 = vector.extract_strided_slice %337 {offsets = [3, 0], sizes = [1, 16], strides = [1, 1]} : vector<128x32xf32> to vector<1x16xf32>
    %342 = vector.extract_strided_slice %337 {offsets = [4, 0], sizes = [1, 16], strides = [1, 1]} : vector<128x32xf32> to vector<1x16xf32>
    %343 = vector.extract_strided_slice %337 {offsets = [5, 0], sizes = [1, 16], strides = [1, 1]} : vector<128x32xf32> to vector<1x16xf32>
    %344 = vector.extract_strided_slice %337 {offsets = [6, 0], sizes = [1, 16], strides = [1, 1]} : vector<128x32xf32> to vector<1x16xf32>
    %345 = vector.extract_strided_slice %337 {offsets = [7, 0], sizes = [1, 16], strides = [1, 1]} : vector<128x32xf32> to vector<1x16xf32>
    %346 = vector.extract_strided_slice %337 {offsets = [8, 0], sizes = [1, 16], strides = [1, 1]} : vector<128x32xf32> to vector<1x16xf32>
    %347 = vector.extract_strided_slice %337 {offsets = [9, 0], sizes = [1, 16], strides = [1, 1]} : vector<128x32xf32> to vector<1x16xf32>
    %348 = vector.extract_strided_slice %337 {offsets = [10, 0], sizes = [1, 16], strides = [1, 1]} : vector<128x32xf32> to vector<1x16xf32>
    %349 = vector.extract_strided_slice %337 {offsets = [11, 0], sizes = [1, 16], strides = [1, 1]} : vector<128x32xf32> to vector<1x16xf32>
    %350 = vector.extract_strided_slice %337 {offsets = [12, 0], sizes = [1, 16], strides = [1, 1]} : vector<128x32xf32> to vector<1x16xf32>
    %351 = vector.extract_strided_slice %337 {offsets = [13, 0], sizes = [1, 16], strides = [1, 1]} : vector<128x32xf32> to vector<1x16xf32>
    %352 = vector.extract_strided_slice %337 {offsets = [14, 0], sizes = [1, 16], strides = [1, 1]} : vector<128x32xf32> to vector<1x16xf32>
    %353 = vector.extract_strided_slice %337 {offsets = [15, 0], sizes = [1, 16], strides = [1, 1]} : vector<128x32xf32> to vector<1x16xf32>
    %354 = vector.extract_strided_slice %337 {offsets = [16, 0], sizes = [1, 16], strides = [1, 1]} : vector<128x32xf32> to vector<1x16xf32>
    %355 = vector.extract_strided_slice %337 {offsets = [17, 0], sizes = [1, 16], strides = [1, 1]} : vector<128x32xf32> to vector<1x16xf32>
    %356 = vector.extract_strided_slice %337 {offsets = [18, 0], sizes = [1, 16], strides = [1, 1]} : vector<128x32xf32> to vector<1x16xf32>
    %357 = vector.extract_strided_slice %337 {offsets = [19, 0], sizes = [1, 16], strides = [1, 1]} : vector<128x32xf32> to vector<1x16xf32>
    %358 = vector.extract_strided_slice %337 {offsets = [20, 0], sizes = [1, 16], strides = [1, 1]} : vector<128x32xf32> to vector<1x16xf32>
    %359 = vector.extract_strided_slice %337 {offsets = [21, 0], sizes = [1, 16], strides = [1, 1]} : vector<128x32xf32> to vector<1x16xf32>
    %360 = vector.extract_strided_slice %337 {offsets = [22, 0], sizes = [1, 16], strides = [1, 1]} : vector<128x32xf32> to vector<1x16xf32>
    %361 = vector.extract_strided_slice %337 {offsets = [23, 0], sizes = [1, 16], strides = [1, 1]} : vector<128x32xf32> to vector<1x16xf32>
    %362 = vector.extract_strided_slice %337 {offsets = [24, 0], sizes = [1, 16], strides = [1, 1]} : vector<128x32xf32> to vector<1x16xf32>
    %363 = vector.extract_strided_slice %337 {offsets = [25, 0], sizes = [1, 16], strides = [1, 1]} : vector<128x32xf32> to vector<1x16xf32>
    %364 = vector.extract_strided_slice %337 {offsets = [26, 0], sizes = [1, 16], strides = [1, 1]} : vector<128x32xf32> to vector<1x16xf32>
    %365 = vector.extract_strided_slice %337 {offsets = [27, 0], sizes = [1, 16], strides = [1, 1]} : vector<128x32xf32> to vector<1x16xf32>
    %366 = vector.extract_strided_slice %337 {offsets = [28, 0], sizes = [1, 16], strides = [1, 1]} : vector<128x32xf32> to vector<1x16xf32>
    %367 = vector.extract_strided_slice %337 {offsets = [29, 0], sizes = [1, 16], strides = [1, 1]} : vector<128x32xf32> to vector<1x16xf32>
    %368 = vector.extract_strided_slice %337 {offsets = [30, 0], sizes = [1, 16], strides = [1, 1]} : vector<128x32xf32> to vector<1x16xf32>
    %369 = vector.extract_strided_slice %337 {offsets = [31, 0], sizes = [1, 16], strides = [1, 1]} : vector<128x32xf32> to vector<1x16xf32>
    %370 = vector.extract_strided_slice %337 {offsets = [32, 0], sizes = [1, 16], strides = [1, 1]} : vector<128x32xf32> to vector<1x16xf32>
    %371 = vector.extract_strided_slice %337 {offsets = [33, 0], sizes = [1, 16], strides = [1, 1]} : vector<128x32xf32> to vector<1x16xf32>
    %372 = vector.extract_strided_slice %337 {offsets = [34, 0], sizes = [1, 16], strides = [1, 1]} : vector<128x32xf32> to vector<1x16xf32>
    %373 = vector.extract_strided_slice %337 {offsets = [35, 0], sizes = [1, 16], strides = [1, 1]} : vector<128x32xf32> to vector<1x16xf32>
    %374 = vector.extract_strided_slice %337 {offsets = [36, 0], sizes = [1, 16], strides = [1, 1]} : vector<128x32xf32> to vector<1x16xf32>
    %375 = vector.extract_strided_slice %337 {offsets = [37, 0], sizes = [1, 16], strides = [1, 1]} : vector<128x32xf32> to vector<1x16xf32>
    %376 = vector.extract_strided_slice %337 {offsets = [38, 0], sizes = [1, 16], strides = [1, 1]} : vector<128x32xf32> to vector<1x16xf32>
    %377 = vector.extract_strided_slice %337 {offsets = [39, 0], sizes = [1, 16], strides = [1, 1]} : vector<128x32xf32> to vector<1x16xf32>
    %378 = vector.extract_strided_slice %337 {offsets = [40, 0], sizes = [1, 16], strides = [1, 1]} : vector<128x32xf32> to vector<1x16xf32>
    %379 = vector.extract_strided_slice %337 {offsets = [41, 0], sizes = [1, 16], strides = [1, 1]} : vector<128x32xf32> to vector<1x16xf32>
    %380 = vector.extract_strided_slice %337 {offsets = [42, 0], sizes = [1, 16], strides = [1, 1]} : vector<128x32xf32> to vector<1x16xf32>
    %381 = vector.extract_strided_slice %337 {offsets = [43, 0], sizes = [1, 16], strides = [1, 1]} : vector<128x32xf32> to vector<1x16xf32>
    %382 = vector.extract_strided_slice %337 {offsets = [44, 0], sizes = [1, 16], strides = [1, 1]} : vector<128x32xf32> to vector<1x16xf32>
    %383 = vector.extract_strided_slice %337 {offsets = [45, 0], sizes = [1, 16], strides = [1, 1]} : vector<128x32xf32> to vector<1x16xf32>
    %384 = vector.extract_strided_slice %337 {offsets = [46, 0], sizes = [1, 16], strides = [1, 1]} : vector<128x32xf32> to vector<1x16xf32>
    %385 = vector.extract_strided_slice %337 {offsets = [47, 0], sizes = [1, 16], strides = [1, 1]} : vector<128x32xf32> to vector<1x16xf32>
    %386 = vector.extract_strided_slice %337 {offsets = [48, 0], sizes = [1, 16], strides = [1, 1]} : vector<128x32xf32> to vector<1x16xf32>
    %387 = vector.extract_strided_slice %337 {offsets = [49, 0], sizes = [1, 16], strides = [1, 1]} : vector<128x32xf32> to vector<1x16xf32>
    %388 = vector.extract_strided_slice %337 {offsets = [50, 0], sizes = [1, 16], strides = [1, 1]} : vector<128x32xf32> to vector<1x16xf32>
    %389 = vector.extract_strided_slice %337 {offsets = [51, 0], sizes = [1, 16], strides = [1, 1]} : vector<128x32xf32> to vector<1x16xf32>
    %390 = vector.extract_strided_slice %337 {offsets = [52, 0], sizes = [1, 16], strides = [1, 1]} : vector<128x32xf32> to vector<1x16xf32>
    %391 = vector.extract_strided_slice %337 {offsets = [53, 0], sizes = [1, 16], strides = [1, 1]} : vector<128x32xf32> to vector<1x16xf32>
    %392 = vector.extract_strided_slice %337 {offsets = [54, 0], sizes = [1, 16], strides = [1, 1]} : vector<128x32xf32> to vector<1x16xf32>
    %393 = vector.extract_strided_slice %337 {offsets = [55, 0], sizes = [1, 16], strides = [1, 1]} : vector<128x32xf32> to vector<1x16xf32>
    %394 = vector.extract_strided_slice %337 {offsets = [56, 0], sizes = [1, 16], strides = [1, 1]} : vector<128x32xf32> to vector<1x16xf32>
    %395 = vector.extract_strided_slice %337 {offsets = [57, 0], sizes = [1, 16], strides = [1, 1]} : vector<128x32xf32> to vector<1x16xf32>
    %396 = vector.extract_strided_slice %337 {offsets = [58, 0], sizes = [1, 16], strides = [1, 1]} : vector<128x32xf32> to vector<1x16xf32>
    %397 = vector.extract_strided_slice %337 {offsets = [59, 0], sizes = [1, 16], strides = [1, 1]} : vector<128x32xf32> to vector<1x16xf32>
    %398 = vector.extract_strided_slice %337 {offsets = [60, 0], sizes = [1, 16], strides = [1, 1]} : vector<128x32xf32> to vector<1x16xf32>
    %399 = vector.extract_strided_slice %337 {offsets = [61, 0], sizes = [1, 16], strides = [1, 1]} : vector<128x32xf32> to vector<1x16xf32>
    %400 = vector.extract_strided_slice %337 {offsets = [62, 0], sizes = [1, 16], strides = [1, 1]} : vector<128x32xf32> to vector<1x16xf32>
    %401 = vector.extract_strided_slice %337 {offsets = [63, 0], sizes = [1, 16], strides = [1, 1]} : vector<128x32xf32> to vector<1x16xf32>
    %402 = tpu.concatenate %338, %339, %340, %341, %342, %343, %344, %345, %346, %347, %348, %349, %350, %351, %352, %353 in 1 : vector<1x16xf32>, vector<1x16xf32>, vector<1x16xf32>, vector<1x16xf32>, vector<1x16xf32>, vector<1x16xf32>, vector<1x16xf32>, vector<1x16xf32>, vector<1x16xf32>, vector<1x16xf32>, vector<1x16xf32>, vector<1x16xf32>, vector<1x16xf32>, vector<1x16xf32>, vector<1x16xf32>, vector<1x16xf32> -> vector<1x256xf32>
    %403 = tpu.concatenate %354, %355, %356, %357, %358, %359, %360, %361, %362, %363, %364, %365, %366, %367, %368, %369 in 1 : vector<1x16xf32>, vector<1x16xf32>, vector<1x16xf32>, vector<1x16xf32>, vector<1x16xf32>, vector<1x16xf32>, vector<1x16xf32>, vector<1x16xf32>, vector<1x16xf32>, vector<1x16xf32>, vector<1x16xf32>, vector<1x16xf32>, vector<1x16xf32>, vector<1x16xf32>, vector<1x16xf32>, vector<1x16xf32> -> vector<1x256xf32>
    %404 = tpu.concatenate %370, %371, %372, %373, %374, %375, %376, %377, %378, %379, %380, %381, %382, %383, %384, %385 in 1 : vector<1x16xf32>, vector<1x16xf32>, vector<1x16xf32>, vector<1x16xf32>, vector<1x16xf32>, vector<1x16xf32>, vector<1x16xf32>, vector<1x16xf32>, vector<1x16xf32>, vector<1x16xf32>, vector<1x16xf32>, vector<1x16xf32>, vector<1x16xf32>, vector<1x16xf32>, vector<1x16xf32>, vector<1x16xf32> -> vector<1x256xf32>
    %405 = tpu.concatenate %386, %387, %388, %389, %390, %391, %392, %393, %394, %395, %396, %397, %398, %399, %400, %401 in 1 : vector<1x16xf32>, vector<1x16xf32>, vector<1x16xf32>, vector<1x16xf32>, vector<1x16xf32>, vector<1x16xf32>, vector<1x16xf32>, vector<1x16xf32>, vector<1x16xf32>, vector<1x16xf32>, vector<1x16xf32>, vector<1x16xf32>, vector<1x16xf32>, vector<1x16xf32>, vector<1x16xf32>, vector<1x16xf32> -> vector<1x256xf32>
    %406 = tpu.concatenate %402, %403, %404, %405 in 1 : vector<1x256xf32>, vector<1x256xf32>, vector<1x256xf32>, vector<1x256xf32> -> vector<1x1024xf32>
    %407 = vector.extract_strided_slice %337 {offsets = [64, 0], sizes = [1, 16], strides = [1, 1]} : vector<128x32xf32> to vector<1x16xf32>
    %408 = vector.extract_strided_slice %337 {offsets = [65, 0], sizes = [1, 16], strides = [1, 1]} : vector<128x32xf32> to vector<1x16xf32>
    %409 = vector.extract_strided_slice %337 {offsets = [66, 0], sizes = [1, 16], strides = [1, 1]} : vector<128x32xf32> to vector<1x16xf32>
    %410 = vector.extract_strided_slice %337 {offsets = [67, 0], sizes = [1, 16], strides = [1, 1]} : vector<128x32xf32> to vector<1x16xf32>
    %411 = vector.extract_strided_slice %337 {offsets = [68, 0], sizes = [1, 16], strides = [1, 1]} : vector<128x32xf32> to vector<1x16xf32>
    %412 = vector.extract_strided_slice %337 {offsets = [69, 0], sizes = [1, 16], strides = [1, 1]} : vector<128x32xf32> to vector<1x16xf32>
    %413 = vector.extract_strided_slice %337 {offsets = [70, 0], sizes = [1, 16], strides = [1, 1]} : vector<128x32xf32> to vector<1x16xf32>
    %414 = vector.extract_strided_slice %337 {offsets = [71, 0], sizes = [1, 16], strides = [1, 1]} : vector<128x32xf32> to vector<1x16xf32>
    %415 = vector.extract_strided_slice %337 {offsets = [72, 0], sizes = [1, 16], strides = [1, 1]} : vector<128x32xf32> to vector<1x16xf32>
    %416 = vector.extract_strided_slice %337 {offsets = [73, 0], sizes = [1, 16], strides = [1, 1]} : vector<128x32xf32> to vector<1x16xf32>
    %417 = vector.extract_strided_slice %337 {offsets = [74, 0], sizes = [1, 16], strides = [1, 1]} : vector<128x32xf32> to vector<1x16xf32>
    %418 = vector.extract_strided_slice %337 {offsets = [75, 0], sizes = [1, 16], strides = [1, 1]} : vector<128x32xf32> to vector<1x16xf32>
    %419 = vector.extract_strided_slice %337 {offsets = [76, 0], sizes = [1, 16], strides = [1, 1]} : vector<128x32xf32> to vector<1x16xf32>
    %420 = vector.extract_strided_slice %337 {offsets = [77, 0], sizes = [1, 16], strides = [1, 1]} : vector<128x32xf32> to vector<1x16xf32>
    %421 = vector.extract_strided_slice %337 {offsets = [78, 0], sizes = [1, 16], strides = [1, 1]} : vector<128x32xf32> to vector<1x16xf32>
    %422 = vector.extract_strided_slice %337 {offsets = [79, 0], sizes = [1, 16], strides = [1, 1]} : vector<128x32xf32> to vector<1x16xf32>
    %423 = vector.extract_strided_slice %337 {offsets = [80, 0], sizes = [1, 16], strides = [1, 1]} : vector<128x32xf32> to vector<1x16xf32>
    %424 = vector.extract_strided_slice %337 {offsets = [81, 0], sizes = [1, 16], strides = [1, 1]} : vector<128x32xf32> to vector<1x16xf32>
    %425 = vector.extract_strided_slice %337 {offsets = [82, 0], sizes = [1, 16], strides = [1, 1]} : vector<128x32xf32> to vector<1x16xf32>
    %426 = vector.extract_strided_slice %337 {offsets = [83, 0], sizes = [1, 16], strides = [1, 1]} : vector<128x32xf32> to vector<1x16xf32>
    %427 = vector.extract_strided_slice %337 {offsets = [84, 0], sizes = [1, 16], strides = [1, 1]} : vector<128x32xf32> to vector<1x16xf32>
    %428 = vector.extract_strided_slice %337 {offsets = [85, 0], sizes = [1, 16], strides = [1, 1]} : vector<128x32xf32> to vector<1x16xf32>
    %429 = vector.extract_strided_slice %337 {offsets = [86, 0], sizes = [1, 16], strides = [1, 1]} : vector<128x32xf32> to vector<1x16xf32>
    %430 = vector.extract_strided_slice %337 {offsets = [87, 0], sizes = [1, 16], strides = [1, 1]} : vector<128x32xf32> to vector<1x16xf32>
    %431 = vector.extract_strided_slice %337 {offsets = [88, 0], sizes = [1, 16], strides = [1, 1]} : vector<128x32xf32> to vector<1x16xf32>
    %432 = vector.extract_strided_slice %337 {offsets = [89, 0], sizes = [1, 16], strides = [1, 1]} : vector<128x32xf32> to vector<1x16xf32>
    %433 = vector.extract_strided_slice %337 {offsets = [90, 0], sizes = [1, 16], strides = [1, 1]} : vector<128x32xf32> to vector<1x16xf32>
    %434 = vector.extract_strided_slice %337 {offsets = [91, 0], sizes = [1, 16], strides = [1, 1]} : vector<128x32xf32> to vector<1x16xf32>
    %435 = vector.extract_strided_slice %337 {offsets = [92, 0], sizes = [1, 16], strides = [1, 1]} : vector<128x32xf32> to vector<1x16xf32>
    %436 = vector.extract_strided_slice %337 {offsets = [93, 0], sizes = [1, 16], strides = [1, 1]} : vector<128x32xf32> to vector<1x16xf32>
    %437 = vector.extract_strided_slice %337 {offsets = [94, 0], sizes = [1, 16], strides = [1, 1]} : vector<128x32xf32> to vector<1x16xf32>
    %438 = vector.extract_strided_slice %337 {offsets = [95, 0], sizes = [1, 16], strides = [1, 1]} : vector<128x32xf32> to vector<1x16xf32>
    %439 = vector.extract_strided_slice %337 {offsets = [96, 0], sizes = [1, 16], strides = [1, 1]} : vector<128x32xf32> to vector<1x16xf32>
    %440 = vector.extract_strided_slice %337 {offsets = [97, 0], sizes = [1, 16], strides = [1, 1]} : vector<128x32xf32> to vector<1x16xf32>
    %441 = vector.extract_strided_slice %337 {offsets = [98, 0], sizes = [1, 16], strides = [1, 1]} : vector<128x32xf32> to vector<1x16xf32>
    %442 = vector.extract_strided_slice %337 {offsets = [99, 0], sizes = [1, 16], strides = [1, 1]} : vector<128x32xf32> to vector<1x16xf32>
    %443 = vector.extract_strided_slice %337 {offsets = [100, 0], sizes = [1, 16], strides = [1, 1]} : vector<128x32xf32> to vector<1x16xf32>
    %444 = vector.extract_strided_slice %337 {offsets = [101, 0], sizes = [1, 16], strides = [1, 1]} : vector<128x32xf32> to vector<1x16xf32>
    %445 = vector.extract_strided_slice %337 {offsets = [102, 0], sizes = [1, 16], strides = [1, 1]} : vector<128x32xf32> to vector<1x16xf32>
    %446 = vector.extract_strided_slice %337 {offsets = [103, 0], sizes = [1, 16], strides = [1, 1]} : vector<128x32xf32> to vector<1x16xf32>
    %447 = vector.extract_strided_slice %337 {offsets = [104, 0], sizes = [1, 16], strides = [1, 1]} : vector<128x32xf32> to vector<1x16xf32>
    %448 = vector.extract_strided_slice %337 {offsets = [105, 0], sizes = [1, 16], strides = [1, 1]} : vector<128x32xf32> to vector<1x16xf32>
    %449 = vector.extract_strided_slice %337 {offsets = [106, 0], sizes = [1, 16], strides = [1, 1]} : vector<128x32xf32> to vector<1x16xf32>
    %450 = vector.extract_strided_slice %337 {offsets = [107, 0], sizes = [1, 16], strides = [1, 1]} : vector<128x32xf32> to vector<1x16xf32>
    %451 = vector.extract_strided_slice %337 {offsets = [108, 0], sizes = [1, 16], strides = [1, 1]} : vector<128x32xf32> to vector<1x16xf32>
    %452 = vector.extract_strided_slice %337 {offsets = [109, 0], sizes = [1, 16], strides = [1, 1]} : vector<128x32xf32> to vector<1x16xf32>
    %453 = vector.extract_strided_slice %337 {offsets = [110, 0], sizes = [1, 16], strides = [1, 1]} : vector<128x32xf32> to vector<1x16xf32>
    %454 = vector.extract_strided_slice %337 {offsets = [111, 0], sizes = [1, 16], strides = [1, 1]} : vector<128x32xf32> to vector<1x16xf32>
    %455 = vector.extract_strided_slice %337 {offsets = [112, 0], sizes = [1, 16], strides = [1, 1]} : vector<128x32xf32> to vector<1x16xf32>
    %456 = vector.extract_strided_slice %337 {offsets = [113, 0], sizes = [1, 16], strides = [1, 1]} : vector<128x32xf32> to vector<1x16xf32>
    %457 = vector.extract_strided_slice %337 {offsets = [114, 0], sizes = [1, 16], strides = [1, 1]} : vector<128x32xf32> to vector<1x16xf32>
    %458 = vector.extract_strided_slice %337 {offsets = [115, 0], sizes = [1, 16], strides = [1, 1]} : vector<128x32xf32> to vector<1x16xf32>
    %459 = vector.extract_strided_slice %337 {offsets = [116, 0], sizes = [1, 16], strides = [1, 1]} : vector<128x32xf32> to vector<1x16xf32>
    %460 = vector.extract_strided_slice %337 {offsets = [117, 0], sizes = [1, 16], strides = [1, 1]} : vector<128x32xf32> to vector<1x16xf32>
    %461 = vector.extract_strided_slice %337 {offsets = [118, 0], sizes = [1, 16], strides = [1, 1]} : vector<128x32xf32> to vector<1x16xf32>
    %462 = vector.extract_strided_slice %337 {offsets = [119, 0], sizes = [1, 16], strides = [1, 1]} : vector<128x32xf32> to vector<1x16xf32>
    %463 = vector.extract_strided_slice %337 {offsets = [120, 0], sizes = [1, 16], strides = [1, 1]} : vector<128x32xf32> to vector<1x16xf32>
    %464 = vector.extract_strided_slice %337 {offsets = [121, 0], sizes = [1, 16], strides = [1, 1]} : vector<128x32xf32> to vector<1x16xf32>
    %465 = vector.extract_strided_slice %337 {offsets = [122, 0], sizes = [1, 16], strides = [1, 1]} : vector<128x32xf32> to vector<1x16xf32>
    %466 = vector.extract_strided_slice %337 {offsets = [123, 0], sizes = [1, 16], strides = [1, 1]} : vector<128x32xf32> to vector<1x16xf32>
    %467 = vector.extract_strided_slice %337 {offsets = [124, 0], sizes = [1, 16], strides = [1, 1]} : vector<128x32xf32> to vector<1x16xf32>
    %468 = vector.extract_strided_slice %337 {offsets = [125, 0], sizes = [1, 16], strides = [1, 1]} : vector<128x32xf32> to vector<1x16xf32>
    %469 = vector.extract_strided_slice %337 {offsets = [126, 0], sizes = [1, 16], strides = [1, 1]} : vector<128x32xf32> to vector<1x16xf32>
    %470 = vector.extract_strided_slice %337 {offsets = [127, 0], sizes = [1, 16], strides = [1, 1]} : vector<128x32xf32> to vector<1x16xf32>
    %471 = tpu.concatenate %407, %408, %409, %410, %411, %412, %413, %414, %415, %416, %417, %418, %419, %420, %421, %422 in 1 : vector<1x16xf32>, vector<1x16xf32>, vector<1x16xf32>, vector<1x16xf32>, vector<1x16xf32>, vector<1x16xf32>, vector<1x16xf32>, vector<1x16xf32>, vector<1x16xf32>, vector<1x16xf32>, vector<1x16xf32>, vector<1x16xf32>, vector<1x16xf32>, vector<1x16xf32>, vector<1x16xf32>, vector<1x16xf32> -> vector<1x256xf32>
    %472 = tpu.concatenate %423, %424, %425, %426, %427, %428, %429, %430, %431, %432, %433, %434, %435, %436, %437, %438 in 1 : vector<1x16xf32>, vector<1x16xf32>, vector<1x16xf32>, vector<1x16xf32>, vector<1x16xf32>, vector<1x16xf32>, vector<1x16xf32>, vector<1x16xf32>, vector<1x16xf32>, vector<1x16xf32>, vector<1x16xf32>, vector<1x16xf32>, vector<1x16xf32>, vector<1x16xf32>, vector<1x16xf32>, vector<1x16xf32> -> vector<1x256xf32>
    %473 = tpu.concatenate %439, %440, %441, %442, %443, %444, %445, %446, %447, %448, %449, %450, %451, %452, %453, %454 in 1 : vector<1x16xf32>, vector<1x16xf32>, vector<1x16xf32>, vector<1x16xf32>, vector<1x16xf32>, vector<1x16xf32>, vector<1x16xf32>, vector<1x16xf32>, vector<1x16xf32>, vector<1x16xf32>, vector<1x16xf32>, vector<1x16xf32>, vector<1x16xf32>, vector<1x16xf32>, vector<1x16xf32>, vector<1x16xf32> -> vector<1x256xf32>
    %474 = tpu.concatenate %455, %456, %457, %458, %459, %460, %461, %462, %463, %464, %465, %466, %467, %468, %469, %470 in 1 : vector<1x16xf32>, vector<1x16xf32>, vector<1x16xf32>, vector<1x16xf32>, vector<1x16xf32>, vector<1x16xf32>, vector<1x16xf32>, vector<1x16xf32>, vector<1x16xf32>, vector<1x16xf32>, vector<1x16xf32>, vector<1x16xf32>, vector<1x16xf32>, vector<1x16xf32>, vector<1x16xf32>, vector<1x16xf32> -> vector<1x256xf32>
    %475 = tpu.concatenate %471, %472, %473, %474 in 1 : vector<1x256xf32>, vector<1x256xf32>, vector<1x256xf32>, vector<1x256xf32> -> vector<1x1024xf32>
    %476 = tpu.concatenate %406, %475 in 0 : vector<1x1024xf32>, vector<1x1024xf32> -> vector<2x1024xf32>
    %477 = vector.extract_strided_slice %337 {offsets = [0, 16], sizes = [1, 16], strides = [1, 1]} : vector<128x32xf32> to vector<1x16xf32>
    %478 = vector.extract_strided_slice %337 {offsets = [1, 16], sizes = [1, 16], strides = [1, 1]} : vector<128x32xf32> to vector<1x16xf32>
    %479 = vector.extract_strided_slice %337 {offsets = [2, 16], sizes = [1, 16], strides = [1, 1]} : vector<128x32xf32> to vector<1x16xf32>
    %480 = vector.extract_strided_slice %337 {offsets = [3, 16], sizes = [1, 16], strides = [1, 1]} : vector<128x32xf32> to vector<1x16xf32>
    %481 = vector.extract_strided_slice %337 {offsets = [4, 16], sizes = [1, 16], strides = [1, 1]} : vector<128x32xf32> to vector<1x16xf32>
    %482 = vector.extract_strided_slice %337 {offsets = [5, 16], sizes = [1, 16], strides = [1, 1]} : vector<128x32xf32> to vector<1x16xf32>
    %483 = vector.extract_strided_slice %337 {offsets = [6, 16], sizes = [1, 16], strides = [1, 1]} : vector<128x32xf32> to vector<1x16xf32>
    %484 = vector.extract_strided_slice %337 {offsets = [7, 16], sizes = [1, 16], strides = [1, 1]} : vector<128x32xf32> to vector<1x16xf32>
    %485 = vector.extract_strided_slice %337 {offsets = [8, 16], sizes = [1, 16], strides = [1, 1]} : vector<128x32xf32> to vector<1x16xf32>
    %486 = vector.extract_strided_slice %337 {offsets = [9, 16], sizes = [1, 16], strides = [1, 1]} : vector<128x32xf32> to vector<1x16xf32>
    %487 = vector.extract_strided_slice %337 {offsets = [10, 16], sizes = [1, 16], strides = [1, 1]} : vector<128x32xf32> to vector<1x16xf32>
    %488 = vector.extract_strided_slice %337 {offsets = [11, 16], sizes = [1, 16], strides = [1, 1]} : vector<128x32xf32> to vector<1x16xf32>
    %489 = vector.extract_strided_slice %337 {offsets = [12, 16], sizes = [1, 16], strides = [1, 1]} : vector<128x32xf32> to vector<1x16xf32>
    %490 = vector.extract_strided_slice %337 {offsets = [13, 16], sizes = [1, 16], strides = [1, 1]} : vector<128x32xf32> to vector<1x16xf32>
    %491 = vector.extract_strided_slice %337 {offsets = [14, 16], sizes = [1, 16], strides = [1, 1]} : vector<128x32xf32> to vector<1x16xf32>
    %492 = vector.extract_strided_slice %337 {offsets = [15, 16], sizes = [1, 16], strides = [1, 1]} : vector<128x32xf32> to vector<1x16xf32>
    %493 = vector.extract_strided_slice %337 {offsets = [16, 16], sizes = [1, 16], strides = [1, 1]} : vector<128x32xf32> to vector<1x16xf32>
    %494 = vector.extract_strided_slice %337 {offsets = [17, 16], sizes = [1, 16], strides = [1, 1]} : vector<128x32xf32> to vector<1x16xf32>
    %495 = vector.extract_strided_slice %337 {offsets = [18, 16], sizes = [1, 16], strides = [1, 1]} : vector<128x32xf32> to vector<1x16xf32>
    %496 = vector.extract_strided_slice %337 {offsets = [19, 16], sizes = [1, 16], strides = [1, 1]} : vector<128x32xf32> to vector<1x16xf32>
    %497 = vector.extract_strided_slice %337 {offsets = [20, 16], sizes = [1, 16], strides = [1, 1]} : vector<128x32xf32> to vector<1x16xf32>
    %498 = vector.extract_strided_slice %337 {offsets = [21, 16], sizes = [1, 16], strides = [1, 1]} : vector<128x32xf32> to vector<1x16xf32>
    %499 = vector.extract_strided_slice %337 {offsets = [22, 16], sizes = [1, 16], strides = [1, 1]} : vector<128x32xf32> to vector<1x16xf32>
    %500 = vector.extract_strided_slice %337 {offsets = [23, 16], sizes = [1, 16], strides = [1, 1]} : vector<128x32xf32> to vector<1x16xf32>
    %501 = vector.extract_strided_slice %337 {offsets = [24, 16], sizes = [1, 16], strides = [1, 1]} : vector<128x32xf32> to vector<1x16xf32>
    %502 = vector.extract_strided_slice %337 {offsets = [25, 16], sizes = [1, 16], strides = [1, 1]} : vector<128x32xf32> to vector<1x16xf32>
    %503 = vector.extract_strided_slice %337 {offsets = [26, 16], sizes = [1, 16], strides = [1, 1]} : vector<128x32xf32> to vector<1x16xf32>
    %504 = vector.extract_strided_slice %337 {offsets = [27, 16], sizes = [1, 16], strides = [1, 1]} : vector<128x32xf32> to vector<1x16xf32>
    %505 = vector.extract_strided_slice %337 {offsets = [28, 16], sizes = [1, 16], strides = [1, 1]} : vector<128x32xf32> to vector<1x16xf32>
    %506 = vector.extract_strided_slice %337 {offsets = [29, 16], sizes = [1, 16], strides = [1, 1]} : vector<128x32xf32> to vector<1x16xf32>
    %507 = vector.extract_strided_slice %337 {offsets = [30, 16], sizes = [1, 16], strides = [1, 1]} : vector<128x32xf32> to vector<1x16xf32>
    %508 = vector.extract_strided_slice %337 {offsets = [31, 16], sizes = [1, 16], strides = [1, 1]} : vector<128x32xf32> to vector<1x16xf32>
    %509 = vector.extract_strided_slice %337 {offsets = [32, 16], sizes = [1, 16], strides = [1, 1]} : vector<128x32xf32> to vector<1x16xf32>
    %510 = vector.extract_strided_slice %337 {offsets = [33, 16], sizes = [1, 16], strides = [1, 1]} : vector<128x32xf32> to vector<1x16xf32>
    %511 = vector.extract_strided_slice %337 {offsets = [34, 16], sizes = [1, 16], strides = [1, 1]} : vector<128x32xf32> to vector<1x16xf32>
    %512 = vector.extract_strided_slice %337 {offsets = [35, 16], sizes = [1, 16], strides = [1, 1]} : vector<128x32xf32> to vector<1x16xf32>
    %513 = vector.extract_strided_slice %337 {offsets = [36, 16], sizes = [1, 16], strides = [1, 1]} : vector<128x32xf32> to vector<1x16xf32>
    %514 = vector.extract_strided_slice %337 {offsets = [37, 16], sizes = [1, 16], strides = [1, 1]} : vector<128x32xf32> to vector<1x16xf32>
    %515 = vector.extract_strided_slice %337 {offsets = [38, 16], sizes = [1, 16], strides = [1, 1]} : vector<128x32xf32> to vector<1x16xf32>
    %516 = vector.extract_strided_slice %337 {offsets = [39, 16], sizes = [1, 16], strides = [1, 1]} : vector<128x32xf32> to vector<1x16xf32>
    %517 = vector.extract_strided_slice %337 {offsets = [40, 16], sizes = [1, 16], strides = [1, 1]} : vector<128x32xf32> to vector<1x16xf32>
    %518 = vector.extract_strided_slice %337 {offsets = [41, 16], sizes = [1, 16], strides = [1, 1]} : vector<128x32xf32> to vector<1x16xf32>
    %519 = vector.extract_strided_slice %337 {offsets = [42, 16], sizes = [1, 16], strides = [1, 1]} : vector<128x32xf32> to vector<1x16xf32>
    %520 = vector.extract_strided_slice %337 {offsets = [43, 16], sizes = [1, 16], strides = [1, 1]} : vector<128x32xf32> to vector<1x16xf32>
    %521 = vector.extract_strided_slice %337 {offsets = [44, 16], sizes = [1, 16], strides = [1, 1]} : vector<128x32xf32> to vector<1x16xf32>
    %522 = vector.extract_strided_slice %337 {offsets = [45, 16], sizes = [1, 16], strides = [1, 1]} : vector<128x32xf32> to vector<1x16xf32>
    %523 = vector.extract_strided_slice %337 {offsets = [46, 16], sizes = [1, 16], strides = [1, 1]} : vector<128x32xf32> to vector<1x16xf32>
    %524 = vector.extract_strided_slice %337 {offsets = [47, 16], sizes = [1, 16], strides = [1, 1]} : vector<128x32xf32> to vector<1x16xf32>
    %525 = vector.extract_strided_slice %337 {offsets = [48, 16], sizes = [1, 16], strides = [1, 1]} : vector<128x32xf32> to vector<1x16xf32>
    %526 = vector.extract_strided_slice %337 {offsets = [49, 16], sizes = [1, 16], strides = [1, 1]} : vector<128x32xf32> to vector<1x16xf32>
    %527 = vector.extract_strided_slice %337 {offsets = [50, 16], sizes = [1, 16], strides = [1, 1]} : vector<128x32xf32> to vector<1x16xf32>
    %528 = vector.extract_strided_slice %337 {offsets = [51, 16], sizes = [1, 16], strides = [1, 1]} : vector<128x32xf32> to vector<1x16xf32>
    %529 = vector.extract_strided_slice %337 {offsets = [52, 16], sizes = [1, 16], strides = [1, 1]} : vector<128x32xf32> to vector<1x16xf32>
    %530 = vector.extract_strided_slice %337 {offsets = [53, 16], sizes = [1, 16], strides = [1, 1]} : vector<128x32xf32> to vector<1x16xf32>
    %531 = vector.extract_strided_slice %337 {offsets = [54, 16], sizes = [1, 16], strides = [1, 1]} : vector<128x32xf32> to vector<1x16xf32>
    %532 = vector.extract_strided_slice %337 {offsets = [55, 16], sizes = [1, 16], strides = [1, 1]} : vector<128x32xf32> to vector<1x16xf32>
    %533 = vector.extract_strided_slice %337 {offsets = [56, 16], sizes = [1, 16], strides = [1, 1]} : vector<128x32xf32> to vector<1x16xf32>
    %534 = vector.extract_strided_slice %337 {offsets = [57, 16], sizes = [1, 16], strides = [1, 1]} : vector<128x32xf32> to vector<1x16xf32>
    %535 = vector.extract_strided_slice %337 {offsets = [58, 16], sizes = [1, 16], strides = [1, 1]} : vector<128x32xf32> to vector<1x16xf32>
    %536 = vector.extract_strided_slice %337 {offsets = [59, 16], sizes = [1, 16], strides = [1, 1]} : vector<128x32xf32> to vector<1x16xf32>
    %537 = vector.extract_strided_slice %337 {offsets = [60, 16], sizes = [1, 16], strides = [1, 1]} : vector<128x32xf32> to vector<1x16xf32>
    %538 = vector.extract_strided_slice %337 {offsets = [61, 16], sizes = [1, 16], strides = [1, 1]} : vector<128x32xf32> to vector<1x16xf32>
    %539 = vector.extract_strided_slice %337 {offsets = [62, 16], sizes = [1, 16], strides = [1, 1]} : vector<128x32xf32> to vector<1x16xf32>
    %540 = vector.extract_strided_slice %337 {offsets = [63, 16], sizes = [1, 16], strides = [1, 1]} : vector<128x32xf32> to vector<1x16xf32>
    %541 = tpu.concatenate %477, %478, %479, %480, %481, %482, %483, %484, %485, %486, %487, %488, %489, %490, %491, %492 in 1 : vector<1x16xf32>, vector<1x16xf32>, vector<1x16xf32>, vector<1x16xf32>, vector<1x16xf32>, vector<1x16xf32>, vector<1x16xf32>, vector<1x16xf32>, vector<1x16xf32>, vector<1x16xf32>, vector<1x16xf32>, vector<1x16xf32>, vector<1x16xf32>, vector<1x16xf32>, vector<1x16xf32>, vector<1x16xf32> -> vector<1x256xf32>
    %542 = tpu.concatenate %493, %494, %495, %496, %497, %498, %499, %500, %501, %502, %503, %504, %505, %506, %507, %508 in 1 : vector<1x16xf32>, vector<1x16xf32>, vector<1x16xf32>, vector<1x16xf32>, vector<1x16xf32>, vector<1x16xf32>, vector<1x16xf32>, vector<1x16xf32>, vector<1x16xf32>, vector<1x16xf32>, vector<1x16xf32>, vector<1x16xf32>, vector<1x16xf32>, vector<1x16xf32>, vector<1x16xf32>, vector<1x16xf32> -> vector<1x256xf32>
    %543 = tpu.concatenate %509, %510, %511, %512, %513, %514, %515, %516, %517, %518, %519, %520, %521, %522, %523, %524 in 1 : vector<1x16xf32>, vector<1x16xf32>, vector<1x16xf32>, vector<1x16xf32>, vector<1x16xf32>, vector<1x16xf32>, vector<1x16xf32>, vector<1x16xf32>, vector<1x16xf32>, vector<1x16xf32>, vector<1x16xf32>, vector<1x16xf32>, vector<1x16xf32>, vector<1x16xf32>, vector<1x16xf32>, vector<1x16xf32> -> vector<1x256xf32>
    %544 = tpu.concatenate %525, %526, %527, %528, %529, %530, %531, %532, %533, %534, %535, %536, %537, %538, %539, %540 in 1 : vector<1x16xf32>, vector<1x16xf32>, vector<1x16xf32>, vector<1x16xf32>, vector<1x16xf32>, vector<1x16xf32>, vector<1x16xf32>, vector<1x16xf32>, vector<1x16xf32>, vector<1x16xf32>, vector<1x16xf32>, vector<1x16xf32>, vector<1x16xf32>, vector<1x16xf32>, vector<1x16xf32>, vector<1x16xf32> -> vector<1x256xf32>
    %545 = tpu.concatenate %541, %542, %543, %544 in 1 : vector<1x256xf32>, vector<1x256xf32>, vector<1x256xf32>, vector<1x256xf32> -> vector<1x1024xf32>
    %546 = vector.extract_strided_slice %337 {offsets = [64, 16], sizes = [1, 16], strides = [1, 1]} : vector<128x32xf32> to vector<1x16xf32>
    %547 = vector.extract_strided_slice %337 {offsets = [65, 16], sizes = [1, 16], strides = [1, 1]} : vector<128x32xf32> to vector<1x16xf32>
    %548 = vector.extract_strided_slice %337 {offsets = [66, 16], sizes = [1, 16], strides = [1, 1]} : vector<128x32xf32> to vector<1x16xf32>
    %549 = vector.extract_strided_slice %337 {offsets = [67, 16], sizes = [1, 16], strides = [1, 1]} : vector<128x32xf32> to vector<1x16xf32>
    %550 = vector.extract_strided_slice %337 {offsets = [68, 16], sizes = [1, 16], strides = [1, 1]} : vector<128x32xf32> to vector<1x16xf32>
    %551 = vector.extract_strided_slice %337 {offsets = [69, 16], sizes = [1, 16], strides = [1, 1]} : vector<128x32xf32> to vector<1x16xf32>
    %552 = vector.extract_strided_slice %337 {offsets = [70, 16], sizes = [1, 16], strides = [1, 1]} : vector<128x32xf32> to vector<1x16xf32>
    %553 = vector.extract_strided_slice %337 {offsets = [71, 16], sizes = [1, 16], strides = [1, 1]} : vector<128x32xf32> to vector<1x16xf32>
    %554 = vector.extract_strided_slice %337 {offsets = [72, 16], sizes = [1, 16], strides = [1, 1]} : vector<128x32xf32> to vector<1x16xf32>
    %555 = vector.extract_strided_slice %337 {offsets = [73, 16], sizes = [1, 16], strides = [1, 1]} : vector<128x32xf32> to vector<1x16xf32>
    %556 = vector.extract_strided_slice %337 {offsets = [74, 16], sizes = [1, 16], strides = [1, 1]} : vector<128x32xf32> to vector<1x16xf32>
    %557 = vector.extract_strided_slice %337 {offsets = [75, 16], sizes = [1, 16], strides = [1, 1]} : vector<128x32xf32> to vector<1x16xf32>
    %558 = vector.extract_strided_slice %337 {offsets = [76, 16], sizes = [1, 16], strides = [1, 1]} : vector<128x32xf32> to vector<1x16xf32>
    %559 = vector.extract_strided_slice %337 {offsets = [77, 16], sizes = [1, 16], strides = [1, 1]} : vector<128x32xf32> to vector<1x16xf32>
    %560 = vector.extract_strided_slice %337 {offsets = [78, 16], sizes = [1, 16], strides = [1, 1]} : vector<128x32xf32> to vector<1x16xf32>
    %561 = vector.extract_strided_slice %337 {offsets = [79, 16], sizes = [1, 16], strides = [1, 1]} : vector<128x32xf32> to vector<1x16xf32>
    %562 = vector.extract_strided_slice %337 {offsets = [80, 16], sizes = [1, 16], strides = [1, 1]} : vector<128x32xf32> to vector<1x16xf32>
    %563 = vector.extract_strided_slice %337 {offsets = [81, 16], sizes = [1, 16], strides = [1, 1]} : vector<128x32xf32> to vector<1x16xf32>
    %564 = vector.extract_strided_slice %337 {offsets = [82, 16], sizes = [1, 16], strides = [1, 1]} : vector<128x32xf32> to vector<1x16xf32>
    %565 = vector.extract_strided_slice %337 {offsets = [83, 16], sizes = [1, 16], strides = [1, 1]} : vector<128x32xf32> to vector<1x16xf32>
    %566 = vector.extract_strided_slice %337 {offsets = [84, 16], sizes = [1, 16], strides = [1, 1]} : vector<128x32xf32> to vector<1x16xf32>
    %567 = vector.extract_strided_slice %337 {offsets = [85, 16], sizes = [1, 16], strides = [1, 1]} : vector<128x32xf32> to vector<1x16xf32>
    %568 = vector.extract_strided_slice %337 {offsets = [86, 16], sizes = [1, 16], strides = [1, 1]} : vector<128x32xf32> to vector<1x16xf32>
    %569 = vector.extract_strided_slice %337 {offsets = [87, 16], sizes = [1, 16], strides = [1, 1]} : vector<128x32xf32> to vector<1x16xf32>
    %570 = vector.extract_strided_slice %337 {offsets = [88, 16], sizes = [1, 16], strides = [1, 1]} : vector<128x32xf32> to vector<1x16xf32>
    %571 = vector.extract_strided_slice %337 {offsets = [89, 16], sizes = [1, 16], strides = [1, 1]} : vector<128x32xf32> to vector<1x16xf32>
    %572 = vector.extract_strided_slice %337 {offsets = [90, 16], sizes = [1, 16], strides = [1, 1]} : vector<128x32xf32> to vector<1x16xf32>
    %573 = vector.extract_strided_slice %337 {offsets = [91, 16], sizes = [1, 16], strides = [1, 1]} : vector<128x32xf32> to vector<1x16xf32>
    %574 = vector.extract_strided_slice %337 {offsets = [92, 16], sizes = [1, 16], strides = [1, 1]} : vector<128x32xf32> to vector<1x16xf32>
    %575 = vector.extract_strided_slice %337 {offsets = [93, 16], sizes = [1, 16], strides = [1, 1]} : vector<128x32xf32> to vector<1x16xf32>
    %576 = vector.extract_strided_slice %337 {offsets = [94, 16], sizes = [1, 16], strides = [1, 1]} : vector<128x32xf32> to vector<1x16xf32>
    %577 = vector.extract_strided_slice %337 {offsets = [95, 16], sizes = [1, 16], strides = [1, 1]} : vector<128x32xf32> to vector<1x16xf32>
    %578 = vector.extract_strided_slice %337 {offsets = [96, 16], sizes = [1, 16], strides = [1, 1]} : vector<128x32xf32> to vector<1x16xf32>
    %579 = vector.extract_strided_slice %337 {offsets = [97, 16], sizes = [1, 16], strides = [1, 1]} : vector<128x32xf32> to vector<1x16xf32>
    %580 = vector.extract_strided_slice %337 {offsets = [98, 16], sizes = [1, 16], strides = [1, 1]} : vector<128x32xf32> to vector<1x16xf32>
    %581 = vector.extract_strided_slice %337 {offsets = [99, 16], sizes = [1, 16], strides = [1, 1]} : vector<128x32xf32> to vector<1x16xf32>
    %582 = vector.extract_strided_slice %337 {offsets = [100, 16], sizes = [1, 16], strides = [1, 1]} : vector<128x32xf32> to vector<1x16xf32>
    %583 = vector.extract_strided_slice %337 {offsets = [101, 16], sizes = [1, 16], strides = [1, 1]} : vector<128x32xf32> to vector<1x16xf32>
    %584 = vector.extract_strided_slice %337 {offsets = [102, 16], sizes = [1, 16], strides = [1, 1]} : vector<128x32xf32> to vector<1x16xf32>
    %585 = vector.extract_strided_slice %337 {offsets = [103, 16], sizes = [1, 16], strides = [1, 1]} : vector<128x32xf32> to vector<1x16xf32>
    %586 = vector.extract_strided_slice %337 {offsets = [104, 16], sizes = [1, 16], strides = [1, 1]} : vector<128x32xf32> to vector<1x16xf32>
    %587 = vector.extract_strided_slice %337 {offsets = [105, 16], sizes = [1, 16], strides = [1, 1]} : vector<128x32xf32> to vector<1x16xf32>
    %588 = vector.extract_strided_slice %337 {offsets = [106, 16], sizes = [1, 16], strides = [1, 1]} : vector<128x32xf32> to vector<1x16xf32>
    %589 = vector.extract_strided_slice %337 {offsets = [107, 16], sizes = [1, 16], strides = [1, 1]} : vector<128x32xf32> to vector<1x16xf32>
    %590 = vector.extract_strided_slice %337 {offsets = [108, 16], sizes = [1, 16], strides = [1, 1]} : vector<128x32xf32> to vector<1x16xf32>
    %591 = vector.extract_strided_slice %337 {offsets = [109, 16], sizes = [1, 16], strides = [1, 1]} : vector<128x32xf32> to vector<1x16xf32>
    %592 = vector.extract_strided_slice %337 {offsets = [110, 16], sizes = [1, 16], strides = [1, 1]} : vector<128x32xf32> to vector<1x16xf32>
    %593 = vector.extract_strided_slice %337 {offsets = [111, 16], sizes = [1, 16], strides = [1, 1]} : vector<128x32xf32> to vector<1x16xf32>
    %594 = vector.extract_strided_slice %337 {offsets = [112, 16], sizes = [1, 16], strides = [1, 1]} : vector<128x32xf32> to vector<1x16xf32>
    %595 = vector.extract_strided_slice %337 {offsets = [113, 16], sizes = [1, 16], strides = [1, 1]} : vector<128x32xf32> to vector<1x16xf32>
    %596 = vector.extract_strided_slice %337 {offsets = [114, 16], sizes = [1, 16], strides = [1, 1]} : vector<128x32xf32> to vector<1x16xf32>
    %597 = vector.extract_strided_slice %337 {offsets = [115, 16], sizes = [1, 16], strides = [1, 1]} : vector<128x32xf32> to vector<1x16xf32>
    %598 = vector.extract_strided_slice %337 {offsets = [116, 16], sizes = [1, 16], strides = [1, 1]} : vector<128x32xf32> to vector<1x16xf32>
    %599 = vector.extract_strided_slice %337 {offsets = [117, 16], sizes = [1, 16], strides = [1, 1]} : vector<128x32xf32> to vector<1x16xf32>
    %600 = vector.extract_strided_slice %337 {offsets = [118, 16], sizes = [1, 16], strides = [1, 1]} : vector<128x32xf32> to vector<1x16xf32>
    %601 = vector.extract_strided_slice %337 {offsets = [119, 16], sizes = [1, 16], strides = [1, 1]} : vector<128x32xf32> to vector<1x16xf32>
    %602 = vector.extract_strided_slice %337 {offsets = [120, 16], sizes = [1, 16], strides = [1, 1]} : vector<128x32xf32> to vector<1x16xf32>
    %603 = vector.extract_strided_slice %337 {offsets = [121, 16], sizes = [1, 16], strides = [1, 1]} : vector<128x32xf32> to vector<1x16xf32>
    %604 = vector.extract_strided_slice %337 {offsets = [122, 16], sizes = [1, 16], strides = [1, 1]} : vector<128x32xf32> to vector<1x16xf32>
    %605 = vector.extract_strided_slice %337 {offsets = [123, 16], sizes = [1, 16], strides = [1, 1]} : vector<128x32xf32> to vector<1x16xf32>
    %606 = vector.extract_strided_slice %337 {offsets = [124, 16], sizes = [1, 16], strides = [1, 1]} : vector<128x32xf32> to vector<1x16xf32>
    %607 = vector.extract_strided_slice %337 {offsets = [125, 16], sizes = [1, 16], strides = [1, 1]} : vector<128x32xf32> to vector<1x16xf32>
    %608 = vector.extract_strided_slice %337 {offsets = [126, 16], sizes = [1, 16], strides = [1, 1]} : vector<128x32xf32> to vector<1x16xf32>
    %609 = vector.extract_strided_slice %337 {offsets = [127, 16], sizes = [1, 16], strides = [1, 1]} : vector<128x32xf32> to vector<1x16xf32>
    %610 = tpu.concatenate %546, %547, %548, %549, %550, %551, %552, %553, %554, %555, %556, %557, %558, %559, %560, %561 in 1 : vector<1x16xf32>, vector<1x16xf32>, vector<1x16xf32>, vector<1x16xf32>, vector<1x16xf32>, vector<1x16xf32>, vector<1x16xf32>, vector<1x16xf32>, vector<1x16xf32>, vector<1x16xf32>, vector<1x16xf32>, vector<1x16xf32>, vector<1x16xf32>, vector<1x16xf32>, vector<1x16xf32>, vector<1x16xf32> -> vector<1x256xf32>
    %611 = tpu.concatenate %562, %563, %564, %565, %566, %567, %568, %569, %570, %571, %572, %573, %574, %575, %576, %577 in 1 : vector<1x16xf32>, vector<1x16xf32>, vector<1x16xf32>, vector<1x16xf32>, vector<1x16xf32>, vector<1x16xf32>, vector<1x16xf32>, vector<1x16xf32>, vector<1x16xf32>, vector<1x16xf32>, vector<1x16xf32>, vector<1x16xf32>, vector<1x16xf32>, vector<1x16xf32>, vector<1x16xf32>, vector<1x16xf32> -> vector<1x256xf32>
    %612 = tpu.concatenate %578, %579, %580, %581, %582, %583, %584, %585, %586, %587, %588, %589, %590, %591, %592, %593 in 1 : vector<1x16xf32>, vector<1x16xf32>, vector<1x16xf32>, vector<1x16xf32>, vector<1x16xf32>, vector<1x16xf32>, vector<1x16xf32>, vector<1x16xf32>, vector<1x16xf32>, vector<1x16xf32>, vector<1x16xf32>, vector<1x16xf32>, vector<1x16xf32>, vector<1x16xf32>, vector<1x16xf32>, vector<1x16xf32> -> vector<1x256xf32>
    %613 = tpu.concatenate %594, %595, %596, %597, %598, %599, %600, %601, %602, %603, %604, %605, %606, %607, %608, %609 in 1 : vector<1x16xf32>, vector<1x16xf32>, vector<1x16xf32>, vector<1x16xf32>, vector<1x16xf32>, vector<1x16xf32>, vector<1x16xf32>, vector<1x16xf32>, vector<1x16xf32>, vector<1x16xf32>, vector<1x16xf32>, vector<1x16xf32>, vector<1x16xf32>, vector<1x16xf32>, vector<1x16xf32>, vector<1x16xf32> -> vector<1x256xf32>
    %614 = tpu.concatenate %610, %611, %612, %613 in 1 : vector<1x256xf32>, vector<1x256xf32>, vector<1x256xf32>, vector<1x256xf32> -> vector<1x1024xf32>
    %615 = tpu.concatenate %545, %614 in 0 : vector<1x1024xf32>, vector<1x1024xf32> -> vector<2x1024xf32>
    %c0_168 = arith.constant 0 : index
    %c0_169 = arith.constant 0 : index
    %616 = vector.load %arg7[%c0_168, %c0_169] : memref<1024x128xf32, #tpu.memory_space<vmem>>, vector<1024x128xf32>
    %cst_170 = arith.constant dense<0.000000e+00> : vector<2x128xf32>
    %617 = tpu.matmul %476, %616, %cst_170 {dimension_numbers = #tpu.dot_dimension_numbers<[1], [0], [0], [1], [0, 0, 1, 1], [], []>} : vector<2x1024xf32>, vector<1024x128xf32>, vector<2x128xf32> -> vector<2x128xf32>
    %c0_171 = arith.constant 0 : index
    %c0_172 = arith.constant 0 : index
    %618 = vector.load %arg8[%c0_171, %c0_172] : memref<1024x128xf32, #tpu.memory_space<vmem>>, vector<1024x128xf32>
    %cst_173 = arith.constant dense<0.000000e+00> : vector<2x128xf32>
    %619 = tpu.matmul %615, %618, %cst_173 {dimension_numbers = #tpu.dot_dimension_numbers<[1], [0], [0], [1], [0, 0, 1, 1], [], []>} : vector<2x1024xf32>, vector<1024x128xf32>, vector<2x128xf32> -> vector<2x128xf32>
    %620 = tpu.concatenate %617, %619 in 1 : vector<2x128xf32>, vector<2x128xf32> -> vector<2x256xf32>
    %c0_174 = arith.constant 0 : index
    %c0_175 = arith.constant 0 : index
    %621 = vector.load %arg2[%c0_174, %c0_175] : memref<2x4xf32, #tpu.memory_space<vmem>>, vector<2x4xf32>
    %c0_176 = arith.constant 0 : index
    %c0_177 = arith.constant 0 : index
    %622 = vector.load %arg9[%c0_176, %c0_177] : memref<4x256xf32, #tpu.memory_space<vmem>>, vector<4x256xf32>
    %cst_178 = arith.constant dense<0.000000e+00> : vector<2x256xf32>
    %623 = tpu.matmul %621, %622, %cst_178 {dimension_numbers = #tpu.dot_dimension_numbers<[1], [0], [0], [1], [0, 0, 1, 1], [], []>} : vector<2x4xf32>, vector<4x256xf32>, vector<2x256xf32> -> vector<2x256xf32>
    %624 = arith.addf %620, %623 : vector<2x256xf32>
    %c0_179 = arith.constant 0 : index
    %c0_180 = arith.constant 0 : index
    %625 = vector.load %arg10[%c0_179, %c0_180] : memref<1x256xf32, #tpu.memory_space<vmem>>, vector<1x256xf32>
    %626 = vector.broadcast %625 : vector<1x256xf32> to vector<2x256xf32>
    %627 = arith.addf %624, %626 : vector<2x256xf32>
    %cst_181 = arith.constant 0.000000e+00 : f32
    %628 = vector.broadcast %cst_181 : f32 to vector<2x256xf32>
    %629 = arith.maximumf %627, %628 : vector<2x256xf32>
    %c0_182 = arith.constant 0 : index
    %c0_183 = arith.constant 0 : index
    %630 = vector.load %arg11[%c0_182, %c0_183] : memref<256x2xf32, #tpu.memory_space<vmem>>, vector<256x2xf32>
    %cst_184 = arith.constant dense<0.000000e+00> : vector<2x2xf32>
    %631 = tpu.matmul %629, %630, %cst_184 {dimension_numbers = #tpu.dot_dimension_numbers<[1], [0], [0], [1], [0, 0, 1, 1], [], []>} : vector<2x256xf32>, vector<256x2xf32>, vector<2x2xf32> -> vector<2x2xf32>
    %c0_185 = arith.constant 0 : index
    %c0_186 = arith.constant 0 : index
    %632 = vector.load %arg12[%c0_185, %c0_186] : memref<1x2xf32, #tpu.memory_space<vmem>>, vector<1x2xf32>
    %633 = vector.broadcast %632 : vector<1x2xf32> to vector<2x2xf32>
    %634 = arith.addf %631, %633 : vector<2x2xf32>
    %c0_187 = arith.constant 0 : index
    %c0_188 = arith.constant 0 : index
    %635 = vector.load %arg13[%c0_187, %c0_188] : memref<2x2xf32, #tpu.memory_space<vmem>>, vector<2x2xf32>
    tpu.vector_store %arg13[%c0_187, %c0_188], %634 {strides = array<i32>} : memref<2x2xf32, #tpu.memory_space<vmem>>, vector<2x2xf32>,
    return
  }
  func.func @transform_0(%arg0: i32) -> (i32, i32, i32, i32) {
    %c0_i32 = arith.constant 0 : i32
    %c0_i32_0 = arith.constant 0 : i32
    %c0_i32_1 = arith.constant 0 : i32
    %c0_i32_2 = arith.constant 0 : i32
    return %arg0, %c0_i32, %c0_i32_0, %c0_i32_1 : i32, i32, i32, i32
  }
  func.func @transform_1(%arg0: i32) -> (i32, i32) {
    %c0_i32 = arith.constant 0 : i32
    %c0_i32_0 = arith.constant 0 : i32
    return %arg0, %c0_i32 : i32, i32
  }
  func.func @transform_2(%arg0: i32) -> (i32, i32) {
    %c0_i32 = arith.constant 0 : i32
    %c0_i32_0 = arith.constant 0 : i32
    %c0_i32_1 = arith.constant 0 : i32
    return %c0_i32, %c0_i32_0 : i32, i32
  }
  func.func @transform_3(%arg0: i32) -> (i32, i32) {
    %c0_i32 = arith.constant 0 : i32
    %c0_i32_0 = arith.constant 0 : i32
    %c0_i32_1 = arith.constant 0 : i32
    return %c0_i32, %c0_i32_0 : i32, i32
  }
  func.func @transform_4(%arg0: i32) -> (i32, i32) {
    %c0_i32 = arith.constant 0 : i32
    %c0_i32_0 = arith.constant 0 : i32
    %c0_i32_1 = arith.constant 0 : i32
    return %c0_i32, %c0_i32_0 : i32, i32
  }
  func.func @transform_5(%arg0: i32) -> (i32, i32) {
    %c0_i32 = arith.constant 0 : i32
    %c0_i32_0 = arith.constant 0 : i32
    %c0_i32_1 = arith.constant 0 : i32
    return %c0_i32, %c0_i32_0 : i32, i32
  }
  func.func @transform_6(%arg0: i32) -> (i32, i32) {
    %c0_i32 = arith.constant 0 : i32
    %c0_i32_0 = arith.constant 0 : i32
    %c0_i32_1 = arith.constant 0 : i32
    return %c0_i32, %c0_i32_0 : i32, i32
  }
  func.func @transform_7(%arg0: i32) -> (i32, i32) {
    %c0_i32 = arith.constant 0 : i32
    %c0_i32_0 = arith.constant 0 : i32
    %c0_i32_1 = arith.constant 0 : i32
    return %c0_i32, %c0_i32_0 : i32, i32
  }
  func.func @transform_8(%arg0: i32) -> (i32, i32) {
    %c0_i32 = arith.constant 0 : i32
    %c0_i32_0 = arith.constant 0 : i32
    %c0_i32_1 = arith.constant 0 : i32
    return %c0_i32, %c0_i32_0 : i32, i32
  }
  func.func @transform_9(%arg0: i32) -> (i32, i32) {
    %c0_i32 = arith.constant 0 : i32
    %c0_i32_0 = arith.constant 0 : i32
    %c0_i32_1 = arith.constant 0 : i32
    return %c0_i32, %c0_i32_0 : i32, i32
  }
  func.func @transform_10(%arg0: i32) -> (i32, i32) {
    %c0_i32 = arith.constant 0 : i32
    %c0_i32_0 = arith.constant 0 : i32
    %c0_i32_1 = arith.constant 0 : i32
    return %c0_i32, %c0_i32_0 : i32, i32
  }
  func.func @transform_11(%arg0: i32) -> (i32, i32) {
    %c0_i32 = arith.constant 0 : i32
    %c0_i32_0 = arith.constant 0 : i32
    %c0_i32_1 = arith.constant 0 : i32
    return %c0_i32, %c0_i32_0 : i32, i32
  }
  func.func @transform_12(%arg0: i32) -> (i32, i32) {
    %c0_i32 = arith.constant 0 : i32
    %c0_i32_0 = arith.constant 0 : i32
    return %arg0, %c0_i32 : i32, i32
  }
}

</mosaic_0001>

<llo_original>
// kernel: critic_forward.1
$region0: #{critic_forward.1}
  #allocation0 [shape = 'u32[]', space=smem, size = 0x4, offset = 0x4, fixed_abs, tag = 'smem constant byte address 0x4 - core index']
  #allocation1 [shape = 'u32[144,128]{1,0:T(1,128)}', space=vmem, size = 0x12000, scoped, tag = 'internal scratch']
  #allocation2 [shape = 'f32[4,2,10,10,32]{4,3,2,1,0:T(8,128)}', space=vmem, size = 0xa0000, scoped, tag = 'scratch operand']
  %s0 = inlined_call_operand.vmem [shape: f32[2,9,9,96], index: 0, kind: input, shape index: {}]
  %s1 = inlined_call_operand.vmem [shape: f32[2,4], index: 1, kind: input, shape index: {}]
  %s2 = inlined_call_operand.vmem [shape: f32[150,32], index: 2, kind: input, shape index: {}]
  %s3 = inlined_call_operand.vmem [shape: f32[1,32], index: 3, kind: input, shape index: {}]
  %s4 = inlined_call_operand.vmem [shape: f32[800,32], index: 4, kind: input, shape index: {}]
  %s5 = inlined_call_operand.vmem [shape: f32[1,32], index: 5, kind: input, shape index: {}]
  %s6 = inlined_call_operand.vmem [shape: f32[1024,128], index: 6, kind: input, shape index: {}]
  %s7 = inlined_call_operand.vmem [shape: f32[1024,128], index: 7, kind: input, shape index: {}]
  %s8 = inlined_call_operand.vmem [shape: f32[4,256], index: 8, kind: input, shape index: {}]
  %s9 = inlined_call_operand.vmem [shape: f32[1,256], index: 9, kind: input, shape index: {}]
  %s10 = inlined_call_operand.vmem [shape: f32[256,2], index: 10, kind: input, shape index: {}]
  %s11 = inlined_call_operand.vmem [shape: f32[1,2], index: 11, kind: input, shape index: {}]
  %s12 = inlined_call_operand.vmem [shape: f32[2,2], index: 12, kind: output, shape index: {}]
  %s13 = sld [smem:[#allocation0]]
  $region58: #{critic_forward.1} parent=0
    _
  %s15 = ssub.s32 1, %s13
  %s16 = scalar_select 0, %s15, %s13
  // Predicated region
  $region2: #{critic_forward.1} parent=0 // pred_check
    _
  $region3: #{critic_forward.1} parent=0 // pred_check_branch
    %18 = sbr.rel (0) target = $region5
  $region4: #{critic_forward.1} parent=0 // pred_region
    _
  $region5: #{critic_forward.1} parent=0 // pred_fallthru
    _
  // Predicated region
  $region6: #{critic_forward.1} parent=0 // pred_check
    _
  $region7: #{critic_forward.1} parent=0 // pred_check_branch
    %20 = sbr.rel (0) target = $region9
  $region8: #{critic_forward.1} parent=0 // pred_region
    _
  $region9: #{critic_forward.1} parent=0 // pred_fallthru
    _
  // Predicated region
  $region10: #{critic_forward.1} parent=0 // pred_check
    _
  $region11: #{critic_forward.1} parent=0 // pred_check_branch
    %22 = sbr.rel (0) target = $region13
  $region12: #{critic_forward.1} parent=0 // pred_region
    _
  $region13: #{critic_forward.1} parent=0 // pred_fallthru
    _
  // Predicated region
  $region14: #{critic_forward.1} parent=0 // pred_check
    _
  $region15: #{critic_forward.1} parent=0 // pred_check_branch
    %24 = sbr.rel (0) target = $region17
  $region16: #{critic_forward.1} parent=0 // pred_region
    _
  $region17: #{critic_forward.1} parent=0 // pred_fallthru
    _
  // Predicated region
  $region18: #{critic_forward.1} parent=0 // pred_check
    _
  $region19: #{critic_forward.1} parent=0 // pred_check_branch
    %26 = sbr.rel (0) target = $region21
  $region20: #{critic_forward.1} parent=0 // pred_region
    _
  $region21: #{critic_forward.1} parent=0 // pred_fallthru
    _
  // Predicated region
  $region22: #{critic_forward.1} parent=0 // pred_check
    _
  $region23: #{critic_forward.1} parent=0 // pred_check_branch
    %28 = sbr.rel (0) target = $region25
  $region24: #{critic_forward.1} parent=0 // pred_region
    _
  $region25: #{critic_forward.1} parent=0 // pred_fallthru
    _
  // Predicated region
  $region26: #{critic_forward.1} parent=0 // pred_check
    _
  $region27: #{critic_forward.1} parent=0 // pred_check_branch
    %30 = sbr.rel (0) target = $region29
  $region28: #{critic_forward.1} parent=0 // pred_region
    _
  $region29: #{critic_forward.1} parent=0 // pred_fallthru
    _
  // Predicated region
  $region30: #{critic_forward.1} parent=0 // pred_check
    _
  $region31: #{critic_forward.1} parent=0 // pred_check_branch
    %32 = sbr.rel (0) target = $region33
  $region32: #{critic_forward.1} parent=0 // pred_region
    _
  $region33: #{critic_forward.1} parent=0 // pred_fallthru
    _
  // Predicated region
  $region34: #{critic_forward.1} parent=0 // pred_check
    _
  $region35: #{critic_forward.1} parent=0 // pred_check_branch
    %34 = sbr.rel (0) target = $region37
  $region36: #{critic_forward.1} parent=0 // pred_region
    _
  $region37: #{critic_forward.1} parent=0 // pred_fallthru
    _
  // Predicated region
  $region38: #{critic_forward.1} parent=0 // pred_check
    _
  $region39: #{critic_forward.1} parent=0 // pred_check_branch
    %36 = sbr.rel (0) target = $region41
  $region40: #{critic_forward.1} parent=0 // pred_region
    _
  $region41: #{critic_forward.1} parent=0 // pred_fallthru
    _
  // Predicated region
  $region42: #{critic_forward.1} parent=0 // pred_check
    _
  $region43: #{critic_forward.1} parent=0 // pred_check_branch
    %38 = sbr.rel (0) target = $region45
  $region44: #{critic_forward.1} parent=0 // pred_region
    _
  $region45: #{critic_forward.1} parent=0 // pred_fallthru
    _
  // Predicated region
  $region46: #{critic_forward.1} parent=0 // pred_check
    _
  $region47: #{critic_forward.1} parent=0 // pred_check_branch
    %40 = sbr.rel (0) target = $region49
  $region48: #{critic_forward.1} parent=0 // pred_region
    _
  $region49: #{critic_forward.1} parent=0 // pred_fallthru
    _
  %vm41 = vcmask 261120
  %42 = vst.msk [vmem:[#allocation2] sm:$0xff] %vm41, 0.0
  %vm43 = vcmask 254976
  %44 = vst.msk [vmem:[#allocation2 + $0x8] sm:$0x3] %vm43, 0.0
  %45 = vst.msk [vmem:[#allocation2 + $0x10] sm:$0xff] %vm41, 0.0
  %46 = vst.msk [vmem:[#allocation2 + $0x18] sm:$0x3] %vm43, 0.0
  %47 = vst.msk [vmem:[#allocation2 + $0x20] sm:$0xff] %vm41, 0.0
  %48 = vst.msk [vmem:[#allocation2 + $0x28] sm:$0x3] %vm43, 0.0
  %49 = vst.msk [vmem:[#allocation2 + $0x30] sm:$0xff] %vm41, 0.0
  %50 = vst.msk [vmem:[#allocation2 + $0x38] sm:$0x3] %vm43, 0.0
  %51 = vst.msk [vmem:[#allocation2 + $0x40] sm:$0xff] %vm41, 0.0
  %52 = vst.msk [vmem:[#allocation2 + $0x48] sm:$0x3] %vm43, 0.0
  %53 = vst.msk [vmem:[#allocation2 + $0x50] sm:$0xff] %vm41, 0.0
  %54 = vst.msk [vmem:[#allocation2 + $0x58] sm:$0x3] %vm43, 0.0
  %55 = vst.msk [vmem:[#allocation2 + $0x60] sm:$0xff] %vm41, 0.0
  %56 = vst.msk [vmem:[#allocation2 + $0x68] sm:$0x3] %vm43, 0.0
  %57 = vst.msk [vmem:[#allocation2 + $0x70] sm:$0xff] %vm41, 0.0
  %58 = vst.msk [vmem:[#allocation2 + $0x78] sm:$0x3] %vm43, 0.0
  %59 = vst.msk [vmem:[#allocation2 + $0x80] sm:$0xff] %vm41, 0.0
  %60 = vst.msk [vmem:[#allocation2 + $0x88] sm:$0x3] %vm43, 0.0
  %61 = vst.msk [vmem:[#allocation2 + $0x90] sm:$0xff] %vm41, 0.0
  %62 = vst.msk [vmem:[#allocation2 + $0x98] sm:$0x3] %vm43, 0.0
  %63 = vst.msk [vmem:[#allocation2 + $0xa0] sm:$0xff] %vm41, 0.0
  %64 = vst.msk [vmem:[#allocation2 + $0xa8] sm:$0x3] %vm43, 0.0
  %65 = vst.msk [vmem:[#allocation2 + $0xb0] sm:$0xff] %vm41, 0.0
  %66 = vst.msk [vmem:[#allocation2 + $0xb8] sm:$0x3] %vm43, 0.0
  %67 = vst.msk [vmem:[#allocation2 + $0xc0] sm:$0xff] %vm41, 0.0
  %68 = vst.msk [vmem:[#allocation2 + $0xc8] sm:$0x3] %vm43, 0.0
  %69 = vst.msk [vmem:[#allocation2 + $0xd0] sm:$0xff] %vm41, 0.0
  %70 = vst.msk [vmem:[#allocation2 + $0xd8] sm:$0x3] %vm43, 0.0
  %71 = vst.msk [vmem:[#allocation2 + $0xe0] sm:$0xff] %vm41, 0.0
  %72 = vst.msk [vmem:[#allocation2 + $0xe8] sm:$0x3] %vm43, 0.0
  %73 = vst.msk [vmem:[#allocation2 + $0xf0] sm:$0xff] %vm41, 0.0
  %74 = vst.msk [vmem:[#allocation2 + $0xf8] sm:$0x3] %vm43, 0.0
  %75 = vst.msk [vmem:[#allocation2 + $0x100] sm:$0xff] %vm41, 0.0
  %76 = vst.msk [vmem:[#allocation2 + $0x108] sm:$0x3] %vm43, 0.0
  %77 = vst.msk [vmem:[#allocation2 + $0x110] sm:$0xff] %vm41, 0.0
  %78 = vst.msk [vmem:[#allocation2 + $0x118] sm:$0x3] %vm43, 0.0
  %79 = vst.msk [vmem:[#allocation2 + $0x120] sm:$0xff] %vm41, 0.0
  %80 = vst.msk [vmem:[#allocation2 + $0x128] sm:$0x3] %vm43, 0.0
  %81 = vst.msk [vmem:[#allocation2 + $0x130] sm:$0xff] %vm41, 0.0
  %82 = vst.msk [vmem:[#allocation2 + $0x138] sm:$0x3] %vm43, 0.0
  %83 = vst.msk [vmem:[#allocation2 + $0x140] sm:$0xff] %vm41, 0.0
  %84 = vst.msk [vmem:[#allocation2 + $0x148] sm:$0x3] %vm43, 0.0
  %85 = vst.msk [vmem:[#allocation2 + $0x150] sm:$0xff] %vm41, 0.0
  %86 = vst.msk [vmem:[#allocation2 + $0x158] sm:$0x3] %vm43, 0.0
  %87 = vst.msk [vmem:[#allocation2 + $0x160] sm:$0xff] %vm41, 0.0
  %88 = vst.msk [vmem:[#allocation2 + $0x168] sm:$0x3] %vm43, 0.0
  %89 = vst.msk [vmem:[#allocation2 + $0x170] sm:$0xff] %vm41, 0.0
  %90 = vst.msk [vmem:[#allocation2 + $0x178] sm:$0x3] %vm43, 0.0
  %91 = vst.msk [vmem:[#allocation2 + $0x180] sm:$0xff] %vm41, 0.0
  %92 = vst.msk [vmem:[#allocation2 + $0x188] sm:$0x3] %vm43, 0.0
  %93 = vst.msk [vmem:[#allocation2 + $0x190] sm:$0xff] %vm41, 0.0
  %94 = vst.msk [vmem:[#allocation2 + $0x198] sm:$0x3] %vm43, 0.0
  %95 = vst.msk [vmem:[#allocation2 + $0x1a0] sm:$0xff] %vm41, 0.0
  %96 = vst.msk [vmem:[#allocation2 + $0x1a8] sm:$0x3] %vm43, 0.0
  %97 = vst.msk [vmem:[#allocation2 + $0x1b0] sm:$0xff] %vm41, 0.0
  %98 = vst.msk [vmem:[#allocation2 + $0x1b8] sm:$0x3] %vm43, 0.0
  %99 = vst.msk [vmem:[#allocation2 + $0x1c0] sm:$0xff] %vm41, 0.0
  %100 = vst.msk [vmem:[#allocation2 + $0x1c8] sm:$0x3] %vm43, 0.0
  %101 = vst.msk [vmem:[#allocation2 + $0x1d0] sm:$0xff] %vm41, 0.0
  %102 = vst.msk [vmem:[#allocation2 + $0x1d8] sm:$0x3] %vm43, 0.0
  %103 = vst.msk [vmem:[#allocation2 + $0x1e0] sm:$0xff] %vm41, 0.0
  %104 = vst.msk [vmem:[#allocation2 + $0x1e8] sm:$0x3] %vm43, 0.0
  %105 = vst.msk [vmem:[#allocation2 + $0x1f0] sm:$0xff] %vm41, 0.0
  %106 = vst.msk [vmem:[#allocation2 + $0x1f8] sm:$0x3] %vm43, 0.0
  %107 = vst.msk [vmem:[#allocation2 + $0x200] sm:$0xff] %vm41, 0.0
  %108 = vst.msk [vmem:[#allocation2 + $0x208] sm:$0x3] %vm43, 0.0
  %109 = vst.msk [vmem:[#allocation2 + $0x210] sm:$0xff] %vm41, 0.0
  %110 = vst.msk [vmem:[#allocation2 + $0x218] sm:$0x3] %vm43, 0.0
  %111 = vst.msk [vmem:[#allocation2 + $0x220] sm:$0xff] %vm41, 0.0
  %112 = vst.msk [vmem:[#allocation2 + $0x228] sm:$0x3] %vm43, 0.0
  %113 = vst.msk [vmem:[#allocation2 + $0x230] sm:$0xff] %vm41, 0.0
  %114 = vst.msk [vmem:[#allocation2 + $0x238] sm:$0x3] %vm43, 0.0
  %115 = vst.msk [vmem:[#allocation2 + $0x240] sm:$0xff] %vm41, 0.0
  %116 = vst.msk [vmem:[#allocation2 + $0x248] sm:$0x3] %vm43, 0.0
  %117 = vst.msk [vmem:[#allocation2 + $0x250] sm:$0xff] %vm41, 0.0
  %118 = vst.msk [vmem:[#allocation2 + $0x258] sm:$0x3] %vm43, 0.0
  %119 = vst.msk [vmem:[#allocation2 + $0x260] sm:$0xff] %vm41, 0.0
  %120 = vst.msk [vmem:[#allocation2 + $0x268] sm:$0x3] %vm43, 0.0
  %121 = vst.msk [vmem:[#allocation2 + $0x270] sm:$0xff] %vm41, 0.0
  %122 = vst.msk [vmem:[#allocation2 + $0x278] sm:$0x3] %vm43, 0.0
  %123 = vst.msk [vmem:[#allocation2 + $0x280] sm:$0xff] %vm41, 0.0
  %124 = vst.msk [vmem:[#allocation2 + $0x288] sm:$0x3] %vm43, 0.0
  %125 = vst.msk [vmem:[#allocation2 + $0x290] sm:$0xff] %vm41, 0.0
  %126 = vst.msk [vmem:[#allocation2 + $0x298] sm:$0x3] %vm43, 0.0
  %127 = vst.msk [vmem:[#allocation2 + $0x2a0] sm:$0xff] %vm41, 0.0
  %128 = vst.msk [vmem:[#allocation2 + $0x2a8] sm:$0x3] %vm43, 0.0
  %129 = vst.msk [vmem:[#allocation2 + $0x2b0] sm:$0xff] %vm41, 0.0
  %130 = vst.msk [vmem:[#allocation2 + $0x2b8] sm:$0x3] %vm43, 0.0
  %131 = vst.msk [vmem:[#allocation2 + $0x2c0] sm:$0xff] %vm41, 0.0
  %132 = vst.msk [vmem:[#allocation2 + $0x2c8] sm:$0x3] %vm43, 0.0
  %133 = vst.msk [vmem:[#allocation2 + $0x2d0] sm:$0xff] %vm41, 0.0
  %134 = vst.msk [vmem:[#allocation2 + $0x2d8] sm:$0x3] %vm43, 0.0
  %135 = vst.msk [vmem:[#allocation2 + $0x2e0] sm:$0xff] %vm41, 0.0
  %136 = vst.msk [vmem:[#allocation2 + $0x2e8] sm:$0x3] %vm43, 0.0
  %137 = vst.msk [vmem:[#allocation2 + $0x2f0] sm:$0xff] %vm41, 0.0
  %138 = vst.msk [vmem:[#allocation2 + $0x2f8] sm:$0x3] %vm43, 0.0
  %139 = vst.msk [vmem:[#allocation2 + $0x300] sm:$0xff] %vm41, 0.0
  %140 = vst.msk [vmem:[#allocation2 + $0x308] sm:$0x3] %vm43, 0.0
  %141 = vst.msk [vmem:[#allocation2 + $0x310] sm:$0xff] %vm41, 0.0
  %142 = vst.msk [vmem:[#allocation2 + $0x318] sm:$0x3] %vm43, 0.0
  %143 = vst.msk [vmem:[#allocation2 + $0x320] sm:$0xff] %vm41, 0.0
  %144 = vst.msk [vmem:[#allocation2 + $0x328] sm:$0x3] %vm43, 0.0
  %145 = vst.msk [vmem:[#allocation2 + $0x330] sm:$0xff] %vm41, 0.0
  %146 = vst.msk [vmem:[#allocation2 + $0x338] sm:$0x3] %vm43, 0.0
  %147 = vst.msk [vmem:[#allocation2 + $0x340] sm:$0xff] %vm41, 0.0
  %148 = vst.msk [vmem:[#allocation2 + $0x348] sm:$0x3] %vm43, 0.0
  %149 = vst.msk [vmem:[#allocation2 + $0x350] sm:$0xff] %vm41, 0.0
  %150 = vst.msk [vmem:[#allocation2 + $0x358] sm:$0x3] %vm43, 0.0
  %151 = vst.msk [vmem:[#allocation2 + $0x360] sm:$0xff] %vm41, 0.0
  %152 = vst.msk [vmem:[#allocation2 + $0x368] sm:$0x3] %vm43, 0.0
  %153 = vst.msk [vmem:[#allocation2 + $0x370] sm:$0xff] %vm41, 0.0
  %154 = vst.msk [vmem:[#allocation2 + $0x378] sm:$0x3] %vm43, 0.0
  %155 = vst.msk [vmem:[#allocation2 + $0x380] sm:$0xff] %vm41, 0.0
  %156 = vst.msk [vmem:[#allocation2 + $0x388] sm:$0x3] %vm43, 0.0
  %157 = vst.msk [vmem:[#allocation2 + $0x390] sm:$0xff] %vm41, 0.0
  %158 = vst.msk [vmem:[#allocation2 + $0x398] sm:$0x3] %vm43, 0.0
  %159 = vst.msk [vmem:[#allocation2 + $0x3a0] sm:$0xff] %vm41, 0.0
  %160 = vst.msk [vmem:[#allocation2 + $0x3a8] sm:$0x3] %vm43, 0.0
  %161 = vst.msk [vmem:[#allocation2 + $0x3b0] sm:$0xff] %vm41, 0.0
  %162 = vst.msk [vmem:[#allocation2 + $0x3b8] sm:$0x3] %vm43, 0.0
  %163 = vst.msk [vmem:[#allocation2 + $0x3c0] sm:$0xff] %vm41, 0.0
  %164 = vst.msk [vmem:[#allocation2 + $0x3c8] sm:$0x3] %vm43, 0.0
  %165 = vst.msk [vmem:[#allocation2 + $0x3d0] sm:$0xff] %vm41, 0.0
  %166 = vst.msk [vmem:[#allocation2 + $0x3d8] sm:$0x3] %vm43, 0.0
  %167 = vst.msk [vmem:[#allocation2 + $0x3e0] sm:$0xff] %vm41, 0.0
  %168 = vst.msk [vmem:[#allocation2 + $0x3e8] sm:$0x3] %vm43, 0.0
  %169 = vst.msk [vmem:[#allocation2 + $0x3f0] sm:$0xff] %vm41, 0.0
  %170 = vst.msk [vmem:[#allocation2 + $0x3f8] sm:$0x3] %vm43, 0.0
  %171 = vst.msk [vmem:[#allocation2 + $0x400] sm:$0xff] %vm41, 0.0
  %172 = vst.msk [vmem:[#allocation2 + $0x408] sm:$0x3] %vm43, 0.0
  %173 = vst.msk [vmem:[#allocation2 + $0x410] sm:$0xff] %vm41, 0.0
  %174 = vst.msk [vmem:[#allocation2 + $0x418] sm:$0x3] %vm43, 0.0
  %175 = vst.msk [vmem:[#allocation2 + $0x420] sm:$0xff] %vm41, 0.0
  %176 = vst.msk [vmem:[#allocation2 + $0x428] sm:$0x3] %vm43, 0.0
  %177 = vst.msk [vmem:[#allocation2 + $0x430] sm:$0xff] %vm41, 0.0
  %178 = vst.msk [vmem:[#allocation2 + $0x438] sm:$0x3] %vm43, 0.0
  %179 = vst.msk [vmem:[#allocation2 + $0x440] sm:$0xff] %vm41, 0.0
  %180 = vst.msk [vmem:[#allocation2 + $0x448] sm:$0x3] %vm43, 0.0
  %181 = vst.msk [vmem:[#allocation2 + $0x450] sm:$0xff] %vm41, 0.0
  %182 = vst.msk [vmem:[#allocation2 + $0x458] sm:$0x3] %vm43, 0.0
  %183 = vst.msk [vmem:[#allocation2 + $0x460] sm:$0xff] %vm41, 0.0
  %184 = vst.msk [vmem:[#allocation2 + $0x468] sm:$0x3] %vm43, 0.0
  %185 = vst.msk [vmem:[#allocation2 + $0x470] sm:$0xff] %vm41, 0.0
  %186 = vst.msk [vmem:[#allocation2 + $0x478] sm:$0x3] %vm43, 0.0
  %187 = vst.msk [vmem:[#allocation2 + $0x480] sm:$0xff] %vm41, 0.0
  %188 = vst.msk [vmem:[#allocation2 + $0x488] sm:$0x3] %vm43, 0.0
  %189 = vst.msk [vmem:[#allocation2 + $0x490] sm:$0xff] %vm41, 0.0
  %190 = vst.msk [vmem:[#allocation2 + $0x498] sm:$0x3] %vm43, 0.0
  %191 = vst.msk [vmem:[#allocation2 + $0x4a0] sm:$0xff] %vm41, 0.0
  %192 = vst.msk [vmem:[#allocation2 + $0x4a8] sm:$0x3] %vm43, 0.0
  %193 = vst.msk [vmem:[#allocation2 + $0x4b0] sm:$0xff] %vm41, 0.0
  %194 = vst.msk [vmem:[#allocation2 + $0x4b8] sm:$0x3] %vm43, 0.0
  %195 = vst.msk [vmem:[#allocation2 + $0x4c0] sm:$0xff] %vm41, 0.0
  %196 = vst.msk [vmem:[#allocation2 + $0x4c8] sm:$0x3] %vm43, 0.0
  %197 = vst.msk [vmem:[#allocation2 + $0x4d0] sm:$0xff] %vm41, 0.0
  %198 = vst.msk [vmem:[#allocation2 + $0x4d8] sm:$0x3] %vm43, 0.0
  %199 = vst.msk [vmem:[#allocation2 + $0x4e0] sm:$0xff] %vm41, 0.0
  %200 = vst.msk [vmem:[#allocation2 + $0x4e8] sm:$0x3] %vm43, 0.0
  %201 = vst.msk [vmem:[#allocation2 + $0x4f0] sm:$0xff] %vm41, 0.0
  %202 = vst.msk [vmem:[#allocation2 + $0x4f8] sm:$0x3] %vm43, 0.0
  %v203 = vld [vmem:[%s0] sm:$0xff]
  %v204 = vld [vmem:[%s0 + $0x8] sm:$0x1]
  %v205 = vld [vmem:[%s0 + $0x10] sm:$0xff]
  %v206 = vld [vmem:[%s0 + $0x18] sm:$0x1]
  %v207 = vld [vmem:[%s0 + $0x20] sm:$0xff]
  %v208 = vld [vmem:[%s0 + $0x28] sm:$0x1]
  %v209 = vld [vmem:[%s0 + $0x30] sm:$0xff]
  %v210 = vld [vmem:[%s0 + $0x38] sm:$0x1]
  %v211 = vld [vmem:[%s0 + $0x40] sm:$0xff]
  %v212 = vld [vmem:[%s0 + $0x48] sm:$0x1]
  %v213 = vld [vmem:[%s0 + $0x50] sm:$0xff]
  %v214 = vld [vmem:[%s0 + $0x58] sm:$0x1]
  %v215 = vld [vmem:[%s0 + $0x60] sm:$0xff]
  %v216 = vld [vmem:[%s0 + $0x68] sm:$0x1]
  %v217 = vld [vmem:[%s0 + $0x70] sm:$0xff]
  %v218 = vld [vmem:[%s0 + $0x78] sm:$0x1]
  %v219 = vld [vmem:[%s0 + $0x80] sm:$0xff]
  %v220 = vld [vmem:[%s0 + $0x88] sm:$0x1]
  %v221 = vld [vmem:[%s0 + $0x90] sm:$0xff]
  %v222 = vld [vmem:[%s0 + $0x98] sm:$0x1]
  %v223 = vld [vmem:[%s0 + $0xa0] sm:$0xff]
  %v224 = vld [vmem:[%s0 + $0xa8] sm:$0x1]
  %v225 = vld [vmem:[%s0 + $0xb0] sm:$0xff]
  %v226 = vld [vmem:[%s0 + $0xb8] sm:$0x1]
  %v227 = vld [vmem:[%s0 + $0xc0] sm:$0xff]
  %v228 = vld [vmem:[%s0 + $0xc8] sm:$0x1]
  %v229 = vld [vmem:[%s0 + $0xd0] sm:$0xff]
  %v230 = vld [vmem:[%s0 + $0xd8] sm:$0x1]
  %v231 = vld [vmem:[%s0 + $0xe0] sm:$0xff]
  %v232 = vld [vmem:[%s0 + $0xe8] sm:$0x1]
  %v233 = vld [vmem:[%s0 + $0xf0] sm:$0xff]
  %v234 = vld [vmem:[%s0 + $0xf8] sm:$0x1]
  %v235 = vld [vmem:[%s0 + $0x100] sm:$0xff]
  %v236 = vld [vmem:[%s0 + $0x108] sm:$0x1]
  %v237 = vld [vmem:[%s0 + $0x110] sm:$0xff]
  %v238 = vld [vmem:[%s0 + $0x118] sm:$0x1]
  %v239 = vld [vmem:[%s2] sm:$0xff]
  %v240 = vld [vmem:[%s2 + $0x8] sm:$0xff]
  %v241 = vld [vmem:[%s2 + $0x10] sm:$0xff]
  %v242 = vld [vmem:[%s2 + $0x18] sm:$0xff]
  %v243 = vld [vmem:[%s2 + $0x20] sm:$0xff]
  %v244 = vld [vmem:[%s2 + $0x28] sm:$0xff]
  %v245 = vld [vmem:[%s2 + $0x30] sm:$0xff]
  %v246 = vld [vmem:[%s2 + $0x38] sm:$0xff]
  %v247 = vld [vmem:[%s2 + $0x40] sm:$0xff]
  %v248 = vld [vmem:[%s2 + $0x48] sm:$0xff]
  %v249 = vld [vmem:[%s2 + $0x50] sm:$0xff]
  %v250 = vld [vmem:[%s2 + $0x58] sm:$0xff]
  %v251 = vld [vmem:[%s2 + $0x60] sm:$0xff]
  %v252 = vld [vmem:[%s2 + $0x68] sm:$0xff]
  %v253 = vld [vmem:[%s2 + $0x70] sm:$0xff]
  %v254 = vld [vmem:[%s2 + $0x78] sm:$0xff]
  %v255 = vld [vmem:[%s2 + $0x80] sm:$0xff]
  %v256 = vld [vmem:[%s2 + $0x88] sm:$0xff]
  %v257 = vld [vmem:[%s2 + $0x90] sm:$0x3f]
  %v258 = vld [vmem:[%s3] sm:$0x1]
  %vm291 = vcmask 1046528
  %v292 = vrot.slane %v203, 1
  %v293 = vrot.slane %v204, 1
  %v294 = vsel %vm291, %v292, %v293
  %v295 = vrot.slane %v205, 1
  %v296 = vrot.slane %v206, 1
  %v297 = vsel %vm291, %v295, %v296
  %v298 = vrot.slane %v207, 1
  %v299 = vrot.slane %v208, 1
  %v300 = vsel %vm291, %v298, %v299
  %v301 = vrot.slane %v209, 1
  %v302 = vrot.slane %v210, 1
  %v303 = vsel %vm291, %v301, %v302
  %v304 = vrot.slane %v211, 1
  %v305 = vrot.slane %v212, 1
  %v306 = vsel %vm291, %v304, %v305
  %v307 = vrot.slane %v213, 1
  %v308 = vrot.slane %v214, 1
  %v309 = vsel %vm291, %v307, %v308
  %v310 = vrot.slane %v215, 1
  %v311 = vrot.slane %v216, 1
  %v312 = vsel %vm291, %v310, %v311
  %v313 = vrot.slane %v217, 1
  %v314 = vrot.slane %v218, 1
  %v315 = vsel %vm291, %v313, %v314
  %v316 = vrot.slane %v221, 1
  %v317 = vrot.slane %v222, 1
  %v318 = vsel %vm291, %v316, %v317
  %v319 = vrot.slane %v223, 1
  %v320 = vrot.slane %v224, 1
  %v321 = vsel %vm291, %v319, %v320
  %v322 = vrot.slane %v225, 1
  %v323 = vrot.slane %v226, 1
  %v324 = vsel %vm291, %v322, %v323
  %v325 = vrot.slane %v227, 1
  %v326 = vrot.slane %v228, 1
  %v327 = vsel %vm291, %v325, %v326
  %v328 = vrot.slane %v229, 1
  %v329 = vrot.slane %v230, 1
  %v330 = vsel %vm291, %v328, %v329
  %v331 = vrot.slane %v231, 1
  %v332 = vrot.slane %v232, 1
  %v333 = vsel %vm291, %v331, %v332
  %v334 = vrot.slane %v233, 1
  %v335 = vrot.slane %v234, 1
  %v336 = vsel %vm291, %v334, %v335
  %v337 = vrot.slane %v235, 1
  %v338 = vrot.slane %v236, 1
  %v339 = vsel %vm291, %v337, %v338
  %v344 = vrot.slane %v219, 1
  %v345 = vrot.slane %v220, 1
  %v346 = vsel %vm291, %v344, %v345
  %v347 = vrot.slane %v237, 1
  %v348 = vrot.slane %v238, 1
  %v349 = vsel %vm291, %v347, %v348
  %350 = vrot.lane.b32.xlu0 %v294, 24
  %v351 = vpop.permute.xlu0 %350
  %352 = vrot.lane.b32.xlu0 %v297, 24
  %v353 = vpop.permute.xlu0 %352
  %354 = vrot.lane.b32.xlu0 %v300, 24
  %v355 = vpop.permute.xlu0 %354
  %356 = vrot.lane.b32.xlu0 %v303, 24
  %v357 = vpop.permute.xlu0 %356
  %358 = vrot.lane.b32.xlu0 %v306, 24
  %v359 = vpop.permute.xlu0 %358
  %360 = vrot.lane.b32.xlu0 %v309, 24
  %v361 = vpop.permute.xlu0 %360
  %362 = vrot.lane.b32.xlu0 %v312, 24
  %v363 = vpop.permute.xlu0 %362
  %364 = vrot.lane.b32.xlu0 %v315, 24
  %v365 = vpop.permute.xlu0 %364
  %366 = vrot.lane.b32.xlu0 %v318, 24
  %v367 = vpop.permute.xlu0 %366
  %368 = vrot.lane.b32.xlu0 %v321, 24
  %v369 = vpop.permute.xlu0 %368
  %370 = vrot.lane.b32.xlu0 %v324, 24
  %v371 = vpop.permute.xlu0 %370
  %372 = vrot.lane.b32.xlu0 %v327, 24
  %v373 = vpop.permute.xlu0 %372
  %374 = vrot.lane.b32.xlu0 %v330, 24
  %v375 = vpop.permute.xlu0 %374
  %376 = vrot.lane.b32.xlu0 %v333, 24
  %v377 = vpop.permute.xlu0 %376
  %378 = vrot.lane.b32.xlu0 %v336, 24
  %v379 = vpop.permute.xlu0 %378
  %380 = vrot.lane.b32.xlu0 %v339, 24
  %v381 = vpop.permute.xlu0 %380
  %398 = vrot.lane.b32.xlu0 %v203, 6
  %v399 = vpop.permute.xlu0 %398
  %400 = vrot.lane.b32.xlu0 %v205, 6
  %v401 = vpop.permute.xlu0 %400
  %402 = vrot.lane.b32.xlu0 %v207, 6
  %v403 = vpop.permute.xlu0 %402
  %404 = vrot.lane.b32.xlu0 %v209, 6
  %v405 = vpop.permute.xlu0 %404
  %406 = vrot.lane.b32.xlu0 %v211, 6
  %v407 = vpop.permute.xlu0 %406
  %408 = vrot.lane.b32.xlu0 %v213, 6
  %v409 = vpop.permute.xlu0 %408
  %410 = vrot.lane.b32.xlu0 %v215, 6
  %v411 = vpop.permute.xlu0 %410
  %412 = vrot.lane.b32.xlu0 %v217, 6
  %v413 = vpop.permute.xlu0 %412
  %414 = vrot.lane.b32.xlu0 %v221, 6
  %v415 = vpop.permute.xlu0 %414
  %416 = vrot.lane.b32.xlu0 %v223, 6
  %v417 = vpop.permute.xlu0 %416
  %418 = vrot.lane.b32.xlu0 %v225, 6
  %v419 = vpop.permute.xlu0 %418
  %420 = vrot.lane.b32.xlu0 %v227, 6
  %v421 = vpop.permute.xlu0 %420
  %422 = vrot.lane.b32.xlu0 %v229, 6
  %v423 = vpop.permute.xlu0 %422
  %424 = vrot.lane.b32.xlu0 %v231, 6
  %v425 = vpop.permute.xlu0 %424
  %426 = vrot.lane.b32.xlu0 %v233, 6
  %v427 = vpop.permute.xlu0 %426
  %428 = vrot.lane.b32.xlu0 %v235, 6
  %v429 = vpop.permute.xlu0 %428
  %446 = vrot.lane.b32.xlu0 %v294, 30
  %v447 = vpop.permute.xlu0 %446
  %448 = vrot.lane.b32.xlu0 %v297, 30
  %v449 = vpop.permute.xlu0 %448
  %450 = vrot.lane.b32.xlu0 %v300, 30
  %v451 = vpop.permute.xlu0 %450
  %452 = vrot.lane.b32.xlu0 %v303, 30
  %v453 = vpop.permute.xlu0 %452
  %454 = vrot.lane.b32.xlu0 %v306, 30
  %v455 = vpop.permute.xlu0 %454
  %456 = vrot.lane.b32.xlu0 %v309, 30
  %v457 = vpop.permute.xlu0 %456
  %458 = vrot.lane.b32.xlu0 %v312, 30
  %v459 = vpop.permute.xlu0 %458
  %460 = vrot.lane.b32.xlu0 %v315, 30
  %v461 = vpop.permute.xlu0 %460
  %462 = vrot.lane.b32.xlu0 %v318, 30
  %v463 = vpop.permute.xlu0 %462
  %464 = vrot.lane.b32.xlu0 %v321, 30
  %v465 = vpop.permute.xlu0 %464
  %466 = vrot.lane.b32.xlu0 %v324, 30
  %v467 = vpop.permute.xlu0 %466
  %468 = vrot.lane.b32.xlu0 %v327, 30
  %v469 = vpop.permute.xlu0 %468
  %470 = vrot.lane.b32.xlu0 %v330, 30
  %v471 = vpop.permute.xlu0 %470
  %472 = vrot.lane.b32.xlu0 %v333, 30
  %v473 = vpop.permute.xlu0 %472
  %474 = vrot.lane.b32.xlu0 %v336, 30
  %v475 = vpop.permute.xlu0 %474
  %476 = vrot.lane.b32.xlu0 %v339, 30
  %v477 = vpop.permute.xlu0 %476
  %494 = vrot.lane.b32.xlu0 %v203, 12
  %v495 = vpop.permute.xlu0 %494
  %496 = vrot.lane.b32.xlu0 %v205, 12
  %v497 = vpop.permute.xlu0 %496
  %498 = vrot.lane.b32.xlu0 %v207, 12
  %v499 = vpop.permute.xlu0 %498
  %500 = vrot.lane.b32.xlu0 %v209, 12
  %v501 = vpop.permute.xlu0 %500
  %502 = vrot.lane.b32.xlu0 %v211, 12
  %v503 = vpop.permute.xlu0 %502
  %504 = vrot.lane.b32.xlu0 %v213, 12
  %v505 = vpop.permute.xlu0 %504
  %506 = vrot.lane.b32.xlu0 %v215, 12
  %v507 = vpop.permute.xlu0 %506
  %508 = vrot.lane.b32.xlu0 %v217, 12
  %v509 = vpop.permute.xlu0 %508
  %510 = vrot.lane.b32.xlu0 %v221, 12
  %v511 = vpop.permute.xlu0 %510
  %512 = vrot.lane.b32.xlu0 %v223, 12
  %v513 = vpop.permute.xlu0 %512
  %514 = vrot.lane.b32.xlu0 %v225, 12
  %v515 = vpop.permute.xlu0 %514
  %516 = vrot.lane.b32.xlu0 %v227, 12
  %v517 = vpop.permute.xlu0 %516
  %518 = vrot.lane.b32.xlu0 %v229, 12
  %v519 = vpop.permute.xlu0 %518
  %520 = vrot.lane.b32.xlu0 %v231, 12
  %v521 = vpop.permute.xlu0 %520
  %522 = vrot.lane.b32.xlu0 %v233, 12
  %v523 = vpop.permute.xlu0 %522
  %524 = vrot.lane.b32.xlu0 %v235, 12
  %v525 = vpop.permute.xlu0 %524
  %542 = vrot.lane.b32.xlu0 %v294, 36
  %v543 = vpop.permute.xlu0 %542
  %544 = vrot.lane.b32.xlu0 %v297, 36
  %v545 = vpop.permute.xlu0 %544
  %546 = vrot.lane.b32.xlu0 %v300, 36
  %v547 = vpop.permute.xlu0 %546
  %548 = vrot.lane.b32.xlu0 %v303, 36
  %v549 = vpop.permute.xlu0 %548
  %550 = vrot.lane.b32.xlu0 %v306, 36
  %v551 = vpop.permute.xlu0 %550
  %552 = vrot.lane.b32.xlu0 %v309, 36
  %v553 = vpop.permute.xlu0 %552
  %554 = vrot.lane.b32.xlu0 %v312, 36
  %v555 = vpop.permute.xlu0 %554
  %556 = vrot.lane.b32.xlu0 %v315, 36
  %v557 = vpop.permute.xlu0 %556
  %558 = vrot.lane.b32.xlu0 %v318, 36
  %v559 = vpop.permute.xlu0 %558
  %560 = vrot.lane.b32.xlu0 %v321, 36
  %v561 = vpop.permute.xlu0 %560
  %562 = vrot.lane.b32.xlu0 %v324, 36
  %v563 = vpop.permute.xlu0 %562
  %564 = vrot.lane.b32.xlu0 %v327, 36
  %v565 = vpop.permute.xlu0 %564
  %566 = vrot.lane.b32.xlu0 %v330, 36
  %v567 = vpop.permute.xlu0 %566
  %568 = vrot.lane.b32.xlu0 %v333, 36
  %v569 = vpop.permute.xlu0 %568
  %570 = vrot.lane.b32.xlu0 %v336, 36
  %v571 = vpop.permute.xlu0 %570
  %572 = vrot.lane.b32.xlu0 %v339, 36
  %v573 = vpop.permute.xlu0 %572
  %590 = vrot.lane.b32.xlu0 %v203, 18
  %v591 = vpop.permute.xlu0 %590
  %592 = vrot.lane.b32.xlu0 %v205, 18
  %v593 = vpop.permute.xlu0 %592
  %594 = vrot.lane.b32.xlu0 %v207, 18
  %v595 = vpop.permute.xlu0 %594
  %596 = vrot.lane.b32.xlu0 %v209, 18
  %v597 = vpop.permute.xlu0 %596
  %598 = vrot.lane.b32.xlu0 %v211, 18
  %v599 = vpop.permute.xlu0 %598
  %600 = vrot.lane.b32.xlu0 %v213, 18
  %v601 = vpop.permute.xlu0 %600
  %602 = vrot.lane.b32.xlu0 %v215, 18
  %v603 = vpop.permute.xlu0 %602
  %604 = vrot.lane.b32.xlu0 %v217, 18
  %v605 = vpop.permute.xlu0 %604
  %606 = vrot.lane.b32.xlu0 %v221, 18
  %v607 = vpop.permute.xlu0 %606
  %608 = vrot.lane.b32.xlu0 %v223, 18
  %v609 = vpop.permute.xlu0 %608
  %610 = vrot.lane.b32.xlu0 %v225, 18
  %v611 = vpop.permute.xlu0 %610
  %612 = vrot.lane.b32.xlu0 %v227, 18
  %v613 = vpop.permute.xlu0 %612
  %614 = vrot.lane.b32.xlu0 %v229, 18
  %v615 = vpop.permute.xlu0 %614
  %616 = vrot.lane.b32.xlu0 %v231, 18
  %v617 = vpop.permute.xlu0 %616
  %618 = vrot.lane.b32.xlu0 %v233, 18
  %v619 = vpop.permute.xlu0 %618
  %620 = vrot.lane.b32.xlu0 %v235, 18
  %v621 = vpop.permute.xlu0 %620
  %vm638 = vcmask 195584
  %v639 = vsel %vm638, %v203, %v351
  %v640 = vsel %vm638, %v205, %v353
  %v641 = vsel %vm638, %v207, %v355
  %v642 = vsel %vm638, %v209, %v357
  %v643 = vsel %vm638, %v211, %v359
  %v644 = vsel %vm638, %v213, %v361
  %v645 = vsel %vm638, %v215, %v363
  %v646 = vsel %vm638, %v217, %v365
  %v647 = vsel %vm638, %v221, %v367
  %v648 = vsel %vm638, %v223, %v369
  %v649 = vsel %vm638, %v225, %v371
  %v650 = vsel %vm638, %v227, %v373
  %v651 = vsel %vm638, %v229, %v375
  %v652 = vsel %vm638, %v231, %v377
  %v653 = vsel %vm638, %v233, %v379
  %v654 = vsel %vm638, %v235, %v381
  %vm655 = vcmask 244736
  %v656 = vsel %vm655, %v639, %v399
  %v657 = vsel %vm655, %v640, %v401
  %v658 = vsel %vm655, %v641, %v403
  %v659 = vsel %vm655, %v642, %v405
  %v660 = vsel %vm655, %v643, %v407
  %v661 = vsel %vm655, %v644, %v409
  %v662 = vsel %vm655, %v645, %v411
  %v663 = vsel %vm655, %v646, %v413
  %v664 = vsel %vm655, %v647, %v415
  %v665 = vsel %vm655, %v648, %v417
  %v666 = vsel %vm655, %v649, %v419
  %v667 = vsel %vm655, %v650, %v421
  %v668 = vsel %vm655, %v651, %v423
  %v669 = vsel %vm655, %v652, %v425
  %v670 = vsel %vm655, %v653, %v427
  %v671 = vsel %vm655, %v654, %v429
  %vm672 = vcmask 293888
  %v673 = vsel %vm672, %v656, %v399
  %v674 = vsel %vm672, %v657, %v401
  %v675 = vsel %vm672, %v658, %v403
  %v676 = vsel %vm672, %v659, %v405
  %v677 = vsel %vm672, %v660, %v407
  %v678 = vsel %vm672, %v661, %v409
  %v679 = vsel %vm672, %v662, %v411
  %v680 = vsel %vm672, %v663, %v413
  %v681 = vsel %vm672, %v664, %v415
  %v682 = vsel %vm672, %v665, %v417
  %v683 = vsel %vm672, %v666, %v419
  %v684 = vsel %vm672, %v667, %v421
  %v685 = vsel %vm672, %v668, %v423
  %v686 = vsel %vm672, %v669, %v425
  %v687 = vsel %vm672, %v670, %v427
  %v688 = vsel %vm672, %v671, %v429
  %vm689 = vcmask 343040
  %v690 = vsel %vm689, %v673, %v399
  %v691 = vsel %vm689, %v674, %v401
  %v692 = vsel %vm689, %v675, %v403
  %v693 = vsel %vm689, %v676, %v405
  %v694 = vsel %vm689, %v677, %v407
  %v695 = vsel %vm689, %v678, %v409
  %v696 = vsel %vm689, %v679, %v411
  %v697 = vsel %vm689, %v680, %v413
  %v698 = vsel %vm689, %v681, %v415
  %v699 = vsel %vm689, %v682, %v417
  %v700 = vsel %vm689, %v683, %v419
  %v701 = vsel %vm689, %v684, %v421
  %v702 = vsel %vm689, %v685, %v423
  %v703 = vsel %vm689, %v686, %v425
  %v704 = vsel %vm689, %v687, %v427
  %v705 = vsel %vm689, %v688, %v429
  %vm706 = vcmask 392192
  %v707 = vsel %vm706, %v690, %v399
  %v708 = vsel %vm706, %v691, %v401
  %v709 = vsel %vm706, %v692, %v403
  %v710 = vsel %vm706, %v693, %v405
  %v711 = vsel %vm706, %v694, %v407
  %v712 = vsel %vm706, %v695, %v409
  %v713 = vsel %vm706, %v696, %v411
  %v714 = vsel %vm706, %v697, %v413
  %v715 = vsel %vm706, %v698, %v415
  %v716 = vsel %vm706, %v699, %v417
  %v717 = vsel %vm706, %v700, %v419
  %v718 = vsel %vm706, %v701, %v421
  %v719 = vsel %vm706, %v702, %v423
  %v720 = vsel %vm706, %v703, %v425
  %v721 = vsel %vm706, %v704, %v427
  %v722 = vsel %vm706, %v705, %v429
  %vm723 = vcmask 441344
  %v724 = vsel %vm723, %v707, %v447
  %v725 = vsel %vm723, %v708, %v449
  %v726 = vsel %vm723, %v709, %v451
  %v727 = vsel %vm723, %v710, %v453
  %v728 = vsel %vm723, %v711, %v455
  %v729 = vsel %vm723, %v712, %v457
  %v730 = vsel %vm723, %v713, %v459
  %v731 = vsel %vm723, %v714, %v461
  %v732 = vsel %vm723, %v715, %v463
  %v733 = vsel %vm723, %v716, %v465
  %v734 = vsel %vm723, %v717, %v467
  %v735 = vsel %vm723, %v718, %v469
  %v736 = vsel %vm723, %v719, %v471
  %v737 = vsel %vm723, %v720, %v473
  %v738 = vsel %vm723, %v721, %v475
  %v739 = vsel %vm723, %v722, %v477
  %vm740 = vcmask 490496
  %v741 = vsel %vm740, %v724, %v495
  %v742 = vsel %vm740, %v725, %v497
  %v743 = vsel %vm740, %v726, %v499
  %v744 = vsel %vm740, %v727, %v501
  %v745 = vsel %vm740, %v728, %v503
  %v746 = vsel %vm740, %v729, %v505
  %v747 = vsel %vm740, %v730, %v507
  %v748 = vsel %vm740, %v731, %v509
  %v749 = vsel %vm740, %v732, %v511
  %v750 = vsel %vm740, %v733, %v513
  %v751 = vsel %vm740, %v734, %v515
  %v752 = vsel %vm740, %v735, %v517
  %v753 = vsel %vm740, %v736, %v519
  %v754 = vsel %vm740, %v737, %v521
  %v755 = vsel %vm740, %v738, %v523
  %v756 = vsel %vm740, %v739, %v525
  %vm757 = vcmask 539648
  %v758 = vsel %vm757, %v741, %v495
  %v759 = vsel %vm757, %v742, %v497
  %v760 = vsel %vm757, %v743, %v499
  %v761 = vsel %vm757, %v744, %v501
  %v762 = vsel %vm757, %v745, %v503
  %v763 = vsel %vm757, %v746, %v505
  %v764 = vsel %vm757, %v747, %v507
  %v765 = vsel %vm757, %v748, %v509
  %v766 = vsel %vm757, %v749, %v511
  %v767 = vsel %vm757, %v750, %v513
  %v768 = vsel %vm757, %v751, %v515
  %v769 = vsel %vm757, %v752, %v517
  %v770 = vsel %vm757, %v753, %v519
  %v771 = vsel %vm757, %v754, %v521
  %v772 = vsel %vm757, %v755, %v523
  %v773 = vsel %vm757, %v756, %v525
  %vm774 = vcmask 588800
  %v775 = vsel %vm774, %v758, %v495
  %v776 = vsel %vm774, %v759, %v497
  %v777 = vsel %vm774, %v760, %v499
  %v778 = vsel %vm774, %v761, %v501
  %v779 = vsel %vm774, %v762, %v503
  %v780 = vsel %vm774, %v763, %v505
  %v781 = vsel %vm774, %v764, %v507
  %v782 = vsel %vm774, %v765, %v509
  %v783 = vsel %vm774, %v766, %v511
  %v784 = vsel %vm774, %v767, %v513
  %v785 = vsel %vm774, %v768, %v515
  %v786 = vsel %vm774, %v769, %v517
  %v787 = vsel %vm774, %v770, %v519
  %v788 = vsel %vm774, %v771, %v521
  %v789 = vsel %vm774, %v772, %v523
  %v790 = vsel %vm774, %v773, %v525
  %vm791 = vcmask 637952
  %v792 = vsel %vm791, %v775, %v495
  %v793 = vsel %vm791, %v776, %v497
  %v794 = vsel %vm791, %v777, %v499
  %v795 = vsel %vm791, %v778, %v501
  %v796 = vsel %vm791, %v779, %v503
  %v797 = vsel %vm791, %v780, %v505
  %v798 = vsel %vm791, %v781, %v507
  %v799 = vsel %vm791, %v782, %v509
  %v800 = vsel %vm791, %v783, %v511
  %v801 = vsel %vm791, %v784, %v513
  %v802 = vsel %vm791, %v785, %v515
  %v803 = vsel %vm791, %v786, %v517
  %v804 = vsel %vm791, %v787, %v519
  %v805 = vsel %vm791, %v788, %v521
  %v806 = vsel %vm791, %v789, %v523
  %v807 = vsel %vm791, %v790, %v525
  %vm808 = vcmask 687104
  %v809 = vsel %vm808, %v792, %v543
  %v810 = vsel %vm808, %v793, %v545
  %v811 = vsel %vm808, %v794, %v547
  %v812 = vsel %vm808, %v795, %v549
  %v813 = vsel %vm808, %v796, %v551
  %v814 = vsel %vm808, %v797, %v553
  %v815 = vsel %vm808, %v798, %v555
  %v816 = vsel %vm808, %v799, %v557
  %v817 = vsel %vm808, %v800, %v559
  %v818 = vsel %vm808, %v801, %v561
  %v819 = vsel %vm808, %v802, %v563
  %v820 = vsel %vm808, %v803, %v565
  %v821 = vsel %vm808, %v804, %v567
  %v822 = vsel %vm808, %v805, %v569
  %v823 = vsel %vm808, %v806, %v571
  %v824 = vsel %vm808, %v807, %v573
  %vm825 = vcmask 736256
  %v826 = vsel %vm825, %v809, %v591
  %v827 = vsel %vm825, %v810, %v593
  %v828 = vsel %vm825, %v811, %v595
  %v829 = vsel %vm825, %v812, %v597
  %v830 = vsel %vm825, %v813, %v599
  %v831 = vsel %vm825, %v814, %v601
  %v832 = vsel %vm825, %v815, %v603
  %v833 = vsel %vm825, %v816, %v605
  %v834 = vsel %vm825, %v817, %v607
  %v835 = vsel %vm825, %v818, %v609
  %v836 = vsel %vm825, %v819, %v611
  %v837 = vsel %vm825, %v820, %v613
  %v838 = vsel %vm825, %v821, %v615
  %v839 = vsel %vm825, %v822, %v617
  %v840 = vsel %vm825, %v823, %v619
  %v841 = vsel %vm825, %v824, %v621
  %842 = vrot.lane.b32.xlu0 %v203, 50
  %v843 = vpop.permute.xlu0 %842
  %844 = vrot.lane.b32.xlu0 %v205, 50
  %v845 = vpop.permute.xlu0 %844
  %846 = vrot.lane.b32.xlu0 %v207, 50
  %v847 = vpop.permute.xlu0 %846
  %848 = vrot.lane.b32.xlu0 %v209, 50
  %v849 = vpop.permute.xlu0 %848
  %850 = vrot.lane.b32.xlu0 %v211, 50
  %v851 = vpop.permute.xlu0 %850
  %852 = vrot.lane.b32.xlu0 %v213, 50
  %v853 = vpop.permute.xlu0 %852
  %854 = vrot.lane.b32.xlu0 %v215, 50
  %v855 = vpop.permute.xlu0 %854
  %856 = vrot.lane.b32.xlu0 %v217, 50
  %v857 = vpop.permute.xlu0 %856
  %858 = vrot.lane.b32.xlu0 %v221, 50
  %v859 = vpop.permute.xlu0 %858
  %860 = vrot.lane.b32.xlu0 %v223, 50
  %v861 = vpop.permute.xlu0 %860
  %862 = vrot.lane.b32.xlu0 %v225, 50
  %v863 = vpop.permute.xlu0 %862
  %864 = vrot.lane.b32.xlu0 %v227, 50
  %v865 = vpop.permute.xlu0 %864
  %866 = vrot.lane.b32.xlu0 %v229, 50
  %v867 = vpop.permute.xlu0 %866
  %868 = vrot.lane.b32.xlu0 %v231, 50
  %v869 = vpop.permute.xlu0 %868
  %870 = vrot.lane.b32.xlu0 %v233, 50
  %v871 = vpop.permute.xlu0 %870
  %872 = vrot.lane.b32.xlu0 %v235, 50
  %v873 = vpop.permute.xlu0 %872
  %890 = vrot.lane.b32.xlu0 %v294, 74
  %v891 = vpop.permute.xlu0 %890
  %892 = vrot.lane.b32.xlu0 %v297, 74
  %v893 = vpop.permute.xlu0 %892
  %894 = vrot.lane.b32.xlu0 %v300, 74
  %v895 = vpop.permute.xlu0 %894
  %896 = vrot.lane.b32.xlu0 %v303, 74
  %v897 = vpop.permute.xlu0 %896
  %898 = vrot.lane.b32.xlu0 %v306, 74
  %v899 = vpop.permute.xlu0 %898
  %900 = vrot.lane.b32.xlu0 %v309, 74
  %v901 = vpop.permute.xlu0 %900
  %902 = vrot.lane.b32.xlu0 %v312, 74
  %v903 = vpop.permute.xlu0 %902
  %904 = vrot.lane.b32.xlu0 %v315, 74
  %v905 = vpop.permute.xlu0 %904
  %906 = vrot.lane.b32.xlu0 %v318, 74
  %v907 = vpop.permute.xlu0 %906
  %908 = vrot.lane.b32.xlu0 %v321, 74
  %v909 = vpop.permute.xlu0 %908
  %910 = vrot.lane.b32.xlu0 %v324, 74
  %v911 = vpop.permute.xlu0 %910
  %912 = vrot.lane.b32.xlu0 %v327, 74
  %v913 = vpop.permute.xlu0 %912
  %914 = vrot.lane.b32.xlu0 %v330, 74
  %v915 = vpop.permute.xlu0 %914
  %916 = vrot.lane.b32.xlu0 %v333, 74
  %v917 = vpop.permute.xlu0 %916
  %918 = vrot.lane.b32.xlu0 %v336, 74
  %v919 = vpop.permute.xlu0 %918
  %920 = vrot.lane.b32.xlu0 %v339, 74
  %v921 = vpop.permute.xlu0 %920
  %938 = vrot.lane.b32.xlu0 %v205, 24
  %v939 = vpop.permute.xlu0 %938
  %940 = vrot.lane.b32.xlu0 %v207, 24
  %v941 = vpop.permute.xlu0 %940
  %942 = vrot.lane.b32.xlu0 %v209, 24
  %v943 = vpop.permute.xlu0 %942
  %944 = vrot.lane.b32.xlu0 %v211, 24
  %v945 = vpop.permute.xlu0 %944
  %946 = vrot.lane.b32.xlu0 %v213, 24
  %v947 = vpop.permute.xlu0 %946
  %948 = vrot.lane.b32.xlu0 %v215, 24
  %v949 = vpop.permute.xlu0 %948
  %950 = vrot.lane.b32.xlu0 %v217, 24
  %v951 = vpop.permute.xlu0 %950
  %952 = vrot.lane.b32.xlu0 %v219, 24
  %v953 = vpop.permute.xlu0 %952
  %954 = vrot.lane.b32.xlu0 %v223, 24
  %v955 = vpop.permute.xlu0 %954
  %956 = vrot.lane.b32.xlu0 %v225, 24
  %v957 = vpop.permute.xlu0 %956
  %958 = vrot.lane.b32.xlu0 %v227, 24
  %v959 = vpop.permute.xlu0 %958
  %960 = vrot.lane.b32.xlu0 %v229, 24
  %v961 = vpop.permute.xlu0 %960
  %962 = vrot.lane.b32.xlu0 %v231, 24
  %v963 = vpop.permute.xlu0 %962
  %964 = vrot.lane.b32.xlu0 %v233, 24
  %v965 = vpop.permute.xlu0 %964
  %966 = vrot.lane.b32.xlu0 %v235, 24
  %v967 = vpop.permute.xlu0 %966
  %968 = vrot.lane.b32.xlu0 %v237, 24
  %v969 = vpop.permute.xlu0 %968
  %986 = vrot.lane.b32.xlu0 %v297, 48
  %v987 = vpop.permute.xlu0 %986
  %988 = vrot.lane.b32.xlu0 %v300, 48
  %v989 = vpop.permute.xlu0 %988
  %990 = vrot.lane.b32.xlu0 %v303, 48
  %v991 = vpop.permute.xlu0 %990
  %992 = vrot.lane.b32.xlu0 %v306, 48
  %v993 = vpop.permute.xlu0 %992
  %994 = vrot.lane.b32.xlu0 %v309, 48
  %v995 = vpop.permute.xlu0 %994
  %996 = vrot.lane.b32.xlu0 %v312, 48
  %v997 = vpop.permute.xlu0 %996
  %998 = vrot.lane.b32.xlu0 %v315, 48
  %v999 = vpop.permute.xlu0 %998
  %1000 = vrot.lane.b32.xlu0 %v346, 48
  %v1001 = vpop.permute.xlu0 %1000
  %1002 = vrot.lane.b32.xlu0 %v321, 48
  %v1003 = vpop.permute.xlu0 %1002
  %1004 = vrot.lane.b32.xlu0 %v324, 48
  %v1005 = vpop.permute.xlu0 %1004
  %1006 = vrot.lane.b32.xlu0 %v327, 48
  %v1007 = vpop.permute.xlu0 %1006
  %1008 = vrot.lane.b32.xlu0 %v330, 48
  %v1009 = vpop.permute.xlu0 %1008
  %1010 = vrot.lane.b32.xlu0 %v333, 48
  %v1011 = vpop.permute.xlu0 %1010
  %1012 = vrot.lane.b32.xlu0 %v336, 48
  %v1013 = vpop.permute.xlu0 %1012
  %1014 = vrot.lane.b32.xlu0 %v339, 48
  %v1015 = vpop.permute.xlu0 %1014
  %1016 = vrot.lane.b32.xlu0 %v349, 48
  %v1017 = vpop.permute.xlu0 %1016
  %vm1034 = vcmask 48128
  %vm1035 = vcmask 97280
  %v1036 = vsel %vm1035, %v843, %v843
  %v1037 = vsel %vm1035, %v845, %v845
  %v1038 = vsel %vm1035, %v847, %v847
  %v1039 = vsel %vm1035, %v849, %v849
  %v1040 = vsel %vm1035, %v851, %v851
  %v1041 = vsel %vm1035, %v853, %v853
  %v1042 = vsel %vm1035, %v855, %v855
  %v1043 = vsel %vm1035, %v857, %v857
  %v1044 = vsel %vm1035, %v859, %v859
  %v1045 = vsel %vm1035, %v861, %v861
  %v1046 = vsel %vm1035, %v863, %v863
  %v1047 = vsel %vm1035, %v865, %v865
  %v1048 = vsel %vm1035, %v867, %v867
  %v1049 = vsel %vm1035, %v869, %v869
  %v1050 = vsel %vm1035, %v871, %v871
  %v1051 = vsel %vm1035, %v873, %v873
  %vm1052 = vcmask 146432
  %v1053 = vsel %vm1052, %v1036, %v891
  %v1054 = vsel %vm1052, %v1037, %v893
  %v1055 = vsel %vm1052, %v1038, %v895
  %v1056 = vsel %vm1052, %v1039, %v897
  %v1057 = vsel %vm1052, %v1040, %v899
  %v1058 = vsel %vm1052, %v1041, %v901
  %v1059 = vsel %vm1052, %v1042, %v903
  %v1060 = vsel %vm1052, %v1043, %v905
  %v1061 = vsel %vm1052, %v1044, %v907
  %v1062 = vsel %vm1052, %v1045, %v909
  %v1063 = vsel %vm1052, %v1046, %v911
  %v1064 = vsel %vm1052, %v1047, %v913
  %v1065 = vsel %vm1052, %v1048, %v915
  %v1066 = vsel %vm1052, %v1049, %v917
  %v1067 = vsel %vm1052, %v1050, %v919
  %v1068 = vsel %vm1052, %v1051, %v921
  %v1069 = vsel %vm638, %v1053, %v939
  %v1070 = vsel %vm638, %v1054, %v941
  %v1071 = vsel %vm638, %v1055, %v943
  %v1072 = vsel %vm638, %v1056, %v945
  %v1073 = vsel %vm638, %v1057, %v947
  %v1074 = vsel %vm638, %v1058, %v949
  %v1075 = vsel %vm638, %v1059, %v951
  %v1076 = vsel %vm638, %v1060, %v953
  %v1077 = vsel %vm638, %v1061, %v955
  %v1078 = vsel %vm638, %v1062, %v957
  %v1079 = vsel %vm638, %v1063, %v959
  %v1080 = vsel %vm638, %v1064, %v961
  %v1081 = vsel %vm638, %v1065, %v963
  %v1082 = vsel %vm638, %v1066, %v965
  %v1083 = vsel %vm638, %v1067, %v967
  %v1084 = vsel %vm638, %v1068, %v969
  %v1085 = vsel %vm655, %v1069, %v939
  %v1086 = vsel %vm655, %v1070, %v941
  %v1087 = vsel %vm655, %v1071, %v943
  %v1088 = vsel %vm655, %v1072, %v945
  %v1089 = vsel %vm655, %v1073, %v947
  %v1090 = vsel %vm655, %v1074, %v949
  %v1091 = vsel %vm655, %v1075, %v951
  %v1092 = vsel %vm655, %v1076, %v953
  %v1093 = vsel %vm655, %v1077, %v955
  %v1094 = vsel %vm655, %v1078, %v957
  %v1095 = vsel %vm655, %v1079, %v959
  %v1096 = vsel %vm655, %v1080, %v961
  %v1097 = vsel %vm655, %v1081, %v963
  %v1098 = vsel %vm655, %v1082, %v965
  %v1099 = vsel %vm655, %v1083, %v967
  %v1100 = vsel %vm655, %v1084, %v969
  %v1101 = vsel %vm672, %v1085, %v939
  %v1102 = vsel %vm672, %v1086, %v941
  %v1103 = vsel %vm672, %v1087, %v943
  %v1104 = vsel %vm672, %v1088, %v945
  %v1105 = vsel %vm672, %v1089, %v947
  %v1106 = vsel %vm672, %v1090, %v949
  %v1107 = vsel %vm672, %v1091, %v951
  %v1108 = vsel %vm672, %v1092, %v953
  %v1109 = vsel %vm672, %v1093, %v955
  %v1110 = vsel %vm672, %v1094, %v957
  %v1111 = vsel %vm672, %v1095, %v959
  %v1112 = vsel %vm672, %v1096, %v961
  %v1113 = vsel %vm672, %v1097, %v963
  %v1114 = vsel %vm672, %v1098, %v965
  %v1115 = vsel %vm672, %v1099, %v967
  %v1116 = vsel %vm672, %v1100, %v969
  %v1117 = vsel %vm689, %v1101, %v939
  %v1118 = vsel %vm689, %v1102, %v941
  %v1119 = vsel %vm689, %v1103, %v943
  %v1120 = vsel %vm689, %v1104, %v945
  %v1121 = vsel %vm689, %v1105, %v947
  %v1122 = vsel %vm689, %v1106, %v949
  %v1123 = vsel %vm689, %v1107, %v951
  %v1124 = vsel %vm689, %v1108, %v953
  %v1125 = vsel %vm689, %v1109, %v955
  %v1126 = vsel %vm689, %v1110, %v957
  %v1127 = vsel %vm689, %v1111, %v959
  %v1128 = vsel %vm689, %v1112, %v961
  %v1129 = vsel %vm689, %v1113, %v963
  %v1130 = vsel %vm689, %v1114, %v965
  %v1131 = vsel %vm689, %v1115, %v967
  %v1132 = vsel %vm689, %v1116, %v969
  %v1133 = vsel %vm706, %v1117, %v987
  %v1134 = vsel %vm706, %v1118, %v989
  %v1135 = vsel %vm706, %v1119, %v991
  %v1136 = vsel %vm706, %v1120, %v993
  %v1137 = vsel %vm706, %v1121, %v995
  %v1138 = vsel %vm706, %v1122, %v997
  %v1139 = vsel %vm706, %v1123, %v999
  %v1140 = vsel %vm706, %v1124, %v1001
  %v1141 = vsel %vm706, %v1125, %v1003
  %v1142 = vsel %vm706, %v1126, %v1005
  %v1143 = vsel %vm706, %v1127, %v1007
  %v1144 = vsel %vm706, %v1128, %v1009
  %v1145 = vsel %vm706, %v1129, %v1011
  %v1146 = vsel %vm706, %v1130, %v1013
  %v1147 = vsel %vm706, %v1131, %v1015
  %v1148 = vsel %vm706, %v1132, %v1017
  %1165 = vrot.lane.b32.xlu0 %v1133, 96
  %v1166 = vpop.permute.xlu0 %1165
  %1167 = vrot.lane.b32.xlu0 %v1134, 96
  %v1168 = vpop.permute.xlu0 %1167
  %1169 = vrot.lane.b32.xlu0 %v1135, 96
  %v1170 = vpop.permute.xlu0 %1169
  %1171 = vrot.lane.b32.xlu0 %v1136, 96
  %v1172 = vpop.permute.xlu0 %1171
  %1173 = vrot.lane.b32.xlu0 %v1137, 96
  %v1174 = vpop.permute.xlu0 %1173
  %1175 = vrot.lane.b32.xlu0 %v1138, 96
  %v1176 = vpop.permute.xlu0 %1175
  %1177 = vrot.lane.b32.xlu0 %v1139, 96
  %v1178 = vpop.permute.xlu0 %1177
  %1179 = vrot.lane.b32.xlu0 %v1140, 96
  %v1180 = vpop.permute.xlu0 %1179
  %1181 = vrot.lane.b32.xlu0 %v1141, 96
  %v1182 = vpop.permute.xlu0 %1181
  %1183 = vrot.lane.b32.xlu0 %v1142, 96
  %v1184 = vpop.permute.xlu0 %1183
  %1185 = vrot.lane.b32.xlu0 %v1143, 96
  %v1186 = vpop.permute.xlu0 %1185
  %1187 = vrot.lane.b32.xlu0 %v1144, 96
  %v1188 = vpop.permute.xlu0 %1187
  %1189 = vrot.lane.b32.xlu0 %v1145, 96
  %v1190 = vpop.permute.xlu0 %1189
  %1191 = vrot.lane.b32.xlu0 %v1146, 96
  %v1192 = vpop.permute.xlu0 %1191
  %1193 = vrot.lane.b32.xlu0 %v1147, 96
  %v1194 = vpop.permute.xlu0 %1193
  %1195 = vrot.lane.b32.xlu0 %v1148, 96
  %v1196 = vpop.permute.xlu0 %1195
  %vm1213 = vcmask 785408
  %v1214 = vsel %vm1213, %v826, %v1166
  %v1215 = vsel %vm1213, %v827, %v1168
  %v1216 = vsel %vm1213, %v828, %v1170
  %v1217 = vsel %vm1213, %v829, %v1172
  %v1218 = vsel %vm1213, %v830, %v1174
  %v1219 = vsel %vm1213, %v831, %v1176
  %v1220 = vsel %vm1213, %v832, %v1178
  %v1221 = vsel %vm1213, %v833, %v1180
  %v1222 = vsel %vm1213, %v834, %v1182
  %v1223 = vsel %vm1213, %v835, %v1184
  %v1224 = vsel %vm1213, %v836, %v1186
  %v1225 = vsel %vm1213, %v837, %v1188
  %v1226 = vsel %vm1213, %v838, %v1190
  %v1227 = vsel %vm1213, %v839, %v1192
  %v1228 = vsel %vm1213, %v840, %v1194
  %v1229 = vsel %vm1213, %v841, %v1196
  %v1231 = vlaneseq
  %v1232 = vshrl.u32 %v1231, 7
  %v1233 = vsub.s32 0, %v1232
  %v1234 = vrot.slane %v258, %v1233
  %vm1236 = vcmask 179200
  %v1237 = vsel %vm1236, %v1166, 0
  %v1239 = vsel %vm1236, %v1168, 0
  %v1241 = vsel %vm1236, %v1170, 0
  %v1243 = vsel %vm1236, %v1172, 0
  %v1245 = vsel %vm1236, %v1174, 0
  %v1247 = vsel %vm1236, %v1176, 0
  %v1249 = vsel %vm1236, %v1178, 0
  %v1251 = vsel %vm1236, %v1180, 0
  %v1253 = vsel %vm1236, %v1182, 0
  %v1255 = vsel %vm1236, %v1184, 0
  %v1257 = vsel %vm1236, %v1186, 0
  %v1259 = vsel %vm1236, %v1188, 0
  %v1261 = vsel %vm1236, %v1190, 0
  %v1263 = vsel %vm1236, %v1192, 0
  %v1265 = vsel %vm1236, %v1194, 0
  %v1267 = vsel %vm1236, %v1196, 0
  %vm1269 = vcmask 1045504
  %v1271 = vsel %vm1269, %v257, 0
  %1273 = vmatprep.subr.mxu0 0.0
  %1274 = vmatpush1.msra.mxu0 %v254
  %1275 = vmatprep.subr.mxu0 0.0
  %1276 = vmatpush1.msra.mxu0 %v253
  %1277 = vmatprep.subr.mxu0 0.0
  %1278 = vmatpush1.msra.mxu0 %v252
  %1279 = vmatprep.subr.mxu0 0.0
  %1280 = vmatpush1.msra.mxu0 %v251
  %1281 = vmatprep.subr.mxu0 0.0
  %1282 = vmatpush1.msra.mxu0 %v250
  %1283 = vmatprep.subr.mxu0 0.0
  %1284 = vmatpush1.msra.mxu0 %v249
  %1285 = vmatprep.subr.mxu0 0.0
  %1286 = vmatpush1.msra.mxu0 %v248
  %1287 = vmatprep.subr.mxu0 0.0
  %1288 = vmatpush1.msra.mxu0 %v247
  %1289 = vmatprep.subr.mxu0 0.0
  %1290 = vmatpush1.msra.mxu0 %v246
  %1291 = vmatprep.subr.mxu0 0.0
  %1292 = vmatpush1.msra.mxu0 %v245
  %1293 = vmatprep.subr.mxu0 0.0
  %1294 = vmatpush1.msra.mxu0 %v244
  %1295 = vmatprep.subr.mxu0 0.0
  %1296 = vmatpush1.msra.mxu0 %v243
  %1297 = vmatprep.subr.mxu0 0.0
  %1298 = vmatpush1.msra.mxu0 %v242
  %1299 = vmatprep.subr.mxu0 0.0
  %1300 = vmatpush1.msra.mxu0 %v241
  %1301 = vmatprep.subr.mxu0 0.0
  %1302 = vmatpush1.msra.mxu0 %v240
  %1303 = vmatprep.subr.mxu0 0.0
  %1304 = vmatpush1.msra.mxu0 %v239
  %1305 = vmatprep.subr.mxu0 0.0
  %1306 = vmatpush2.msra.mxu0 0.0
  %1307 = vmatprep.subr.mxu0 0.0
  %1308 = vmatpush2.msra.mxu0 0.0
  %1309 = vmatprep.subr.mxu0 0.0
  %1310 = vmatpush2.msra.mxu0 0.0
  %1311 = vmatprep.subr.mxu0 0.0
  %1312 = vmatpush2.msra.mxu0 0.0
  %1313 = vmatprep.subr.mxu0 0.0
  %1314 = vmatpush2.msra.mxu0 0.0
  %1315 = vmatprep.subr.mxu0 0.0
  %1316 = vmatpush2.msra.mxu0 0.0
  %1317 = vmatprep.subr.mxu0 0.0
  %1318 = vmatpush2.msra.mxu0 0.0
  %1319 = vmatprep.subr.mxu0 0.0
  %1320 = vmatpush2.msra.mxu0 0.0
  %1321 = vmatprep.subr.mxu0 0.0
  %1322 = vmatpush2.msra.mxu0 0.0
  %1323 = vmatprep.subr.mxu0 0.0
  %1324 = vmatpush2.msra.mxu0 0.0
  %1325 = vmatprep.subr.mxu0 0.0
  %1326 = vmatpush2.msra.mxu0 0.0
  %1327 = vmatprep.subr.mxu0 0.0
  %1328 = vmatpush2.msra.mxu0 0.0
  %1329 = vmatprep.subr.mxu0 0.0
  %1330 = vmatpush2.msra.mxu0 0.0
  %1331 = vmatprep.subr.mxu0 0.0
  %1332 = vmatpush2.msra.mxu0 %v1271
  %1333 = vmatprep.subr.mxu0 0.0
  %1334 = vmatpush2.msra.mxu0 %v256
  %1335 = vmatprep.subr.mxu0 0.0
  %1336 = vmatpush2.msra.mxu0 %v255
  %1337 = vmatprep.mubr.f32.mxu0 %v1237
  %1338 = vmatmul.mubr.f32.gmra.mxu0 %v1214
  %v1339 = vpop.f32.mrf.mxu0
  %v1340 = vadd.f32 %v1234, %v1339
  %v1341 = vpop.f32.mrf.mxu0
  %1342 = vmatprep.mubr.f32.mxu0 %v1239
  %1343 = vmatmul.mubr.f32.gmra.mxu0 %v1215
  %v1344 = vpop.f32.mrf.mxu0
  %v1345 = vadd.f32 %v1234, %v1344
  %v1346 = vpop.f32.mrf.mxu0
  %1347 = vmatprep.mubr.f32.mxu0 %v1241
  %1348 = vmatmul.mubr.f32.gmra.mxu0 %v1216
  %v1349 = vpop.f32.mrf.mxu0
  %v1350 = vadd.f32 %v1234, %v1349
  %v1351 = vpop.f32.mrf.mxu0
  %1352 = vmatprep.mubr.f32.mxu0 %v1243
  %1353 = vmatmul.mubr.f32.gmra.mxu0 %v1217
  %v1354 = vpop.f32.mrf.mxu0
  %v1355 = vadd.f32 %v1234, %v1354
  %v1356 = vpop.f32.mrf.mxu0
  %1357 = vmatprep.mubr.f32.mxu0 %v1245
  %1358 = vmatmul.mubr.f32.gmra.mxu0 %v1218
  %v1359 = vpop.f32.mrf.mxu0
  %v1360 = vadd.f32 %v1234, %v1359
  %v1361 = vpop.f32.mrf.mxu0
  %1362 = vmatprep.mubr.f32.mxu0 %v1247
  %1363 = vmatmul.mubr.f32.gmra.mxu0 %v1219
  %v1364 = vpop.f32.mrf.mxu0
  %v1365 = vadd.f32 %v1234, %v1364
  %v1366 = vpop.f32.mrf.mxu0
  %1367 = vmatprep.mubr.f32.mxu0 %v1249
  %1368 = vmatmul.mubr.f32.gmra.mxu0 %v1220
  %v1369 = vpop.f32.mrf.mxu0
  %v1370 = vadd.f32 %v1234, %v1369
  %v1371 = vpop.f32.mrf.mxu0
  %1372 = vmatprep.mubr.f32.mxu0 %v1251
  %1373 = vmatmul.mubr.f32.gmra.mxu0 %v1221
  %v1374 = vpop.f32.mrf.mxu0
  %v1375 = vadd.f32 %v1234, %v1374
  %v1376 = vpop.f32.mrf.mxu0
  %1377 = vmatprep.mubr.f32.mxu0 %v1253
  %1378 = vmatmul.mubr.f32.gmra.mxu0 %v1222
  %v1379 = vpop.f32.mrf.mxu0
  %v1380 = vadd.f32 %v1234, %v1379
  %v1381 = vpop.f32.mrf.mxu0
  %1382 = vmatprep.mubr.f32.mxu0 %v1255
  %1383 = vmatmul.mubr.f32.gmra.mxu0 %v1223
  %v1384 = vpop.f32.mrf.mxu0
  %v1385 = vadd.f32 %v1234, %v1384
  %v1386 = vpop.f32.mrf.mxu0
  %1387 = vmatprep.mubr.f32.mxu0 %v1257
  %1388 = vmatmul.mubr.f32.gmra.mxu0 %v1224
  %v1389 = vpop.f32.mrf.mxu0
  %v1390 = vadd.f32 %v1234, %v1389
  %v1391 = vpop.f32.mrf.mxu0
  %1392 = vmatprep.mubr.f32.mxu0 %v1259
  %1393 = vmatmul.mubr.f32.gmra.mxu0 %v1225
  %v1394 = vpop.f32.mrf.mxu0
  %v1395 = vadd.f32 %v1234, %v1394
  %v1396 = vpop.f32.mrf.mxu0
  %1397 = vmatprep.mubr.f32.mxu0 %v1261
  %1398 = vmatmul.mubr.f32.gmra.mxu0 %v1226
  %v1399 = vpop.f32.mrf.mxu0
  %v1400 = vadd.f32 %v1234, %v1399
  %v1401 = vpop.f32.mrf.mxu0
  %1402 = vmatprep.mubr.f32.mxu0 %v1263
  %1403 = vmatmul.mubr.f32.gmra.mxu0 %v1227
  %v1404 = vpop.f32.mrf.mxu0
  %v1405 = vadd.f32 %v1234, %v1404
  %v1406 = vpop.f32.mrf.mxu0
  %1407 = vmatprep.mubr.f32.mxu0 %v1265
  %1408 = vmatmul.mubr.f32.gmra.mxu0 %v1228
  %v1409 = vpop.f32.mrf.mxu0
  %v1410 = vadd.f32 %v1234, %v1409
  %v1411 = vpop.f32.mrf.mxu0
  %1412 = vmatprep.mubr.f32.mxu0 %v1267
  %1413 = vmatmul.mubr.f32.gmra.mxu0 %v1229
  %v1414 = vpop.f32.mrf.mxu0
  %v1415 = vadd.f32 %v1234, %v1414
  %v1416 = vpop.f32.mrf.mxu0
  %1417 = vdwg.mxu0
  %v1418 = vmax.f32 %v1340, 0.0
  %v1419 = vmax.f32 %v1345, 0.0
  %v1420 = vmax.f32 %v1350, 0.0
  %v1421 = vmax.f32 %v1355, 0.0
  %v1422 = vmax.f32 %v1360, 0.0
  %v1423 = vmax.f32 %v1365, 0.0
  %v1424 = vmax.f32 %v1370, 0.0
  %v1425 = vmax.f32 %v1375, 0.0
  %v1426 = vmax.f32 %v1380, 0.0
  %v1427 = vmax.f32 %v1385, 0.0
  %v1428 = vmax.f32 %v1390, 0.0
  %v1429 = vmax.f32 %v1395, 0.0
  %v1430 = vmax.f32 %v1400, 0.0
  %v1431 = vmax.f32 %v1405, 0.0
  %v1432 = vmax.f32 %v1410, 0.0
  %v1433 = vmax.f32 %v1415, 0.0
  %s1434 = scalar_lea.vmem [#allocation2], 960
  %1435 = vst.msk [vmem:[%s1434] sm:$0xff] %vm41, %v1418
  %1436 = vst.msk [vmem:[%s1434 + $0x10] sm:$0xff] %vm41, %v1419
  %1437 = vst.msk [vmem:[%s1434 + $0x20] sm:$0xff] %vm41, %v1420
  %1438 = vst.msk [vmem:[%s1434 + $0x30] sm:$0xff] %vm41, %v1421
  %1439 = vst.msk [vmem:[%s1434 + $0x40] sm:$0xff] %vm41, %v1422
  %1440 = vst.msk [vmem:[%s1434 + $0x50] sm:$0xff] %vm41, %v1423
  %1441 = vst.msk [vmem:[%s1434 + $0x60] sm:$0xff] %vm41, %v1424
  %1442 = vst.msk [vmem:[%s1434 + $0x70] sm:$0xff] %vm41, %v1425
  %1443 = vst.msk [vmem:[%s1434 + $0xa0] sm:$0xff] %vm41, %v1426
  %1444 = vst.msk [vmem:[%s1434 + $0xb0] sm:$0xff] %vm41, %v1427
  %1445 = vst.msk [vmem:[%s1434 + $0xc0] sm:$0xff] %vm41, %v1428
  %1446 = vst.msk [vmem:[%s1434 + $0xd0] sm:$0xff] %vm41, %v1429
  %1447 = vst.msk [vmem:[%s1434 + $0xe0] sm:$0xff] %vm41, %v1430
  %1448 = vst.msk [vmem:[%s1434 + $0xf0] sm:$0xff] %vm41, %v1431
  %1449 = vst.msk [vmem:[%s1434 + $0x100] sm:$0xff] %vm41, %v1432
  %1450 = vst.msk [vmem:[%s1434 + $0x110] sm:$0xff] %vm41, %v1433
  %1451 = vrot.lane.b32.xlu0 %v203, 116
  %v1452 = vpop.permute.xlu0 %1451
  %1453 = vrot.lane.b32.xlu0 %v205, 116
  %v1454 = vpop.permute.xlu0 %1453
  %1455 = vrot.lane.b32.xlu0 %v207, 116
  %v1456 = vpop.permute.xlu0 %1455
  %1457 = vrot.lane.b32.xlu0 %v209, 116
  %v1458 = vpop.permute.xlu0 %1457
  %1459 = vrot.lane.b32.xlu0 %v211, 116
  %v1460 = vpop.permute.xlu0 %1459
  %1461 = vrot.lane.b32.xlu0 %v213, 116
  %v1462 = vpop.permute.xlu0 %1461
  %1463 = vrot.lane.b32.xlu0 %v215, 116
  %v1464 = vpop.permute.xlu0 %1463
  %1465 = vrot.lane.b32.xlu0 %v217, 116
  %v1466 = vpop.permute.xlu0 %1465
  %1467 = vrot.lane.b32.xlu0 %v221, 116
  %v1468 = vpop.permute.xlu0 %1467
  %1469 = vrot.lane.b32.xlu0 %v223, 116
  %v1470 = vpop.permute.xlu0 %1469
  %1471 = vrot.lane.b32.xlu0 %v225, 116
  %v1472 = vpop.permute.xlu0 %1471
  %1473 = vrot.lane.b32.xlu0 %v227, 116
  %v1474 = vpop.permute.xlu0 %1473
  %1475 = vrot.lane.b32.xlu0 %v229, 116
  %v1476 = vpop.permute.xlu0 %1475
  %1477 = vrot.lane.b32.xlu0 %v231, 116
  %v1478 = vpop.permute.xlu0 %1477
  %1479 = vrot.lane.b32.xlu0 %v233, 116
  %v1480 = vpop.permute.xlu0 %1479
  %1481 = vrot.lane.b32.xlu0 %v235, 116
  %v1482 = vpop.permute.xlu0 %1481
  %1499 = vrot.lane.b32.xlu0 %v294, 12
  %v1500 = vpop.permute.xlu0 %1499
  %1501 = vrot.lane.b32.xlu0 %v297, 12
  %v1502 = vpop.permute.xlu0 %1501
  %1503 = vrot.lane.b32.xlu0 %v300, 12
  %v1504 = vpop.permute.xlu0 %1503
  %1505 = vrot.lane.b32.xlu0 %v303, 12
  %v1506 = vpop.permute.xlu0 %1505
  %1507 = vrot.lane.b32.xlu0 %v306, 12
  %v1508 = vpop.permute.xlu0 %1507
  %1509 = vrot.lane.b32.xlu0 %v309, 12
  %v1510 = vpop.permute.xlu0 %1509
  %1511 = vrot.lane.b32.xlu0 %v312, 12
  %v1512 = vpop.permute.xlu0 %1511
  %1513 = vrot.lane.b32.xlu0 %v315, 12
  %v1514 = vpop.permute.xlu0 %1513
  %1515 = vrot.lane.b32.xlu0 %v318, 12
  %v1516 = vpop.permute.xlu0 %1515
  %1517 = vrot.lane.b32.xlu0 %v321, 12
  %v1518 = vpop.permute.xlu0 %1517
  %1519 = vrot.lane.b32.xlu0 %v324, 12
  %v1520 = vpop.permute.xlu0 %1519
  %1521 = vrot.lane.b32.xlu0 %v327, 12
  %v1522 = vpop.permute.xlu0 %1521
  %1523 = vrot.lane.b32.xlu0 %v330, 12
  %v1524 = vpop.permute.xlu0 %1523
  %1525 = vrot.lane.b32.xlu0 %v333, 12
  %v1526 = vpop.permute.xlu0 %1525
  %1527 = vrot.lane.b32.xlu0 %v336, 12
  %v1528 = vpop.permute.xlu0 %1527
  %1529 = vrot.lane.b32.xlu0 %v339, 12
  %v1530 = vpop.permute.xlu0 %1529
  %1547 = vrot.lane.b32.xlu0 %v203, 122
  %v1548 = vpop.permute.xlu0 %1547
  %1549 = vrot.lane.b32.xlu0 %v205, 122
  %v1550 = vpop.permute.xlu0 %1549
  %1551 = vrot.lane.b32.xlu0 %v207, 122
  %v1552 = vpop.permute.xlu0 %1551
  %1553 = vrot.lane.b32.xlu0 %v209, 122
  %v1554 = vpop.permute.xlu0 %1553
  %1555 = vrot.lane.b32.xlu0 %v211, 122
  %v1556 = vpop.permute.xlu0 %1555
  %1557 = vrot.lane.b32.xlu0 %v213, 122
  %v1558 = vpop.permute.xlu0 %1557
  %1559 = vrot.lane.b32.xlu0 %v215, 122
  %v1560 = vpop.permute.xlu0 %1559
  %1561 = vrot.lane.b32.xlu0 %v217, 122
  %v1562 = vpop.permute.xlu0 %1561
  %1563 = vrot.lane.b32.xlu0 %v221, 122
  %v1564 = vpop.permute.xlu0 %1563
  %1565 = vrot.lane.b32.xlu0 %v223, 122
  %v1566 = vpop.permute.xlu0 %1565
  %1567 = vrot.lane.b32.xlu0 %v225, 122
  %v1568 = vpop.permute.xlu0 %1567
  %1569 = vrot.lane.b32.xlu0 %v227, 122
  %v1570 = vpop.permute.xlu0 %1569
  %1571 = vrot.lane.b32.xlu0 %v229, 122
  %v1572 = vpop.permute.xlu0 %1571
  %1573 = vrot.lane.b32.xlu0 %v231, 122
  %v1574 = vpop.permute.xlu0 %1573
  %1575 = vrot.lane.b32.xlu0 %v233, 122
  %v1576 = vpop.permute.xlu0 %1575
  %1577 = vrot.lane.b32.xlu0 %v235, 122
  %v1578 = vpop.permute.xlu0 %1577
  %1595 = vrot.lane.b32.xlu0 %v294, 18
  %v1596 = vpop.permute.xlu0 %1595
  %1597 = vrot.lane.b32.xlu0 %v297, 18
  %v1598 = vpop.permute.xlu0 %1597
  %1599 = vrot.lane.b32.xlu0 %v300, 18
  %v1600 = vpop.permute.xlu0 %1599
  %1601 = vrot.lane.b32.xlu0 %v303, 18
  %v1602 = vpop.permute.xlu0 %1601
  %1603 = vrot.lane.b32.xlu0 %v306, 18
  %v1604 = vpop.permute.xlu0 %1603
  %1605 = vrot.lane.b32.xlu0 %v309, 18
  %v1606 = vpop.permute.xlu0 %1605
  %1607 = vrot.lane.b32.xlu0 %v312, 18
  %v1608 = vpop.permute.xlu0 %1607
  %1609 = vrot.lane.b32.xlu0 %v315, 18
  %v1610 = vpop.permute.xlu0 %1609
  %1611 = vrot.lane.b32.xlu0 %v318, 18
  %v1612 = vpop.permute.xlu0 %1611
  %1613 = vrot.lane.b32.xlu0 %v321, 18
  %v1614 = vpop.permute.xlu0 %1613
  %1615 = vrot.lane.b32.xlu0 %v324, 18
  %v1616 = vpop.permute.xlu0 %1615
  %1617 = vrot.lane.b32.xlu0 %v327, 18
  %v1618 = vpop.permute.xlu0 %1617
  %1619 = vrot.lane.b32.xlu0 %v330, 18
  %v1620 = vpop.permute.xlu0 %1619
  %1621 = vrot.lane.b32.xlu0 %v333, 18
  %v1622 = vpop.permute.xlu0 %1621
  %1623 = vrot.lane.b32.xlu0 %v336, 18
  %v1624 = vpop.permute.xlu0 %1623
  %1625 = vrot.lane.b32.xlu0 %v339, 18
  %v1626 = vpop.permute.xlu0 %1625
  %v1643 = vsel %vm1035, %v1452, %v1500
  %v1644 = vsel %vm1035, %v1454, %v1502
  %v1645 = vsel %vm1035, %v1456, %v1504
  %v1646 = vsel %vm1035, %v1458, %v1506
  %v1647 = vsel %vm1035, %v1460, %v1508
  %v1648 = vsel %vm1035, %v1462, %v1510
  %v1649 = vsel %vm1035, %v1464, %v1512
  %v1650 = vsel %vm1035, %v1466, %v1514
  %v1651 = vsel %vm1035, %v1468, %v1516
  %v1652 = vsel %vm1035, %v1470, %v1518
  %v1653 = vsel %vm1035, %v1472, %v1520
  %v1654 = vsel %vm1035, %v1474, %v1522
  %v1655 = vsel %vm1035, %v1476, %v1524
  %v1656 = vsel %vm1035, %v1478, %v1526
  %v1657 = vsel %vm1035, %v1480, %v1528
  %v1658 = vsel %vm1035, %v1482, %v1530
  %v1659 = vsel %vm1052, %v1643, %v1500
  %v1660 = vsel %vm1052, %v1644, %v1502
  %v1661 = vsel %vm1052, %v1645, %v1504
  %v1662 = vsel %vm1052, %v1646, %v1506
  %v1663 = vsel %vm1052, %v1647, %v1508
  %v1664 = vsel %vm1052, %v1648, %v1510
  %v1665 = vsel %vm1052, %v1649, %v1512
  %v1666 = vsel %vm1052, %v1650, %v1514
  %v1667 = vsel %vm1052, %v1651, %v1516
  %v1668 = vsel %vm1052, %v1652, %v1518
  %v1669 = vsel %vm1052, %v1653, %v1520
  %v1670 = vsel %vm1052, %v1654, %v1522
  %v1671 = vsel %vm1052, %v1655, %v1524
  %v1672 = vsel %vm1052, %v1656, %v1526
  %v1673 = vsel %vm1052, %v1657, %v1528
  %v1674 = vsel %vm1052, %v1658, %v1530
  %v1675 = vsel %vm638, %v1659, %v1500
  %v1676 = vsel %vm638, %v1660, %v1502
  %v1677 = vsel %vm638, %v1661, %v1504
  %v1678 = vsel %vm638, %v1662, %v1506
  %v1679 = vsel %vm638, %v1663, %v1508
  %v1680 = vsel %vm638, %v1664, %v1510
  %v1681 = vsel %vm638, %v1665, %v1512
  %v1682 = vsel %vm638, %v1666, %v1514
  %v1683 = vsel %vm638, %v1667, %v1516
  %v1684 = vsel %vm638, %v1668, %v1518
  %v1685 = vsel %vm638, %v1669, %v1520
  %v1686 = vsel %vm638, %v1670, %v1522
  %v1687 = vsel %vm638, %v1671, %v1524
  %v1688 = vsel %vm638, %v1672, %v1526
  %v1689 = vsel %vm638, %v1673, %v1528
  %v1690 = vsel %vm638, %v1674, %v1530
  %v1691 = vsel %vm655, %v1675, %v1548
  %v1692 = vsel %vm655, %v1676, %v1550
  %v1693 = vsel %vm655, %v1677, %v1552
  %v1694 = vsel %vm655, %v1678, %v1554
  %v1695 = vsel %vm655, %v1679, %v1556
  %v1696 = vsel %vm655, %v1680, %v1558
  %v1697 = vsel %vm655, %v1681, %v1560
  %v1698 = vsel %vm655, %v1682, %v1562
  %v1699 = vsel %vm655, %v1683, %v1564
  %v1700 = vsel %vm655, %v1684, %v1566
  %v1701 = vsel %vm655, %v1685, %v1568
  %v1702 = vsel %vm655, %v1686, %v1570
  %v1703 = vsel %vm655, %v1687, %v1572
  %v1704 = vsel %vm655, %v1688, %v1574
  %v1705 = vsel %vm655, %v1689, %v1576
  %v1706 = vsel %vm655, %v1690, %v1578
  %v1707 = vsel %vm672, %v1691, %v1548
  %v1708 = vsel %vm672, %v1692, %v1550
  %v1709 = vsel %vm672, %v1693, %v1552
  %v1710 = vsel %vm672, %v1694, %v1554
  %v1711 = vsel %vm672, %v1695, %v1556
  %v1712 = vsel %vm672, %v1696, %v1558
  %v1713 = vsel %vm672, %v1697, %v1560
  %v1714 = vsel %vm672, %v1698, %v1562
  %v1715 = vsel %vm672, %v1699, %v1564
  %v1716 = vsel %vm672, %v1700, %v1566
  %v1717 = vsel %vm672, %v1701, %v1568
  %v1718 = vsel %vm672, %v1702, %v1570
  %v1719 = vsel %vm672, %v1703, %v1572
  %v1720 = vsel %vm672, %v1704, %v1574
  %v1721 = vsel %vm672, %v1705, %v1576
  %v1722 = vsel %vm672, %v1706, %v1578
  %v1723 = vsel %vm689, %v1707, %v1596
  %v1724 = vsel %vm689, %v1708, %v1598
  %v1725 = vsel %vm689, %v1709, %v1600
  %v1726 = vsel %vm689, %v1710, %v1602
  %v1727 = vsel %vm689, %v1711, %v1604
  %v1728 = vsel %vm689, %v1712, %v1606
  %v1729 = vsel %vm689, %v1713, %v1608
  %v1730 = vsel %vm689, %v1714, %v1610
  %v1731 = vsel %vm689, %v1715, %v1612
  %v1732 = vsel %vm689, %v1716, %v1614
  %v1733 = vsel %vm689, %v1717, %v1616
  %v1734 = vsel %vm689, %v1718, %v1618
  %v1735 = vsel %vm689, %v1719, %v1620
  %v1736 = vsel %vm689, %v1720, %v1622
  %v1737 = vsel %vm689, %v1721, %v1624
  %v1738 = vsel %vm689, %v1722, %v1626
  %v1739 = vsel %vm706, %v1723, %v1596
  %v1740 = vsel %vm706, %v1724, %v1598
  %v1741 = vsel %vm706, %v1725, %v1600
  %v1742 = vsel %vm706, %v1726, %v1602
  %v1743 = vsel %vm706, %v1727, %v1604
  %v1744 = vsel %vm706, %v1728, %v1606
  %v1745 = vsel %vm706, %v1729, %v1608
  %v1746 = vsel %vm706, %v1730, %v1610
  %v1747 = vsel %vm706, %v1731, %v1612
  %v1748 = vsel %vm706, %v1732, %v1614
  %v1749 = vsel %vm706, %v1733, %v1616
  %v1750 = vsel %vm706, %v1734, %v1618
  %v1751 = vsel %vm706, %v1735, %v1620
  %v1752 = vsel %vm706, %v1736, %v1622
  %v1753 = vsel %vm706, %v1737, %v1624
  %v1754 = vsel %vm706, %v1738, %v1626
  %v1755 = vsel %vm723, %v1739, %v1596
  %v1756 = vsel %vm723, %v1740, %v1598
  %v1757 = vsel %vm723, %v1741, %v1600
  %v1758 = vsel %vm723, %v1742, %v1602
  %v1759 = vsel %vm723, %v1743, %v1604
  %v1760 = vsel %vm723, %v1744, %v1606
  %v1761 = vsel %vm723, %v1745, %v1608
  %v1762 = vsel %vm723, %v1746, %v1610
  %v1763 = vsel %vm723, %v1747, %v1612
  %v1764 = vsel %vm723, %v1748, %v1614
  %v1765 = vsel %vm723, %v1749, %v1616
  %v1766 = vsel %vm723, %v1750, %v1618
  %v1767 = vsel %vm723, %v1751, %v1620
  %v1768 = vsel %vm723, %v1752, %v1622
  %v1769 = vsel %vm723, %v1753, %v1624
  %v1770 = vsel %vm723, %v1754, %v1626
  %v1771 = vsel %vm740, %v1755, %v203
  %v1772 = vsel %vm740, %v1756, %v205
  %v1773 = vsel %vm740, %v1757, %v207
  %v1774 = vsel %vm740, %v1758, %v209
  %v1775 = vsel %vm740, %v1759, %v211
  %v1776 = vsel %vm740, %v1760, %v213
  %v1777 = vsel %vm740, %v1761, %v215
  %v1778 = vsel %vm740, %v1762, %v217
  %v1779 = vsel %vm740, %v1763, %v221
  %v1780 = vsel %vm740, %v1764, %v223
  %v1781 = vsel %vm740, %v1765, %v225
  %v1782 = vsel %vm740, %v1766, %v227
  %v1783 = vsel %vm740, %v1767, %v229
  %v1784 = vsel %vm740, %v1768, %v231
  %v1785 = vsel %vm740, %v1769, %v233
  %v1786 = vsel %vm740, %v1770, %v235
  %v1787 = vsel %vm757, %v1771, %v203
  %v1788 = vsel %vm757, %v1772, %v205
  %v1789 = vsel %vm757, %v1773, %v207
  %v1790 = vsel %vm757, %v1774, %v209
  %v1791 = vsel %vm757, %v1775, %v211
  %v1792 = vsel %vm757, %v1776, %v213
  %v1793 = vsel %vm757, %v1777, %v215
  %v1794 = vsel %vm757, %v1778, %v217
  %v1795 = vsel %vm757, %v1779, %v221
  %v1796 = vsel %vm757, %v1780, %v223
  %v1797 = vsel %vm757, %v1781, %v225
  %v1798 = vsel %vm757, %v1782, %v227
  %v1799 = vsel %vm757, %v1783, %v229
  %v1800 = vsel %vm757, %v1784, %v231
  %v1801 = vsel %vm757, %v1785, %v233
  %v1802 = vsel %vm757, %v1786, %v235
  %v1803 = vsel %vm774, %v1787, %v351
  %v1804 = vsel %vm774, %v1788, %v353
  %v1805 = vsel %vm774, %v1789, %v355
  %v1806 = vsel %vm774, %v1790, %v357
  %v1807 = vsel %vm774, %v1791, %v359
  %v1808 = vsel %vm774, %v1792, %v361
  %v1809 = vsel %vm774, %v1793, %v363
  %v1810 = vsel %vm774, %v1794, %v365
  %v1811 = vsel %vm774, %v1795, %v367
  %v1812 = vsel %vm774, %v1796, %v369
  %v1813 = vsel %vm774, %v1797, %v371
  %v1814 = vsel %vm774, %v1798, %v373
  %v1815 = vsel %vm774, %v1799, %v375
  %v1816 = vsel %vm774, %v1800, %v377
  %v1817 = vsel %vm774, %v1801, %v379
  %v1818 = vsel %vm774, %v1802, %v381
  %v1819 = vsel %vm791, %v1803, %v351
  %v1820 = vsel %vm791, %v1804, %v353
  %v1821 = vsel %vm791, %v1805, %v355
  %v1822 = vsel %vm791, %v1806, %v357
  %v1823 = vsel %vm791, %v1807, %v359
  %v1824 = vsel %vm791, %v1808, %v361
  %v1825 = vsel %vm791, %v1809, %v363
  %v1826 = vsel %vm791, %v1810, %v365
  %v1827 = vsel %vm791, %v1811, %v367
  %v1828 = vsel %vm791, %v1812, %v369
  %v1829 = vsel %vm791, %v1813, %v371
  %v1830 = vsel %vm791, %v1814, %v373
  %v1831 = vsel %vm791, %v1815, %v375
  %v1832 = vsel %vm791, %v1816, %v377
  %v1833 = vsel %vm791, %v1817, %v379
  %v1834 = vsel %vm791, %v1818, %v381
  %v1835 = vsel %vm808, %v1819, %v351
  %v1836 = vsel %vm808, %v1820, %v353
  %v1837 = vsel %vm808, %v1821, %v355
  %v1838 = vsel %vm808, %v1822, %v357
  %v1839 = vsel %vm808, %v1823, %v359
  %v1840 = vsel %vm808, %v1824, %v361
  %v1841 = vsel %vm808, %v1825, %v363
  %v1842 = vsel %vm808, %v1826, %v365
  %v1843 = vsel %vm808, %v1827, %v367
  %v1844 = vsel %vm808, %v1828, %v369
  %v1845 = vsel %vm808, %v1829, %v371
  %v1846 = vsel %vm808, %v1830, %v373
  %v1847 = vsel %vm808, %v1831, %v375
  %v1848 = vsel %vm808, %v1832, %v377
  %v1849 = vsel %vm808, %v1833, %v379
  %v1850 = vsel %vm808, %v1834, %v381
  %v1851 = vsel %vm825, %v1835, %v399
  %v1852 = vsel %vm825, %v1836, %v401
  %v1853 = vsel %vm825, %v1837, %v403
  %v1854 = vsel %vm825, %v1838, %v405
  %v1855 = vsel %vm825, %v1839, %v407
  %v1856 = vsel %vm825, %v1840, %v409
  %v1857 = vsel %vm825, %v1841, %v411
  %v1858 = vsel %vm825, %v1842, %v413
  %v1859 = vsel %vm825, %v1843, %v415
  %v1860 = vsel %vm825, %v1844, %v417
  %v1861 = vsel %vm825, %v1845, %v419
  %v1862 = vsel %vm825, %v1846, %v421
  %v1863 = vsel %vm825, %v1847, %v423
  %v1864 = vsel %vm825, %v1848, %v425
  %v1865 = vsel %vm825, %v1849, %v427
  %v1866 = vsel %vm825, %v1850, %v429
  %1867 = vrot.lane.b32.xlu0 %v203, 38
  %v1868 = vpop.permute.xlu0 %1867
  %1869 = vrot.lane.b32.xlu0 %v205, 38
  %v1870 = vpop.permute.xlu0 %1869
  %1871 = vrot.lane.b32.xlu0 %v207, 38
  %v1872 = vpop.permute.xlu0 %1871
  %1873 = vrot.lane.b32.xlu0 %v209, 38
  %v1874 = vpop.permute.xlu0 %1873
  %1875 = vrot.lane.b32.xlu0 %v211, 38
  %v1876 = vpop.permute.xlu0 %1875
  %1877 = vrot.lane.b32.xlu0 %v213, 38
  %v1878 = vpop.permute.xlu0 %1877
  %1879 = vrot.lane.b32.xlu0 %v215, 38
  %v1880 = vpop.permute.xlu0 %1879
  %1881 = vrot.lane.b32.xlu0 %v217, 38
  %v1882 = vpop.permute.xlu0 %1881
  %1883 = vrot.lane.b32.xlu0 %v221, 38
  %v1884 = vpop.permute.xlu0 %1883
  %1885 = vrot.lane.b32.xlu0 %v223, 38
  %v1886 = vpop.permute.xlu0 %1885
  %1887 = vrot.lane.b32.xlu0 %v225, 38
  %v1888 = vpop.permute.xlu0 %1887
  %1889 = vrot.lane.b32.xlu0 %v227, 38
  %v1890 = vpop.permute.xlu0 %1889
  %1891 = vrot.lane.b32.xlu0 %v229, 38
  %v1892 = vpop.permute.xlu0 %1891
  %1893 = vrot.lane.b32.xlu0 %v231, 38
  %v1894 = vpop.permute.xlu0 %1893
  %1895 = vrot.lane.b32.xlu0 %v233, 38
  %v1896 = vpop.permute.xlu0 %1895
  %1897 = vrot.lane.b32.xlu0 %v235, 38
  %v1898 = vpop.permute.xlu0 %1897
  %1915 = vrot.lane.b32.xlu0 %v294, 62
  %v1916 = vpop.permute.xlu0 %1915
  %1917 = vrot.lane.b32.xlu0 %v297, 62
  %v1918 = vpop.permute.xlu0 %1917
  %1919 = vrot.lane.b32.xlu0 %v300, 62
  %v1920 = vpop.permute.xlu0 %1919
  %1921 = vrot.lane.b32.xlu0 %v303, 62
  %v1922 = vpop.permute.xlu0 %1921
  %1923 = vrot.lane.b32.xlu0 %v306, 62
  %v1924 = vpop.permute.xlu0 %1923
  %1925 = vrot.lane.b32.xlu0 %v309, 62
  %v1926 = vpop.permute.xlu0 %1925
  %1927 = vrot.lane.b32.xlu0 %v312, 62
  %v1928 = vpop.permute.xlu0 %1927
  %1929 = vrot.lane.b32.xlu0 %v315, 62
  %v1930 = vpop.permute.xlu0 %1929
  %1931 = vrot.lane.b32.xlu0 %v318, 62
  %v1932 = vpop.permute.xlu0 %1931
  %1933 = vrot.lane.b32.xlu0 %v321, 62
  %v1934 = vpop.permute.xlu0 %1933
  %1935 = vrot.lane.b32.xlu0 %v324, 62
  %v1936 = vpop.permute.xlu0 %1935
  %1937 = vrot.lane.b32.xlu0 %v327, 62
  %v1938 = vpop.permute.xlu0 %1937
  %1939 = vrot.lane.b32.xlu0 %v330, 62
  %v1940 = vpop.permute.xlu0 %1939
  %1941 = vrot.lane.b32.xlu0 %v333, 62
  %v1942 = vpop.permute.xlu0 %1941
  %1943 = vrot.lane.b32.xlu0 %v336, 62
  %v1944 = vpop.permute.xlu0 %1943
  %1945 = vrot.lane.b32.xlu0 %v339, 62
  %v1946 = vpop.permute.xlu0 %1945
  %1963 = vrot.lane.b32.xlu0 %v219, 12
  %v1964 = vpop.permute.xlu0 %1963
  %1965 = vrot.lane.b32.xlu0 %v237, 12
  %v1966 = vpop.permute.xlu0 %1965
  %1969 = vrot.lane.b32.xlu0 %v346, 36
  %v1970 = vpop.permute.xlu0 %1969
  %1971 = vrot.lane.b32.xlu0 %v349, 36
  %v1972 = vpop.permute.xlu0 %1971
  %v1975 = vsel %vm1034, %v1868, %v1916
  %v1976 = vsel %vm1034, %v1870, %v1918
  %v1977 = vsel %vm1034, %v1872, %v1920
  %v1978 = vsel %vm1034, %v1874, %v1922
  %v1979 = vsel %vm1034, %v1876, %v1924
  %v1980 = vsel %vm1034, %v1878, %v1926
  %v1981 = vsel %vm1034, %v1880, %v1928
  %v1982 = vsel %vm1034, %v1882, %v1930
  %v1983 = vsel %vm1034, %v1884, %v1932
  %v1984 = vsel %vm1034, %v1886, %v1934
  %v1985 = vsel %vm1034, %v1888, %v1936
  %v1986 = vsel %vm1034, %v1890, %v1938
  %v1987 = vsel %vm1034, %v1892, %v1940
  %v1988 = vsel %vm1034, %v1894, %v1942
  %v1989 = vsel %vm1034, %v1896, %v1944
  %v1990 = vsel %vm1034, %v1898, %v1946
  %v1991 = vsel %vm1035, %v1975, %v1916
  %v1992 = vsel %vm1035, %v1976, %v1918
  %v1993 = vsel %vm1035, %v1977, %v1920
  %v1994 = vsel %vm1035, %v1978, %v1922
  %v1995 = vsel %vm1035, %v1979, %v1924
  %v1996 = vsel %vm1035, %v1980, %v1926
  %v1997 = vsel %vm1035, %v1981, %v1928
  %v1998 = vsel %vm1035, %v1982, %v1930
  %v1999 = vsel %vm1035, %v1983, %v1932
  %v2000 = vsel %vm1035, %v1984, %v1934
  %v2001 = vsel %vm1035, %v1985, %v1936
  %v2002 = vsel %vm1035, %v1986, %v1938
  %v2003 = vsel %vm1035, %v1987, %v1940
  %v2004 = vsel %vm1035, %v1988, %v1942
  %v2005 = vsel %vm1035, %v1989, %v1944
  %v2006 = vsel %vm1035, %v1990, %v1946
  %v2007 = vsel %vm1052, %v1991, %v1916
  %v2008 = vsel %vm1052, %v1992, %v1918
  %v2009 = vsel %vm1052, %v1993, %v1920
  %v2010 = vsel %vm1052, %v1994, %v1922
  %v2011 = vsel %vm1052, %v1995, %v1924
  %v2012 = vsel %vm1052, %v1996, %v1926
  %v2013 = vsel %vm1052, %v1997, %v1928
  %v2014 = vsel %vm1052, %v1998, %v1930
  %v2015 = vsel %vm1052, %v1999, %v1932
  %v2016 = vsel %vm1052, %v2000, %v1934
  %v2017 = vsel %vm1052, %v2001, %v1936
  %v2018 = vsel %vm1052, %v2002, %v1938
  %v2019 = vsel %vm1052, %v2003, %v1940
  %v2020 = vsel %vm1052, %v2004, %v1942
  %v2021 = vsel %vm1052, %v2005, %v1944
  %v2022 = vsel %vm1052, %v2006, %v1946
  %v2023 = vsel %vm638, %v2007, %v497
  %v2024 = vsel %vm638, %v2008, %v499
  %v2025 = vsel %vm638, %v2009, %v501
  %v2026 = vsel %vm638, %v2010, %v503
  %v2027 = vsel %vm638, %v2011, %v505
  %v2028 = vsel %vm638, %v2012, %v507
  %v2029 = vsel %vm638, %v2013, %v509
  %v2030 = vsel %vm638, %v2014, %v1964
  %v2031 = vsel %vm638, %v2015, %v513
  %v2032 = vsel %vm638, %v2016, %v515
  %v2033 = vsel %vm638, %v2017, %v517
  %v2034 = vsel %vm638, %v2018, %v519
  %v2035 = vsel %vm638, %v2019, %v521
  %v2036 = vsel %vm638, %v2020, %v523
  %v2037 = vsel %vm638, %v2021, %v525
  %v2038 = vsel %vm638, %v2022, %v1966
  %v2039 = vsel %vm655, %v2023, %v497
  %v2040 = vsel %vm655, %v2024, %v499
  %v2041 = vsel %vm655, %v2025, %v501
  %v2042 = vsel %vm655, %v2026, %v503
  %v2043 = vsel %vm655, %v2027, %v505
  %v2044 = vsel %vm655, %v2028, %v507
  %v2045 = vsel %vm655, %v2029, %v509
  %v2046 = vsel %vm655, %v2030, %v1964
  %v2047 = vsel %vm655, %v2031, %v513
  %v2048 = vsel %vm655, %v2032, %v515
  %v2049 = vsel %vm655, %v2033, %v517
  %v2050 = vsel %vm655, %v2034, %v519
  %v2051 = vsel %vm655, %v2035, %v521
  %v2052 = vsel %vm655, %v2036, %v523
  %v2053 = vsel %vm655, %v2037, %v525
  %v2054 = vsel %vm655, %v2038, %v1966
  %v2055 = vsel %vm672, %v2039, %v545
  %v2056 = vsel %vm672, %v2040, %v547
  %v2057 = vsel %vm672, %v2041, %v549
  %v2058 = vsel %vm672, %v2042, %v551
  %v2059 = vsel %vm672, %v2043, %v553
  %v2060 = vsel %vm672, %v2044, %v555
  %v2061 = vsel %vm672, %v2045, %v557
  %v2062 = vsel %vm672, %v2046, %v1970
  %v2063 = vsel %vm672, %v2047, %v561
  %v2064 = vsel %vm672, %v2048, %v563
  %v2065 = vsel %vm672, %v2049, %v565
  %v2066 = vsel %vm672, %v2050, %v567
  %v2067 = vsel %vm672, %v2051, %v569
  %v2068 = vsel %vm672, %v2052, %v571
  %v2069 = vsel %vm672, %v2053, %v573
  %v2070 = vsel %vm672, %v2054, %v1972
  %v2071 = vsel %vm689, %v2055, %v545
  %v2072 = vsel %vm689, %v2056, %v547
  %v2073 = vsel %vm689, %v2057, %v549
  %v2074 = vsel %vm689, %v2058, %v551
  %v2075 = vsel %vm689, %v2059, %v553
  %v2076 = vsel %vm689, %v2060, %v555
  %v2077 = vsel %vm689, %v2061, %v557
  %v2078 = vsel %vm689, %v2062, %v1970
  %v2079 = vsel %vm689, %v2063, %v561
  %v2080 = vsel %vm689, %v2064, %v563
  %v2081 = vsel %vm689, %v2065, %v565
  %v2082 = vsel %vm689, %v2066, %v567
  %v2083 = vsel %vm689, %v2067, %v569
  %v2084 = vsel %vm689, %v2068, %v571
  %v2085 = vsel %vm689, %v2069, %v573
  %v2086 = vsel %vm689, %v2070, %v1972
  %v2087 = vsel %vm706, %v2071, %v545
  %v2088 = vsel %vm706, %v2072, %v547
  %v2089 = vsel %vm706, %v2073, %v549
  %v2090 = vsel %vm706, %v2074, %v551
  %v2091 = vsel %vm706, %v2075, %v553
  %v2092 = vsel %vm706, %v2076, %v555
  %v2093 = vsel %vm706, %v2077, %v557
  %v2094 = vsel %vm706, %v2078, %v1970
  %v2095 = vsel %vm706, %v2079, %v561
  %v2096 = vsel %vm706, %v2080, %v563
  %v2097 = vsel %vm706, %v2081, %v565
  %v2098 = vsel %vm706, %v2082, %v567
  %v2099 = vsel %vm706, %v2083, %v569
  %v2100 = vsel %vm706, %v2084, %v571
  %v2101 = vsel %vm706, %v2085, %v573
  %v2102 = vsel %vm706, %v2086, %v1972
  %2119 = vrot.lane.b32.xlu0 %v2087, 96
  %v2120 = vpop.permute.xlu0 %2119
  %2121 = vrot.lane.b32.xlu0 %v2088, 96
  %v2122 = vpop.permute.xlu0 %2121
  %2123 = vrot.lane.b32.xlu0 %v2089, 96
  %v2124 = vpop.permute.xlu0 %2123
  %2125 = vrot.lane.b32.xlu0 %v2090, 96
  %v2126 = vpop.permute.xlu0 %2125
  %2127 = vrot.lane.b32.xlu0 %v2091, 96
  %v2128 = vpop.permute.xlu0 %2127
  %2129 = vrot.lane.b32.xlu0 %v2092, 96
  %v2130 = vpop.permute.xlu0 %2129
  %2131 = vrot.lane.b32.xlu0 %v2093, 96
  %v2132 = vpop.permute.xlu0 %2131
  %2133 = vrot.lane.b32.xlu0 %v2094, 96
  %v2134 = vpop.permute.xlu0 %2133
  %2135 = vrot.lane.b32.xlu0 %v2095, 96
  %v2136 = vpop.permute.xlu0 %2135
  %2137 = vrot.lane.b32.xlu0 %v2096, 96
  %v2138 = vpop.permute.xlu0 %2137
  %2139 = vrot.lane.b32.xlu0 %v2097, 96
  %v2140 = vpop.permute.xlu0 %2139
  %2141 = vrot.lane.b32.xlu0 %v2098, 96
  %v2142 = vpop.permute.xlu0 %2141
  %2143 = vrot.lane.b32.xlu0 %v2099, 96
  %v2144 = vpop.permute.xlu0 %2143
  %2145 = vrot.lane.b32.xlu0 %v2100, 96
  %v2146 = vpop.permute.xlu0 %2145
  %2147 = vrot.lane.b32.xlu0 %v2101, 96
  %v2148 = vpop.permute.xlu0 %2147
  %2149 = vrot.lane.b32.xlu0 %v2102, 96
  %v2150 = vpop.permute.xlu0 %2149
  %v2167 = vsel %vm1213, %v1851, %v2120
  %v2168 = vsel %vm1213, %v1852, %v2122
  %v2169 = vsel %vm1213, %v1853, %v2124
  %v2170 = vsel %vm1213, %v1854, %v2126
  %v2171 = vsel %vm1213, %v1855, %v2128
  %v2172 = vsel %vm1213, %v1856, %v2130
  %v2173 = vsel %vm1213, %v1857, %v2132
  %v2174 = vsel %vm1213, %v1858, %v2134
  %v2175 = vsel %vm1213, %v1859, %v2136
  %v2176 = vsel %vm1213, %v1860, %v2138
  %v2177 = vsel %vm1213, %v1861, %v2140
  %v2178 = vsel %vm1213, %v1862, %v2142
  %v2179 = vsel %vm1213, %v1863, %v2144
  %v2180 = vsel %vm1213, %v1864, %v2146
  %v2181 = vsel %vm1213, %v1865, %v2148
  %v2182 = vsel %vm1213, %v1866, %v2150
  %v2183 = vsel %vm1236, %v2120, 0
  %v2185 = vsel %vm1236, %v2122, 0
  %v2187 = vsel %vm1236, %v2124, 0
  %v2189 = vsel %vm1236, %v2126, 0
  %v2191 = vsel %vm1236, %v2128, 0
  %v2193 = vsel %vm1236, %v2130, 0
  %v2195 = vsel %vm1236, %v2132, 0
  %v2197 = vsel %vm1236, %v2134, 0
  %v2199 = vsel %vm1236, %v2136, 0
  %v2201 = vsel %vm1236, %v2138, 0
  %v2203 = vsel %vm1236, %v2140, 0
  %v2205 = vsel %vm1236, %v2142, 0
  %v2207 = vsel %vm1236, %v2144, 0
  %v2209 = vsel %vm1236, %v2146, 0
  %v2211 = vsel %vm1236, %v2148, 0
  %v2213 = vsel %vm1236, %v2150, 0
  %2215 = vmatprep.subr.mxu0 0.0
  %2216 = vmatpush1.msra.mxu0 %v254
  %2217 = vmatprep.subr.mxu0 0.0
  %2218 = vmatpush1.msra.mxu0 %v253
  %2219 = vmatprep.subr.mxu0 0.0
  %2220 = vmatpush1.msra.mxu0 %v252
  %2221 = vmatprep.subr.mxu0 0.0
  %2222 = vmatpush1.msra.mxu0 %v251
  %2223 = vmatprep.subr.mxu0 0.0
  %2224 = vmatpush1.msra.mxu0 %v250
  %2225 = vmatprep.subr.mxu0 0.0
  %2226 = vmatpush1.msra.mxu0 %v249
  %2227 = vmatprep.subr.mxu0 0.0
  %2228 = vmatpush1.msra.mxu0 %v248
  %2229 = vmatprep.subr.mxu0 0.0
  %2230 = vmatpush1.msra.mxu0 %v247
  %2231 = vmatprep.subr.mxu0 0.0
  %2232 = vmatpush1.msra.mxu0 %v246
  %2233 = vmatprep.subr.mxu0 0.0
  %2234 = vmatpush1.msra.mxu0 %v245
  %2235 = vmatprep.subr.mxu0 0.0
  %2236 = vmatpush1.msra.mxu0 %v244
  %2237 = vmatprep.subr.mxu0 0.0
  %2238 = vmatpush1.msra.mxu0 %v243
  %2239 = vmatprep.subr.mxu0 0.0
  %2240 = vmatpush1.msra.mxu0 %v242
  %2241 = vmatprep.subr.mxu0 0.0
  %2242 = vmatpush1.msra.mxu0 %v241
  %2243 = vmatprep.subr.mxu0 0.0
  %2244 = vmatpush1.msra.mxu0 %v240
  %2245 = vmatprep.subr.mxu0 0.0
  %2246 = vmatpush1.msra.mxu0 %v239
  %2247 = vmatprep.subr.mxu0 0.0
  %2248 = vmatpush2.msra.mxu0 0.0
  %2249 = vmatprep.subr.mxu0 0.0
  %2250 = vmatpush2.msra.mxu0 0.0
  %2251 = vmatprep.subr.mxu0 0.0
  %2252 = vmatpush2.msra.mxu0 0.0
  %2253 = vmatprep.subr.mxu0 0.0
  %2254 = vmatpush2.msra.mxu0 0.0
  %2255 = vmatprep.subr.mxu0 0.0
  %2256 = vmatpush2.msra.mxu0 0.0
  %2257 = vmatprep.subr.mxu0 0.0
  %2258 = vmatpush2.msra.mxu0 0.0
  %2259 = vmatprep.subr.mxu0 0.0
  %2260 = vmatpush2.msra.mxu0 0.0
  %2261 = vmatprep.subr.mxu0 0.0
  %2262 = vmatpush2.msra.mxu0 0.0
  %2263 = vmatprep.subr.mxu0 0.0
  %2264 = vmatpush2.msra.mxu0 0.0
  %2265 = vmatprep.subr.mxu0 0.0
  %2266 = vmatpush2.msra.mxu0 0.0
  %2267 = vmatprep.subr.mxu0 0.0
  %2268 = vmatpush2.msra.mxu0 0.0
  %2269 = vmatprep.subr.mxu0 0.0
  %2270 = vmatpush2.msra.mxu0 0.0
  %2271 = vmatprep.subr.mxu0 0.0
  %2272 = vmatpush2.msra.mxu0 0.0
  %2273 = vmatprep.subr.mxu0 0.0
  %2274 = vmatpush2.msra.mxu0 %v1271
  %2275 = vmatprep.subr.mxu0 0.0
  %2276 = vmatpush2.msra.mxu0 %v256
  %2277 = vmatprep.subr.mxu0 0.0
  %2278 = vmatpush2.msra.mxu0 %v255
  %2279 = vmatprep.mubr.f32.mxu0 %v2183
  %2280 = vmatmul.mubr.f32.gmra.mxu0 %v2167
  %v2281 = vpop.f32.mrf.mxu0
  %v2282 = vadd.f32 %v1234, %v2281
  %v2283 = vpop.f32.mrf.mxu0
  %2284 = vmatprep.mubr.f32.mxu0 %v2185
  %2285 = vmatmul.mubr.f32.gmra.mxu0 %v2168
  %v2286 = vpop.f32.mrf.mxu0
  %v2287 = vadd.f32 %v1234, %v2286
  %v2288 = vpop.f32.mrf.mxu0
  %2289 = vmatprep.mubr.f32.mxu0 %v2187
  %2290 = vmatmul.mubr.f32.gmra.mxu0 %v2169
  %v2291 = vpop.f32.mrf.mxu0
  %v2292 = vadd.f32 %v1234, %v2291
  %v2293 = vpop.f32.mrf.mxu0
  %2294 = vmatprep.mubr.f32.mxu0 %v2189
  %2295 = vmatmul.mubr.f32.gmra.mxu0 %v2170
  %v2296 = vpop.f32.mrf.mxu0
  %v2297 = vadd.f32 %v1234, %v2296
  %v2298 = vpop.f32.mrf.mxu0
  %2299 = vmatprep.mubr.f32.mxu0 %v2191
  %2300 = vmatmul.mubr.f32.gmra.mxu0 %v2171
  %v2301 = vpop.f32.mrf.mxu0
  %v2302 = vadd.f32 %v1234, %v2301
  %v2303 = vpop.f32.mrf.mxu0
  %2304 = vmatprep.mubr.f32.mxu0 %v2193
  %2305 = vmatmul.mubr.f32.gmra.mxu0 %v2172
  %v2306 = vpop.f32.mrf.mxu0
  %v2307 = vadd.f32 %v1234, %v2306
  %v2308 = vpop.f32.mrf.mxu0
  %2309 = vmatprep.mubr.f32.mxu0 %v2195
  %2310 = vmatmul.mubr.f32.gmra.mxu0 %v2173
  %v2311 = vpop.f32.mrf.mxu0
  %v2312 = vadd.f32 %v1234, %v2311
  %v2313 = vpop.f32.mrf.mxu0
  %2314 = vmatprep.mubr.f32.mxu0 %v2197
  %2315 = vmatmul.mubr.f32.gmra.mxu0 %v2174
  %v2316 = vpop.f32.mrf.mxu0
  %v2317 = vadd.f32 %v1234, %v2316
  %v2318 = vpop.f32.mrf.mxu0
  %2319 = vmatprep.mubr.f32.mxu0 %v2199
  %2320 = vmatmul.mubr.f32.gmra.mxu0 %v2175
  %v2321 = vpop.f32.mrf.mxu0
  %v2322 = vadd.f32 %v1234, %v2321
  %v2323 = vpop.f32.mrf.mxu0
  %2324 = vmatprep.mubr.f32.mxu0 %v2201
  %2325 = vmatmul.mubr.f32.gmra.mxu0 %v2176
  %v2326 = vpop.f32.mrf.mxu0
  %v2327 = vadd.f32 %v1234, %v2326
  %v2328 = vpop.f32.mrf.mxu0
  %2329 = vmatprep.mubr.f32.mxu0 %v2203
  %2330 = vmatmul.mubr.f32.gmra.mxu0 %v2177
  %v2331 = vpop.f32.mrf.mxu0
  %v2332 = vadd.f32 %v1234, %v2331
  %v2333 = vpop.f32.mrf.mxu0
  %2334 = vmatprep.mubr.f32.mxu0 %v2205
  %2335 = vmatmul.mubr.f32.gmra.mxu0 %v2178
  %v2336 = vpop.f32.mrf.mxu0
  %v2337 = vadd.f32 %v1234, %v2336
  %v2338 = vpop.f32.mrf.mxu0
  %2339 = vmatprep.mubr.f32.mxu0 %v2207
  %2340 = vmatmul.mubr.f32.gmra.mxu0 %v2179
  %v2341 = vpop.f32.mrf.mxu0
  %v2342 = vadd.f32 %v1234, %v2341
  %v2343 = vpop.f32.mrf.mxu0
  %2344 = vmatprep.mubr.f32.mxu0 %v2209
  %2345 = vmatmul.mubr.f32.gmra.mxu0 %v2180
  %v2346 = vpop.f32.mrf.mxu0
  %v2347 = vadd.f32 %v1234, %v2346
  %v2348 = vpop.f32.mrf.mxu0
  %2349 = vmatprep.mubr.f32.mxu0 %v2211
  %2350 = vmatmul.mubr.f32.gmra.mxu0 %v2181
  %v2351 = vpop.f32.mrf.mxu0
  %v2352 = vadd.f32 %v1234, %v2351
  %v2353 = vpop.f32.mrf.mxu0
  %2354 = vmatprep.mubr.f32.mxu0 %v2213
  %2355 = vmatmul.mubr.f32.gmra.mxu0 %v2182
  %v2356 = vpop.f32.mrf.mxu0
  %v2357 = vadd.f32 %v1234, %v2356
  %v2358 = vpop.f32.mrf.mxu0
  %2359 = vdwg.mxu0
  %v2360 = vmax.f32 %v2282, 0.0
  %v2361 = vmax.f32 %v2287, 0.0
  %v2362 = vmax.f32 %v2292, 0.0
  %v2363 = vmax.f32 %v2297, 0.0
  %v2364 = vmax.f32 %v2302, 0.0
  %v2365 = vmax.f32 %v2307, 0.0
  %v2366 = vmax.f32 %v2312, 0.0
  %v2367 = vmax.f32 %v2317, 0.0
  %v2368 = vmax.f32 %v2322, 0.0
  %v2369 = vmax.f32 %v2327, 0.0
  %v2370 = vmax.f32 %v2332, 0.0
  %v2371 = vmax.f32 %v2337, 0.0
  %v2372 = vmax.f32 %v2342, 0.0
  %v2373 = vmax.f32 %v2347, 0.0
  %v2374 = vmax.f32 %v2352, 0.0
  %v2375 = vmax.f32 %v2357, 0.0
  %s2376 = scalar_lea.vmem [#allocation2], 640
  %2377 = vst.msk [vmem:[%s2376 + $0x1] sm:$0xff] %vm41, %v2360
  %2378 = vst.msk [vmem:[%s2376 + $0x11] sm:$0xff] %vm41, %v2361
  %2379 = vst.msk [vmem:[%s2376 + $0x21] sm:$0xff] %vm41, %v2362
  %2380 = vst.msk [vmem:[%s2376 + $0x31] sm:$0xff] %vm41, %v2363
  %2381 = vst.msk [vmem:[%s2376 + $0x41] sm:$0xff] %vm41, %v2364
  %2382 = vst.msk [vmem:[%s2376 + $0x51] sm:$0xff] %vm41, %v2365
  %2383 = vst.msk [vmem:[%s2376 + $0x61] sm:$0xff] %vm41, %v2366
  %2384 = vst.msk [vmem:[%s2376 + $0x71] sm:$0xff] %vm41, %v2367
  %2385 = vst.msk [vmem:[%s2376 + $0xa1] sm:$0xff] %vm41, %v2368
  %2386 = vst.msk [vmem:[%s2376 + $0xb1] sm:$0xff] %vm41, %v2369
  %2387 = vst.msk [vmem:[%s2376 + $0xc1] sm:$0xff] %vm41, %v2370
  %2388 = vst.msk [vmem:[%s2376 + $0xd1] sm:$0xff] %vm41, %v2371
  %2389 = vst.msk [vmem:[%s2376 + $0xe1] sm:$0xff] %vm41, %v2372
  %2390 = vst.msk [vmem:[%s2376 + $0xf1] sm:$0xff] %vm41, %v2373
  %2391 = vst.msk [vmem:[%s2376 + $0x101] sm:$0xff] %vm41, %v2374
  %2392 = vst.msk [vmem:[%s2376 + $0x111] sm:$0xff] %vm41, %v2375
  %2409 = vrot.lane.b32.xlu0 %v203, 80
  %v2410 = vpop.permute.xlu0 %2409
  %2411 = vrot.lane.b32.xlu0 %v205, 80
  %v2412 = vpop.permute.xlu0 %2411
  %2413 = vrot.lane.b32.xlu0 %v207, 80
  %v2414 = vpop.permute.xlu0 %2413
  %2415 = vrot.lane.b32.xlu0 %v209, 80
  %v2416 = vpop.permute.xlu0 %2415
  %2417 = vrot.lane.b32.xlu0 %v211, 80
  %v2418 = vpop.permute.xlu0 %2417
  %2419 = vrot.lane.b32.xlu0 %v213, 80
  %v2420 = vpop.permute.xlu0 %2419
  %2421 = vrot.lane.b32.xlu0 %v215, 80
  %v2422 = vpop.permute.xlu0 %2421
  %2423 = vrot.lane.b32.xlu0 %v217, 80
  %v2424 = vpop.permute.xlu0 %2423
  %2425 = vrot.lane.b32.xlu0 %v221, 80
  %v2426 = vpop.permute.xlu0 %2425
  %2427 = vrot.lane.b32.xlu0 %v223, 80
  %v2428 = vpop.permute.xlu0 %2427
  %2429 = vrot.lane.b32.xlu0 %v225, 80
  %v2430 = vpop.permute.xlu0 %2429
  %2431 = vrot.lane.b32.xlu0 %v227, 80
  %v2432 = vpop.permute.xlu0 %2431
  %2433 = vrot.lane.b32.xlu0 %v229, 80
  %v2434 = vpop.permute.xlu0 %2433
  %2435 = vrot.lane.b32.xlu0 %v231, 80
  %v2436 = vpop.permute.xlu0 %2435
  %2437 = vrot.lane.b32.xlu0 %v233, 80
  %v2438 = vpop.permute.xlu0 %2437
  %2439 = vrot.lane.b32.xlu0 %v235, 80
  %v2440 = vpop.permute.xlu0 %2439
  %2457 = vrot.lane.b32.xlu0 %v294, 104
  %v2458 = vpop.permute.xlu0 %2457
  %2459 = vrot.lane.b32.xlu0 %v297, 104
  %v2460 = vpop.permute.xlu0 %2459
  %2461 = vrot.lane.b32.xlu0 %v300, 104
  %v2462 = vpop.permute.xlu0 %2461
  %2463 = vrot.lane.b32.xlu0 %v303, 104
  %v2464 = vpop.permute.xlu0 %2463
  %2465 = vrot.lane.b32.xlu0 %v306, 104
  %v2466 = vpop.permute.xlu0 %2465
  %2467 = vrot.lane.b32.xlu0 %v309, 104
  %v2468 = vpop.permute.xlu0 %2467
  %2469 = vrot.lane.b32.xlu0 %v312, 104
  %v2470 = vpop.permute.xlu0 %2469
  %2471 = vrot.lane.b32.xlu0 %v315, 104
  %v2472 = vpop.permute.xlu0 %2471
  %2473 = vrot.lane.b32.xlu0 %v318, 104
  %v2474 = vpop.permute.xlu0 %2473
  %2475 = vrot.lane.b32.xlu0 %v321, 104
  %v2476 = vpop.permute.xlu0 %2475
  %2477 = vrot.lane.b32.xlu0 %v324, 104
  %v2478 = vpop.permute.xlu0 %2477
  %2479 = vrot.lane.b32.xlu0 %v327, 104
  %v2480 = vpop.permute.xlu0 %2479
  %2481 = vrot.lane.b32.xlu0 %v330, 104
  %v2482 = vpop.permute.xlu0 %2481
  %2483 = vrot.lane.b32.xlu0 %v333, 104
  %v2484 = vpop.permute.xlu0 %2483
  %2485 = vrot.lane.b32.xlu0 %v336, 104
  %v2486 = vpop.permute.xlu0 %2485
  %2487 = vrot.lane.b32.xlu0 %v339, 104
  %v2488 = vpop.permute.xlu0 %2487
  %2505 = vrot.lane.b32.xlu0 %v203, 86
  %v2506 = vpop.permute.xlu0 %2505
  %2507 = vrot.lane.b32.xlu0 %v205, 86
  %v2508 = vpop.permute.xlu0 %2507
  %2509 = vrot.lane.b32.xlu0 %v207, 86
  %v2510 = vpop.permute.xlu0 %2509
  %2511 = vrot.lane.b32.xlu0 %v209, 86
  %v2512 = vpop.permute.xlu0 %2511
  %2513 = vrot.lane.b32.xlu0 %v211, 86
  %v2514 = vpop.permute.xlu0 %2513
  %2515 = vrot.lane.b32.xlu0 %v213, 86
  %v2516 = vpop.permute.xlu0 %2515
  %2517 = vrot.lane.b32.xlu0 %v215, 86
  %v2518 = vpop.permute.xlu0 %2517
  %2519 = vrot.lane.b32.xlu0 %v217, 86
  %v2520 = vpop.permute.xlu0 %2519
  %2521 = vrot.lane.b32.xlu0 %v221, 86
  %v2522 = vpop.permute.xlu0 %2521
  %2523 = vrot.lane.b32.xlu0 %v223, 86
  %v2524 = vpop.permute.xlu0 %2523
  %2525 = vrot.lane.b32.xlu0 %v225, 86
  %v2526 = vpop.permute.xlu0 %2525
  %2527 = vrot.lane.b32.xlu0 %v227, 86
  %v2528 = vpop.permute.xlu0 %2527
  %2529 = vrot.lane.b32.xlu0 %v229, 86
  %v2530 = vpop.permute.xlu0 %2529
  %2531 = vrot.lane.b32.xlu0 %v231, 86
  %v2532 = vpop.permute.xlu0 %2531
  %2533 = vrot.lane.b32.xlu0 %v233, 86
  %v2534 = vpop.permute.xlu0 %2533
  %2535 = vrot.lane.b32.xlu0 %v235, 86
  %v2536 = vpop.permute.xlu0 %2535
  %2553 = vrot.lane.b32.xlu0 %v294, 110
  %v2554 = vpop.permute.xlu0 %2553
  %2555 = vrot.lane.b32.xlu0 %v297, 110
  %v2556 = vpop.permute.xlu0 %2555
  %2557 = vrot.lane.b32.xlu0 %v300, 110
  %v2558 = vpop.permute.xlu0 %2557
  %2559 = vrot.lane.b32.xlu0 %v303, 110
  %v2560 = vpop.permute.xlu0 %2559
  %2561 = vrot.lane.b32.xlu0 %v306, 110
  %v2562 = vpop.permute.xlu0 %2561
  %2563 = vrot.lane.b32.xlu0 %v309, 110
  %v2564 = vpop.permute.xlu0 %2563
  %2565 = vrot.lane.b32.xlu0 %v312, 110
  %v2566 = vpop.permute.xlu0 %2565
  %2567 = vrot.lane.b32.xlu0 %v315, 110
  %v2568 = vpop.permute.xlu0 %2567
  %2569 = vrot.lane.b32.xlu0 %v318, 110
  %v2570 = vpop.permute.xlu0 %2569
  %2571 = vrot.lane.b32.xlu0 %v321, 110
  %v2572 = vpop.permute.xlu0 %2571
  %2573 = vrot.lane.b32.xlu0 %v324, 110
  %v2574 = vpop.permute.xlu0 %2573
  %2575 = vrot.lane.b32.xlu0 %v327, 110
  %v2576 = vpop.permute.xlu0 %2575
  %2577 = vrot.lane.b32.xlu0 %v330, 110
  %v2578 = vpop.permute.xlu0 %2577
  %2579 = vrot.lane.b32.xlu0 %v333, 110
  %v2580 = vpop.permute.xlu0 %2579
  %2581 = vrot.lane.b32.xlu0 %v336, 110
  %v2582 = vpop.permute.xlu0 %2581
  %2583 = vrot.lane.b32.xlu0 %v339, 110
  %v2584 = vpop.permute.xlu0 %2583
  %2601 = vrot.lane.b32.xlu0 %v205, 60
  %v2602 = vpop.permute.xlu0 %2601
  %2603 = vrot.lane.b32.xlu0 %v207, 60
  %v2604 = vpop.permute.xlu0 %2603
  %2605 = vrot.lane.b32.xlu0 %v209, 60
  %v2606 = vpop.permute.xlu0 %2605
  %2607 = vrot.lane.b32.xlu0 %v211, 60
  %v2608 = vpop.permute.xlu0 %2607
  %2609 = vrot.lane.b32.xlu0 %v213, 60
  %v2610 = vpop.permute.xlu0 %2609
  %2611 = vrot.lane.b32.xlu0 %v215, 60
  %v2612 = vpop.permute.xlu0 %2611
  %2613 = vrot.lane.b32.xlu0 %v217, 60
  %v2614 = vpop.permute.xlu0 %2613
  %2615 = vrot.lane.b32.xlu0 %v219, 60
  %v2616 = vpop.permute.xlu0 %2615
  %2617 = vrot.lane.b32.xlu0 %v223, 60
  %v2618 = vpop.permute.xlu0 %2617
  %2619 = vrot.lane.b32.xlu0 %v225, 60
  %v2620 = vpop.permute.xlu0 %2619
  %2621 = vrot.lane.b32.xlu0 %v227, 60
  %v2622 = vpop.permute.xlu0 %2621
  %2623 = vrot.lane.b32.xlu0 %v229, 60
  %v2624 = vpop.permute.xlu0 %2623
  %2625 = vrot.lane.b32.xlu0 %v231, 60
  %v2626 = vpop.permute.xlu0 %2625
  %2627 = vrot.lane.b32.xlu0 %v233, 60
  %v2628 = vpop.permute.xlu0 %2627
  %2629 = vrot.lane.b32.xlu0 %v235, 60
  %v2630 = vpop.permute.xlu0 %2629
  %2631 = vrot.lane.b32.xlu0 %v237, 60
  %v2632 = vpop.permute.xlu0 %2631
  %2649 = vrot.lane.b32.xlu0 %v297, 84
  %v2650 = vpop.permute.xlu0 %2649
  %2651 = vrot.lane.b32.xlu0 %v300, 84
  %v2652 = vpop.permute.xlu0 %2651
  %2653 = vrot.lane.b32.xlu0 %v303, 84
  %v2654 = vpop.permute.xlu0 %2653
  %2655 = vrot.lane.b32.xlu0 %v306, 84
  %v2656 = vpop.permute.xlu0 %2655
  %2657 = vrot.lane.b32.xlu0 %v309, 84
  %v2658 = vpop.permute.xlu0 %2657
  %2659 = vrot.lane.b32.xlu0 %v312, 84
  %v2660 = vpop.permute.xlu0 %2659
  %2661 = vrot.lane.b32.xlu0 %v315, 84
  %v2662 = vpop.permute.xlu0 %2661
  %2663 = vrot.lane.b32.xlu0 %v346, 84
  %v2664 = vpop.permute.xlu0 %2663
  %2665 = vrot.lane.b32.xlu0 %v321, 84
  %v2666 = vpop.permute.xlu0 %2665
  %2667 = vrot.lane.b32.xlu0 %v324, 84
  %v2668 = vpop.permute.xlu0 %2667
  %2669 = vrot.lane.b32.xlu0 %v327, 84
  %v2670 = vpop.permute.xlu0 %2669
  %2671 = vrot.lane.b32.xlu0 %v330, 84
  %v2672 = vpop.permute.xlu0 %2671
  %2673 = vrot.lane.b32.xlu0 %v333, 84
  %v2674 = vpop.permute.xlu0 %2673
  %2675 = vrot.lane.b32.xlu0 %v336, 84
  %v2676 = vpop.permute.xlu0 %2675
  %2677 = vrot.lane.b32.xlu0 %v339, 84
  %v2678 = vpop.permute.xlu0 %2677
  %2679 = vrot.lane.b32.xlu0 %v349, 84
  %v2680 = vpop.permute.xlu0 %2679
  %2697 = vrot.lane.b32.xlu0 %v205, 66
  %v2698 = vpop.permute.xlu0 %2697
  %2699 = vrot.lane.b32.xlu0 %v207, 66
  %v2700 = vpop.permute.xlu0 %2699
  %2701 = vrot.lane.b32.xlu0 %v209, 66
  %v2702 = vpop.permute.xlu0 %2701
  %2703 = vrot.lane.b32.xlu0 %v211, 66
  %v2704 = vpop.permute.xlu0 %2703
  %2705 = vrot.lane.b32.xlu0 %v213, 66
  %v2706 = vpop.permute.xlu0 %2705
  %2707 = vrot.lane.b32.xlu0 %v215, 66
  %v2708 = vpop.permute.xlu0 %2707
  %2709 = vrot.lane.b32.xlu0 %v217, 66
  %v2710 = vpop.permute.xlu0 %2709
  %2711 = vrot.lane.b32.xlu0 %v219, 66
  %v2712 = vpop.permute.xlu0 %2711
  %2713 = vrot.lane.b32.xlu0 %v223, 66
  %v2714 = vpop.permute.xlu0 %2713
  %2715 = vrot.lane.b32.xlu0 %v225, 66
  %v2716 = vpop.permute.xlu0 %2715
  %2717 = vrot.lane.b32.xlu0 %v227, 66
  %v2718 = vpop.permute.xlu0 %2717
  %2719 = vrot.lane.b32.xlu0 %v229, 66
  %v2720 = vpop.permute.xlu0 %2719
  %2721 = vrot.lane.b32.xlu0 %v231, 66
  %v2722 = vpop.permute.xlu0 %2721
  %2723 = vrot.lane.b32.xlu0 %v233, 66
  %v2724 = vpop.permute.xlu0 %2723
  %2725 = vrot.lane.b32.xlu0 %v235, 66
  %v2726 = vpop.permute.xlu0 %2725
  %2727 = vrot.lane.b32.xlu0 %v237, 66
  %v2728 = vpop.permute.xlu0 %2727
  %v2745 = vsel %vm1035, %v2410, %v2410
  %v2746 = vsel %vm1035, %v2412, %v2412
  %v2747 = vsel %vm1035, %v2414, %v2414
  %v2748 = vsel %vm1035, %v2416, %v2416
  %v2749 = vsel %vm1035, %v2418, %v2418
  %v2750 = vsel %vm1035, %v2420, %v2420
  %v2751 = vsel %vm1035, %v2422, %v2422
  %v2752 = vsel %vm1035, %v2424, %v2424
  %v2753 = vsel %vm1035, %v2426, %v2426
  %v2754 = vsel %vm1035, %v2428, %v2428
  %v2755 = vsel %vm1035, %v2430, %v2430
  %v2756 = vsel %vm1035, %v2432, %v2432
  %v2757 = vsel %vm1035, %v2434, %v2434
  %v2758 = vsel %vm1035, %v2436, %v2436
  %v2759 = vsel %vm1035, %v2438, %v2438
  %v2760 = vsel %vm1035, %v2440, %v2440
  %v2761 = vsel %vm1052, %v2745, %v2410
  %v2762 = vsel %vm1052, %v2746, %v2412
  %v2763 = vsel %vm1052, %v2747, %v2414
  %v2764 = vsel %vm1052, %v2748, %v2416
  %v2765 = vsel %vm1052, %v2749, %v2418
  %v2766 = vsel %vm1052, %v2750, %v2420
  %v2767 = vsel %vm1052, %v2751, %v2422
  %v2768 = vsel %vm1052, %v2752, %v2424
  %v2769 = vsel %vm1052, %v2753, %v2426
  %v2770 = vsel %vm1052, %v2754, %v2428
  %v2771 = vsel %vm1052, %v2755, %v2430
  %v2772 = vsel %vm1052, %v2756, %v2432
  %v2773 = vsel %vm1052, %v2757, %v2434
  %v2774 = vsel %vm1052, %v2758, %v2436
  %v2775 = vsel %vm1052, %v2759, %v2438
  %v2776 = vsel %vm1052, %v2760, %v2440
  %v2777 = vsel %vm638, %v2761, %v2458
  %v2778 = vsel %vm638, %v2762, %v2460
  %v2779 = vsel %vm638, %v2763, %v2462
  %v2780 = vsel %vm638, %v2764, %v2464
  %v2781 = vsel %vm638, %v2765, %v2466
  %v2782 = vsel %vm638, %v2766, %v2468
  %v2783 = vsel %vm638, %v2767, %v2470
  %v2784 = vsel %vm638, %v2768, %v2472
  %v2785 = vsel %vm638, %v2769, %v2474
  %v2786 = vsel %vm638, %v2770, %v2476
  %v2787 = vsel %vm638, %v2771, %v2478
  %v2788 = vsel %vm638, %v2772, %v2480
  %v2789 = vsel %vm638, %v2773, %v2482
  %v2790 = vsel %vm638, %v2774, %v2484
  %v2791 = vsel %vm638, %v2775, %v2486
  %v2792 = vsel %vm638, %v2776, %v2488
  %v2793 = vsel %vm655, %v2777, %v2506
  %v2794 = vsel %vm655, %v2778, %v2508
  %v2795 = vsel %vm655, %v2779, %v2510
  %v2796 = vsel %vm655, %v2780, %v2512
  %v2797 = vsel %vm655, %v2781, %v2514
  %v2798 = vsel %vm655, %v2782, %v2516
  %v2799 = vsel %vm655, %v2783, %v2518
  %v2800 = vsel %vm655, %v2784, %v2520
  %v2801 = vsel %vm655, %v2785, %v2522
  %v2802 = vsel %vm655, %v2786, %v2524
  %v2803 = vsel %vm655, %v2787, %v2526
  %v2804 = vsel %vm655, %v2788, %v2528
  %v2805 = vsel %vm655, %v2789, %v2530
  %v2806 = vsel %vm655, %v2790, %v2532
  %v2807 = vsel %vm655, %v2791, %v2534
  %v2808 = vsel %vm655, %v2792, %v2536
  %v2809 = vsel %vm672, %v2793, %v2506
  %v2810 = vsel %vm672, %v2794, %v2508
  %v2811 = vsel %vm672, %v2795, %v2510
  %v2812 = vsel %vm672, %v2796, %v2512
  %v2813 = vsel %vm672, %v2797, %v2514
  %v2814 = vsel %vm672, %v2798, %v2516
  %v2815 = vsel %vm672, %v2799, %v2518
  %v2816 = vsel %vm672, %v2800, %v2520
  %v2817 = vsel %vm672, %v2801, %v2522
  %v2818 = vsel %vm672, %v2802, %v2524
  %v2819 = vsel %vm672, %v2803, %v2526
  %v2820 = vsel %vm672, %v2804, %v2528
  %v2821 = vsel %vm672, %v2805, %v2530
  %v2822 = vsel %vm672, %v2806, %v2532
  %v2823 = vsel %vm672, %v2807, %v2534
  %v2824 = vsel %vm672, %v2808, %v2536
  %v2825 = vsel %vm689, %v2809, %v2506
  %v2826 = vsel %vm689, %v2810, %v2508
  %v2827 = vsel %vm689, %v2811, %v2510
  %v2828 = vsel %vm689, %v2812, %v2512
  %v2829 = vsel %vm689, %v2813, %v2514
  %v2830 = vsel %vm689, %v2814, %v2516
  %v2831 = vsel %vm689, %v2815, %v2518
  %v2832 = vsel %vm689, %v2816, %v2520
  %v2833 = vsel %vm689, %v2817, %v2522
  %v2834 = vsel %vm689, %v2818, %v2524
  %v2835 = vsel %vm689, %v2819, %v2526
  %v2836 = vsel %vm689, %v2820, %v2528
  %v2837 = vsel %vm689, %v2821, %v2530
  %v2838 = vsel %vm689, %v2822, %v2532
  %v2839 = vsel %vm689, %v2823, %v2534
  %v2840 = vsel %vm689, %v2824, %v2536
  %v2841 = vsel %vm706, %v2825, %v2506
  %v2842 = vsel %vm706, %v2826, %v2508
  %v2843 = vsel %vm706, %v2827, %v2510
  %v2844 = vsel %vm706, %v2828, %v2512
  %v2845 = vsel %vm706, %v2829, %v2514
  %v2846 = vsel %vm706, %v2830, %v2516
  %v2847 = vsel %vm706, %v2831, %v2518
  %v2848 = vsel %vm706, %v2832, %v2520
  %v2849 = vsel %vm706, %v2833, %v2522
  %v2850 = vsel %vm706, %v2834, %v2524
  %v2851 = vsel %vm706, %v2835, %v2526
  %v2852 = vsel %vm706, %v2836, %v2528
  %v2853 = vsel %vm706, %v2837, %v2530
  %v2854 = vsel %vm706, %v2838, %v2532
  %v2855 = vsel %vm706, %v2839, %v2534
  %v2856 = vsel %vm706, %v2840, %v2536
  %v2857 = vsel %vm723, %v2841, %v2554
  %v2858 = vsel %vm723, %v2842, %v2556
  %v2859 = vsel %vm723, %v2843, %v2558
  %v2860 = vsel %vm723, %v2844, %v2560
  %v2861 = vsel %vm723, %v2845, %v2562
  %v2862 = vsel %vm723, %v2846, %v2564
  %v2863 = vsel %vm723, %v2847, %v2566
  %v2864 = vsel %vm723, %v2848, %v2568
  %v2865 = vsel %vm723, %v2849, %v2570
  %v2866 = vsel %vm723, %v2850, %v2572
  %v2867 = vsel %vm723, %v2851, %v2574
  %v2868 = vsel %vm723, %v2852, %v2576
  %v2869 = vsel %vm723, %v2853, %v2578
  %v2870 = vsel %vm723, %v2854, %v2580
  %v2871 = vsel %vm723, %v2855, %v2582
  %v2872 = vsel %vm723, %v2856, %v2584
  %v2873 = vsel %vm740, %v2857, %v2602
  %v2874 = vsel %vm740, %v2858, %v2604
  %v2875 = vsel %vm740, %v2859, %v2606
  %v2876 = vsel %vm740, %v2860, %v2608
  %v2877 = vsel %vm740, %v2861, %v2610
  %v2878 = vsel %vm740, %v2862, %v2612
  %v2879 = vsel %vm740, %v2863, %v2614
  %v2880 = vsel %vm740, %v2864, %v2616
  %v2881 = vsel %vm740, %v2865, %v2618
  %v2882 = vsel %vm740, %v2866, %v2620
  %v2883 = vsel %vm740, %v2867, %v2622
  %v2884 = vsel %vm740, %v2868, %v2624
  %v2885 = vsel %vm740, %v2869, %v2626
  %v2886 = vsel %vm740, %v2870, %v2628
  %v2887 = vsel %vm740, %v2871, %v2630
  %v2888 = vsel %vm740, %v2872, %v2632
  %v2889 = vsel %vm757, %v2873, %v2602
  %v2890 = vsel %vm757, %v2874, %v2604
  %v2891 = vsel %vm757, %v2875, %v2606
  %v2892 = vsel %vm757, %v2876, %v2608
  %v2893 = vsel %vm757, %v2877, %v2610
  %v2894 = vsel %vm757, %v2878, %v2612
  %v2895 = vsel %vm757, %v2879, %v2614
  %v2896 = vsel %vm757, %v2880, %v2616
  %v2897 = vsel %vm757, %v2881, %v2618
  %v2898 = vsel %vm757, %v2882, %v2620
  %v2899 = vsel %vm757, %v2883, %v2622
  %v2900 = vsel %vm757, %v2884, %v2624
  %v2901 = vsel %vm757, %v2885, %v2626
  %v2902 = vsel %vm757, %v2886, %v2628
  %v2903 = vsel %vm757, %v2887, %v2630
  %v2904 = vsel %vm757, %v2888, %v2632
  %v2905 = vsel %vm774, %v2889, %v2602
  %v2906 = vsel %vm774, %v2890, %v2604
  %v2907 = vsel %vm774, %v2891, %v2606
  %v2908 = vsel %vm774, %v2892, %v2608
  %v2909 = vsel %vm774, %v2893, %v2610
  %v2910 = vsel %vm774, %v2894, %v2612
  %v2911 = vsel %vm774, %v2895, %v2614
  %v2912 = vsel %vm774, %v2896, %v2616
  %v2913 = vsel %vm774, %v2897, %v2618
  %v2914 = vsel %vm774, %v2898, %v2620
  %v2915 = vsel %vm774, %v2899, %v2622
  %v2916 = vsel %vm774, %v2900, %v2624
  %v2917 = vsel %vm774, %v2901, %v2626
  %v2918 = vsel %vm774, %v2902, %v2628
  %v2919 = vsel %vm774, %v2903, %v2630
  %v2920 = vsel %vm774, %v2904, %v2632
  %v2921 = vsel %vm791, %v2905, %v2602
  %v2922 = vsel %vm791, %v2906, %v2604
  %v2923 = vsel %vm791, %v2907, %v2606
  %v2924 = vsel %vm791, %v2908, %v2608
  %v2925 = vsel %vm791, %v2909, %v2610
  %v2926 = vsel %vm791, %v2910, %v2612
  %v2927 = vsel %vm791, %v2911, %v2614
  %v2928 = vsel %vm791, %v2912, %v2616
  %v2929 = vsel %vm791, %v2913, %v2618
  %v2930 = vsel %vm791, %v2914, %v2620
  %v2931 = vsel %vm791, %v2915, %v2622
  %v2932 = vsel %vm791, %v2916, %v2624
  %v2933 = vsel %vm791, %v2917, %v2626
  %v2934 = vsel %vm791, %v2918, %v2628
  %v2935 = vsel %vm791, %v2919, %v2630
  %v2936 = vsel %vm791, %v2920, %v2632
  %v2937 = vsel %vm808, %v2921, %v2650
  %v2938 = vsel %vm808, %v2922, %v2652
  %v2939 = vsel %vm808, %v2923, %v2654
  %v2940 = vsel %vm808, %v2924, %v2656
  %v2941 = vsel %vm808, %v2925, %v2658
  %v2942 = vsel %vm808, %v2926, %v2660
  %v2943 = vsel %vm808, %v2927, %v2662
  %v2944 = vsel %vm808, %v2928, %v2664
  %v2945 = vsel %vm808, %v2929, %v2666
  %v2946 = vsel %vm808, %v2930, %v2668
  %v2947 = vsel %vm808, %v2931, %v2670
  %v2948 = vsel %vm808, %v2932, %v2672
  %v2949 = vsel %vm808, %v2933, %v2674
  %v2950 = vsel %vm808, %v2934, %v2676
  %v2951 = vsel %vm808, %v2935, %v2678
  %v2952 = vsel %vm808, %v2936, %v2680
  %v2953 = vsel %vm825, %v2937, %v2698
  %v2954 = vsel %vm825, %v2938, %v2700
  %v2955 = vsel %vm825, %v2939, %v2702
  %v2956 = vsel %vm825, %v2940, %v2704
  %v2957 = vsel %vm825, %v2941, %v2706
  %v2958 = vsel %vm825, %v2942, %v2708
  %v2959 = vsel %vm825, %v2943, %v2710
  %v2960 = vsel %vm825, %v2944, %v2712
  %v2961 = vsel %vm825, %v2945, %v2714
  %v2962 = vsel %vm825, %v2946, %v2716
  %v2963 = vsel %vm825, %v2947, %v2718
  %v2964 = vsel %vm825, %v2948, %v2720
  %v2965 = vsel %vm825, %v2949, %v2722
  %v2966 = vsel %vm825, %v2950, %v2724
  %v2967 = vsel %vm825, %v2951, %v2726
  %v2968 = vsel %vm825, %v2952, %v2728
  %2969 = vrot.lane.b32.xlu0 %v205, 98
  %v2970 = vpop.permute.xlu0 %2969
  %2971 = vrot.lane.b32.xlu0 %v207, 98
  %v2972 = vpop.permute.xlu0 %2971
  %2973 = vrot.lane.b32.xlu0 %v209, 98
  %v2974 = vpop.permute.xlu0 %2973
  %2975 = vrot.lane.b32.xlu0 %v211, 98
  %v2976 = vpop.permute.xlu0 %2975
  %2977 = vrot.lane.b32.xlu0 %v213, 98
  %v2978 = vpop.permute.xlu0 %2977
  %2979 = vrot.lane.b32.xlu0 %v215, 98
  %v2980 = vpop.permute.xlu0 %2979
  %2981 = vrot.lane.b32.xlu0 %v217, 98
  %v2982 = vpop.permute.xlu0 %2981
  %2983 = vrot.lane.b32.xlu0 %v219, 98
  %v2984 = vpop.permute.xlu0 %2983
  %2985 = vrot.lane.b32.xlu0 %v223, 98
  %v2986 = vpop.permute.xlu0 %2985
  %2987 = vrot.lane.b32.xlu0 %v225, 98
  %v2988 = vpop.permute.xlu0 %2987
  %2989 = vrot.lane.b32.xlu0 %v227, 98
  %v2990 = vpop.permute.xlu0 %2989
  %2991 = vrot.lane.b32.xlu0 %v229, 98
  %v2992 = vpop.permute.xlu0 %2991
  %2993 = vrot.lane.b32.xlu0 %v231, 98
  %v2994 = vpop.permute.xlu0 %2993
  %2995 = vrot.lane.b32.xlu0 %v233, 98
  %v2996 = vpop.permute.xlu0 %2995
  %2997 = vrot.lane.b32.xlu0 %v235, 98
  %v2998 = vpop.permute.xlu0 %2997
  %2999 = vrot.lane.b32.xlu0 %v237, 98
  %v3000 = vpop.permute.xlu0 %2999
  %3017 = vrot.lane.b32.xlu0 %v297, 122
  %v3018 = vpop.permute.xlu0 %3017
  %3019 = vrot.lane.b32.xlu0 %v300, 122
  %v3020 = vpop.permute.xlu0 %3019
  %3021 = vrot.lane.b32.xlu0 %v303, 122
  %v3022 = vpop.permute.xlu0 %3021
  %3023 = vrot.lane.b32.xlu0 %v306, 122
  %v3024 = vpop.permute.xlu0 %3023
  %3025 = vrot.lane.b32.xlu0 %v309, 122
  %v3026 = vpop.permute.xlu0 %3025
  %3027 = vrot.lane.b32.xlu0 %v312, 122
  %v3028 = vpop.permute.xlu0 %3027
  %3029 = vrot.lane.b32.xlu0 %v315, 122
  %v3030 = vpop.permute.xlu0 %3029
  %3031 = vrot.lane.b32.xlu0 %v346, 122
  %v3032 = vpop.permute.xlu0 %3031
  %3033 = vrot.lane.b32.xlu0 %v321, 122
  %v3034 = vpop.permute.xlu0 %3033
  %3035 = vrot.lane.b32.xlu0 %v324, 122
  %v3036 = vpop.permute.xlu0 %3035
  %3037 = vrot.lane.b32.xlu0 %v327, 122
  %v3038 = vpop.permute.xlu0 %3037
  %3039 = vrot.lane.b32.xlu0 %v330, 122
  %v3040 = vpop.permute.xlu0 %3039
  %3041 = vrot.lane.b32.xlu0 %v333, 122
  %v3042 = vpop.permute.xlu0 %3041
  %3043 = vrot.lane.b32.xlu0 %v336, 122
  %v3044 = vpop.permute.xlu0 %3043
  %3045 = vrot.lane.b32.xlu0 %v339, 122
  %v3046 = vpop.permute.xlu0 %3045
  %3047 = vrot.lane.b32.xlu0 %v349, 122
  %v3048 = vpop.permute.xlu0 %3047
  %3065 = vrot.lane.b32.xlu0 %v205, 104
  %v3066 = vpop.permute.xlu0 %3065
  %3067 = vrot.lane.b32.xlu0 %v207, 104
  %v3068 = vpop.permute.xlu0 %3067
  %3069 = vrot.lane.b32.xlu0 %v209, 104
  %v3070 = vpop.permute.xlu0 %3069
  %3071 = vrot.lane.b32.xlu0 %v211, 104
  %v3072 = vpop.permute.xlu0 %3071
  %3073 = vrot.lane.b32.xlu0 %v213, 104
  %v3074 = vpop.permute.xlu0 %3073
  %3075 = vrot.lane.b32.xlu0 %v215, 104
  %v3076 = vpop.permute.xlu0 %3075
  %3077 = vrot.lane.b32.xlu0 %v217, 104
  %v3078 = vpop.permute.xlu0 %3077
  %3079 = vrot.lane.b32.xlu0 %v219, 104
  %v3080 = vpop.permute.xlu0 %3079
  %3081 = vrot.lane.b32.xlu0 %v223, 104
  %v3082 = vpop.permute.xlu0 %3081
  %3083 = vrot.lane.b32.xlu0 %v225, 104
  %v3084 = vpop.permute.xlu0 %3083
  %3085 = vrot.lane.b32.xlu0 %v227, 104
  %v3086 = vpop.permute.xlu0 %3085
  %3087 = vrot.lane.b32.xlu0 %v229, 104
  %v3088 = vpop.permute.xlu0 %3087
  %3089 = vrot.lane.b32.xlu0 %v231, 104
  %v3090 = vpop.permute.xlu0 %3089
  %3091 = vrot.lane.b32.xlu0 %v233, 104
  %v3092 = vpop.permute.xlu0 %3091
  %3093 = vrot.lane.b32.xlu0 %v235, 104
  %v3094 = vpop.permute.xlu0 %3093
  %3095 = vrot.lane.b32.xlu0 %v237, 104
  %v3096 = vpop.permute.xlu0 %3095
  %v3113 = vsel %vm1035, %v2970, %v2970
  %v3114 = vsel %vm1035, %v2972, %v2972
  %v3115 = vsel %vm1035, %v2974, %v2974
  %v3116 = vsel %vm1035, %v2976, %v2976
  %v3117 = vsel %vm1035, %v2978, %v2978
  %v3118 = vsel %vm1035, %v2980, %v2980
  %v3119 = vsel %vm1035, %v2982, %v2982
  %v3120 = vsel %vm1035, %v2984, %v2984
  %v3121 = vsel %vm1035, %v2986, %v2986
  %v3122 = vsel %vm1035, %v2988, %v2988
  %v3123 = vsel %vm1035, %v2990, %v2990
  %v3124 = vsel %vm1035, %v2992, %v2992
  %v3125 = vsel %vm1035, %v2994, %v2994
  %v3126 = vsel %vm1035, %v2996, %v2996
  %v3127 = vsel %vm1035, %v2998, %v2998
  %v3128 = vsel %vm1035, %v3000, %v3000
  %v3129 = vsel %vm1052, %v3113, %v3018
  %v3130 = vsel %vm1052, %v3114, %v3020
  %v3131 = vsel %vm1052, %v3115, %v3022
  %v3132 = vsel %vm1052, %v3116, %v3024
  %v3133 = vsel %vm1052, %v3117, %v3026
  %v3134 = vsel %vm1052, %v3118, %v3028
  %v3135 = vsel %vm1052, %v3119, %v3030
  %v3136 = vsel %vm1052, %v3120, %v3032
  %v3137 = vsel %vm1052, %v3121, %v3034
  %v3138 = vsel %vm1052, %v3122, %v3036
  %v3139 = vsel %vm1052, %v3123, %v3038
  %v3140 = vsel %vm1052, %v3124, %v3040
  %v3141 = vsel %vm1052, %v3125, %v3042
  %v3142 = vsel %vm1052, %v3126, %v3044
  %v3143 = vsel %vm1052, %v3127, %v3046
  %v3144 = vsel %vm1052, %v3128, %v3048
  %v3145 = vsel %vm638, %v3129, %v3066
  %v3146 = vsel %vm638, %v3130, %v3068
  %v3147 = vsel %vm638, %v3131, %v3070
  %v3148 = vsel %vm638, %v3132, %v3072
  %v3149 = vsel %vm638, %v3133, %v3074
  %v3150 = vsel %vm638, %v3134, %v3076
  %v3151 = vsel %vm638, %v3135, %v3078
  %v3152 = vsel %vm638, %v3136, %v3080
  %v3153 = vsel %vm638, %v3137, %v3082
  %v3154 = vsel %vm638, %v3138, %v3084
  %v3155 = vsel %vm638, %v3139, %v3086
  %v3156 = vsel %vm638, %v3140, %v3088
  %v3157 = vsel %vm638, %v3141, %v3090
  %v3158 = vsel %vm638, %v3142, %v3092
  %v3159 = vsel %vm638, %v3143, %v3094
  %v3160 = vsel %vm638, %v3144, %v3096
  %v3161 = vsel %vm655, %v3145, %v3066
  %v3162 = vsel %vm655, %v3146, %v3068
  %v3163 = vsel %vm655, %v3147, %v3070
  %v3164 = vsel %vm655, %v3148, %v3072
  %v3165 = vsel %vm655, %v3149, %v3074
  %v3166 = vsel %vm655, %v3150, %v3076
  %v3167 = vsel %vm655, %v3151, %v3078
  %v3168 = vsel %vm655, %v3152, %v3080
  %v3169 = vsel %vm655, %v3153, %v3082
  %v3170 = vsel %vm655, %v3154, %v3084
  %v3171 = vsel %vm655, %v3155, %v3086
  %v3172 = vsel %vm655, %v3156, %v3088
  %v3173 = vsel %vm655, %v3157, %v3090
  %v3174 = vsel %vm655, %v3158, %v3092
  %v3175 = vsel %vm655, %v3159, %v3094
  %v3176 = vsel %vm655, %v3160, %v3096
  %v3177 = vsel %vm672, %v3161, %v3066
  %v3178 = vsel %vm672, %v3162, %v3068
  %v3179 = vsel %vm672, %v3163, %v3070
  %v3180 = vsel %vm672, %v3164, %v3072
  %v3181 = vsel %vm672, %v3165, %v3074
  %v3182 = vsel %vm672, %v3166, %v3076
  %v3183 = vsel %vm672, %v3167, %v3078
  %v3184 = vsel %vm672, %v3168, %v3080
  %v3185 = vsel %vm672, %v3169, %v3082
  %v3186 = vsel %vm672, %v3170, %v3084
  %v3187 = vsel %vm672, %v3171, %v3086
  %v3188 = vsel %vm672, %v3172, %v3088
  %v3189 = vsel %vm672, %v3173, %v3090
  %v3190 = vsel %vm672, %v3174, %v3092
  %v3191 = vsel %vm672, %v3175, %v3094
  %v3192 = vsel %vm672, %v3176, %v3096
  %v3193 = vsel %vm689, %v3177, %v3066
  %v3194 = vsel %vm689, %v3178, %v3068
  %v3195 = vsel %vm689, %v3179, %v3070
  %v3196 = vsel %vm689, %v3180, %v3072
  %v3197 = vsel %vm689, %v3181, %v3074
  %v3198 = vsel %vm689, %v3182, %v3076
  %v3199 = vsel %vm689, %v3183, %v3078
  %v3200 = vsel %vm689, %v3184, %v3080
  %v3201 = vsel %vm689, %v3185, %v3082
  %v3202 = vsel %vm689, %v3186, %v3084
  %v3203 = vsel %vm689, %v3187, %v3086
  %v3204 = vsel %vm689, %v3188, %v3088
  %v3205 = vsel %vm689, %v3189, %v3090
  %v3206 = vsel %vm689, %v3190, %v3092
  %v3207 = vsel %vm689, %v3191, %v3094
  %v3208 = vsel %vm689, %v3192, %v3096
  %v3209 = vsel %vm706, %v3193, %v297
  %v3210 = vsel %vm706, %v3194, %v300
  %v3211 = vsel %vm706, %v3195, %v303
  %v3212 = vsel %vm706, %v3196, %v306
  %v3213 = vsel %vm706, %v3197, %v309
  %v3214 = vsel %vm706, %v3198, %v312
  %v3215 = vsel %vm706, %v3199, %v315
  %v3216 = vsel %vm706, %v3200, %v346
  %v3217 = vsel %vm706, %v3201, %v321
  %v3218 = vsel %vm706, %v3202, %v324
  %v3219 = vsel %vm706, %v3203, %v327
  %v3220 = vsel %vm706, %v3204, %v330
  %v3221 = vsel %vm706, %v3205, %v333
  %v3222 = vsel %vm706, %v3206, %v336
  %v3223 = vsel %vm706, %v3207, %v339
  %v3224 = vsel %vm706, %v3208, %v349
  %3241 = vrot.lane.b32.xlu0 %v3209, 96
  %v3242 = vpop.permute.xlu0 %3241
  %3243 = vrot.lane.b32.xlu0 %v3210, 96
  %v3244 = vpop.permute.xlu0 %3243
  %3245 = vrot.lane.b32.xlu0 %v3211, 96
  %v3246 = vpop.permute.xlu0 %3245
  %3247 = vrot.lane.b32.xlu0 %v3212, 96
  %v3248 = vpop.permute.xlu0 %3247
  %3249 = vrot.lane.b32.xlu0 %v3213, 96
  %v3250 = vpop.permute.xlu0 %3249
  %3251 = vrot.lane.b32.xlu0 %v3214, 96
  %v3252 = vpop.permute.xlu0 %3251
  %3253 = vrot.lane.b32.xlu0 %v3215, 96
  %v3254 = vpop.permute.xlu0 %3253
  %3255 = vrot.lane.b32.xlu0 %v3216, 96
  %v3256 = vpop.permute.xlu0 %3255
  %3257 = vrot.lane.b32.xlu0 %v3217, 96
  %v3258 = vpop.permute.xlu0 %3257
  %3259 = vrot.lane.b32.xlu0 %v3218, 96
  %v3260 = vpop.permute.xlu0 %3259
  %3261 = vrot.lane.b32.xlu0 %v3219, 96
  %v3262 = vpop.permute.xlu0 %3261
  %3263 = vrot.lane.b32.xlu0 %v3220, 96
  %v3264 = vpop.permute.xlu0 %3263
  %3265 = vrot.lane.b32.xlu0 %v3221, 96
  %v3266 = vpop.permute.xlu0 %3265
  %3267 = vrot.lane.b32.xlu0 %v3222, 96
  %v3268 = vpop.permute.xlu0 %3267
  %3269 = vrot.lane.b32.xlu0 %v3223, 96
  %v3270 = vpop.permute.xlu0 %3269
  %3271 = vrot.lane.b32.xlu0 %v3224, 96
  %v3272 = vpop.permute.xlu0 %3271
  %v3289 = vsel %vm1213, %v2953, %v3242
  %v3290 = vsel %vm1213, %v2954, %v3244
  %v3291 = vsel %vm1213, %v2955, %v3246
  %v3292 = vsel %vm1213, %v2956, %v3248
  %v3293 = vsel %vm1213, %v2957, %v3250
  %v3294 = vsel %vm1213, %v2958, %v3252
  %v3295 = vsel %vm1213, %v2959, %v3254
  %v3296 = vsel %vm1213, %v2960, %v3256
  %v3297 = vsel %vm1213, %v2961, %v3258
  %v3298 = vsel %vm1213, %v2962, %v3260
  %v3299 = vsel %vm1213, %v2963, %v3262
  %v3300 = vsel %vm1213, %v2964, %v3264
  %v3301 = vsel %vm1213, %v2965, %v3266
  %v3302 = vsel %vm1213, %v2966, %v3268
  %v3303 = vsel %vm1213, %v2967, %v3270
  %v3304 = vsel %vm1213, %v2968, %v3272
  %v3305 = vsel %vm1236, %v3242, 0
  %v3307 = vsel %vm1236, %v3244, 0
  %v3309 = vsel %vm1236, %v3246, 0
  %v3311 = vsel %vm1236, %v3248, 0
  %v3313 = vsel %vm1236, %v3250, 0
  %v3315 = vsel %vm1236, %v3252, 0
  %v3317 = vsel %vm1236, %v3254, 0
  %v3319 = vsel %vm1236, %v3256, 0
  %v3321 = vsel %vm1236, %v3258, 0
  %v3323 = vsel %vm1236, %v3260, 0
  %v3325 = vsel %vm1236, %v3262, 0
  %v3327 = vsel %vm1236, %v3264, 0
  %v3329 = vsel %vm1236, %v3266, 0
  %v3331 = vsel %vm1236, %v3268, 0
  %v3333 = vsel %vm1236, %v3270, 0
  %v3335 = vsel %vm1236, %v3272, 0
  %3337 = vmatprep.subr.mxu0 0.0
  %3338 = vmatpush1.msra.mxu0 %v254
  %3339 = vmatprep.subr.mxu0 0.0
  %3340 = vmatpush1.msra.mxu0 %v253
  %3341 = vmatprep.subr.mxu0 0.0
  %3342 = vmatpush1.msra.mxu0 %v252
  %3343 = vmatprep.subr.mxu0 0.0
  %3344 = vmatpush1.msra.mxu0 %v251
  %3345 = vmatprep.subr.mxu0 0.0
  %3346 = vmatpush1.msra.mxu0 %v250
  %3347 = vmatprep.subr.mxu0 0.0
  %3348 = vmatpush1.msra.mxu0 %v249
  %3349 = vmatprep.subr.mxu0 0.0
  %3350 = vmatpush1.msra.mxu0 %v248
  %3351 = vmatprep.subr.mxu0 0.0
  %3352 = vmatpush1.msra.mxu0 %v247
  %3353 = vmatprep.subr.mxu0 0.0
  %3354 = vmatpush1.msra.mxu0 %v246
  %3355 = vmatprep.subr.mxu0 0.0
  %3356 = vmatpush1.msra.mxu0 %v245
  %3357 = vmatprep.subr.mxu0 0.0
  %3358 = vmatpush1.msra.mxu0 %v244
  %3359 = vmatprep.subr.mxu0 0.0
  %3360 = vmatpush1.msra.mxu0 %v243
  %3361 = vmatprep.subr.mxu0 0.0
  %3362 = vmatpush1.msra.mxu0 %v242
  %3363 = vmatprep.subr.mxu0 0.0
  %3364 = vmatpush1.msra.mxu0 %v241
  %3365 = vmatprep.subr.mxu0 0.0
  %3366 = vmatpush1.msra.mxu0 %v240
  %3367 = vmatprep.subr.mxu0 0.0
  %3368 = vmatpush1.msra.mxu0 %v239
  %3369 = vmatprep.subr.mxu0 0.0
  %3370 = vmatpush2.msra.mxu0 0.0
  %3371 = vmatprep.subr.mxu0 0.0
  %3372 = vmatpush2.msra.mxu0 0.0
  %3373 = vmatprep.subr.mxu0 0.0
  %3374 = vmatpush2.msra.mxu0 0.0
  %3375 = vmatprep.subr.mxu0 0.0
  %3376 = vmatpush2.msra.mxu0 0.0
  %3377 = vmatprep.subr.mxu0 0.0
  %3378 = vmatpush2.msra.mxu0 0.0
  %3379 = vmatprep.subr.mxu0 0.0
  %3380 = vmatpush2.msra.mxu0 0.0
  %3381 = vmatprep.subr.mxu0 0.0
  %3382 = vmatpush2.msra.mxu0 0.0
  %3383 = vmatprep.subr.mxu0 0.0
  %3384 = vmatpush2.msra.mxu0 0.0
  %3385 = vmatprep.subr.mxu0 0.0
  %3386 = vmatpush2.msra.mxu0 0.0
  %3387 = vmatprep.subr.mxu0 0.0
  %3388 = vmatpush2.msra.mxu0 0.0
  %3389 = vmatprep.subr.mxu0 0.0
  %3390 = vmatpush2.msra.mxu0 0.0
  %3391 = vmatprep.subr.mxu0 0.0
  %3392 = vmatpush2.msra.mxu0 0.0
  %3393 = vmatprep.subr.mxu0 0.0
  %3394 = vmatpush2.msra.mxu0 0.0
  %3395 = vmatprep.subr.mxu0 0.0
  %3396 = vmatpush2.msra.mxu0 %v1271
  %3397 = vmatprep.subr.mxu0 0.0
  %3398 = vmatpush2.msra.mxu0 %v256
  %3399 = vmatprep.subr.mxu0 0.0
  %3400 = vmatpush2.msra.mxu0 %v255
  %3401 = vmatprep.mubr.f32.mxu0 %v3305
  %3402 = vmatmul.mubr.f32.gmra.mxu0 %v3289
  %v3403 = vpop.f32.mrf.mxu0
  %v3404 = vadd.f32 %v1234, %v3403
  %v3405 = vpop.f32.mrf.mxu0
  %3406 = vmatprep.mubr.f32.mxu0 %v3307
  %3407 = vmatmul.mubr.f32.gmra.mxu0 %v3290
  %v3408 = vpop.f32.mrf.mxu0
  %v3409 = vadd.f32 %v1234, %v3408
  %v3410 = vpop.f32.mrf.mxu0
  %3411 = vmatprep.mubr.f32.mxu0 %v3309
  %3412 = vmatmul.mubr.f32.gmra.mxu0 %v3291
  %v3413 = vpop.f32.mrf.mxu0
  %v3414 = vadd.f32 %v1234, %v3413
  %v3415 = vpop.f32.mrf.mxu0
  %3416 = vmatprep.mubr.f32.mxu0 %v3311
  %3417 = vmatmul.mubr.f32.gmra.mxu0 %v3292
  %v3418 = vpop.f32.mrf.mxu0
  %v3419 = vadd.f32 %v1234, %v3418
  %v3420 = vpop.f32.mrf.mxu0
  %3421 = vmatprep.mubr.f32.mxu0 %v3313
  %3422 = vmatmul.mubr.f32.gmra.mxu0 %v3293
  %v3423 = vpop.f32.mrf.mxu0
  %v3424 = vadd.f32 %v1234, %v3423
  %v3425 = vpop.f32.mrf.mxu0
  %3426 = vmatprep.mubr.f32.mxu0 %v3315
  %3427 = vmatmul.mubr.f32.gmra.mxu0 %v3294
  %v3428 = vpop.f32.mrf.mxu0
  %v3429 = vadd.f32 %v1234, %v3428
  %v3430 = vpop.f32.mrf.mxu0
  %3431 = vmatprep.mubr.f32.mxu0 %v3317
  %3432 = vmatmul.mubr.f32.gmra.mxu0 %v3295
  %v3433 = vpop.f32.mrf.mxu0
  %v3434 = vadd.f32 %v1234, %v3433
  %v3435 = vpop.f32.mrf.mxu0
  %3436 = vmatprep.mubr.f32.mxu0 %v3319
  %3437 = vmatmul.mubr.f32.gmra.mxu0 %v3296
  %v3438 = vpop.f32.mrf.mxu0
  %v3439 = vadd.f32 %v1234, %v3438
  %v3440 = vpop.f32.mrf.mxu0
  %3441 = vmatprep.mubr.f32.mxu0 %v3321
  %3442 = vmatmul.mubr.f32.gmra.mxu0 %v3297
  %v3443 = vpop.f32.mrf.mxu0
  %v3444 = vadd.f32 %v1234, %v3443
  %v3445 = vpop.f32.mrf.mxu0
  %3446 = vmatprep.mubr.f32.mxu0 %v3323
  %3447 = vmatmul.mubr.f32.gmra.mxu0 %v3298
  %v3448 = vpop.f32.mrf.mxu0
  %v3449 = vadd.f32 %v1234, %v3448
  %v3450 = vpop.f32.mrf.mxu0
  %3451 = vmatprep.mubr.f32.mxu0 %v3325
  %3452 = vmatmul.mubr.f32.gmra.mxu0 %v3299
  %v3453 = vpop.f32.mrf.mxu0
  %v3454 = vadd.f32 %v1234, %v3453
  %v3455 = vpop.f32.mrf.mxu0
  %3456 = vmatprep.mubr.f32.mxu0 %v3327
  %3457 = vmatmul.mubr.f32.gmra.mxu0 %v3300
  %v3458 = vpop.f32.mrf.mxu0
  %v3459 = vadd.f32 %v1234, %v3458
  %v3460 = vpop.f32.mrf.mxu0
  %3461 = vmatprep.mubr.f32.mxu0 %v3329
  %3462 = vmatmul.mubr.f32.gmra.mxu0 %v3301
  %v3463 = vpop.f32.mrf.mxu0
  %v3464 = vadd.f32 %v1234, %v3463
  %v3465 = vpop.f32.mrf.mxu0
  %3466 = vmatprep.mubr.f32.mxu0 %v3331
  %3467 = vmatmul.mubr.f32.gmra.mxu0 %v3302
  %v3468 = vpop.f32.mrf.mxu0
  %v3469 = vadd.f32 %v1234, %v3468
  %v3470 = vpop.f32.mrf.mxu0
  %3471 = vmatprep.mubr.f32.mxu0 %v3333
  %3472 = vmatmul.mubr.f32.gmra.mxu0 %v3303
  %v3473 = vpop.f32.mrf.mxu0
  %v3474 = vadd.f32 %v1234, %v3473
  %v3475 = vpop.f32.mrf.mxu0
  %3476 = vmatprep.mubr.f32.mxu0 %v3335
  %3477 = vmatmul.mubr.f32.gmra.mxu0 %v3304
  %v3478 = vpop.f32.mrf.mxu0
  %v3479 = vadd.f32 %v1234, %v3478
  %v3480 = vpop.f32.mrf.mxu0
  %3481 = vdwg.mxu0
  %v3482 = vmax.f32 %v3404, 0.0
  %v3483 = vmax.f32 %v3409, 0.0
  %v3484 = vmax.f32 %v3414, 0.0
  %v3485 = vmax.f32 %v3419, 0.0
  %v3486 = vmax.f32 %v3424, 0.0
  %v3487 = vmax.f32 %v3429, 0.0
  %v3488 = vmax.f32 %v3434, 0.0
  %v3489 = vmax.f32 %v3439, 0.0
  %v3490 = vmax.f32 %v3444, 0.0
  %v3491 = vmax.f32 %v3449, 0.0
  %v3492 = vmax.f32 %v3454, 0.0
  %v3493 = vmax.f32 %v3459, 0.0
  %v3494 = vmax.f32 %v3464, 0.0
  %v3495 = vmax.f32 %v3469, 0.0
  %v3496 = vmax.f32 %v3474, 0.0
  %v3497 = vmax.f32 %v3479, 0.0
  %s3498 = scalar_lea.vmem [#allocation2], 336
  %3499 = vst.msk [vmem:[%s3498] sm:$0xff] %vm41, %v3482
  %3500 = vst.msk [vmem:[%s3498 + $0x10] sm:$0xff] %vm41, %v3483
  %3501 = vst.msk [vmem:[%s3498 + $0x20] sm:$0xff] %vm41, %v3484
  %3502 = vst.msk [vmem:[%s3498 + $0x30] sm:$0xff] %vm41, %v3485
  %3503 = vst.msk [vmem:[%s3498 + $0x40] sm:$0xff] %vm41, %v3486
  %3504 = vst.msk [vmem:[%s3498 + $0x50] sm:$0xff] %vm41, %v3487
  %3505 = vst.msk [vmem:[%s3498 + $0x60] sm:$0xff] %vm41, %v3488
  %3506 = vst.msk [vmem:[%s3498 + $0x70] sm:$0xff] %vm41, %v3489
  %3507 = vst.msk [vmem:[%s3498 + $0xa0] sm:$0xff] %vm41, %v3490
  %3508 = vst.msk [vmem:[%s3498 + $0xb0] sm:$0xff] %vm41, %v3491
  %3509 = vst.msk [vmem:[%s3498 + $0xc0] sm:$0xff] %vm41, %v3492
  %3510 = vst.msk [vmem:[%s3498 + $0xd0] sm:$0xff] %vm41, %v3493
  %3511 = vst.msk [vmem:[%s3498 + $0xe0] sm:$0xff] %vm41, %v3494
  %3512 = vst.msk [vmem:[%s3498 + $0xf0] sm:$0xff] %vm41, %v3495
  %3513 = vst.msk [vmem:[%s3498 + $0x100] sm:$0xff] %vm41, %v3496
  %3514 = vst.msk [vmem:[%s3498 + $0x110] sm:$0xff] %vm41, %v3497
  %3515 = vrot.lane.b32.xlu0 %v203, 68
  %v3516 = vpop.permute.xlu0 %3515
  %3517 = vrot.lane.b32.xlu0 %v205, 68
  %v3518 = vpop.permute.xlu0 %3517
  %3519 = vrot.lane.b32.xlu0 %v207, 68
  %v3520 = vpop.permute.xlu0 %3519
  %3521 = vrot.lane.b32.xlu0 %v209, 68
  %v3522 = vpop.permute.xlu0 %3521
  %3523 = vrot.lane.b32.xlu0 %v211, 68
  %v3524 = vpop.permute.xlu0 %3523
  %3525 = vrot.lane.b32.xlu0 %v213, 68
  %v3526 = vpop.permute.xlu0 %3525
  %3527 = vrot.lane.b32.xlu0 %v215, 68
  %v3528 = vpop.permute.xlu0 %3527
  %3529 = vrot.lane.b32.xlu0 %v217, 68
  %v3530 = vpop.permute.xlu0 %3529
  %3531 = vrot.lane.b32.xlu0 %v221, 68
  %v3532 = vpop.permute.xlu0 %3531
  %3533 = vrot.lane.b32.xlu0 %v223, 68
  %v3534 = vpop.permute.xlu0 %3533
  %3535 = vrot.lane.b32.xlu0 %v225, 68
  %v3536 = vpop.permute.xlu0 %3535
  %3537 = vrot.lane.b32.xlu0 %v227, 68
  %v3538 = vpop.permute.xlu0 %3537
  %3539 = vrot.lane.b32.xlu0 %v229, 68
  %v3540 = vpop.permute.xlu0 %3539
  %3541 = vrot.lane.b32.xlu0 %v231, 68
  %v3542 = vpop.permute.xlu0 %3541
  %3543 = vrot.lane.b32.xlu0 %v233, 68
  %v3544 = vpop.permute.xlu0 %3543
  %3545 = vrot.lane.b32.xlu0 %v235, 68
  %v3546 = vpop.permute.xlu0 %3545
  %3563 = vrot.lane.b32.xlu0 %v294, 92
  %v3564 = vpop.permute.xlu0 %3563
  %3565 = vrot.lane.b32.xlu0 %v297, 92
  %v3566 = vpop.permute.xlu0 %3565
  %3567 = vrot.lane.b32.xlu0 %v300, 92
  %v3568 = vpop.permute.xlu0 %3567
  %3569 = vrot.lane.b32.xlu0 %v303, 92
  %v3570 = vpop.permute.xlu0 %3569
  %3571 = vrot.lane.b32.xlu0 %v306, 92
  %v3572 = vpop.permute.xlu0 %3571
  %3573 = vrot.lane.b32.xlu0 %v309, 92
  %v3574 = vpop.permute.xlu0 %3573
  %3575 = vrot.lane.b32.xlu0 %v312, 92
  %v3576 = vpop.permute.xlu0 %3575
  %3577 = vrot.lane.b32.xlu0 %v315, 92
  %v3578 = vpop.permute.xlu0 %3577
  %3579 = vrot.lane.b32.xlu0 %v318, 92
  %v3580 = vpop.permute.xlu0 %3579
  %3581 = vrot.lane.b32.xlu0 %v321, 92
  %v3582 = vpop.permute.xlu0 %3581
  %3583 = vrot.lane.b32.xlu0 %v324, 92
  %v3584 = vpop.permute.xlu0 %3583
  %3585 = vrot.lane.b32.xlu0 %v327, 92
  %v3586 = vpop.permute.xlu0 %3585
  %3587 = vrot.lane.b32.xlu0 %v330, 92
  %v3588 = vpop.permute.xlu0 %3587
  %3589 = vrot.lane.b32.xlu0 %v333, 92
  %v3590 = vpop.permute.xlu0 %3589
  %3591 = vrot.lane.b32.xlu0 %v336, 92
  %v3592 = vpop.permute.xlu0 %3591
  %3593 = vrot.lane.b32.xlu0 %v339, 92
  %v3594 = vpop.permute.xlu0 %3593
  %3611 = vrot.lane.b32.xlu0 %v203, 74
  %v3612 = vpop.permute.xlu0 %3611
  %3613 = vrot.lane.b32.xlu0 %v205, 74
  %v3614 = vpop.permute.xlu0 %3613
  %3615 = vrot.lane.b32.xlu0 %v207, 74
  %v3616 = vpop.permute.xlu0 %3615
  %3617 = vrot.lane.b32.xlu0 %v209, 74
  %v3618 = vpop.permute.xlu0 %3617
  %3619 = vrot.lane.b32.xlu0 %v211, 74
  %v3620 = vpop.permute.xlu0 %3619
  %3621 = vrot.lane.b32.xlu0 %v213, 74
  %v3622 = vpop.permute.xlu0 %3621
  %3623 = vrot.lane.b32.xlu0 %v215, 74
  %v3624 = vpop.permute.xlu0 %3623
  %3625 = vrot.lane.b32.xlu0 %v217, 74
  %v3626 = vpop.permute.xlu0 %3625
  %3627 = vrot.lane.b32.xlu0 %v221, 74
  %v3628 = vpop.permute.xlu0 %3627
  %3629 = vrot.lane.b32.xlu0 %v223, 74
  %v3630 = vpop.permute.xlu0 %3629
  %3631 = vrot.lane.b32.xlu0 %v225, 74
  %v3632 = vpop.permute.xlu0 %3631
  %3633 = vrot.lane.b32.xlu0 %v227, 74
  %v3634 = vpop.permute.xlu0 %3633
  %3635 = vrot.lane.b32.xlu0 %v229, 74
  %v3636 = vpop.permute.xlu0 %3635
  %3637 = vrot.lane.b32.xlu0 %v231, 74
  %v3638 = vpop.permute.xlu0 %3637
  %3639 = vrot.lane.b32.xlu0 %v233, 74
  %v3640 = vpop.permute.xlu0 %3639
  %3641 = vrot.lane.b32.xlu0 %v235, 74
  %v3642 = vpop.permute.xlu0 %3641
  %3659 = vrot.lane.b32.xlu0 %v294, 98
  %v3660 = vpop.permute.xlu0 %3659
  %3661 = vrot.lane.b32.xlu0 %v297, 98
  %v3662 = vpop.permute.xlu0 %3661
  %3663 = vrot.lane.b32.xlu0 %v300, 98
  %v3664 = vpop.permute.xlu0 %3663
  %3665 = vrot.lane.b32.xlu0 %v303, 98
  %v3666 = vpop.permute.xlu0 %3665
  %3667 = vrot.lane.b32.xlu0 %v306, 98
  %v3668 = vpop.permute.xlu0 %3667
  %3669 = vrot.lane.b32.xlu0 %v309, 98
  %v3670 = vpop.permute.xlu0 %3669
  %3671 = vrot.lane.b32.xlu0 %v312, 98
  %v3672 = vpop.permute.xlu0 %3671
  %3673 = vrot.lane.b32.xlu0 %v315, 98
  %v3674 = vpop.permute.xlu0 %3673
  %3675 = vrot.lane.b32.xlu0 %v318, 98
  %v3676 = vpop.permute.xlu0 %3675
  %3677 = vrot.lane.b32.xlu0 %v321, 98
  %v3678 = vpop.permute.xlu0 %3677
  %3679 = vrot.lane.b32.xlu0 %v324, 98
  %v3680 = vpop.permute.xlu0 %3679
  %3681 = vrot.lane.b32.xlu0 %v327, 98
  %v3682 = vpop.permute.xlu0 %3681
  %3683 = vrot.lane.b32.xlu0 %v330, 98
  %v3684 = vpop.permute.xlu0 %3683
  %3685 = vrot.lane.b32.xlu0 %v333, 98
  %v3686 = vpop.permute.xlu0 %3685
  %3687 = vrot.lane.b32.xlu0 %v336, 98
  %v3688 = vpop.permute.xlu0 %3687
  %3689 = vrot.lane.b32.xlu0 %v339, 98
  %v3690 = vpop.permute.xlu0 %3689
  %3707 = vrot.lane.b32.xlu0 %v205, 48
  %v3708 = vpop.permute.xlu0 %3707
  %3709 = vrot.lane.b32.xlu0 %v207, 48
  %v3710 = vpop.permute.xlu0 %3709
  %3711 = vrot.lane.b32.xlu0 %v209, 48
  %v3712 = vpop.permute.xlu0 %3711
  %3713 = vrot.lane.b32.xlu0 %v211, 48
  %v3714 = vpop.permute.xlu0 %3713
  %3715 = vrot.lane.b32.xlu0 %v213, 48
  %v3716 = vpop.permute.xlu0 %3715
  %3717 = vrot.lane.b32.xlu0 %v215, 48
  %v3718 = vpop.permute.xlu0 %3717
  %3719 = vrot.lane.b32.xlu0 %v217, 48
  %v3720 = vpop.permute.xlu0 %3719
  %3721 = vrot.lane.b32.xlu0 %v219, 48
  %v3722 = vpop.permute.xlu0 %3721
  %3723 = vrot.lane.b32.xlu0 %v223, 48
  %v3724 = vpop.permute.xlu0 %3723
  %3725 = vrot.lane.b32.xlu0 %v225, 48
  %v3726 = vpop.permute.xlu0 %3725
  %3727 = vrot.lane.b32.xlu0 %v227, 48
  %v3728 = vpop.permute.xlu0 %3727
  %3729 = vrot.lane.b32.xlu0 %v229, 48
  %v3730 = vpop.permute.xlu0 %3729
  %3731 = vrot.lane.b32.xlu0 %v231, 48
  %v3732 = vpop.permute.xlu0 %3731
  %3733 = vrot.lane.b32.xlu0 %v233, 48
  %v3734 = vpop.permute.xlu0 %3733
  %3735 = vrot.lane.b32.xlu0 %v235, 48
  %v3736 = vpop.permute.xlu0 %3735
  %3737 = vrot.lane.b32.xlu0 %v237, 48
  %v3738 = vpop.permute.xlu0 %3737
  %3755 = vrot.lane.b32.xlu0 %v297, 72
  %v3756 = vpop.permute.xlu0 %3755
  %3757 = vrot.lane.b32.xlu0 %v300, 72
  %v3758 = vpop.permute.xlu0 %3757
  %3759 = vrot.lane.b32.xlu0 %v303, 72
  %v3760 = vpop.permute.xlu0 %3759
  %3761 = vrot.lane.b32.xlu0 %v306, 72
  %v3762 = vpop.permute.xlu0 %3761
  %3763 = vrot.lane.b32.xlu0 %v309, 72
  %v3764 = vpop.permute.xlu0 %3763
  %3765 = vrot.lane.b32.xlu0 %v312, 72
  %v3766 = vpop.permute.xlu0 %3765
  %3767 = vrot.lane.b32.xlu0 %v315, 72
  %v3768 = vpop.permute.xlu0 %3767
  %3769 = vrot.lane.b32.xlu0 %v346, 72
  %v3770 = vpop.permute.xlu0 %3769
  %3771 = vrot.lane.b32.xlu0 %v321, 72
  %v3772 = vpop.permute.xlu0 %3771
  %3773 = vrot.lane.b32.xlu0 %v324, 72
  %v3774 = vpop.permute.xlu0 %3773
  %3775 = vrot.lane.b32.xlu0 %v327, 72
  %v3776 = vpop.permute.xlu0 %3775
  %3777 = vrot.lane.b32.xlu0 %v330, 72
  %v3778 = vpop.permute.xlu0 %3777
  %3779 = vrot.lane.b32.xlu0 %v333, 72
  %v3780 = vpop.permute.xlu0 %3779
  %3781 = vrot.lane.b32.xlu0 %v336, 72
  %v3782 = vpop.permute.xlu0 %3781
  %3783 = vrot.lane.b32.xlu0 %v339, 72
  %v3784 = vpop.permute.xlu0 %3783
  %3785 = vrot.lane.b32.xlu0 %v349, 72
  %v3786 = vpop.permute.xlu0 %3785
  %3803 = vrot.lane.b32.xlu0 %v205, 54
  %v3804 = vpop.permute.xlu0 %3803
  %3805 = vrot.lane.b32.xlu0 %v207, 54
  %v3806 = vpop.permute.xlu0 %3805
  %3807 = vrot.lane.b32.xlu0 %v209, 54
  %v3808 = vpop.permute.xlu0 %3807
  %3809 = vrot.lane.b32.xlu0 %v211, 54
  %v3810 = vpop.permute.xlu0 %3809
  %3811 = vrot.lane.b32.xlu0 %v213, 54
  %v3812 = vpop.permute.xlu0 %3811
  %3813 = vrot.lane.b32.xlu0 %v215, 54
  %v3814 = vpop.permute.xlu0 %3813
  %3815 = vrot.lane.b32.xlu0 %v217, 54
  %v3816 = vpop.permute.xlu0 %3815
  %3817 = vrot.lane.b32.xlu0 %v219, 54
  %v3818 = vpop.permute.xlu0 %3817
  %3819 = vrot.lane.b32.xlu0 %v223, 54
  %v3820 = vpop.permute.xlu0 %3819
  %3821 = vrot.lane.b32.xlu0 %v225, 54
  %v3822 = vpop.permute.xlu0 %3821
  %3823 = vrot.lane.b32.xlu0 %v227, 54
  %v3824 = vpop.permute.xlu0 %3823
  %3825 = vrot.lane.b32.xlu0 %v229, 54
  %v3826 = vpop.permute.xlu0 %3825
  %3827 = vrot.lane.b32.xlu0 %v231, 54
  %v3828 = vpop.permute.xlu0 %3827
  %3829 = vrot.lane.b32.xlu0 %v233, 54
  %v3830 = vpop.permute.xlu0 %3829
  %3831 = vrot.lane.b32.xlu0 %v235, 54
  %v3832 = vpop.permute.xlu0 %3831
  %3833 = vrot.lane.b32.xlu0 %v237, 54
  %v3834 = vpop.permute.xlu0 %3833
  %v3851 = vsel %vm1035, %v3516, %v3564
  %v3852 = vsel %vm1035, %v3518, %v3566
  %v3853 = vsel %vm1035, %v3520, %v3568
  %v3854 = vsel %vm1035, %v3522, %v3570
  %v3855 = vsel %vm1035, %v3524, %v3572
  %v3856 = vsel %vm1035, %v3526, %v3574
  %v3857 = vsel %vm1035, %v3528, %v3576
  %v3858 = vsel %vm1035, %v3530, %v3578
  %v3859 = vsel %vm1035, %v3532, %v3580
  %v3860 = vsel %vm1035, %v3534, %v3582
  %v3861 = vsel %vm1035, %v3536, %v3584
  %v3862 = vsel %vm1035, %v3538, %v3586
  %v3863 = vsel %vm1035, %v3540, %v3588
  %v3864 = vsel %vm1035, %v3542, %v3590
  %v3865 = vsel %vm1035, %v3544, %v3592
  %v3866 = vsel %vm1035, %v3546, %v3594
  %v3867 = vsel %vm1052, %v3851, %v3564
  %v3868 = vsel %vm1052, %v3852, %v3566
  %v3869 = vsel %vm1052, %v3853, %v3568
  %v3870 = vsel %vm1052, %v3854, %v3570
  %v3871 = vsel %vm1052, %v3855, %v3572
  %v3872 = vsel %vm1052, %v3856, %v3574
  %v3873 = vsel %vm1052, %v3857, %v3576
  %v3874 = vsel %vm1052, %v3858, %v3578
  %v3875 = vsel %vm1052, %v3859, %v3580
  %v3876 = vsel %vm1052, %v3860, %v3582
  %v3877 = vsel %vm1052, %v3861, %v3584
  %v3878 = vsel %vm1052, %v3862, %v3586
  %v3879 = vsel %vm1052, %v3863, %v3588
  %v3880 = vsel %vm1052, %v3864, %v3590
  %v3881 = vsel %vm1052, %v3865, %v3592
  %v3882 = vsel %vm1052, %v3866, %v3594
  %v3883 = vsel %vm638, %v3867, %v3564
  %v3884 = vsel %vm638, %v3868, %v3566
  %v3885 = vsel %vm638, %v3869, %v3568
  %v3886 = vsel %vm638, %v3870, %v3570
  %v3887 = vsel %vm638, %v3871, %v3572
  %v3888 = vsel %vm638, %v3872, %v3574
  %v3889 = vsel %vm638, %v3873, %v3576
  %v3890 = vsel %vm638, %v3874, %v3578
  %v3891 = vsel %vm638, %v3875, %v3580
  %v3892 = vsel %vm638, %v3876, %v3582
  %v3893 = vsel %vm638, %v3877, %v3584
  %v3894 = vsel %vm638, %v3878, %v3586
  %v3895 = vsel %vm638, %v3879, %v3588
  %v3896 = vsel %vm638, %v3880, %v3590
  %v3897 = vsel %vm638, %v3881, %v3592
  %v3898 = vsel %vm638, %v3882, %v3594
  %v3899 = vsel %vm655, %v3883, %v3612
  %v3900 = vsel %vm655, %v3884, %v3614
  %v3901 = vsel %vm655, %v3885, %v3616
  %v3902 = vsel %vm655, %v3886, %v3618
  %v3903 = vsel %vm655, %v3887, %v3620
  %v3904 = vsel %vm655, %v3888, %v3622
  %v3905 = vsel %vm655, %v3889, %v3624
  %v3906 = vsel %vm655, %v3890, %v3626
  %v3907 = vsel %vm655, %v3891, %v3628
  %v3908 = vsel %vm655, %v3892, %v3630
  %v3909 = vsel %vm655, %v3893, %v3632
  %v3910 = vsel %vm655, %v3894, %v3634
  %v3911 = vsel %vm655, %v3895, %v3636
  %v3912 = vsel %vm655, %v3896, %v3638
  %v3913 = vsel %vm655, %v3897, %v3640
  %v3914 = vsel %vm655, %v3898, %v3642
  %v3915 = vsel %vm672, %v3899, %v3612
  %v3916 = vsel %vm672, %v3900, %v3614
  %v3917 = vsel %vm672, %v3901, %v3616
  %v3918 = vsel %vm672, %v3902, %v3618
  %v3919 = vsel %vm672, %v3903, %v3620
  %v3920 = vsel %vm672, %v3904, %v3622
  %v3921 = vsel %vm672, %v3905, %v3624
  %v3922 = vsel %vm672, %v3906, %v3626
  %v3923 = vsel %vm672, %v3907, %v3628
  %v3924 = vsel %vm672, %v3908, %v3630
  %v3925 = vsel %vm672, %v3909, %v3632
  %v3926 = vsel %vm672, %v3910, %v3634
  %v3927 = vsel %vm672, %v3911, %v3636
  %v3928 = vsel %vm672, %v3912, %v3638
  %v3929 = vsel %vm672, %v3913, %v3640
  %v3930 = vsel %vm672, %v3914, %v3642
  %v3931 = vsel %vm689, %v3915, %v3660
  %v3932 = vsel %vm689, %v3916, %v3662
  %v3933 = vsel %vm689, %v3917, %v3664
  %v3934 = vsel %vm689, %v3918, %v3666
  %v3935 = vsel %vm689, %v3919, %v3668
  %v3936 = vsel %vm689, %v3920, %v3670
  %v3937 = vsel %vm689, %v3921, %v3672
  %v3938 = vsel %vm689, %v3922, %v3674
  %v3939 = vsel %vm689, %v3923, %v3676
  %v3940 = vsel %vm689, %v3924, %v3678
  %v3941 = vsel %vm689, %v3925, %v3680
  %v3942 = vsel %vm689, %v3926, %v3682
  %v3943 = vsel %vm689, %v3927, %v3684
  %v3944 = vsel %vm689, %v3928, %v3686
  %v3945 = vsel %vm689, %v3929, %v3688
  %v3946 = vsel %vm689, %v3930, %v3690
  %v3947 = vsel %vm706, %v3931, %v3660
  %v3948 = vsel %vm706, %v3932, %v3662
  %v3949 = vsel %vm706, %v3933, %v3664
  %v3950 = vsel %vm706, %v3934, %v3666
  %v3951 = vsel %vm706, %v3935, %v3668
  %v3952 = vsel %vm706, %v3936, %v3670
  %v3953 = vsel %vm706, %v3937, %v3672
  %v3954 = vsel %vm706, %v3938, %v3674
  %v3955 = vsel %vm706, %v3939, %v3676
  %v3956 = vsel %vm706, %v3940, %v3678
  %v3957 = vsel %vm706, %v3941, %v3680
  %v3958 = vsel %vm706, %v3942, %v3682
  %v3959 = vsel %vm706, %v3943, %v3684
  %v3960 = vsel %vm706, %v3944, %v3686
  %v3961 = vsel %vm706, %v3945, %v3688
  %v3962 = vsel %vm706, %v3946, %v3690
  %v3963 = vsel %vm723, %v3947, %v3660
  %v3964 = vsel %vm723, %v3948, %v3662
  %v3965 = vsel %vm723, %v3949, %v3664
  %v3966 = vsel %vm723, %v3950, %v3666
  %v3967 = vsel %vm723, %v3951, %v3668
  %v3968 = vsel %vm723, %v3952, %v3670
  %v3969 = vsel %vm723, %v3953, %v3672
  %v3970 = vsel %vm723, %v3954, %v3674
  %v3971 = vsel %vm723, %v3955, %v3676
  %v3972 = vsel %vm723, %v3956, %v3678
  %v3973 = vsel %vm723, %v3957, %v3680
  %v3974 = vsel %vm723, %v3958, %v3682
  %v3975 = vsel %vm723, %v3959, %v3684
  %v3976 = vsel %vm723, %v3960, %v3686
  %v3977 = vsel %vm723, %v3961, %v3688
  %v3978 = vsel %vm723, %v3962, %v3690
  %v3979 = vsel %vm740, %v3963, %v3708
  %v3980 = vsel %vm740, %v3964, %v3710
  %v3981 = vsel %vm740, %v3965, %v3712
  %v3982 = vsel %vm740, %v3966, %v3714
  %v3983 = vsel %vm740, %v3967, %v3716
  %v3984 = vsel %vm740, %v3968, %v3718
  %v3985 = vsel %vm740, %v3969, %v3720
  %v3986 = vsel %vm740, %v3970, %v3722
  %v3987 = vsel %vm740, %v3971, %v3724
  %v3988 = vsel %vm740, %v3972, %v3726
  %v3989 = vsel %vm740, %v3973, %v3728
  %v3990 = vsel %vm740, %v3974, %v3730
  %v3991 = vsel %vm740, %v3975, %v3732
  %v3992 = vsel %vm740, %v3976, %v3734
  %v3993 = vsel %vm740, %v3977, %v3736
  %v3994 = vsel %vm740, %v3978, %v3738
  %v3995 = vsel %vm757, %v3979, %v3708
  %v3996 = vsel %vm757, %v3980, %v3710
  %v3997 = vsel %vm757, %v3981, %v3712
  %v3998 = vsel %vm757, %v3982, %v3714
  %v3999 = vsel %vm757, %v3983, %v3716
  %v4000 = vsel %vm757, %v3984, %v3718
  %v4001 = vsel %vm757, %v3985, %v3720
  %v4002 = vsel %vm757, %v3986, %v3722
  %v4003 = vsel %vm757, %v3987, %v3724
  %v4004 = vsel %vm757, %v3988, %v3726
  %v4005 = vsel %vm757, %v3989, %v3728
  %v4006 = vsel %vm757, %v3990, %v3730
  %v4007 = vsel %vm757, %v3991, %v3732
  %v4008 = vsel %vm757, %v3992, %v3734
  %v4009 = vsel %vm757, %v3993, %v3736
  %v4010 = vsel %vm757, %v3994, %v3738
  %v4011 = vsel %vm774, %v3995, %v3756
  %v4012 = vsel %vm774, %v3996, %v3758
  %v4013 = vsel %vm774, %v3997, %v3760
  %v4014 = vsel %vm774, %v3998, %v3762
  %v4015 = vsel %vm774, %v3999, %v3764
  %v4016 = vsel %vm774, %v4000, %v3766
  %v4017 = vsel %vm774, %v4001, %v3768
  %v4018 = vsel %vm774, %v4002, %v3770
  %v4019 = vsel %vm774, %v4003, %v3772
  %v4020 = vsel %vm774, %v4004, %v3774
  %v4021 = vsel %vm774, %v4005, %v3776
  %v4022 = vsel %vm774, %v4006, %v3778
  %v4023 = vsel %vm774, %v4007, %v3780
  %v4024 = vsel %vm774, %v4008, %v3782
  %v4025 = vsel %vm774, %v4009, %v3784
  %v4026 = vsel %vm774, %v4010, %v3786
  %v4027 = vsel %vm791, %v4011, %v3756
  %v4028 = vsel %vm791, %v4012, %v3758
  %v4029 = vsel %vm791, %v4013, %v3760
  %v4030 = vsel %vm791, %v4014, %v3762
  %v4031 = vsel %vm791, %v4015, %v3764
  %v4032 = vsel %vm791, %v4016, %v3766
  %v4033 = vsel %vm791, %v4017, %v3768
  %v4034 = vsel %vm791, %v4018, %v3770
  %v4035 = vsel %vm791, %v4019, %v3772
  %v4036 = vsel %vm791, %v4020, %v3774
  %v4037 = vsel %vm791, %v4021, %v3776
  %v4038 = vsel %vm791, %v4022, %v3778
  %v4039 = vsel %vm791, %v4023, %v3780
  %v4040 = vsel %vm791, %v4024, %v3782
  %v4041 = vsel %vm791, %v4025, %v3784
  %v4042 = vsel %vm791, %v4026, %v3786
  %v4043 = vsel %vm808, %v4027, %v3756
  %v4044 = vsel %vm808, %v4028, %v3758
  %v4045 = vsel %vm808, %v4029, %v3760
  %v4046 = vsel %vm808, %v4030, %v3762
  %v4047 = vsel %vm808, %v4031, %v3764
  %v4048 = vsel %vm808, %v4032, %v3766
  %v4049 = vsel %vm808, %v4033, %v3768
  %v4050 = vsel %vm808, %v4034, %v3770
  %v4051 = vsel %vm808, %v4035, %v3772
  %v4052 = vsel %vm808, %v4036, %v3774
  %v4053 = vsel %vm808, %v4037, %v3776
  %v4054 = vsel %vm808, %v4038, %v3778
  %v4055 = vsel %vm808, %v4039, %v3780
  %v4056 = vsel %vm808, %v4040, %v3782
  %v4057 = vsel %vm808, %v4041, %v3784
  %v4058 = vsel %vm808, %v4042, %v3786
  %v4059 = vsel %vm825, %v4043, %v3804
  %v4060 = vsel %vm825, %v4044, %v3806
  %v4061 = vsel %vm825, %v4045, %v3808
  %v4062 = vsel %vm825, %v4046, %v3810
  %v4063 = vsel %vm825, %v4047, %v3812
  %v4064 = vsel %vm825, %v4048, %v3814
  %v4065 = vsel %vm825, %v4049, %v3816
  %v4066 = vsel %vm825, %v4050, %v3818
  %v4067 = vsel %vm825, %v4051, %v3820
  %v4068 = vsel %vm825, %v4052, %v3822
  %v4069 = vsel %vm825, %v4053, %v3824
  %v4070 = vsel %vm825, %v4054, %v3826
  %v4071 = vsel %vm825, %v4055, %v3828
  %v4072 = vsel %vm825, %v4056, %v3830
  %v4073 = vsel %vm825, %v4057, %v3832
  %v4074 = vsel %vm825, %v4058, %v3834
  %4075 = vrot.lane.b32.xlu0 %v219, 86
  %v4076 = vpop.permute.xlu0 %4075
  %4077 = vrot.lane.b32.xlu0 %v237, 86
  %v4078 = vpop.permute.xlu0 %4077
  %4081 = vrot.lane.b32.xlu0 %v346, 110
  %v4082 = vpop.permute.xlu0 %4081
  %4083 = vrot.lane.b32.xlu0 %v349, 110
  %v4084 = vpop.permute.xlu0 %4083
  %4087 = vrot.lane.b32.xlu0 %v205, 92
  %v4088 = vpop.permute.xlu0 %4087
  %4089 = vrot.lane.b32.xlu0 %v207, 92
  %v4090 = vpop.permute.xlu0 %4089
  %4091 = vrot.lane.b32.xlu0 %v209, 92
  %v4092 = vpop.permute.xlu0 %4091
  %4093 = vrot.lane.b32.xlu0 %v211, 92
  %v4094 = vpop.permute.xlu0 %4093
  %4095 = vrot.lane.b32.xlu0 %v213, 92
  %v4096 = vpop.permute.xlu0 %4095
  %4097 = vrot.lane.b32.xlu0 %v215, 92
  %v4098 = vpop.permute.xlu0 %4097
  %4099 = vrot.lane.b32.xlu0 %v217, 92
  %v4100 = vpop.permute.xlu0 %4099
  %4101 = vrot.lane.b32.xlu0 %v219, 92
  %v4102 = vpop.permute.xlu0 %4101
  %4103 = vrot.lane.b32.xlu0 %v223, 92
  %v4104 = vpop.permute.xlu0 %4103
  %4105 = vrot.lane.b32.xlu0 %v225, 92
  %v4106 = vpop.permute.xlu0 %4105
  %4107 = vrot.lane.b32.xlu0 %v227, 92
  %v4108 = vpop.permute.xlu0 %4107
  %4109 = vrot.lane.b32.xlu0 %v229, 92
  %v4110 = vpop.permute.xlu0 %4109
  %4111 = vrot.lane.b32.xlu0 %v231, 92
  %v4112 = vpop.permute.xlu0 %4111
  %4113 = vrot.lane.b32.xlu0 %v233, 92
  %v4114 = vpop.permute.xlu0 %4113
  %4115 = vrot.lane.b32.xlu0 %v235, 92
  %v4116 = vpop.permute.xlu0 %4115
  %4117 = vrot.lane.b32.xlu0 %v237, 92
  %v4118 = vpop.permute.xlu0 %4117
  %4135 = vrot.lane.b32.xlu0 %v297, 116
  %v4136 = vpop.permute.xlu0 %4135
  %4137 = vrot.lane.b32.xlu0 %v300, 116
  %v4138 = vpop.permute.xlu0 %4137
  %4139 = vrot.lane.b32.xlu0 %v303, 116
  %v4140 = vpop.permute.xlu0 %4139
  %4141 = vrot.lane.b32.xlu0 %v306, 116
  %v4142 = vpop.permute.xlu0 %4141
  %4143 = vrot.lane.b32.xlu0 %v309, 116
  %v4144 = vpop.permute.xlu0 %4143
  %4145 = vrot.lane.b32.xlu0 %v312, 116
  %v4146 = vpop.permute.xlu0 %4145
  %4147 = vrot.lane.b32.xlu0 %v315, 116
  %v4148 = vpop.permute.xlu0 %4147
  %4149 = vrot.lane.b32.xlu0 %v346, 116
  %v4150 = vpop.permute.xlu0 %4149
  %4151 = vrot.lane.b32.xlu0 %v321, 116
  %v4152 = vpop.permute.xlu0 %4151
  %4153 = vrot.lane.b32.xlu0 %v324, 116
  %v4154 = vpop.permute.xlu0 %4153
  %4155 = vrot.lane.b32.xlu0 %v327, 116
  %v4156 = vpop.permute.xlu0 %4155
  %4157 = vrot.lane.b32.xlu0 %v330, 116
  %v4158 = vpop.permute.xlu0 %4157
  %4159 = vrot.lane.b32.xlu0 %v333, 116
  %v4160 = vpop.permute.xlu0 %4159
  %4161 = vrot.lane.b32.xlu0 %v336, 116
  %v4162 = vpop.permute.xlu0 %4161
  %4163 = vrot.lane.b32.xlu0 %v339, 116
  %v4164 = vpop.permute.xlu0 %4163
  %4165 = vrot.lane.b32.xlu0 %v349, 116
  %v4166 = vpop.permute.xlu0 %4165
  %v4183 = vsel %vm1034, %v2508, %v2556
  %v4184 = vsel %vm1034, %v2510, %v2558
  %v4185 = vsel %vm1034, %v2512, %v2560
  %v4186 = vsel %vm1034, %v2514, %v2562
  %v4187 = vsel %vm1034, %v2516, %v2564
  %v4188 = vsel %vm1034, %v2518, %v2566
  %v4189 = vsel %vm1034, %v2520, %v2568
  %v4190 = vsel %vm1034, %v4076, %v4082
  %v4191 = vsel %vm1034, %v2524, %v2572
  %v4192 = vsel %vm1034, %v2526, %v2574
  %v4193 = vsel %vm1034, %v2528, %v2576
  %v4194 = vsel %vm1034, %v2530, %v2578
  %v4195 = vsel %vm1034, %v2532, %v2580
  %v4196 = vsel %vm1034, %v2534, %v2582
  %v4197 = vsel %vm1034, %v2536, %v2584
  %v4198 = vsel %vm1034, %v4078, %v4084
  %v4199 = vsel %vm1035, %v4183, %v2556
  %v4200 = vsel %vm1035, %v4184, %v2558
  %v4201 = vsel %vm1035, %v4185, %v2560
  %v4202 = vsel %vm1035, %v4186, %v2562
  %v4203 = vsel %vm1035, %v4187, %v2564
  %v4204 = vsel %vm1035, %v4188, %v2566
  %v4205 = vsel %vm1035, %v4189, %v2568
  %v4206 = vsel %vm1035, %v4190, %v4082
  %v4207 = vsel %vm1035, %v4191, %v2572
  %v4208 = vsel %vm1035, %v4192, %v2574
  %v4209 = vsel %vm1035, %v4193, %v2576
  %v4210 = vsel %vm1035, %v4194, %v2578
  %v4211 = vsel %vm1035, %v4195, %v2580
  %v4212 = vsel %vm1035, %v4196, %v2582
  %v4213 = vsel %vm1035, %v4197, %v2584
  %v4214 = vsel %vm1035, %v4198, %v4084
  %v4215 = vsel %vm1052, %v4199, %v2556
  %v4216 = vsel %vm1052, %v4200, %v2558
  %v4217 = vsel %vm1052, %v4201, %v2560
  %v4218 = vsel %vm1052, %v4202, %v2562
  %v4219 = vsel %vm1052, %v4203, %v2564
  %v4220 = vsel %vm1052, %v4204, %v2566
  %v4221 = vsel %vm1052, %v4205, %v2568
  %v4222 = vsel %vm1052, %v4206, %v4082
  %v4223 = vsel %vm1052, %v4207, %v2572
  %v4224 = vsel %vm1052, %v4208, %v2574
  %v4225 = vsel %vm1052, %v4209, %v2576
  %v4226 = vsel %vm1052, %v4210, %v2578
  %v4227 = vsel %vm1052, %v4211, %v2580
  %v4228 = vsel %vm1052, %v4212, %v2582
  %v4229 = vsel %vm1052, %v4213, %v2584
  %v4230 = vsel %vm1052, %v4214, %v4084
  %v4231 = vsel %vm638, %v4215, %v4088
  %v4232 = vsel %vm638, %v4216, %v4090
  %v4233 = vsel %vm638, %v4217, %v4092
  %v4234 = vsel %vm638, %v4218, %v4094
  %v4235 = vsel %vm638, %v4219, %v4096
  %v4236 = vsel %vm638, %v4220, %v4098
  %v4237 = vsel %vm638, %v4221, %v4100
  %v4238 = vsel %vm638, %v4222, %v4102
  %v4239 = vsel %vm638, %v4223, %v4104
  %v4240 = vsel %vm638, %v4224, %v4106
  %v4241 = vsel %vm638, %v4225, %v4108
  %v4242 = vsel %vm638, %v4226, %v4110
  %v4243 = vsel %vm638, %v4227, %v4112
  %v4244 = vsel %vm638, %v4228, %v4114
  %v4245 = vsel %vm638, %v4229, %v4116
  %v4246 = vsel %vm638, %v4230, %v4118
  %v4247 = vsel %vm655, %v4231, %v4088
  %v4248 = vsel %vm655, %v4232, %v4090
  %v4249 = vsel %vm655, %v4233, %v4092
  %v4250 = vsel %vm655, %v4234, %v4094
  %v4251 = vsel %vm655, %v4235, %v4096
  %v4252 = vsel %vm655, %v4236, %v4098
  %v4253 = vsel %vm655, %v4237, %v4100
  %v4254 = vsel %vm655, %v4238, %v4102
  %v4255 = vsel %vm655, %v4239, %v4104
  %v4256 = vsel %vm655, %v4240, %v4106
  %v4257 = vsel %vm655, %v4241, %v4108
  %v4258 = vsel %vm655, %v4242, %v4110
  %v4259 = vsel %vm655, %v4243, %v4112
  %v4260 = vsel %vm655, %v4244, %v4114
  %v4261 = vsel %vm655, %v4245, %v4116
  %v4262 = vsel %vm655, %v4246, %v4118
  %v4263 = vsel %vm672, %v4247, %v4136
  %v4264 = vsel %vm672, %v4248, %v4138
  %v4265 = vsel %vm672, %v4249, %v4140
  %v4266 = vsel %vm672, %v4250, %v4142
  %v4267 = vsel %vm672, %v4251, %v4144
  %v4268 = vsel %vm672, %v4252, %v4146
  %v4269 = vsel %vm672, %v4253, %v4148
  %v4270 = vsel %vm672, %v4254, %v4150
  %v4271 = vsel %vm672, %v4255, %v4152
  %v4272 = vsel %vm672, %v4256, %v4154
  %v4273 = vsel %vm672, %v4257, %v4156
  %v4274 = vsel %vm672, %v4258, %v4158
  %v4275 = vsel %vm672, %v4259, %v4160
  %v4276 = vsel %vm672, %v4260, %v4162
  %v4277 = vsel %vm672, %v4261, %v4164
  %v4278 = vsel %vm672, %v4262, %v4166
  %v4279 = vsel %vm689, %v4263, %v4136
  %v4280 = vsel %vm689, %v4264, %v4138
  %v4281 = vsel %vm689, %v4265, %v4140
  %v4282 = vsel %vm689, %v4266, %v4142
  %v4283 = vsel %vm689, %v4267, %v4144
  %v4284 = vsel %vm689, %v4268, %v4146
  %v4285 = vsel %vm689, %v4269, %v4148
  %v4286 = vsel %vm689, %v4270, %v4150
  %v4287 = vsel %vm689, %v4271, %v4152
  %v4288 = vsel %vm689, %v4272, %v4154
  %v4289 = vsel %vm689, %v4273, %v4156
  %v4290 = vsel %vm689, %v4274, %v4158
  %v4291 = vsel %vm689, %v4275, %v4160
  %v4292 = vsel %vm689, %v4276, %v4162
  %v4293 = vsel %vm689, %v4277, %v4164
  %v4294 = vsel %vm689, %v4278, %v4166
  %v4295 = vsel %vm706, %v4279, %v4136
  %v4296 = vsel %vm706, %v4280, %v4138
  %v4297 = vsel %vm706, %v4281, %v4140
  %v4298 = vsel %vm706, %v4282, %v4142
  %v4299 = vsel %vm706, %v4283, %v4144
  %v4300 = vsel %vm706, %v4284, %v4146
  %v4301 = vsel %vm706, %v4285, %v4148
  %v4302 = vsel %vm706, %v4286, %v4150
  %v4303 = vsel %vm706, %v4287, %v4152
  %v4304 = vsel %vm706, %v4288, %v4154
  %v4305 = vsel %vm706, %v4289, %v4156
  %v4306 = vsel %vm706, %v4290, %v4158
  %v4307 = vsel %vm706, %v4291, %v4160
  %v4308 = vsel %vm706, %v4292, %v4162
  %v4309 = vsel %vm706, %v4293, %v4164
  %v4310 = vsel %vm706, %v4294, %v4166
  %4327 = vrot.lane.b32.xlu0 %v4295, 96
  %v4328 = vpop.permute.xlu0 %4327
  %4329 = vrot.lane.b32.xlu0 %v4296, 96
  %v4330 = vpop.permute.xlu0 %4329
  %4331 = vrot.lane.b32.xlu0 %v4297, 96
  %v4332 = vpop.permute.xlu0 %4331
  %4333 = vrot.lane.b32.xlu0 %v4298, 96
  %v4334 = vpop.permute.xlu0 %4333
  %4335 = vrot.lane.b32.xlu0 %v4299, 96
  %v4336 = vpop.permute.xlu0 %4335
  %4337 = vrot.lane.b32.xlu0 %v4300, 96
  %v4338 = vpop.permute.xlu0 %4337
  %4339 = vrot.lane.b32.xlu0 %v4301, 96
  %v4340 = vpop.permute.xlu0 %4339
  %4341 = vrot.lane.b32.xlu0 %v4302, 96
  %v4342 = vpop.permute.xlu0 %4341
  %4343 = vrot.lane.b32.xlu0 %v4303, 96
  %v4344 = vpop.permute.xlu0 %4343
  %4345 = vrot.lane.b32.xlu0 %v4304, 96
  %v4346 = vpop.permute.xlu0 %4345
  %4347 = vrot.lane.b32.xlu0 %v4305, 96
  %v4348 = vpop.permute.xlu0 %4347
  %4349 = vrot.lane.b32.xlu0 %v4306, 96
  %v4350 = vpop.permute.xlu0 %4349
  %4351 = vrot.lane.b32.xlu0 %v4307, 96
  %v4352 = vpop.permute.xlu0 %4351
  %4353 = vrot.lane.b32.xlu0 %v4308, 96
  %v4354 = vpop.permute.xlu0 %4353
  %4355 = vrot.lane.b32.xlu0 %v4309, 96
  %v4356 = vpop.permute.xlu0 %4355
  %4357 = vrot.lane.b32.xlu0 %v4310, 96
  %v4358 = vpop.permute.xlu0 %4357
  %v4375 = vsel %vm1213, %v4059, %v4328
  %v4376 = vsel %vm1213, %v4060, %v4330
  %v4377 = vsel %vm1213, %v4061, %v4332
  %v4378 = vsel %vm1213, %v4062, %v4334
  %v4379 = vsel %vm1213, %v4063, %v4336
  %v4380 = vsel %vm1213, %v4064, %v4338
  %v4381 = vsel %vm1213, %v4065, %v4340
  %v4382 = vsel %vm1213, %v4066, %v4342
  %v4383 = vsel %vm1213, %v4067, %v4344
  %v4384 = vsel %vm1213, %v4068, %v4346
  %v4385 = vsel %vm1213, %v4069, %v4348
  %v4386 = vsel %vm1213, %v4070, %v4350
  %v4387 = vsel %vm1213, %v4071, %v4352
  %v4388 = vsel %vm1213, %v4072, %v4354
  %v4389 = vsel %vm1213, %v4073, %v4356
  %v4390 = vsel %vm1213, %v4074, %v4358
  %v4391 = vsel %vm1236, %v4328, 0
  %v4393 = vsel %vm1236, %v4330, 0
  %v4395 = vsel %vm1236, %v4332, 0
  %v4397 = vsel %vm1236, %v4334, 0
  %v4399 = vsel %vm1236, %v4336, 0
  %v4401 = vsel %vm1236, %v4338, 0
  %v4403 = vsel %vm1236, %v4340, 0
  %v4405 = vsel %vm1236, %v4342, 0
  %v4407 = vsel %vm1236, %v4344, 0
  %v4409 = vsel %vm1236, %v4346, 0
  %v4411 = vsel %vm1236, %v4348, 0
  %v4413 = vsel %vm1236, %v4350, 0
  %v4415 = vsel %vm1236, %v4352, 0
  %v4417 = vsel %vm1236, %v4354, 0
  %v4419 = vsel %vm1236, %v4356, 0
  %v4421 = vsel %vm1236, %v4358, 0
  %4423 = vmatprep.subr.mxu0 0.0
  %4424 = vmatpush1.msra.mxu0 %v254
  %4425 = vmatprep.subr.mxu0 0.0
  %4426 = vmatpush1.msra.mxu0 %v253
  %4427 = vmatprep.subr.mxu0 0.0
  %4428 = vmatpush1.msra.mxu0 %v252
  %4429 = vmatprep.subr.mxu0 0.0
  %4430 = vmatpush1.msra.mxu0 %v251
  %4431 = vmatprep.subr.mxu0 0.0
  %4432 = vmatpush1.msra.mxu0 %v250
  %4433 = vmatprep.subr.mxu0 0.0
  %4434 = vmatpush1.msra.mxu0 %v249
  %4435 = vmatprep.subr.mxu0 0.0
  %4436 = vmatpush1.msra.mxu0 %v248
  %4437 = vmatprep.subr.mxu0 0.0
  %4438 = vmatpush1.msra.mxu0 %v247
  %4439 = vmatprep.subr.mxu0 0.0
  %4440 = vmatpush1.msra.mxu0 %v246
  %4441 = vmatprep.subr.mxu0 0.0
  %4442 = vmatpush1.msra.mxu0 %v245
  %4443 = vmatprep.subr.mxu0 0.0
  %4444 = vmatpush1.msra.mxu0 %v244
  %4445 = vmatprep.subr.mxu0 0.0
  %4446 = vmatpush1.msra.mxu0 %v243
  %4447 = vmatprep.subr.mxu0 0.0
  %4448 = vmatpush1.msra.mxu0 %v242
  %4449 = vmatprep.subr.mxu0 0.0
  %4450 = vmatpush1.msra.mxu0 %v241
  %4451 = vmatprep.subr.mxu0 0.0
  %4452 = vmatpush1.msra.mxu0 %v240
  %4453 = vmatprep.subr.mxu0 0.0
  %4454 = vmatpush1.msra.mxu0 %v239
  %4455 = vmatprep.subr.mxu0 0.0
  %4456 = vmatpush2.msra.mxu0 0.0
  %4457 = vmatprep.subr.mxu0 0.0
  %4458 = vmatpush2.msra.mxu0 0.0
  %4459 = vmatprep.subr.mxu0 0.0
  %4460 = vmatpush2.msra.mxu0 0.0
  %4461 = vmatprep.subr.mxu0 0.0
  %4462 = vmatpush2.msra.mxu0 0.0
  %4463 = vmatprep.subr.mxu0 0.0
  %4464 = vmatpush2.msra.mxu0 0.0
  %4465 = vmatprep.subr.mxu0 0.0
  %4466 = vmatpush2.msra.mxu0 0.0
  %4467 = vmatprep.subr.mxu0 0.0
  %4468 = vmatpush2.msra.mxu0 0.0
  %4469 = vmatprep.subr.mxu0 0.0
  %4470 = vmatpush2.msra.mxu0 0.0
  %4471 = vmatprep.subr.mxu0 0.0
  %4472 = vmatpush2.msra.mxu0 0.0
  %4473 = vmatprep.subr.mxu0 0.0
  %4474 = vmatpush2.msra.mxu0 0.0
  %4475 = vmatprep.subr.mxu0 0.0
  %4476 = vmatpush2.msra.mxu0 0.0
  %4477 = vmatprep.subr.mxu0 0.0
  %4478 = vmatpush2.msra.mxu0 0.0
  %4479 = vmatprep.subr.mxu0 0.0
  %4480 = vmatpush2.msra.mxu0 0.0
  %4481 = vmatprep.subr.mxu0 0.0
  %4482 = vmatpush2.msra.mxu0 %v1271
  %4483 = vmatprep.subr.mxu0 0.0
  %4484 = vmatpush2.msra.mxu0 %v256
  %4485 = vmatprep.subr.mxu0 0.0
  %4486 = vmatpush2.msra.mxu0 %v255
  %4487 = vmatprep.mubr.f32.mxu0 %v4391
  %4488 = vmatmul.mubr.f32.gmra.mxu0 %v4375
  %v4489 = vpop.f32.mrf.mxu0
  %v4490 = vadd.f32 %v1234, %v4489
  %v4491 = vpop.f32.mrf.mxu0
  %4492 = vmatprep.mubr.f32.mxu0 %v4393
  %4493 = vmatmul.mubr.f32.gmra.mxu0 %v4376
  %v4494 = vpop.f32.mrf.mxu0
  %v4495 = vadd.f32 %v1234, %v4494
  %v4496 = vpop.f32.mrf.mxu0
  %4497 = vmatprep.mubr.f32.mxu0 %v4395
  %4498 = vmatmul.mubr.f32.gmra.mxu0 %v4377
  %v4499 = vpop.f32.mrf.mxu0
  %v4500 = vadd.f32 %v1234, %v4499
  %v4501 = vpop.f32.mrf.mxu0
  %4502 = vmatprep.mubr.f32.mxu0 %v4397
  %4503 = vmatmul.mubr.f32.gmra.mxu0 %v4378
  %v4504 = vpop.f32.mrf.mxu0
  %v4505 = vadd.f32 %v1234, %v4504
  %v4506 = vpop.f32.mrf.mxu0
  %4507 = vmatprep.mubr.f32.mxu0 %v4399
  %4508 = vmatmul.mubr.f32.gmra.mxu0 %v4379
  %v4509 = vpop.f32.mrf.mxu0
  %v4510 = vadd.f32 %v1234, %v4509
  %v4511 = vpop.f32.mrf.mxu0
  %4512 = vmatprep.mubr.f32.mxu0 %v4401
  %4513 = vmatmul.mubr.f32.gmra.mxu0 %v4380
  %v4514 = vpop.f32.mrf.mxu0
  %v4515 = vadd.f32 %v1234, %v4514
  %v4516 = vpop.f32.mrf.mxu0
  %4517 = vmatprep.mubr.f32.mxu0 %v4403
  %4518 = vmatmul.mubr.f32.gmra.mxu0 %v4381
  %v4519 = vpop.f32.mrf.mxu0
  %v4520 = vadd.f32 %v1234, %v4519
  %v4521 = vpop.f32.mrf.mxu0
  %4522 = vmatprep.mubr.f32.mxu0 %v4405
  %4523 = vmatmul.mubr.f32.gmra.mxu0 %v4382
  %v4524 = vpop.f32.mrf.mxu0
  %v4525 = vadd.f32 %v1234, %v4524
  %v4526 = vpop.f32.mrf.mxu0
  %4527 = vmatprep.mubr.f32.mxu0 %v4407
  %4528 = vmatmul.mubr.f32.gmra.mxu0 %v4383
  %v4529 = vpop.f32.mrf.mxu0
  %v4530 = vadd.f32 %v1234, %v4529
  %v4531 = vpop.f32.mrf.mxu0
  %4532 = vmatprep.mubr.f32.mxu0 %v4409
  %4533 = vmatmul.mubr.f32.gmra.mxu0 %v4384
  %v4534 = vpop.f32.mrf.mxu0
  %v4535 = vadd.f32 %v1234, %v4534
  %v4536 = vpop.f32.mrf.mxu0
  %4537 = vmatprep.mubr.f32.mxu0 %v4411
  %4538 = vmatmul.mubr.f32.gmra.mxu0 %v4385
  %v4539 = vpop.f32.mrf.mxu0
  %v4540 = vadd.f32 %v1234, %v4539
  %v4541 = vpop.f32.mrf.mxu0
  %4542 = vmatprep.mubr.f32.mxu0 %v4413
  %4543 = vmatmul.mubr.f32.gmra.mxu0 %v4386
  %v4544 = vpop.f32.mrf.mxu0
  %v4545 = vadd.f32 %v1234, %v4544
  %v4546 = vpop.f32.mrf.mxu0
  %4547 = vmatprep.mubr.f32.mxu0 %v4415
  %4548 = vmatmul.mubr.f32.gmra.mxu0 %v4387
  %v4549 = vpop.f32.mrf.mxu0
  %v4550 = vadd.f32 %v1234, %v4549
  %v4551 = vpop.f32.mrf.mxu0
  %4552 = vmatprep.mubr.f32.mxu0 %v4417
  %4553 = vmatmul.mubr.f32.gmra.mxu0 %v4388
  %v4554 = vpop.f32.mrf.mxu0
  %v4555 = vadd.f32 %v1234, %v4554
  %v4556 = vpop.f32.mrf.mxu0
  %4557 = vmatprep.mubr.f32.mxu0 %v4419
  %4558 = vmatmul.mubr.f32.gmra.mxu0 %v4389
  %v4559 = vpop.f32.mrf.mxu0
  %v4560 = vadd.f32 %v1234, %v4559
  %v4561 = vpop.f32.mrf.mxu0
  %4562 = vmatprep.mubr.f32.mxu0 %v4421
  %4563 = vmatmul.mubr.f32.gmra.mxu0 %v4390
  %v4564 = vpop.f32.mrf.mxu0
  %v4565 = vadd.f32 %v1234, %v4564
  %v4566 = vpop.f32.mrf.mxu0
  %4567 = vdwg.mxu0
  %v4568 = vmax.f32 %v4490, 0.0
  %v4569 = vmax.f32 %v4495, 0.0
  %v4570 = vmax.f32 %v4500, 0.0
  %v4571 = vmax.f32 %v4505, 0.0
  %v4572 = vmax.f32 %v4510, 0.0
  %v4573 = vmax.f32 %v4515, 0.0
  %v4574 = vmax.f32 %v4520, 0.0
  %v4575 = vmax.f32 %v4525, 0.0
  %v4576 = vmax.f32 %v4530, 0.0
  %v4577 = vmax.f32 %v4535, 0.0
  %v4578 = vmax.f32 %v4540, 0.0
  %v4579 = vmax.f32 %v4545, 0.0
  %v4580 = vmax.f32 %v4550, 0.0
  %v4581 = vmax.f32 %v4555, 0.0
  %v4582 = vmax.f32 %v4560, 0.0
  %v4583 = vmax.f32 %v4565, 0.0
  %s4584 = scalar_lea.vmem [#allocation2], 16
  %4585 = vst.msk [vmem:[%s4584 + $0x1] sm:$0xff] %vm41, %v4568
  %4586 = vst.msk [vmem:[%s4584 + $0x11] sm:$0xff] %vm41, %v4569
  %4587 = vst.msk [vmem:[%s4584 + $0x21] sm:$0xff] %vm41, %v4570
  %4588 = vst.msk [vmem:[%s4584 + $0x31] sm:$0xff] %vm41, %v4571
  %4589 = vst.msk [vmem:[%s4584 + $0x41] sm:$0xff] %vm41, %v4572
  %4590 = vst.msk [vmem:[%s4584 + $0x51] sm:$0xff] %vm41, %v4573
  %4591 = vst.msk [vmem:[%s4584 + $0x61] sm:$0xff] %vm41, %v4574
  %4592 = vst.msk [vmem:[%s4584 + $0x71] sm:$0xff] %vm41, %v4575
  %4593 = vst.msk [vmem:[%s4584 + $0xa1] sm:$0xff] %vm41, %v4576
  %4594 = vst.msk [vmem:[%s4584 + $0xb1] sm:$0xff] %vm41, %v4577
  %4595 = vst.msk [vmem:[%s4584 + $0xc1] sm:$0xff] %vm41, %v4578
  %4596 = vst.msk [vmem:[%s4584 + $0xd1] sm:$0xff] %vm41, %v4579
  %4597 = vst.msk [vmem:[%s4584 + $0xe1] sm:$0xff] %vm41, %v4580
  %4598 = vst.msk [vmem:[%s4584 + $0xf1] sm:$0xff] %vm41, %v4581
  %4599 = vst.msk [vmem:[%s4584 + $0x101] sm:$0xff] %vm41, %v4582
  %4600 = vst.msk [vmem:[%s4584 + $0x111] sm:$0xff] %vm41, %v4583
  %v4601 = vld [vmem:[%s4] sm:$0xff]
  %v4602 = vld [vmem:[%s4 + $0x8] sm:$0xff]
  %v4603 = vld [vmem:[%s4 + $0x10] sm:$0xff]
  %v4604 = vld [vmem:[%s4 + $0x18] sm:$0xff]
  %v4605 = vld [vmem:[%s4 + $0x20] sm:$0xff]
  %v4606 = vld [vmem:[%s4 + $0x28] sm:$0xff]
  %v4607 = vld [vmem:[%s4 + $0x30] sm:$0xff]
  %v4608 = vld [vmem:[%s4 + $0x38] sm:$0xff]
  %v4609 = vld [vmem:[%s4 + $0x40] sm:$0xff]
  %v4610 = vld [vmem:[%s4 + $0x48] sm:$0xff]
  %v4611 = vld [vmem:[%s4 + $0x50] sm:$0xff]
  %v4612 = vld [vmem:[%s4 + $0x58] sm:$0xff]
  %v4613 = vld [vmem:[%s4 + $0x60] sm:$0xff]
  %v4614 = vld [vmem:[%s4 + $0x68] sm:$0xff]
  %v4615 = vld [vmem:[%s4 + $0x70] sm:$0xff]
  %v4616 = vld [vmem:[%s4 + $0x78] sm:$0xff]
  %v4617 = vld [vmem:[%s4 + $0x80] sm:$0xff]
  %v4618 = vld [vmem:[%s4 + $0x88] sm:$0xff]
  %v4619 = vld [vmem:[%s4 + $0x90] sm:$0xff]
  %v4620 = vld [vmem:[%s4 + $0x98] sm:$0xff]
  %v4621 = vld [vmem:[%s4 + $0xa0] sm:$0xff]
  %v4622 = vld [vmem:[%s4 + $0xa8] sm:$0xff]
  %v4623 = vld [vmem:[%s4 + $0xb0] sm:$0xff]
  %v4624 = vld [vmem:[%s4 + $0xb8] sm:$0xff]
  %v4625 = vld [vmem:[%s4 + $0xc0] sm:$0xff]
  %v4626 = vld [vmem:[%s4 + $0xc8] sm:$0xff]
  %v4627 = vld [vmem:[%s4 + $0xd0] sm:$0xff]
  %v4628 = vld [vmem:[%s4 + $0xd8] sm:$0xff]
  %v4629 = vld [vmem:[%s4 + $0xe0] sm:$0xff]
  %v4630 = vld [vmem:[%s4 + $0xe8] sm:$0xff]
  %v4631 = vld [vmem:[%s4 + $0xf0] sm:$0xff]
  %v4632 = vld [vmem:[%s4 + $0xf8] sm:$0xff]
  %v4633 = vld [vmem:[%s4 + $0x100] sm:$0xff]
  %v4634 = vld [vmem:[%s4 + $0x108] sm:$0xff]
  %v4635 = vld [vmem:[%s4 + $0x110] sm:$0xff]
  %v4636 = vld [vmem:[%s4 + $0x118] sm:$0xff]
  %v4637 = vld [vmem:[%s4 + $0x120] sm:$0xff]
  %v4638 = vld [vmem:[%s4 + $0x128] sm:$0xff]
  %v4639 = vld [vmem:[%s4 + $0x130] sm:$0xff]
  %v4640 = vld [vmem:[%s4 + $0x138] sm:$0xff]
  %v4641 = vld [vmem:[%s4 + $0x140] sm:$0xff]
  %v4642 = vld [vmem:[%s4 + $0x148] sm:$0xff]
  %v4643 = vld [vmem:[%s4 + $0x150] sm:$0xff]
  %v4644 = vld [vmem:[%s4 + $0x158] sm:$0xff]
  %v4645 = vld [vmem:[%s4 + $0x160] sm:$0xff]
  %v4646 = vld [vmem:[%s4 + $0x168] sm:$0xff]
  %v4647 = vld [vmem:[%s4 + $0x170] sm:$0xff]
  %v4648 = vld [vmem:[%s4 + $0x178] sm:$0xff]
  %v4649 = vld [vmem:[%s4 + $0x180] sm:$0xff]
  %v4650 = vld [vmem:[%s4 + $0x188] sm:$0xff]
  %v4651 = vld [vmem:[%s4 + $0x190] sm:$0xff]
  %v4652 = vld [vmem:[%s4 + $0x198] sm:$0xff]
  %v4653 = vld [vmem:[%s4 + $0x1a0] sm:$0xff]
  %v4654 = vld [vmem:[%s4 + $0x1a8] sm:$0xff]
  %v4655 = vld [vmem:[%s4 + $0x1b0] sm:$0xff]
  %v4656 = vld [vmem:[%s4 + $0x1b8] sm:$0xff]
  %v4657 = vld [vmem:[%s4 + $0x1c0] sm:$0xff]
  %v4658 = vld [vmem:[%s4 + $0x1c8] sm:$0xff]
  %v4659 = vld [vmem:[%s4 + $0x1d0] sm:$0xff]
  %v4660 = vld [vmem:[%s4 + $0x1d8] sm:$0xff]
  %v4661 = vld [vmem:[%s4 + $0x1e0] sm:$0xff]
  %v4662 = vld [vmem:[%s4 + $0x1e8] sm:$0xff]
  %v4663 = vld [vmem:[%s4 + $0x1f0] sm:$0xff]
  %v4664 = vld [vmem:[%s4 + $0x1f8] sm:$0xff]
  %v4665 = vld [vmem:[%s4 + $0x200] sm:$0xff]
  %v4666 = vld [vmem:[%s4 + $0x208] sm:$0xff]
  %v4667 = vld [vmem:[%s4 + $0x210] sm:$0xff]
  %v4668 = vld [vmem:[%s4 + $0x218] sm:$0xff]
  %v4669 = vld [vmem:[%s4 + $0x220] sm:$0xff]
  %v4670 = vld [vmem:[%s4 + $0x228] sm:$0xff]
  %v4671 = vld [vmem:[%s4 + $0x230] sm:$0xff]
  %v4672 = vld [vmem:[%s4 + $0x238] sm:$0xff]
  %v4673 = vld [vmem:[%s4 + $0x240] sm:$0xff]
  %v4674 = vld [vmem:[%s4 + $0x248] sm:$0xff]
  %v4675 = vld [vmem:[%s4 + $0x250] sm:$0xff]
  %v4676 = vld [vmem:[%s4 + $0x258] sm:$0xff]
  %v4677 = vld [vmem:[%s4 + $0x260] sm:$0xff]
  %v4678 = vld [vmem:[%s4 + $0x268] sm:$0xff]
  %v4679 = vld [vmem:[%s4 + $0x270] sm:$0xff]
  %v4680 = vld [vmem:[%s4 + $0x278] sm:$0xff]
  %v4681 = vld [vmem:[%s4 + $0x280] sm:$0xff]
  %v4682 = vld [vmem:[%s4 + $0x288] sm:$0xff]
  %v4683 = vld [vmem:[%s4 + $0x290] sm:$0xff]
  %v4684 = vld [vmem:[%s4 + $0x298] sm:$0xff]
  %v4685 = vld [vmem:[%s4 + $0x2a0] sm:$0xff]
  %v4686 = vld [vmem:[%s4 + $0x2a8] sm:$0xff]
  %v4687 = vld [vmem:[%s4 + $0x2b0] sm:$0xff]
  %v4688 = vld [vmem:[%s4 + $0x2b8] sm:$0xff]
  %v4689 = vld [vmem:[%s4 + $0x2c0] sm:$0xff]
  %v4690 = vld [vmem:[%s4 + $0x2c8] sm:$0xff]
  %v4691 = vld [vmem:[%s4 + $0x2d0] sm:$0xff]
  %v4692 = vld [vmem:[%s4 + $0x2d8] sm:$0xff]
  %v4693 = vld [vmem:[%s4 + $0x2e0] sm:$0xff]
  %v4694 = vld [vmem:[%s4 + $0x2e8] sm:$0xff]
  %v4695 = vld [vmem:[%s4 + $0x2f0] sm:$0xff]
  %v4696 = vld [vmem:[%s4 + $0x2f8] sm:$0xff]
  %v4697 = vld [vmem:[%s4 + $0x300] sm:$0xff]
  %v4698 = vld [vmem:[%s4 + $0x308] sm:$0xff]
  %v4699 = vld [vmem:[%s4 + $0x310] sm:$0xff]
  %v4700 = vld [vmem:[%s4 + $0x318] sm:$0xff]
  %v4701 = vld [vmem:[%s5] sm:$0x1]
  %v4702 = vld [vmem:[#allocation2] sm:$0xff]
  %v4703 = vld [vmem:[#allocation2 + $0x10] sm:$0xff]
  %v4704 = vld [vmem:[#allocation2 + $0x20] sm:$0xff]
  %v4705 = vld [vmem:[#allocation2 + $0x30] sm:$0xff]
  %v4706 = vld [vmem:[#allocation2 + $0x40] sm:$0xff]
  %v4707 = vld [vmem:[#allocation2 + $0x50] sm:$0xff]
  %v4708 = vld [vmem:[#allocation2 + $0x60] sm:$0xff]
  %v4709 = vld [vmem:[#allocation2 + $0x70] sm:$0xff]
  %v4710 = vld [vmem:[#allocation2 + $0xa0] sm:$0xff]
  %v4711 = vld [vmem:[#allocation2 + $0xb0] sm:$0xff]
  %v4712 = vld [vmem:[#allocation2 + $0xc0] sm:$0xff]
  %v4713 = vld [vmem:[#allocation2 + $0xd0] sm:$0xff]
  %v4714 = vld [vmem:[#allocation2 + $0xe0] sm:$0xff]
  %v4715 = vld [vmem:[#allocation2 + $0xf0] sm:$0xff]
  %v4716 = vld [vmem:[#allocation2 + $0x100] sm:$0xff]
  %v4717 = vld [vmem:[#allocation2 + $0x110] sm:$0xff]
  %s4718 = scalar_lea.vmem [#allocation2], 320
  %v4719 = vld [vmem:[%s4718] sm:$0xff]
  %v4720 = vld [vmem:[%s4718 + $0x10] sm:$0xff]
  %v4721 = vld [vmem:[%s4718 + $0x20] sm:$0xff]
  %v4722 = vld [vmem:[%s4718 + $0x30] sm:$0xff]
  %v4723 = vld [vmem:[%s4718 + $0x40] sm:$0xff]
  %v4724 = vld [vmem:[%s4718 + $0x50] sm:$0xff]
  %v4725 = vld [vmem:[%s4718 + $0x60] sm:$0xff]
  %v4726 = vld [vmem:[%s4718 + $0x70] sm:$0xff]
  %v4727 = vld [vmem:[%s4718 + $0xa0] sm:$0xff]
  %v4728 = vld [vmem:[%s4718 + $0xb0] sm:$0xff]
  %v4729 = vld [vmem:[%s4718 + $0xc0] sm:$0xff]
  %v4730 = vld [vmem:[%s4718 + $0xd0] sm:$0xff]
  %v4731 = vld [vmem:[%s4718 + $0xe0] sm:$0xff]
  %v4732 = vld [vmem:[%s4718 + $0xf0] sm:$0xff]
  %v4733 = vld [vmem:[%s4718 + $0x100] sm:$0xff]
  %v4734 = vld [vmem:[%s4718 + $0x110] sm:$0xff]
  %v4735 = vld [vmem:[#allocation2 + $0x1] sm:$0xff]
  %v4736 = vld [vmem:[#allocation2 + $0x11] sm:$0xff]
  %v4737 = vld [vmem:[#allocation2 + $0x21] sm:$0xff]
  %v4738 = vld [vmem:[#allocation2 + $0x31] sm:$0xff]
  %v4739 = vld [vmem:[#allocation2 + $0x41] sm:$0xff]
  %v4740 = vld [vmem:[#allocation2 + $0x51] sm:$0xff]
  %v4741 = vld [vmem:[#allocation2 + $0x61] sm:$0xff]
  %v4742 = vld [vmem:[#allocation2 + $0x71] sm:$0xff]
  %v4743 = vld [vmem:[#allocation2 + $0xa1] sm:$0xff]
  %v4744 = vld [vmem:[#allocation2 + $0xb1] sm:$0xff]
  %v4745 = vld [vmem:[#allocation2 + $0xc1] sm:$0xff]
  %v4746 = vld [vmem:[#allocation2 + $0xd1] sm:$0xff]
  %v4747 = vld [vmem:[#allocation2 + $0xe1] sm:$0xff]
  %v4748 = vld [vmem:[#allocation2 + $0xf1] sm:$0xff]
  %v4749 = vld [vmem:[#allocation2 + $0x101] sm:$0xff]
  %v4750 = vld [vmem:[#allocation2 + $0x111] sm:$0xff]
  %v4751 = vld [vmem:[%s4718 + $0x1] sm:$0xff]
  %v4752 = vld [vmem:[%s4718 + $0x11] sm:$0xff]
  %v4753 = vld [vmem:[%s4718 + $0x21] sm:$0xff]
  %v4754 = vld [vmem:[%s4718 + $0x31] sm:$0xff]
  %v4755 = vld [vmem:[%s4718 + $0x41] sm:$0xff]
  %v4756 = vld [vmem:[%s4718 + $0x51] sm:$0xff]
  %v4757 = vld [vmem:[%s4718 + $0x61] sm:$0xff]
  %v4758 = vld [vmem:[%s4718 + $0x71] sm:$0xff]
  %v4759 = vld [vmem:[%s4718 + $0xa1] sm:$0xff]
  %v4760 = vld [vmem:[%s4718 + $0xb1] sm:$0xff]
  %v4761 = vld [vmem:[%s4718 + $0xc1] sm:$0xff]
  %v4762 = vld [vmem:[%s4718 + $0xd1] sm:$0xff]
  %v4763 = vld [vmem:[%s4718 + $0xe1] sm:$0xff]
  %v4764 = vld [vmem:[%s4718 + $0xf1] sm:$0xff]
  %v4765 = vld [vmem:[%s4718 + $0x101] sm:$0xff]
  %v4766 = vld [vmem:[%s4718 + $0x111] sm:$0xff]
  %v4767 = vld [vmem:[#allocation2 + $0x2] sm:$0xff]
  %v4768 = vld [vmem:[#allocation2 + $0x12] sm:$0xff]
  %v4769 = vld [vmem:[#allocation2 + $0x22] sm:$0xff]
  %v4770 = vld [vmem:[#allocation2 + $0x32] sm:$0xff]
  %v4771 = vld [vmem:[#allocation2 + $0x42] sm:$0xff]
  %v4772 = vld [vmem:[#allocation2 + $0x52] sm:$0xff]
  %v4773 = vld [vmem:[#allocation2 + $0x62] sm:$0xff]
  %v4774 = vld [vmem:[#allocation2 + $0x72] sm:$0xff]
  %v4775 = vld [vmem:[#allocation2 + $0xa2] sm:$0xff]
  %v4776 = vld [vmem:[#allocation2 + $0xb2] sm:$0xff]
  %v4777 = vld [vmem:[#allocation2 + $0xc2] sm:$0xff]
  %v4778 = vld [vmem:[#allocation2 + $0xd2] sm:$0xff]
  %v4779 = vld [vmem:[#allocation2 + $0xe2] sm:$0xff]
  %v4780 = vld [vmem:[#allocation2 + $0xf2] sm:$0xff]
  %v4781 = vld [vmem:[#allocation2 + $0x102] sm:$0xff]
  %v4782 = vld [vmem:[#allocation2 + $0x112] sm:$0xff]
  %v4783 = vld [vmem:[%s2376] sm:$0xff]
  %v4784 = vld [vmem:[%s2376 + $0x10] sm:$0xff]
  %v4785 = vld [vmem:[%s2376 + $0x20] sm:$0xff]
  %v4786 = vld [vmem:[%s2376 + $0x30] sm:$0xff]
  %v4787 = vld [vmem:[%s2376 + $0x40] sm:$0xff]
  %v4788 = vld [vmem:[%s2376 + $0x50] sm:$0xff]
  %v4789 = vld [vmem:[%s2376 + $0x60] sm:$0xff]
  %v4790 = vld [vmem:[%s2376 + $0x70] sm:$0xff]
  %v4791 = vld [vmem:[%s2376 + $0xa0] sm:$0xff]
  %v4792 = vld [vmem:[%s2376 + $0xb0] sm:$0xff]
  %v4793 = vld [vmem:[%s2376 + $0xc0] sm:$0xff]
  %v4794 = vld [vmem:[%s2376 + $0xd0] sm:$0xff]
  %v4795 = vld [vmem:[%s2376 + $0xe0] sm:$0xff]
  %v4796 = vld [vmem:[%s2376 + $0xf0] sm:$0xff]
  %v4797 = vld [vmem:[%s2376 + $0x100] sm:$0xff]
  %v4798 = vld [vmem:[%s2376 + $0x110] sm:$0xff]
  %v4799 = vld [vmem:[%s1434] sm:$0xff]
  %v4800 = vld [vmem:[%s1434 + $0x10] sm:$0xff]
  %v4801 = vld [vmem:[%s1434 + $0x20] sm:$0xff]
  %v4802 = vld [vmem:[%s1434 + $0x30] sm:$0xff]
  %v4803 = vld [vmem:[%s1434 + $0x40] sm:$0xff]
  %v4804 = vld [vmem:[%s1434 + $0x50] sm:$0xff]
  %v4805 = vld [vmem:[%s1434 + $0x60] sm:$0xff]
  %v4806 = vld [vmem:[%s1434 + $0x70] sm:$0xff]
  %v4807 = vld [vmem:[%s1434 + $0xa0] sm:$0xff]
  %v4808 = vld [vmem:[%s1434 + $0xb0] sm:$0xff]
  %v4809 = vld [vmem:[%s1434 + $0xc0] sm:$0xff]
  %v4810 = vld [vmem:[%s1434 + $0xd0] sm:$0xff]
  %v4811 = vld [vmem:[%s1434 + $0xe0] sm:$0xff]
  %v4812 = vld [vmem:[%s1434 + $0xf0] sm:$0xff]
  %v4813 = vld [vmem:[%s1434 + $0x100] sm:$0xff]
  %v4814 = vld [vmem:[%s1434 + $0x110] sm:$0xff]
  %v4815 = vld [vmem:[%s2376 + $0x1] sm:$0xff]
  %v4816 = vld [vmem:[%s2376 + $0x11] sm:$0xff]
  %v4817 = vld [vmem:[%s2376 + $0x21] sm:$0xff]
  %v4818 = vld [vmem:[%s2376 + $0x31] sm:$0xff]
  %v4819 = vld [vmem:[%s2376 + $0x41] sm:$0xff]
  %v4820 = vld [vmem:[%s2376 + $0x51] sm:$0xff]
  %v4821 = vld [vmem:[%s2376 + $0x61] sm:$0xff]
  %v4822 = vld [vmem:[%s2376 + $0x71] sm:$0xff]
  %v4823 = vld [vmem:[%s2376 + $0xa1] sm:$0xff]
  %v4824 = vld [vmem:[%s2376 + $0xb1] sm:$0xff]
  %v4825 = vld [vmem:[%s2376 + $0xc1] sm:$0xff]
  %v4826 = vld [vmem:[%s2376 + $0xd1] sm:$0xff]
  %v4827 = vld [vmem:[%s2376 + $0xe1] sm:$0xff]
  %v4828 = vld [vmem:[%s2376 + $0xf1] sm:$0xff]
  %v4829 = vld [vmem:[%s2376 + $0x101] sm:$0xff]
  %v4830 = vld [vmem:[%s2376 + $0x111] sm:$0xff]
  %v4831 = vld [vmem:[%s1434 + $0x1] sm:$0xff]
  %v4832 = vld [vmem:[%s1434 + $0x11] sm:$0xff]
  %v4833 = vld [vmem:[%s1434 + $0x21] sm:$0xff]
  %v4834 = vld [vmem:[%s1434 + $0x31] sm:$0xff]
  %v4835 = vld [vmem:[%s1434 + $0x41] sm:$0xff]
  %v4836 = vld [vmem:[%s1434 + $0x51] sm:$0xff]
  %v4837 = vld [vmem:[%s1434 + $0x61] sm:$0xff]
  %v4838 = vld [vmem:[%s1434 + $0x71] sm:$0xff]
  %v4839 = vld [vmem:[%s1434 + $0xa1] sm:$0xff]
  %v4840 = vld [vmem:[%s1434 + $0xb1] sm:$0xff]
  %v4841 = vld [vmem:[%s1434 + $0xc1] sm:$0xff]
  %v4842 = vld [vmem:[%s1434 + $0xd1] sm:$0xff]
  %v4843 = vld [vmem:[%s1434 + $0xe1] sm:$0xff]
  %v4844 = vld [vmem:[%s1434 + $0xf1] sm:$0xff]
  %v4845 = vld [vmem:[%s1434 + $0x101] sm:$0xff]
  %v4846 = vld [vmem:[%s1434 + $0x111] sm:$0xff]
  %v4847 = vld [vmem:[%s2376 + $0x2] sm:$0xff]
  %v4848 = vld [vmem:[%s2376 + $0x12] sm:$0xff]
  %v4849 = vld [vmem:[%s2376 + $0x22] sm:$0xff]
  %v4850 = vld [vmem:[%s2376 + $0x32] sm:$0xff]
  %v4851 = vld [vmem:[%s2376 + $0x42] sm:$0xff]
  %v4852 = vld [vmem:[%s2376 + $0x52] sm:$0xff]
  %v4853 = vld [vmem:[%s2376 + $0x62] sm:$0xff]
  %v4854 = vld [vmem:[%s2376 + $0x72] sm:$0xff]
  %v4855 = vld [vmem:[%s2376 + $0xa2] sm:$0xff]
  %v4856 = vld [vmem:[%s2376 + $0xb2] sm:$0xff]
  %v4857 = vld [vmem:[%s2376 + $0xc2] sm:$0xff]
  %v4858 = vld [vmem:[%s2376 + $0xd2] sm:$0xff]
  %v4859 = vld [vmem:[%s2376 + $0xe2] sm:$0xff]
  %v4860 = vld [vmem:[%s2376 + $0xf2] sm:$0xff]
  %v4861 = vld [vmem:[%s2376 + $0x102] sm:$0xff]
  %v4862 = vld [vmem:[%s2376 + $0x112] sm:$0xff]
  %v4863 = vld [vmem:[%s4584] sm:$0xff]
  %v4864 = vld [vmem:[%s4584 + $0x10] sm:$0xff]
  %v4865 = vld [vmem:[%s4584 + $0x20] sm:$0xff]
  %v4866 = vld [vmem:[%s4584 + $0x30] sm:$0xff]
  %v4867 = vld [vmem:[%s4584 + $0x40] sm:$0xff]
  %v4868 = vld [vmem:[%s4584 + $0x50] sm:$0xff]
  %v4869 = vld [vmem:[%s4584 + $0x60] sm:$0xff]
  %v4870 = vld [vmem:[%s4584 + $0x70] sm:$0xff]
  %v4871 = vld [vmem:[%s4584 + $0xa0] sm:$0xff]
  %v4872 = vld [vmem:[%s4584 + $0xb0] sm:$0xff]
  %v4873 = vld [vmem:[%s4584 + $0xc0] sm:$0xff]
  %v4874 = vld [vmem:[%s4584 + $0xd0] sm:$0xff]
  %v4875 = vld [vmem:[%s4584 + $0xe0] sm:$0xff]
  %v4876 = vld [vmem:[%s4584 + $0xf0] sm:$0xff]
  %v4877 = vld [vmem:[%s4584 + $0x100] sm:$0xff]
  %v4878 = vld [vmem:[%s4584 + $0x110] sm:$0xff]
  %v4879 = vld [vmem:[%s3498] sm:$0xff]
  %v4880 = vld [vmem:[%s3498 + $0x10] sm:$0xff]
  %v4881 = vld [vmem:[%s3498 + $0x20] sm:$0xff]
  %v4882 = vld [vmem:[%s3498 + $0x30] sm:$0xff]
  %v4883 = vld [vmem:[%s3498 + $0x40] sm:$0xff]
  %v4884 = vld [vmem:[%s3498 + $0x50] sm:$0xff]
  %v4885 = vld [vmem:[%s3498 + $0x60] sm:$0xff]
  %v4886 = vld [vmem:[%s3498 + $0x70] sm:$0xff]
  %v4887 = vld [vmem:[%s3498 + $0xa0] sm:$0xff]
  %v4888 = vld [vmem:[%s3498 + $0xb0] sm:$0xff]
  %v4889 = vld [vmem:[%s3498 + $0xc0] sm:$0xff]
  %v4890 = vld [vmem:[%s3498 + $0xd0] sm:$0xff]
  %v4891 = vld [vmem:[%s3498 + $0xe0] sm:$0xff]
  %v4892 = vld [vmem:[%s3498 + $0xf0] sm:$0xff]
  %v4893 = vld [vmem:[%s3498 + $0x100] sm:$0xff]
  %v4894 = vld [vmem:[%s3498 + $0x110] sm:$0xff]
  %v4895 = vld [vmem:[%s4584 + $0x1] sm:$0xff]
  %v4896 = vld [vmem:[%s4584 + $0x11] sm:$0xff]
  %v4897 = vld [vmem:[%s4584 + $0x21] sm:$0xff]
  %v4898 = vld [vmem:[%s4584 + $0x31] sm:$0xff]
  %v4899 = vld [vmem:[%s4584 + $0x41] sm:$0xff]
  %v4900 = vld [vmem:[%s4584 + $0x51] sm:$0xff]
  %v4901 = vld [vmem:[%s4584 + $0x61] sm:$0xff]
  %v4902 = vld [vmem:[%s4584 + $0x71] sm:$0xff]
  %v4903 = vld [vmem:[%s4584 + $0xa1] sm:$0xff]
  %v4904 = vld [vmem:[%s4584 + $0xb1] sm:$0xff]
  %v4905 = vld [vmem:[%s4584 + $0xc1] sm:$0xff]
  %v4906 = vld [vmem:[%s4584 + $0xd1] sm:$0xff]
  %v4907 = vld [vmem:[%s4584 + $0xe1] sm:$0xff]
  %v4908 = vld [vmem:[%s4584 + $0xf1] sm:$0xff]
  %v4909 = vld [vmem:[%s4584 + $0x101] sm:$0xff]
  %v4910 = vld [vmem:[%s4584 + $0x111] sm:$0xff]
  %v4911 = vld [vmem:[%s3498 + $0x1] sm:$0xff]
  %v4912 = vld [vmem:[%s3498 + $0x11] sm:$0xff]
  %v4913 = vld [vmem:[%s3498 + $0x21] sm:$0xff]
  %v4914 = vld [vmem:[%s3498 + $0x31] sm:$0xff]
  %v4915 = vld [vmem:[%s3498 + $0x41] sm:$0xff]
  %v4916 = vld [vmem:[%s3498 + $0x51] sm:$0xff]
  %v4917 = vld [vmem:[%s3498 + $0x61] sm:$0xff]
  %v4918 = vld [vmem:[%s3498 + $0x71] sm:$0xff]
  %v4919 = vld [vmem:[%s3498 + $0xa1] sm:$0xff]
  %v4920 = vld [vmem:[%s3498 + $0xb1] sm:$0xff]
  %v4921 = vld [vmem:[%s3498 + $0xc1] sm:$0xff]
  %v4922 = vld [vmem:[%s3498 + $0xd1] sm:$0xff]
  %v4923 = vld [vmem:[%s3498 + $0xe1] sm:$0xff]
  %v4924 = vld [vmem:[%s3498 + $0xf1] sm:$0xff]
  %v4925 = vld [vmem:[%s3498 + $0x101] sm:$0xff]
  %v4926 = vld [vmem:[%s3498 + $0x111] sm:$0xff]
  %v4927 = vld [vmem:[%s4584 + $0x2] sm:$0xff]
  %v4928 = vld [vmem:[%s4584 + $0x12] sm:$0xff]
  %v4929 = vld [vmem:[%s4584 + $0x22] sm:$0xff]
  %v4930 = vld [vmem:[%s4584 + $0x32] sm:$0xff]
  %v4931 = vld [vmem:[%s4584 + $0x42] sm:$0xff]
  %v4932 = vld [vmem:[%s4584 + $0x52] sm:$0xff]
  %v4933 = vld [vmem:[%s4584 + $0x62] sm:$0xff]
  %v4934 = vld [vmem:[%s4584 + $0x72] sm:$0xff]
  %v4935 = vld [vmem:[%s4584 + $0xa2] sm:$0xff]
  %v4936 = vld [vmem:[%s4584 + $0xb2] sm:$0xff]
  %v4937 = vld [vmem:[%s4584 + $0xc2] sm:$0xff]
  %v4938 = vld [vmem:[%s4584 + $0xd2] sm:$0xff]
  %v4939 = vld [vmem:[%s4584 + $0xe2] sm:$0xff]
  %v4940 = vld [vmem:[%s4584 + $0xf2] sm:$0xff]
  %v4941 = vld [vmem:[%s4584 + $0x102] sm:$0xff]
  %v4942 = vld [vmem:[%s4584 + $0x112] sm:$0xff]
  %s4943 = scalar_lea.vmem [#allocation2], 656
  %v4944 = vld [vmem:[%s4943] sm:$0xff]
  %v4945 = vld [vmem:[%s4943 + $0x10] sm:$0xff]
  %v4946 = vld [vmem:[%s4943 + $0x20] sm:$0xff]
  %v4947 = vld [vmem:[%s4943 + $0x30] sm:$0xff]
  %v4948 = vld [vmem:[%s4943 + $0x40] sm:$0xff]
  %v4949 = vld [vmem:[%s4943 + $0x50] sm:$0xff]
  %v4950 = vld [vmem:[%s4943 + $0x60] sm:$0xff]
  %v4951 = vld [vmem:[%s4943 + $0x70] sm:$0xff]
  %v4952 = vld [vmem:[%s4943 + $0xa0] sm:$0xff]
  %v4953 = vld [vmem:[%s4943 + $0xb0] sm:$0xff]
  %v4954 = vld [vmem:[%s4943 + $0xc0] sm:$0xff]
  %v4955 = vld [vmem:[%s4943 + $0xd0] sm:$0xff]
  %v4956 = vld [vmem:[%s4943 + $0xe0] sm:$0xff]
  %v4957 = vld [vmem:[%s4943 + $0xf0] sm:$0xff]
  %v4958 = vld [vmem:[%s4943 + $0x100] sm:$0xff]
  %v4959 = vld [vmem:[%s4943 + $0x110] sm:$0xff]
  %s4960 = scalar_lea.vmem [#allocation2], 976
  %v4961 = vld [vmem:[%s4960] sm:$0xff]
  %v4962 = vld [vmem:[%s4960 + $0x10] sm:$0xff]
  %v4963 = vld [vmem:[%s4960 + $0x20] sm:$0xff]
  %v4964 = vld [vmem:[%s4960 + $0x30] sm:$0xff]
  %v4965 = vld [vmem:[%s4960 + $0x40] sm:$0xff]
  %v4966 = vld [vmem:[%s4960 + $0x50] sm:$0xff]
  %v4967 = vld [vmem:[%s4960 + $0x60] sm:$0xff]
  %v4968 = vld [vmem:[%s4960 + $0x70] sm:$0xff]
  %v4969 = vld [vmem:[%s4960 + $0xa0] sm:$0xff]
  %v4970 = vld [vmem:[%s4960 + $0xb0] sm:$0xff]
  %v4971 = vld [vmem:[%s4960 + $0xc0] sm:$0xff]
  %v4972 = vld [vmem:[%s4960 + $0xd0] sm:$0xff]
  %v4973 = vld [vmem:[%s4960 + $0xe0] sm:$0xff]
  %v4974 = vld [vmem:[%s4960 + $0xf0] sm:$0xff]
  %v4975 = vld [vmem:[%s4960 + $0x100] sm:$0xff]
  %v4976 = vld [vmem:[%s4960 + $0x110] sm:$0xff]
  %v4977 = vld [vmem:[%s4943 + $0x1] sm:$0xff]
  %v4978 = vld [vmem:[%s4943 + $0x11] sm:$0xff]
  %v4979 = vld [vmem:[%s4943 + $0x21] sm:$0xff]
  %v4980 = vld [vmem:[%s4943 + $0x31] sm:$0xff]
  %v4981 = vld [vmem:[%s4943 + $0x41] sm:$0xff]
  %v4982 = vld [vmem:[%s4943 + $0x51] sm:$0xff]
  %v4983 = vld [vmem:[%s4943 + $0x61] sm:$0xff]
  %v4984 = vld [vmem:[%s4943 + $0x71] sm:$0xff]
  %v4985 = vld [vmem:[%s4943 + $0xa1] sm:$0xff]
  %v4986 = vld [vmem:[%s4943 + $0xb1] sm:$0xff]
  %v4987 = vld [vmem:[%s4943 + $0xc1] sm:$0xff]
  %v4988 = vld [vmem:[%s4943 + $0xd1] sm:$0xff]
  %v4989 = vld [vmem:[%s4943 + $0xe1] sm:$0xff]
  %v4990 = vld [vmem:[%s4943 + $0xf1] sm:$0xff]
  %v4991 = vld [vmem:[%s4943 + $0x101] sm:$0xff]
  %v4992 = vld [vmem:[%s4943 + $0x111] sm:$0xff]
  %v4993 = vld [vmem:[%s4960 + $0x1] sm:$0xff]
  %v4994 = vld [vmem:[%s4960 + $0x11] sm:$0xff]
  %v4995 = vld [vmem:[%s4960 + $0x21] sm:$0xff]
  %v4996 = vld [vmem:[%s4960 + $0x31] sm:$0xff]
  %v4997 = vld [vmem:[%s4960 + $0x41] sm:$0xff]
  %v4998 = vld [vmem:[%s4960 + $0x51] sm:$0xff]
  %v4999 = vld [vmem:[%s4960 + $0x61] sm:$0xff]
  %v5000 = vld [vmem:[%s4960 + $0x71] sm:$0xff]
  %v5001 = vld [vmem:[%s4960 + $0xa1] sm:$0xff]
  %v5002 = vld [vmem:[%s4960 + $0xb1] sm:$0xff]
  %v5003 = vld [vmem:[%s4960 + $0xc1] sm:$0xff]
  %v5004 = vld [vmem:[%s4960 + $0xd1] sm:$0xff]
  %v5005 = vld [vmem:[%s4960 + $0xe1] sm:$0xff]
  %v5006 = vld [vmem:[%s4960 + $0xf1] sm:$0xff]
  %v5007 = vld [vmem:[%s4960 + $0x101] sm:$0xff]
  %v5008 = vld [vmem:[%s4960 + $0x111] sm:$0xff]
  %v5009 = vld [vmem:[%s4943 + $0x2] sm:$0xff]
  %v5010 = vld [vmem:[%s4943 + $0x12] sm:$0xff]
  %v5011 = vld [vmem:[%s4943 + $0x22] sm:$0xff]
  %v5012 = vld [vmem:[%s4943 + $0x32] sm:$0xff]
  %v5013 = vld [vmem:[%s4943 + $0x42] sm:$0xff]
  %v5014 = vld [vmem:[%s4943 + $0x52] sm:$0xff]
  %v5015 = vld [vmem:[%s4943 + $0x62] sm:$0xff]
  %v5016 = vld [vmem:[%s4943 + $0x72] sm:$0xff]
  %v5017 = vld [vmem:[%s4943 + $0xa2] sm:$0xff]
  %v5018 = vld [vmem:[%s4943 + $0xb2] sm:$0xff]
  %v5019 = vld [vmem:[%s4943 + $0xc2] sm:$0xff]
  %v5020 = vld [vmem:[%s4943 + $0xd2] sm:$0xff]
  %v5021 = vld [vmem:[%s4943 + $0xe2] sm:$0xff]
  %v5022 = vld [vmem:[%s4943 + $0xf2] sm:$0xff]
  %v5023 = vld [vmem:[%s4943 + $0x102] sm:$0xff]
  %v5024 = vld [vmem:[%s4943 + $0x112] sm:$0xff]
  %s5025 = scalar_lea.vmem [#allocation2], 32
  %v5026 = vld [vmem:[%s5025] sm:$0xff]
  %v5027 = vld [vmem:[%s5025 + $0x10] sm:$0xff]
  %v5028 = vld [vmem:[%s5025 + $0x20] sm:$0xff]
  %v5029 = vld [vmem:[%s5025 + $0x30] sm:$0xff]
  %v5030 = vld [vmem:[%s5025 + $0x40] sm:$0xff]
  %v5031 = vld [vmem:[%s5025 + $0x50] sm:$0xff]
  %v5032 = vld [vmem:[%s5025 + $0x60] sm:$0xff]
  %v5033 = vld [vmem:[%s5025 + $0x70] sm:$0xff]
  %v5034 = vld [vmem:[%s5025 + $0xa0] sm:$0xff]
  %v5035 = vld [vmem:[%s5025 + $0xb0] sm:$0xff]
  %v5036 = vld [vmem:[%s5025 + $0xc0] sm:$0xff]
  %v5037 = vld [vmem:[%s5025 + $0xd0] sm:$0xff]
  %v5038 = vld [vmem:[%s5025 + $0xe0] sm:$0xff]
  %v5039 = vld [vmem:[%s5025 + $0xf0] sm:$0xff]
  %v5040 = vld [vmem:[%s5025 + $0x100] sm:$0xff]
  %v5041 = vld [vmem:[%s5025 + $0x110] sm:$0xff]
  %s5042 = scalar_lea.vmem [#allocation2], 352
  %v5043 = vld [vmem:[%s5042] sm:$0xff]
  %v5044 = vld [vmem:[%s5042 + $0x10] sm:$0xff]
  %v5045 = vld [vmem:[%s5042 + $0x20] sm:$0xff]
  %v5046 = vld [vmem:[%s5042 + $0x30] sm:$0xff]
  %v5047 = vld [vmem:[%s5042 + $0x40] sm:$0xff]
  %v5048 = vld [vmem:[%s5042 + $0x50] sm:$0xff]
  %v5049 = vld [vmem:[%s5042 + $0x60] sm:$0xff]
  %v5050 = vld [vmem:[%s5042 + $0x70] sm:$0xff]
  %v5051 = vld [vmem:[%s5042 + $0xa0] sm:$0xff]
  %v5052 = vld [vmem:[%s5042 + $0xb0] sm:$0xff]
  %v5053 = vld [vmem:[%s5042 + $0xc0] sm:$0xff]
  %v5054 = vld [vmem:[%s5042 + $0xd0] sm:$0xff]
  %v5055 = vld [vmem:[%s5042 + $0xe0] sm:$0xff]
  %v5056 = vld [vmem:[%s5042 + $0xf0] sm:$0xff]
  %v5057 = vld [vmem:[%s5042 + $0x100] sm:$0xff]
  %v5058 = vld [vmem:[%s5042 + $0x110] sm:$0xff]
  %v5059 = vld [vmem:[%s5025 + $0x1] sm:$0xff]
  %v5060 = vld [vmem:[%s5025 + $0x11] sm:$0xff]
  %v5061 = vld [vmem:[%s5025 + $0x21] sm:$0xff]
  %v5062 = vld [vmem:[%s5025 + $0x31] sm:$0xff]
  %v5063 = vld [vmem:[%s5025 + $0x41] sm:$0xff]
  %v5064 = vld [vmem:[%s5025 + $0x51] sm:$0xff]
  %v5065 = vld [vmem:[%s5025 + $0x61] sm:$0xff]
  %v5066 = vld [vmem:[%s5025 + $0x71] sm:$0xff]
  %v5067 = vld [vmem:[%s5025 + $0xa1] sm:$0xff]
  %v5068 = vld [vmem:[%s5025 + $0xb1] sm:$0xff]
  %v5069 = vld [vmem:[%s5025 + $0xc1] sm:$0xff]
  %v5070 = vld [vmem:[%s5025 + $0xd1] sm:$0xff]
  %v5071 = vld [vmem:[%s5025 + $0xe1] sm:$0xff]
  %v5072 = vld [vmem:[%s5025 + $0xf1] sm:$0xff]
  %v5073 = vld [vmem:[%s5025 + $0x101] sm:$0xff]
  %v5074 = vld [vmem:[%s5025 + $0x111] sm:$0xff]
  %v5075 = vld [vmem:[%s5042 + $0x1] sm:$0xff]
  %v5076 = vld [vmem:[%s5042 + $0x11] sm:$0xff]
  %v5077 = vld [vmem:[%s5042 + $0x21] sm:$0xff]
  %v5078 = vld [vmem:[%s5042 + $0x31] sm:$0xff]
  %v5079 = vld [vmem:[%s5042 + $0x41] sm:$0xff]
  %v5080 = vld [vmem:[%s5042 + $0x51] sm:$0xff]
  %v5081 = vld [vmem:[%s5042 + $0x61] sm:$0xff]
  %v5082 = vld [vmem:[%s5042 + $0x71] sm:$0xff]
  %v5083 = vld [vmem:[%s5042 + $0xa1] sm:$0xff]
  %v5084 = vld [vmem:[%s5042 + $0xb1] sm:$0xff]
  %v5085 = vld [vmem:[%s5042 + $0xc1] sm:$0xff]
  %v5086 = vld [vmem:[%s5042 + $0xd1] sm:$0xff]
  %v5087 = vld [vmem:[%s5042 + $0xe1] sm:$0xff]
  %v5088 = vld [vmem:[%s5042 + $0xf1] sm:$0xff]
  %v5089 = vld [vmem:[%s5042 + $0x101] sm:$0xff]
  %v5090 = vld [vmem:[%s5042 + $0x111] sm:$0xff]
  %v5091 = vld [vmem:[%s5025 + $0x2] sm:$0xff]
  %v5092 = vld [vmem:[%s5025 + $0x12] sm:$0xff]
  %v5093 = vld [vmem:[%s5025 + $0x22] sm:$0xff]
  %v5094 = vld [vmem:[%s5025 + $0x32] sm:$0xff]
  %v5095 = vld [vmem:[%s5025 + $0x42] sm:$0xff]
  %v5096 = vld [vmem:[%s5025 + $0x52] sm:$0xff]
  %v5097 = vld [vmem:[%s5025 + $0x62] sm:$0xff]
  %v5098 = vld [vmem:[%s5025 + $0x72] sm:$0xff]
  %v5099 = vld [vmem:[%s5025 + $0xa2] sm:$0xff]
  %v5100 = vld [vmem:[%s5025 + $0xb2] sm:$0xff]
  %v5101 = vld [vmem:[%s5025 + $0xc2] sm:$0xff]
  %v5102 = vld [vmem:[%s5025 + $0xd2] sm:$0xff]
  %v5103 = vld [vmem:[%s5025 + $0xe2] sm:$0xff]
  %v5104 = vld [vmem:[%s5025 + $0xf2] sm:$0xff]
  %v5105 = vld [vmem:[%s5025 + $0x102] sm:$0xff]
  %v5106 = vld [vmem:[%s5025 + $0x112] sm:$0xff]
  %5123 = vrot.lane.b32.xlu0 %v4719, 32
  %v5124 = vpop.permute.xlu0 %5123
  %5125 = vrot.lane.b32.xlu0 %v4720, 32
  %v5126 = vpop.permute.xlu0 %5125
  %5127 = vrot.lane.b32.xlu0 %v4721, 32
  %v5128 = vpop.permute.xlu0 %5127
  %5129 = vrot.lane.b32.xlu0 %v4722, 32
  %v5130 = vpop.permute.xlu0 %5129
  %5131 = vrot.lane.b32.xlu0 %v4723, 32
  %v5132 = vpop.permute.xlu0 %5131
  %5133 = vrot.lane.b32.xlu0 %v4724, 32
  %v5134 = vpop.permute.xlu0 %5133
  %5135 = vrot.lane.b32.xlu0 %v4725, 32
  %v5136 = vpop.permute.xlu0 %5135
  %5137 = vrot.lane.b32.xlu0 %v4726, 32
  %v5138 = vpop.permute.xlu0 %5137
  %5139 = vrot.lane.b32.xlu0 %v4727, 32
  %v5140 = vpop.permute.xlu0 %5139
  %5141 = vrot.lane.b32.xlu0 %v4728, 32
  %v5142 = vpop.permute.xlu0 %5141
  %5143 = vrot.lane.b32.xlu0 %v4729, 32
  %v5144 = vpop.permute.xlu0 %5143
  %5145 = vrot.lane.b32.xlu0 %v4730, 32
  %v5146 = vpop.permute.xlu0 %5145
  %5147 = vrot.lane.b32.xlu0 %v4731, 32
  %v5148 = vpop.permute.xlu0 %5147
  %5149 = vrot.lane.b32.xlu0 %v4732, 32
  %v5150 = vpop.permute.xlu0 %5149
  %5151 = vrot.lane.b32.xlu0 %v4733, 32
  %v5152 = vpop.permute.xlu0 %5151
  %5153 = vrot.lane.b32.xlu0 %v4734, 32
  %v5154 = vpop.permute.xlu0 %5153
  %5187 = vrot.lane.b32.xlu0 %v4735, 64
  %v5188 = vpop.permute.xlu0 %5187
  %5189 = vrot.lane.b32.xlu0 %v4736, 64
  %v5190 = vpop.permute.xlu0 %5189
  %5191 = vrot.lane.b32.xlu0 %v4737, 64
  %v5192 = vpop.permute.xlu0 %5191
  %5193 = vrot.lane.b32.xlu0 %v4738, 64
  %v5194 = vpop.permute.xlu0 %5193
  %5195 = vrot.lane.b32.xlu0 %v4739, 64
  %v5196 = vpop.permute.xlu0 %5195
  %5197 = vrot.lane.b32.xlu0 %v4740, 64
  %v5198 = vpop.permute.xlu0 %5197
  %5199 = vrot.lane.b32.xlu0 %v4741, 64
  %v5200 = vpop.permute.xlu0 %5199
  %5201 = vrot.lane.b32.xlu0 %v4742, 64
  %v5202 = vpop.permute.xlu0 %5201
  %5203 = vrot.lane.b32.xlu0 %v4743, 64
  %v5204 = vpop.permute.xlu0 %5203
  %5205 = vrot.lane.b32.xlu0 %v4744, 64
  %v5206 = vpop.permute.xlu0 %5205
  %5207 = vrot.lane.b32.xlu0 %v4745, 64
  %v5208 = vpop.permute.xlu0 %5207
  %5209 = vrot.lane.b32.xlu0 %v4746, 64
  %v5210 = vpop.permute.xlu0 %5209
  %5211 = vrot.lane.b32.xlu0 %v4747, 64
  %v5212 = vpop.permute.xlu0 %5211
  %5213 = vrot.lane.b32.xlu0 %v4748, 64
  %v5214 = vpop.permute.xlu0 %5213
  %5215 = vrot.lane.b32.xlu0 %v4749, 64
  %v5216 = vpop.permute.xlu0 %5215
  %5217 = vrot.lane.b32.xlu0 %v4750, 64
  %v5218 = vpop.permute.xlu0 %5217
  %5251 = vrot.lane.b32.xlu0 %v4751, 96
  %v5252 = vpop.permute.xlu0 %5251
  %5253 = vrot.lane.b32.xlu0 %v4752, 96
  %v5254 = vpop.permute.xlu0 %5253
  %5255 = vrot.lane.b32.xlu0 %v4753, 96
  %v5256 = vpop.permute.xlu0 %5255
  %5257 = vrot.lane.b32.xlu0 %v4754, 96
  %v5258 = vpop.permute.xlu0 %5257
  %5259 = vrot.lane.b32.xlu0 %v4755, 96
  %v5260 = vpop.permute.xlu0 %5259
  %5261 = vrot.lane.b32.xlu0 %v4756, 96
  %v5262 = vpop.permute.xlu0 %5261
  %5263 = vrot.lane.b32.xlu0 %v4757, 96
  %v5264 = vpop.permute.xlu0 %5263
  %5265 = vrot.lane.b32.xlu0 %v4758, 96
  %v5266 = vpop.permute.xlu0 %5265
  %5267 = vrot.lane.b32.xlu0 %v4759, 96
  %v5268 = vpop.permute.xlu0 %5267
  %5269 = vrot.lane.b32.xlu0 %v4760, 96
  %v5270 = vpop.permute.xlu0 %5269
  %5271 = vrot.lane.b32.xlu0 %v4761, 96
  %v5272 = vpop.permute.xlu0 %5271
  %5273 = vrot.lane.b32.xlu0 %v4762, 96
  %v5274 = vpop.permute.xlu0 %5273
  %5275 = vrot.lane.b32.xlu0 %v4763, 96
  %v5276 = vpop.permute.xlu0 %5275
  %5277 = vrot.lane.b32.xlu0 %v4764, 96
  %v5278 = vpop.permute.xlu0 %5277
  %5279 = vrot.lane.b32.xlu0 %v4765, 96
  %v5280 = vpop.permute.xlu0 %5279
  %5281 = vrot.lane.b32.xlu0 %v4766, 96
  %v5282 = vpop.permute.xlu0 %5281
  %5315 = vrot.lane.b32.xlu0 %v4783, 32
  %v5316 = vpop.permute.xlu0 %5315
  %5317 = vrot.lane.b32.xlu0 %v4784, 32
  %v5318 = vpop.permute.xlu0 %5317
  %5319 = vrot.lane.b32.xlu0 %v4785, 32
  %v5320 = vpop.permute.xlu0 %5319
  %5321 = vrot.lane.b32.xlu0 %v4786, 32
  %v5322 = vpop.permute.xlu0 %5321
  %5323 = vrot.lane.b32.xlu0 %v4787, 32
  %v5324 = vpop.permute.xlu0 %5323
  %5325 = vrot.lane.b32.xlu0 %v4788, 32
  %v5326 = vpop.permute.xlu0 %5325
  %5327 = vrot.lane.b32.xlu0 %v4789, 32
  %v5328 = vpop.permute.xlu0 %5327
  %5329 = vrot.lane.b32.xlu0 %v4790, 32
  %v5330 = vpop.permute.xlu0 %5329
  %5331 = vrot.lane.b32.xlu0 %v4791, 32
  %v5332 = vpop.permute.xlu0 %5331
  %5333 = vrot.lane.b32.xlu0 %v4792, 32
  %v5334 = vpop.permute.xlu0 %5333
  %5335 = vrot.lane.b32.xlu0 %v4793, 32
  %v5336 = vpop.permute.xlu0 %5335
  %5337 = vrot.lane.b32.xlu0 %v4794, 32
  %v5338 = vpop.permute.xlu0 %5337
  %5339 = vrot.lane.b32.xlu0 %v4795, 32
  %v5340 = vpop.permute.xlu0 %5339
  %5341 = vrot.lane.b32.xlu0 %v4796, 32
  %v5342 = vpop.permute.xlu0 %5341
  %5343 = vrot.lane.b32.xlu0 %v4797, 32
  %v5344 = vpop.permute.xlu0 %5343
  %5345 = vrot.lane.b32.xlu0 %v4798, 32
  %v5346 = vpop.permute.xlu0 %5345
  %5379 = vrot.lane.b32.xlu0 %v4799, 64
  %v5380 = vpop.permute.xlu0 %5379
  %5381 = vrot.lane.b32.xlu0 %v4800, 64
  %v5382 = vpop.permute.xlu0 %5381
  %5383 = vrot.lane.b32.xlu0 %v4801, 64
  %v5384 = vpop.permute.xlu0 %5383
  %5385 = vrot.lane.b32.xlu0 %v4802, 64
  %v5386 = vpop.permute.xlu0 %5385
  %5387 = vrot.lane.b32.xlu0 %v4803, 64
  %v5388 = vpop.permute.xlu0 %5387
  %5389 = vrot.lane.b32.xlu0 %v4804, 64
  %v5390 = vpop.permute.xlu0 %5389
  %5391 = vrot.lane.b32.xlu0 %v4805, 64
  %v5392 = vpop.permute.xlu0 %5391
  %5393 = vrot.lane.b32.xlu0 %v4806, 64
  %v5394 = vpop.permute.xlu0 %5393
  %5395 = vrot.lane.b32.xlu0 %v4807, 64
  %v5396 = vpop.permute.xlu0 %5395
  %5397 = vrot.lane.b32.xlu0 %v4808, 64
  %v5398 = vpop.permute.xlu0 %5397
  %5399 = vrot.lane.b32.xlu0 %v4809, 64
  %v5400 = vpop.permute.xlu0 %5399
  %5401 = vrot.lane.b32.xlu0 %v4810, 64
  %v5402 = vpop.permute.xlu0 %5401
  %5403 = vrot.lane.b32.xlu0 %v4811, 64
  %v5404 = vpop.permute.xlu0 %5403
  %5405 = vrot.lane.b32.xlu0 %v4812, 64
  %v5406 = vpop.permute.xlu0 %5405
  %5407 = vrot.lane.b32.xlu0 %v4813, 64
  %v5408 = vpop.permute.xlu0 %5407
  %5409 = vrot.lane.b32.xlu0 %v4814, 64
  %v5410 = vpop.permute.xlu0 %5409
  %5443 = vrot.lane.b32.xlu0 %v4815, 96
  %v5444 = vpop.permute.xlu0 %5443
  %5445 = vrot.lane.b32.xlu0 %v4816, 96
  %v5446 = vpop.permute.xlu0 %5445
  %5447 = vrot.lane.b32.xlu0 %v4817, 96
  %v5448 = vpop.permute.xlu0 %5447
  %5449 = vrot.lane.b32.xlu0 %v4818, 96
  %v5450 = vpop.permute.xlu0 %5449
  %5451 = vrot.lane.b32.xlu0 %v4819, 96
  %v5452 = vpop.permute.xlu0 %5451
  %5453 = vrot.lane.b32.xlu0 %v4820, 96
  %v5454 = vpop.permute.xlu0 %5453
  %5455 = vrot.lane.b32.xlu0 %v4821, 96
  %v5456 = vpop.permute.xlu0 %5455
  %5457 = vrot.lane.b32.xlu0 %v4822, 96
  %v5458 = vpop.permute.xlu0 %5457
  %5459 = vrot.lane.b32.xlu0 %v4823, 96
  %v5460 = vpop.permute.xlu0 %5459
  %5461 = vrot.lane.b32.xlu0 %v4824, 96
  %v5462 = vpop.permute.xlu0 %5461
  %5463 = vrot.lane.b32.xlu0 %v4825, 96
  %v5464 = vpop.permute.xlu0 %5463
  %5465 = vrot.lane.b32.xlu0 %v4826, 96
  %v5466 = vpop.permute.xlu0 %5465
  %5467 = vrot.lane.b32.xlu0 %v4827, 96
  %v5468 = vpop.permute.xlu0 %5467
  %5469 = vrot.lane.b32.xlu0 %v4828, 96
  %v5470 = vpop.permute.xlu0 %5469
  %5471 = vrot.lane.b32.xlu0 %v4829, 96
  %v5472 = vpop.permute.xlu0 %5471
  %5473 = vrot.lane.b32.xlu0 %v4830, 96
  %v5474 = vpop.permute.xlu0 %5473
  %5507 = vrot.lane.b32.xlu0 %v4847, 32
  %v5508 = vpop.permute.xlu0 %5507
  %5509 = vrot.lane.b32.xlu0 %v4848, 32
  %v5510 = vpop.permute.xlu0 %5509
  %5511 = vrot.lane.b32.xlu0 %v4849, 32
  %v5512 = vpop.permute.xlu0 %5511
  %5513 = vrot.lane.b32.xlu0 %v4850, 32
  %v5514 = vpop.permute.xlu0 %5513
  %5515 = vrot.lane.b32.xlu0 %v4851, 32
  %v5516 = vpop.permute.xlu0 %5515
  %5517 = vrot.lane.b32.xlu0 %v4852, 32
  %v5518 = vpop.permute.xlu0 %5517
  %5519 = vrot.lane.b32.xlu0 %v4853, 32
  %v5520 = vpop.permute.xlu0 %5519
  %5521 = vrot.lane.b32.xlu0 %v4854, 32
  %v5522 = vpop.permute.xlu0 %5521
  %5523 = vrot.lane.b32.xlu0 %v4855, 32
  %v5524 = vpop.permute.xlu0 %5523
  %5525 = vrot.lane.b32.xlu0 %v4856, 32
  %v5526 = vpop.permute.xlu0 %5525
  %5527 = vrot.lane.b32.xlu0 %v4857, 32
  %v5528 = vpop.permute.xlu0 %5527
  %5529 = vrot.lane.b32.xlu0 %v4858, 32
  %v5530 = vpop.permute.xlu0 %5529
  %5531 = vrot.lane.b32.xlu0 %v4859, 32
  %v5532 = vpop.permute.xlu0 %5531
  %5533 = vrot.lane.b32.xlu0 %v4860, 32
  %v5534 = vpop.permute.xlu0 %5533
  %5535 = vrot.lane.b32.xlu0 %v4861, 32
  %v5536 = vpop.permute.xlu0 %5535
  %5537 = vrot.lane.b32.xlu0 %v4862, 32
  %v5538 = vpop.permute.xlu0 %5537
  %5571 = vrot.lane.b32.xlu0 %v4863, 64
  %v5572 = vpop.permute.xlu0 %5571
  %5573 = vrot.lane.b32.xlu0 %v4864, 64
  %v5574 = vpop.permute.xlu0 %5573
  %5575 = vrot.lane.b32.xlu0 %v4865, 64
  %v5576 = vpop.permute.xlu0 %5575
  %5577 = vrot.lane.b32.xlu0 %v4866, 64
  %v5578 = vpop.permute.xlu0 %5577
  %5579 = vrot.lane.b32.xlu0 %v4867, 64
  %v5580 = vpop.permute.xlu0 %5579
  %5581 = vrot.lane.b32.xlu0 %v4868, 64
  %v5582 = vpop.permute.xlu0 %5581
  %5583 = vrot.lane.b32.xlu0 %v4869, 64
  %v5584 = vpop.permute.xlu0 %5583
  %5585 = vrot.lane.b32.xlu0 %v4870, 64
  %v5586 = vpop.permute.xlu0 %5585
  %5587 = vrot.lane.b32.xlu0 %v4871, 64
  %v5588 = vpop.permute.xlu0 %5587
  %5589 = vrot.lane.b32.xlu0 %v4872, 64
  %v5590 = vpop.permute.xlu0 %5589
  %5591 = vrot.lane.b32.xlu0 %v4873, 64
  %v5592 = vpop.permute.xlu0 %5591
  %5593 = vrot.lane.b32.xlu0 %v4874, 64
  %v5594 = vpop.permute.xlu0 %5593
  %5595 = vrot.lane.b32.xlu0 %v4875, 64
  %v5596 = vpop.permute.xlu0 %5595
  %5597 = vrot.lane.b32.xlu0 %v4876, 64
  %v5598 = vpop.permute.xlu0 %5597
  %5599 = vrot.lane.b32.xlu0 %v4877, 64
  %v5600 = vpop.permute.xlu0 %5599
  %5601 = vrot.lane.b32.xlu0 %v4878, 64
  %v5602 = vpop.permute.xlu0 %5601
  %5635 = vrot.lane.b32.xlu0 %v4879, 96
  %v5636 = vpop.permute.xlu0 %5635
  %5637 = vrot.lane.b32.xlu0 %v4880, 96
  %v5638 = vpop.permute.xlu0 %5637
  %5639 = vrot.lane.b32.xlu0 %v4881, 96
  %v5640 = vpop.permute.xlu0 %5639
  %5641 = vrot.lane.b32.xlu0 %v4882, 96
  %v5642 = vpop.permute.xlu0 %5641
  %5643 = vrot.lane.b32.xlu0 %v4883, 96
  %v5644 = vpop.permute.xlu0 %5643
  %5645 = vrot.lane.b32.xlu0 %v4884, 96
  %v5646 = vpop.permute.xlu0 %5645
  %5647 = vrot.lane.b32.xlu0 %v4885, 96
  %v5648 = vpop.permute.xlu0 %5647
  %5649 = vrot.lane.b32.xlu0 %v4886, 96
  %v5650 = vpop.permute.xlu0 %5649
  %5651 = vrot.lane.b32.xlu0 %v4887, 96
  %v5652 = vpop.permute.xlu0 %5651
  %5653 = vrot.lane.b32.xlu0 %v4888, 96
  %v5654 = vpop.permute.xlu0 %5653
  %5655 = vrot.lane.b32.xlu0 %v4889, 96
  %v5656 = vpop.permute.xlu0 %5655
  %5657 = vrot.lane.b32.xlu0 %v4890, 96
  %v5658 = vpop.permute.xlu0 %5657
  %5659 = vrot.lane.b32.xlu0 %v4891, 96
  %v5660 = vpop.permute.xlu0 %5659
  %5661 = vrot.lane.b32.xlu0 %v4892, 96
  %v5662 = vpop.permute.xlu0 %5661
  %5663 = vrot.lane.b32.xlu0 %v4893, 96
  %v5664 = vpop.permute.xlu0 %5663
  %5665 = vrot.lane.b32.xlu0 %v4894, 96
  %v5666 = vpop.permute.xlu0 %5665
  %5699 = vrot.lane.b32.xlu0 %v4911, 32
  %v5700 = vpop.permute.xlu0 %5699
  %5701 = vrot.lane.b32.xlu0 %v4912, 32
  %v5702 = vpop.permute.xlu0 %5701
  %5703 = vrot.lane.b32.xlu0 %v4913, 32
  %v5704 = vpop.permute.xlu0 %5703
  %5705 = vrot.lane.b32.xlu0 %v4914, 32
  %v5706 = vpop.permute.xlu0 %5705
  %5707 = vrot.lane.b32.xlu0 %v4915, 32
  %v5708 = vpop.permute.xlu0 %5707
  %5709 = vrot.lane.b32.xlu0 %v4916, 32
  %v5710 = vpop.permute.xlu0 %5709
  %5711 = vrot.lane.b32.xlu0 %v4917, 32
  %v5712 = vpop.permute.xlu0 %5711
  %5713 = vrot.lane.b32.xlu0 %v4918, 32
  %v5714 = vpop.permute.xlu0 %5713
  %5715 = vrot.lane.b32.xlu0 %v4919, 32
  %v5716 = vpop.permute.xlu0 %5715
  %5717 = vrot.lane.b32.xlu0 %v4920, 32
  %v5718 = vpop.permute.xlu0 %5717
  %5719 = vrot.lane.b32.xlu0 %v4921, 32
  %v5720 = vpop.permute.xlu0 %5719
  %5721 = vrot.lane.b32.xlu0 %v4922, 32
  %v5722 = vpop.permute.xlu0 %5721
  %5723 = vrot.lane.b32.xlu0 %v4923, 32
  %v5724 = vpop.permute.xlu0 %5723
  %5725 = vrot.lane.b32.xlu0 %v4924, 32
  %v5726 = vpop.permute.xlu0 %5725
  %5727 = vrot.lane.b32.xlu0 %v4925, 32
  %v5728 = vpop.permute.xlu0 %5727
  %5729 = vrot.lane.b32.xlu0 %v4926, 32
  %v5730 = vpop.permute.xlu0 %5729
  %5763 = vrot.lane.b32.xlu0 %v4927, 64
  %v5764 = vpop.permute.xlu0 %5763
  %5765 = vrot.lane.b32.xlu0 %v4928, 64
  %v5766 = vpop.permute.xlu0 %5765
  %5767 = vrot.lane.b32.xlu0 %v4929, 64
  %v5768 = vpop.permute.xlu0 %5767
  %5769 = vrot.lane.b32.xlu0 %v4930, 64
  %v5770 = vpop.permute.xlu0 %5769
  %5771 = vrot.lane.b32.xlu0 %v4931, 64
  %v5772 = vpop.permute.xlu0 %5771
  %5773 = vrot.lane.b32.xlu0 %v4932, 64
  %v5774 = vpop.permute.xlu0 %5773
  %5775 = vrot.lane.b32.xlu0 %v4933, 64
  %v5776 = vpop.permute.xlu0 %5775
  %5777 = vrot.lane.b32.xlu0 %v4934, 64
  %v5778 = vpop.permute.xlu0 %5777
  %5779 = vrot.lane.b32.xlu0 %v4935, 64
  %v5780 = vpop.permute.xlu0 %5779
  %5781 = vrot.lane.b32.xlu0 %v4936, 64
  %v5782 = vpop.permute.xlu0 %5781
  %5783 = vrot.lane.b32.xlu0 %v4937, 64
  %v5784 = vpop.permute.xlu0 %5783
  %5785 = vrot.lane.b32.xlu0 %v4938, 64
  %v5786 = vpop.permute.xlu0 %5785
  %5787 = vrot.lane.b32.xlu0 %v4939, 64
  %v5788 = vpop.permute.xlu0 %5787
  %5789 = vrot.lane.b32.xlu0 %v4940, 64
  %v5790 = vpop.permute.xlu0 %5789
  %5791 = vrot.lane.b32.xlu0 %v4941, 64
  %v5792 = vpop.permute.xlu0 %5791
  %5793 = vrot.lane.b32.xlu0 %v4942, 64
  %v5794 = vpop.permute.xlu0 %5793
  %5827 = vrot.lane.b32.xlu0 %v4944, 96
  %v5828 = vpop.permute.xlu0 %5827
  %5829 = vrot.lane.b32.xlu0 %v4945, 96
  %v5830 = vpop.permute.xlu0 %5829
  %5831 = vrot.lane.b32.xlu0 %v4946, 96
  %v5832 = vpop.permute.xlu0 %5831
  %5833 = vrot.lane.b32.xlu0 %v4947, 96
  %v5834 = vpop.permute.xlu0 %5833
  %5835 = vrot.lane.b32.xlu0 %v4948, 96
  %v5836 = vpop.permute.xlu0 %5835
  %5837 = vrot.lane.b32.xlu0 %v4949, 96
  %v5838 = vpop.permute.xlu0 %5837
  %5839 = vrot.lane.b32.xlu0 %v4950, 96
  %v5840 = vpop.permute.xlu0 %5839
  %5841 = vrot.lane.b32.xlu0 %v4951, 96
  %v5842 = vpop.permute.xlu0 %5841
  %5843 = vrot.lane.b32.xlu0 %v4952, 96
  %v5844 = vpop.permute.xlu0 %5843
  %5845 = vrot.lane.b32.xlu0 %v4953, 96
  %v5846 = vpop.permute.xlu0 %5845
  %5847 = vrot.lane.b32.xlu0 %v4954, 96
  %v5848 = vpop.permute.xlu0 %5847
  %5849 = vrot.lane.b32.xlu0 %v4955, 96
  %v5850 = vpop.permute.xlu0 %5849
  %5851 = vrot.lane.b32.xlu0 %v4956, 96
  %v5852 = vpop.permute.xlu0 %5851
  %5853 = vrot.lane.b32.xlu0 %v4957, 96
  %v5854 = vpop.permute.xlu0 %5853
  %5855 = vrot.lane.b32.xlu0 %v4958, 96
  %v5856 = vpop.permute.xlu0 %5855
  %5857 = vrot.lane.b32.xlu0 %v4959, 96
  %v5858 = vpop.permute.xlu0 %5857
  %v5875 = vsel %vm41, %v4702, %v5124
  %v5876 = vsel %vm41, %v4703, %v5126
  %v5877 = vsel %vm41, %v4704, %v5128
  %v5878 = vsel %vm41, %v4705, %v5130
  %v5879 = vsel %vm41, %v4706, %v5132
  %v5880 = vsel %vm41, %v4707, %v5134
  %v5881 = vsel %vm41, %v4708, %v5136
  %v5882 = vsel %vm41, %v4709, %v5138
  %v5883 = vsel %vm41, %v4710, %v5140
  %v5884 = vsel %vm41, %v4711, %v5142
  %v5885 = vsel %vm41, %v4712, %v5144
  %v5886 = vsel %vm41, %v4713, %v5146
  %v5887 = vsel %vm41, %v4714, %v5148
  %v5888 = vsel %vm41, %v4715, %v5150
  %v5889 = vsel %vm41, %v4716, %v5152
  %v5890 = vsel %vm41, %v4717, %v5154
  %vm5891 = vcmask 523264
  %v5892 = vsel %vm5891, %v5875, %v5188
  %v5893 = vsel %vm5891, %v5876, %v5190
  %v5894 = vsel %vm5891, %v5877, %v5192
  %v5895 = vsel %vm5891, %v5878, %v5194
  %v5896 = vsel %vm5891, %v5879, %v5196
  %v5897 = vsel %vm5891, %v5880, %v5198
  %v5898 = vsel %vm5891, %v5881, %v5200
  %v5899 = vsel %vm5891, %v5882, %v5202
  %v5900 = vsel %vm5891, %v5883, %v5204
  %v5901 = vsel %vm5891, %v5884, %v5206
  %v5902 = vsel %vm5891, %v5885, %v5208
  %v5903 = vsel %vm5891, %v5886, %v5210
  %v5904 = vsel %vm5891, %v5887, %v5212
  %v5905 = vsel %vm5891, %v5888, %v5214
  %v5906 = vsel %vm5891, %v5889, %v5216
  %v5907 = vsel %vm5891, %v5890, %v5218
  %v5908 = vsel %vm1213, %v5892, %v5252
  %v5909 = vsel %vm1213, %v5893, %v5254
  %v5910 = vsel %vm1213, %v5894, %v5256
  %v5911 = vsel %vm1213, %v5895, %v5258
  %v5912 = vsel %vm1213, %v5896, %v5260
  %v5913 = vsel %vm1213, %v5897, %v5262
  %v5914 = vsel %vm1213, %v5898, %v5264
  %v5915 = vsel %vm1213, %v5899, %v5266
  %v5916 = vsel %vm1213, %v5900, %v5268
  %v5917 = vsel %vm1213, %v5901, %v5270
  %v5918 = vsel %vm1213, %v5902, %v5272
  %v5919 = vsel %vm1213, %v5903, %v5274
  %v5920 = vsel %vm1213, %v5904, %v5276
  %v5921 = vsel %vm1213, %v5905, %v5278
  %v5922 = vsel %vm1213, %v5906, %v5280
  %v5923 = vsel %vm1213, %v5907, %v5282
  %v5924 = vsel %vm41, %v4767, %v5316
  %v5925 = vsel %vm41, %v4768, %v5318
  %v5926 = vsel %vm41, %v4769, %v5320
  %v5927 = vsel %vm41, %v4770, %v5322
  %v5928 = vsel %vm41, %v4771, %v5324
  %v5929 = vsel %vm41, %v4772, %v5326
  %v5930 = vsel %vm41, %v4773, %v5328
  %v5931 = vsel %vm41, %v4774, %v5330
  %v5932 = vsel %vm41, %v4775, %v5332
  %v5933 = vsel %vm41, %v4776, %v5334
  %v5934 = vsel %vm41, %v4777, %v5336
  %v5935 = vsel %vm41, %v4778, %v5338
  %v5936 = vsel %vm41, %v4779, %v5340
  %v5937 = vsel %vm41, %v4780, %v5342
  %v5938 = vsel %vm41, %v4781, %v5344
  %v5939 = vsel %vm41, %v4782, %v5346
  %v5940 = vsel %vm5891, %v5924, %v5380
  %v5941 = vsel %vm5891, %v5925, %v5382
  %v5942 = vsel %vm5891, %v5926, %v5384
  %v5943 = vsel %vm5891, %v5927, %v5386
  %v5944 = vsel %vm5891, %v5928, %v5388
  %v5945 = vsel %vm5891, %v5929, %v5390
  %v5946 = vsel %vm5891, %v5930, %v5392
  %v5947 = vsel %vm5891, %v5931, %v5394
  %v5948 = vsel %vm5891, %v5932, %v5396
  %v5949 = vsel %vm5891, %v5933, %v5398
  %v5950 = vsel %vm5891, %v5934, %v5400
  %v5951 = vsel %vm5891, %v5935, %v5402
  %v5952 = vsel %vm5891, %v5936, %v5404
  %v5953 = vsel %vm5891, %v5937, %v5406
  %v5954 = vsel %vm5891, %v5938, %v5408
  %v5955 = vsel %vm5891, %v5939, %v5410
  %v5956 = vsel %vm1213, %v5940, %v5444
  %v5957 = vsel %vm1213, %v5941, %v5446
  %v5958 = vsel %vm1213, %v5942, %v5448
  %v5959 = vsel %vm1213, %v5943, %v5450
  %v5960 = vsel %vm1213, %v5944, %v5452
  %v5961 = vsel %vm1213, %v5945, %v5454
  %v5962 = vsel %vm1213, %v5946, %v5456
  %v5963 = vsel %vm1213, %v5947, %v5458
  %v5964 = vsel %vm1213, %v5948, %v5460
  %v5965 = vsel %vm1213, %v5949, %v5462
  %v5966 = vsel %vm1213, %v5950, %v5464
  %v5967 = vsel %vm1213, %v5951, %v5466
  %v5968 = vsel %vm1213, %v5952, %v5468
  %v5969 = vsel %vm1213, %v5953, %v5470
  %v5970 = vsel %vm1213, %v5954, %v5472
  %v5971 = vsel %vm1213, %v5955, %v5474
  %v5972 = vsel %vm41, %v4831, %v5508
  %v5973 = vsel %vm41, %v4832, %v5510
  %v5974 = vsel %vm41, %v4833, %v5512
  %v5975 = vsel %vm41, %v4834, %v5514
  %v5976 = vsel %vm41, %v4835, %v5516
  %v5977 = vsel %vm41, %v4836, %v5518
  %v5978 = vsel %vm41, %v4837, %v5520
  %v5979 = vsel %vm41, %v4838, %v5522
  %v5980 = vsel %vm41, %v4839, %v5524
  %v5981 = vsel %vm41, %v4840, %v5526
  %v5982 = vsel %vm41, %v4841, %v5528
  %v5983 = vsel %vm41, %v4842, %v5530
  %v5984 = vsel %vm41, %v4843, %v5532
  %v5985 = vsel %vm41, %v4844, %v5534
  %v5986 = vsel %vm41, %v4845, %v5536
  %v5987 = vsel %vm41, %v4846, %v5538
  %v5988 = vsel %vm5891, %v5972, %v5572
  %v5989 = vsel %vm5891, %v5973, %v5574
  %v5990 = vsel %vm5891, %v5974, %v5576
  %v5991 = vsel %vm5891, %v5975, %v5578
  %v5992 = vsel %vm5891, %v5976, %v5580
  %v5993 = vsel %vm5891, %v5977, %v5582
  %v5994 = vsel %vm5891, %v5978, %v5584
  %v5995 = vsel %vm5891, %v5979, %v5586
  %v5996 = vsel %vm5891, %v5980, %v5588
  %v5997 = vsel %vm5891, %v5981, %v5590
  %v5998 = vsel %vm5891, %v5982, %v5592
  %v5999 = vsel %vm5891, %v5983, %v5594
  %v6000 = vsel %vm5891, %v5984, %v5596
  %v6001 = vsel %vm5891, %v5985, %v5598
  %v6002 = vsel %vm5891, %v5986, %v5600
  %v6003 = vsel %vm5891, %v5987, %v5602
  %v6004 = vsel %vm1213, %v5988, %v5636
  %v6005 = vsel %vm1213, %v5989, %v5638
  %v6006 = vsel %vm1213, %v5990, %v5640
  %v6007 = vsel %vm1213, %v5991, %v5642
  %v6008 = vsel %vm1213, %v5992, %v5644
  %v6009 = vsel %vm1213, %v5993, %v5646
  %v6010 = vsel %vm1213, %v5994, %v5648
  %v6011 = vsel %vm1213, %v5995, %v5650
  %v6012 = vsel %vm1213, %v5996, %v5652
  %v6013 = vsel %vm1213, %v5997, %v5654
  %v6014 = vsel %vm1213, %v5998, %v5656
  %v6015 = vsel %vm1213, %v5999, %v5658
  %v6016 = vsel %vm1213, %v6000, %v5660
  %v6017 = vsel %vm1213, %v6001, %v5662
  %v6018 = vsel %vm1213, %v6002, %v5664
  %v6019 = vsel %vm1213, %v6003, %v5666
  %v6020 = vsel %vm41, %v4895, %v5700
  %v6021 = vsel %vm41, %v4896, %v5702
  %v6022 = vsel %vm41, %v4897, %v5704
  %v6023 = vsel %vm41, %v4898, %v5706
  %v6024 = vsel %vm41, %v4899, %v5708
  %v6025 = vsel %vm41, %v4900, %v5710
  %v6026 = vsel %vm41, %v4901, %v5712
  %v6027 = vsel %vm41, %v4902, %v5714
  %v6028 = vsel %vm41, %v4903, %v5716
  %v6029 = vsel %vm41, %v4904, %v5718
  %v6030 = vsel %vm41, %v4905, %v5720
  %v6031 = vsel %vm41, %v4906, %v5722
  %v6032 = vsel %vm41, %v4907, %v5724
  %v6033 = vsel %vm41, %v4908, %v5726
  %v6034 = vsel %vm41, %v4909, %v5728
  %v6035 = vsel %vm41, %v4910, %v5730
  %v6036 = vsel %vm5891, %v6020, %v5764
  %v6037 = vsel %vm5891, %v6021, %v5766
  %v6038 = vsel %vm5891, %v6022, %v5768
  %v6039 = vsel %vm5891, %v6023, %v5770
  %v6040 = vsel %vm5891, %v6024, %v5772
  %v6041 = vsel %vm5891, %v6025, %v5774
  %v6042 = vsel %vm5891, %v6026, %v5776
  %v6043 = vsel %vm5891, %v6027, %v5778
  %v6044 = vsel %vm5891, %v6028, %v5780
  %v6045 = vsel %vm5891, %v6029, %v5782
  %v6046 = vsel %vm5891, %v6030, %v5784
  %v6047 = vsel %vm5891, %v6031, %v5786
  %v6048 = vsel %vm5891, %v6032, %v5788
  %v6049 = vsel %vm5891, %v6033, %v5790
  %v6050 = vsel %vm5891, %v6034, %v5792
  %v6051 = vsel %vm5891, %v6035, %v5794
  %v6052 = vsel %vm1213, %v6036, %v5828
  %v6053 = vsel %vm1213, %v6037, %v5830
  %v6054 = vsel %vm1213, %v6038, %v5832
  %v6055 = vsel %vm1213, %v6039, %v5834
  %v6056 = vsel %vm1213, %v6040, %v5836
  %v6057 = vsel %vm1213, %v6041, %v5838
  %v6058 = vsel %vm1213, %v6042, %v5840
  %v6059 = vsel %vm1213, %v6043, %v5842
  %v6060 = vsel %vm1213, %v6044, %v5844
  %v6061 = vsel %vm1213, %v6045, %v5846
  %v6062 = vsel %vm1213, %v6046, %v5848
  %v6063 = vsel %vm1213, %v6047, %v5850
  %v6064 = vsel %vm1213, %v6048, %v5852
  %v6065 = vsel %vm1213, %v6049, %v5854
  %v6066 = vsel %vm1213, %v6050, %v5856
  %v6067 = vsel %vm1213, %v6051, %v5858
  %6084 = vrot.lane.b32.xlu0 %v4977, 32
  %v6085 = vpop.permute.xlu0 %6084
  %6086 = vrot.lane.b32.xlu0 %v4978, 32
  %v6087 = vpop.permute.xlu0 %6086
  %6088 = vrot.lane.b32.xlu0 %v4979, 32
  %v6089 = vpop.permute.xlu0 %6088
  %6090 = vrot.lane.b32.xlu0 %v4980, 32
  %v6091 = vpop.permute.xlu0 %6090
  %6092 = vrot.lane.b32.xlu0 %v4981, 32
  %v6093 = vpop.permute.xlu0 %6092
  %6094 = vrot.lane.b32.xlu0 %v4982, 32
  %v6095 = vpop.permute.xlu0 %6094
  %6096 = vrot.lane.b32.xlu0 %v4983, 32
  %v6097 = vpop.permute.xlu0 %6096
  %6098 = vrot.lane.b32.xlu0 %v4984, 32
  %v6099 = vpop.permute.xlu0 %6098
  %6100 = vrot.lane.b32.xlu0 %v4985, 32
  %v6101 = vpop.permute.xlu0 %6100
  %6102 = vrot.lane.b32.xlu0 %v4986, 32
  %v6103 = vpop.permute.xlu0 %6102
  %6104 = vrot.lane.b32.xlu0 %v4987, 32
  %v6105 = vpop.permute.xlu0 %6104
  %6106 = vrot.lane.b32.xlu0 %v4988, 32
  %v6107 = vpop.permute.xlu0 %6106
  %6108 = vrot.lane.b32.xlu0 %v4989, 32
  %v6109 = vpop.permute.xlu0 %6108
  %6110 = vrot.lane.b32.xlu0 %v4990, 32
  %v6111 = vpop.permute.xlu0 %6110
  %6112 = vrot.lane.b32.xlu0 %v4991, 32
  %v6113 = vpop.permute.xlu0 %6112
  %6114 = vrot.lane.b32.xlu0 %v4992, 32
  %v6115 = vpop.permute.xlu0 %6114
  %6148 = vrot.lane.b32.xlu0 %v4993, 64
  %v6149 = vpop.permute.xlu0 %6148
  %6150 = vrot.lane.b32.xlu0 %v4994, 64
  %v6151 = vpop.permute.xlu0 %6150
  %6152 = vrot.lane.b32.xlu0 %v4995, 64
  %v6153 = vpop.permute.xlu0 %6152
  %6154 = vrot.lane.b32.xlu0 %v4996, 64
  %v6155 = vpop.permute.xlu0 %6154
  %6156 = vrot.lane.b32.xlu0 %v4997, 64
  %v6157 = vpop.permute.xlu0 %6156
  %6158 = vrot.lane.b32.xlu0 %v4998, 64
  %v6159 = vpop.permute.xlu0 %6158
  %6160 = vrot.lane.b32.xlu0 %v4999, 64
  %v6161 = vpop.permute.xlu0 %6160
  %6162 = vrot.lane.b32.xlu0 %v5000, 64
  %v6163 = vpop.permute.xlu0 %6162
  %6164 = vrot.lane.b32.xlu0 %v5001, 64
  %v6165 = vpop.permute.xlu0 %6164
  %6166 = vrot.lane.b32.xlu0 %v5002, 64
  %v6167 = vpop.permute.xlu0 %6166
  %6168 = vrot.lane.b32.xlu0 %v5003, 64
  %v6169 = vpop.permute.xlu0 %6168
  %6170 = vrot.lane.b32.xlu0 %v5004, 64
  %v6171 = vpop.permute.xlu0 %6170
  %6172 = vrot.lane.b32.xlu0 %v5005, 64
  %v6173 = vpop.permute.xlu0 %6172
  %6174 = vrot.lane.b32.xlu0 %v5006, 64
  %v6175 = vpop.permute.xlu0 %6174
  %6176 = vrot.lane.b32.xlu0 %v5007, 64
  %v6177 = vpop.permute.xlu0 %6176
  %6178 = vrot.lane.b32.xlu0 %v5008, 64
  %v6179 = vpop.permute.xlu0 %6178
  %6212 = vrot.lane.b32.xlu0 %v5009, 96
  %v6213 = vpop.permute.xlu0 %6212
  %6214 = vrot.lane.b32.xlu0 %v5010, 96
  %v6215 = vpop.permute.xlu0 %6214
  %6216 = vrot.lane.b32.xlu0 %v5011, 96
  %v6217 = vpop.permute.xlu0 %6216
  %6218 = vrot.lane.b32.xlu0 %v5012, 96
  %v6219 = vpop.permute.xlu0 %6218
  %6220 = vrot.lane.b32.xlu0 %v5013, 96
  %v6221 = vpop.permute.xlu0 %6220
  %6222 = vrot.lane.b32.xlu0 %v5014, 96
  %v6223 = vpop.permute.xlu0 %6222
  %6224 = vrot.lane.b32.xlu0 %v5015, 96
  %v6225 = vpop.permute.xlu0 %6224
  %6226 = vrot.lane.b32.xlu0 %v5016, 96
  %v6227 = vpop.permute.xlu0 %6226
  %6228 = vrot.lane.b32.xlu0 %v5017, 96
  %v6229 = vpop.permute.xlu0 %6228
  %6230 = vrot.lane.b32.xlu0 %v5018, 96
  %v6231 = vpop.permute.xlu0 %6230
  %6232 = vrot.lane.b32.xlu0 %v5019, 96
  %v6233 = vpop.permute.xlu0 %6232
  %6234 = vrot.lane.b32.xlu0 %v5020, 96
  %v6235 = vpop.permute.xlu0 %6234
  %6236 = vrot.lane.b32.xlu0 %v5021, 96
  %v6237 = vpop.permute.xlu0 %6236
  %6238 = vrot.lane.b32.xlu0 %v5022, 96
  %v6239 = vpop.permute.xlu0 %6238
  %6240 = vrot.lane.b32.xlu0 %v5023, 96
  %v6241 = vpop.permute.xlu0 %6240
  %6242 = vrot.lane.b32.xlu0 %v5024, 96
  %v6243 = vpop.permute.xlu0 %6242
  %6276 = vrot.lane.b32.xlu0 %v5043, 32
  %v6277 = vpop.permute.xlu0 %6276
  %6278 = vrot.lane.b32.xlu0 %v5044, 32
  %v6279 = vpop.permute.xlu0 %6278
  %6280 = vrot.lane.b32.xlu0 %v5045, 32
  %v6281 = vpop.permute.xlu0 %6280
  %6282 = vrot.lane.b32.xlu0 %v5046, 32
  %v6283 = vpop.permute.xlu0 %6282
  %6284 = vrot.lane.b32.xlu0 %v5047, 32
  %v6285 = vpop.permute.xlu0 %6284
  %6286 = vrot.lane.b32.xlu0 %v5048, 32
  %v6287 = vpop.permute.xlu0 %6286
  %6288 = vrot.lane.b32.xlu0 %v5049, 32
  %v6289 = vpop.permute.xlu0 %6288
  %6290 = vrot.lane.b32.xlu0 %v5050, 32
  %v6291 = vpop.permute.xlu0 %6290
  %6292 = vrot.lane.b32.xlu0 %v5051, 32
  %v6293 = vpop.permute.xlu0 %6292
  %6294 = vrot.lane.b32.xlu0 %v5052, 32
  %v6295 = vpop.permute.xlu0 %6294
  %6296 = vrot.lane.b32.xlu0 %v5053, 32
  %v6297 = vpop.permute.xlu0 %6296
  %6298 = vrot.lane.b32.xlu0 %v5054, 32
  %v6299 = vpop.permute.xlu0 %6298
  %6300 = vrot.lane.b32.xlu0 %v5055, 32
  %v6301 = vpop.permute.xlu0 %6300
  %6302 = vrot.lane.b32.xlu0 %v5056, 32
  %v6303 = vpop.permute.xlu0 %6302
  %6304 = vrot.lane.b32.xlu0 %v5057, 32
  %v6305 = vpop.permute.xlu0 %6304
  %6306 = vrot.lane.b32.xlu0 %v5058, 32
  %v6307 = vpop.permute.xlu0 %6306
  %6340 = vrot.lane.b32.xlu0 %v5059, 64
  %v6341 = vpop.permute.xlu0 %6340
  %6342 = vrot.lane.b32.xlu0 %v5060, 64
  %v6343 = vpop.permute.xlu0 %6342
  %6344 = vrot.lane.b32.xlu0 %v5061, 64
  %v6345 = vpop.permute.xlu0 %6344
  %6346 = vrot.lane.b32.xlu0 %v5062, 64
  %v6347 = vpop.permute.xlu0 %6346
  %6348 = vrot.lane.b32.xlu0 %v5063, 64
  %v6349 = vpop.permute.xlu0 %6348
  %6350 = vrot.lane.b32.xlu0 %v5064, 64
  %v6351 = vpop.permute.xlu0 %6350
  %6352 = vrot.lane.b32.xlu0 %v5065, 64
  %v6353 = vpop.permute.xlu0 %6352
  %6354 = vrot.lane.b32.xlu0 %v5066, 64
  %v6355 = vpop.permute.xlu0 %6354
  %6356 = vrot.lane.b32.xlu0 %v5067, 64
  %v6357 = vpop.permute.xlu0 %6356
  %6358 = vrot.lane.b32.xlu0 %v5068, 64
  %v6359 = vpop.permute.xlu0 %6358
  %6360 = vrot.lane.b32.xlu0 %v5069, 64
  %v6361 = vpop.permute.xlu0 %6360
  %6362 = vrot.lane.b32.xlu0 %v5070, 64
  %v6363 = vpop.permute.xlu0 %6362
  %6364 = vrot.lane.b32.xlu0 %v5071, 64
  %v6365 = vpop.permute.xlu0 %6364
  %6366 = vrot.lane.b32.xlu0 %v5072, 64
  %v6367 = vpop.permute.xlu0 %6366
  %6368 = vrot.lane.b32.xlu0 %v5073, 64
  %v6369 = vpop.permute.xlu0 %6368
  %6370 = vrot.lane.b32.xlu0 %v5074, 64
  %v6371 = vpop.permute.xlu0 %6370
  %6404 = vrot.lane.b32.xlu0 %v5075, 96
  %v6405 = vpop.permute.xlu0 %6404
  %6406 = vrot.lane.b32.xlu0 %v5076, 96
  %v6407 = vpop.permute.xlu0 %6406
  %6408 = vrot.lane.b32.xlu0 %v5077, 96
  %v6409 = vpop.permute.xlu0 %6408
  %6410 = vrot.lane.b32.xlu0 %v5078, 96
  %v6411 = vpop.permute.xlu0 %6410
  %6412 = vrot.lane.b32.xlu0 %v5079, 96
  %v6413 = vpop.permute.xlu0 %6412
  %6414 = vrot.lane.b32.xlu0 %v5080, 96
  %v6415 = vpop.permute.xlu0 %6414
  %6416 = vrot.lane.b32.xlu0 %v5081, 96
  %v6417 = vpop.permute.xlu0 %6416
  %6418 = vrot.lane.b32.xlu0 %v5082, 96
  %v6419 = vpop.permute.xlu0 %6418
  %6420 = vrot.lane.b32.xlu0 %v5083, 96
  %v6421 = vpop.permute.xlu0 %6420
  %6422 = vrot.lane.b32.xlu0 %v5084, 96
  %v6423 = vpop.permute.xlu0 %6422
  %6424 = vrot.lane.b32.xlu0 %v5085, 96
  %v6425 = vpop.permute.xlu0 %6424
  %6426 = vrot.lane.b32.xlu0 %v5086, 96
  %v6427 = vpop.permute.xlu0 %6426
  %6428 = vrot.lane.b32.xlu0 %v5087, 96
  %v6429 = vpop.permute.xlu0 %6428
  %6430 = vrot.lane.b32.xlu0 %v5088, 96
  %v6431 = vpop.permute.xlu0 %6430
  %6432 = vrot.lane.b32.xlu0 %v5089, 96
  %v6433 = vpop.permute.xlu0 %6432
  %6434 = vrot.lane.b32.xlu0 %v5090, 96
  %v6435 = vpop.permute.xlu0 %6434
  %v6452 = vsel %vm41, %v4961, %v6085
  %v6453 = vsel %vm41, %v4962, %v6087
  %v6454 = vsel %vm41, %v4963, %v6089
  %v6455 = vsel %vm41, %v4964, %v6091
  %v6456 = vsel %vm41, %v4965, %v6093
  %v6457 = vsel %vm41, %v4966, %v6095
  %v6458 = vsel %vm41, %v4967, %v6097
  %v6459 = vsel %vm41, %v4968, %v6099
  %v6460 = vsel %vm41, %v4969, %v6101
  %v6461 = vsel %vm41, %v4970, %v6103
  %v6462 = vsel %vm41, %v4971, %v6105
  %v6463 = vsel %vm41, %v4972, %v6107
  %v6464 = vsel %vm41, %v4973, %v6109
  %v6465 = vsel %vm41, %v4974, %v6111
  %v6466 = vsel %vm41, %v4975, %v6113
  %v6467 = vsel %vm41, %v4976, %v6115
  %v6468 = vsel %vm5891, %v6452, %v6149
  %v6469 = vsel %vm5891, %v6453, %v6151
  %v6470 = vsel %vm5891, %v6454, %v6153
  %v6471 = vsel %vm5891, %v6455, %v6155
  %v6472 = vsel %vm5891, %v6456, %v6157
  %v6473 = vsel %vm5891, %v6457, %v6159
  %v6474 = vsel %vm5891, %v6458, %v6161
  %v6475 = vsel %vm5891, %v6459, %v6163
  %v6476 = vsel %vm5891, %v6460, %v6165
  %v6477 = vsel %vm5891, %v6461, %v6167
  %v6478 = vsel %vm5891, %v6462, %v6169
  %v6479 = vsel %vm5891, %v6463, %v6171
  %v6480 = vsel %vm5891, %v6464, %v6173
  %v6481 = vsel %vm5891, %v6465, %v6175
  %v6482 = vsel %vm5891, %v6466, %v6177
  %v6483 = vsel %vm5891, %v6467, %v6179
  %v6484 = vsel %vm1213, %v6468, %v6213
  %v6485 = vsel %vm1213, %v6469, %v6215
  %v6486 = vsel %vm1213, %v6470, %v6217
  %v6487 = vsel %vm1213, %v6471, %v6219
  %v6488 = vsel %vm1213, %v6472, %v6221
  %v6489 = vsel %vm1213, %v6473, %v6223
  %v6490 = vsel %vm1213, %v6474, %v6225
  %v6491 = vsel %vm1213, %v6475, %v6227
  %v6492 = vsel %vm1213, %v6476, %v6229
  %v6493 = vsel %vm1213, %v6477, %v6231
  %v6494 = vsel %vm1213, %v6478, %v6233
  %v6495 = vsel %vm1213, %v6479, %v6235
  %v6496 = vsel %vm1213, %v6480, %v6237
  %v6497 = vsel %vm1213, %v6481, %v6239
  %v6498 = vsel %vm1213, %v6482, %v6241
  %v6499 = vsel %vm1213, %v6483, %v6243
  %v6500 = vsel %vm41, %v5026, %v6277
  %v6501 = vsel %vm41, %v5027, %v6279
  %v6502 = vsel %vm41, %v5028, %v6281
  %v6503 = vsel %vm41, %v5029, %v6283
  %v6504 = vsel %vm41, %v5030, %v6285
  %v6505 = vsel %vm41, %v5031, %v6287
  %v6506 = vsel %vm41, %v5032, %v6289
  %v6507 = vsel %vm41, %v5033, %v6291
  %v6508 = vsel %vm41, %v5034, %v6293
  %v6509 = vsel %vm41, %v5035, %v6295
  %v6510 = vsel %vm41, %v5036, %v6297
  %v6511 = vsel %vm41, %v5037, %v6299
  %v6512 = vsel %vm41, %v5038, %v6301
  %v6513 = vsel %vm41, %v5039, %v6303
  %v6514 = vsel %vm41, %v5040, %v6305
  %v6515 = vsel %vm41, %v5041, %v6307
  %v6516 = vsel %vm5891, %v6500, %v6341
  %v6517 = vsel %vm5891, %v6501, %v6343
  %v6518 = vsel %vm5891, %v6502, %v6345
  %v6519 = vsel %vm5891, %v6503, %v6347
  %v6520 = vsel %vm5891, %v6504, %v6349
  %v6521 = vsel %vm5891, %v6505, %v6351
  %v6522 = vsel %vm5891, %v6506, %v6353
  %v6523 = vsel %vm5891, %v6507, %v6355
  %v6524 = vsel %vm5891, %v6508, %v6357
  %v6525 = vsel %vm5891, %v6509, %v6359
  %v6526 = vsel %vm5891, %v6510, %v6361
  %v6527 = vsel %vm5891, %v6511, %v6363
  %v6528 = vsel %vm5891, %v6512, %v6365
  %v6529 = vsel %vm5891, %v6513, %v6367
  %v6530 = vsel %vm5891, %v6514, %v6369
  %v6531 = vsel %vm5891, %v6515, %v6371
  %v6532 = vsel %vm1213, %v6516, %v6405
  %v6533 = vsel %vm1213, %v6517, %v6407
  %v6534 = vsel %vm1213, %v6518, %v6409
  %v6535 = vsel %vm1213, %v6519, %v6411
  %v6536 = vsel %vm1213, %v6520, %v6413
  %v6537 = vsel %vm1213, %v6521, %v6415
  %v6538 = vsel %vm1213, %v6522, %v6417
  %v6539 = vsel %vm1213, %v6523, %v6419
  %v6540 = vsel %vm1213, %v6524, %v6421
  %v6541 = vsel %vm1213, %v6525, %v6423
  %v6542 = vsel %vm1213, %v6526, %v6425
  %v6543 = vsel %vm1213, %v6527, %v6427
  %v6544 = vsel %vm1213, %v6528, %v6429
  %v6545 = vsel %vm1213, %v6529, %v6431
  %v6546 = vsel %vm1213, %v6530, %v6433
  %v6547 = vsel %vm1213, %v6531, %v6435
  %v6549 = vlaneseq
  %v6550 = vshrl.u32 %v6549, 7
  %v6551 = vsub.s32 0, %v6550
  %v6552 = vrot.slane %v4701, %v6551
  %v6555 = vsel %vm41, %v5091, 0
  %v6558 = vsel %vm41, %v5092, 0
  %v6561 = vsel %vm41, %v5093, 0
  %v6564 = vsel %vm41, %v5094, 0
  %v6567 = vsel %vm41, %v5095, 0
  %v6570 = vsel %vm41, %v5096, 0
  %v6573 = vsel %vm41, %v5097, 0
  %v6576 = vsel %vm41, %v5098, 0
  %v6579 = vsel %vm41, %v5099, 0
  %v6582 = vsel %vm41, %v5100, 0
  %v6585 = vsel %vm41, %v5101, 0
  %v6588 = vsel %vm41, %v5102, 0
  %v6591 = vsel %vm41, %v5103, 0
  %v6594 = vsel %vm41, %v5104, 0
  %v6597 = vsel %vm41, %v5105, 0
  %v6600 = vsel %vm41, %v5106, 0
  %6602 = vmatprep.subr.mxu0 0.0
  %6603 = vmatpush1.msra.mxu0 %v4616
  %6604 = vmatprep.subr.mxu0 0.0
  %6605 = vmatpush1.msra.mxu0 %v4615
  %6606 = vmatprep.subr.mxu0 0.0
  %6607 = vmatpush1.msra.mxu0 %v4614
  %6608 = vmatprep.subr.mxu0 0.0
  %6609 = vmatpush1.msra.mxu0 %v4613
  %6610 = vmatprep.subr.mxu0 0.0
  %6611 = vmatpush1.msra.mxu0 %v4612
  %6612 = vmatprep.subr.mxu0 0.0
  %6613 = vmatpush1.msra.mxu0 %v4611
  %6614 = vmatprep.subr.mxu0 0.0
  %6615 = vmatpush1.msra.mxu0 %v4610
  %6616 = vmatprep.subr.mxu0 0.0
  %6617 = vmatpush1.msra.mxu0 %v4609
  %6618 = vmatprep.subr.mxu0 0.0
  %6619 = vmatpush1.msra.mxu0 %v4608
  %6620 = vmatprep.subr.mxu0 0.0
  %6621 = vmatpush1.msra.mxu0 %v4607
  %6622 = vmatprep.subr.mxu0 0.0
  %6623 = vmatpush1.msra.mxu0 %v4606
  %6624 = vmatprep.subr.mxu0 0.0
  %6625 = vmatpush1.msra.mxu0 %v4605
  %6626 = vmatprep.subr.mxu0 0.0
  %6627 = vmatpush1.msra.mxu0 %v4604
  %6628 = vmatprep.subr.mxu0 0.0
  %6629 = vmatpush1.msra.mxu0 %v4603
  %6630 = vmatprep.subr.mxu0 0.0
  %6631 = vmatpush1.msra.mxu0 %v4602
  %6632 = vmatprep.subr.mxu0 0.0
  %6633 = vmatpush1.msra.mxu0 %v4601
  %6634 = vmatprep.subr.mxu0 0.0
  %6635 = vmatpush2.msra.mxu0 %v4632
  %6636 = vmatprep.subr.mxu0 0.0
  %6637 = vmatpush2.msra.mxu0 %v4631
  %6638 = vmatprep.subr.mxu0 0.0
  %6639 = vmatpush2.msra.mxu0 %v4630
  %6640 = vmatprep.subr.mxu0 0.0
  %6641 = vmatpush2.msra.mxu0 %v4629
  %6642 = vmatprep.subr.mxu0 0.0
  %6643 = vmatpush2.msra.mxu0 %v4628
  %6644 = vmatprep.subr.mxu0 0.0
  %6645 = vmatpush2.msra.mxu0 %v4627
  %6646 = vmatprep.subr.mxu0 0.0
  %6647 = vmatpush2.msra.mxu0 %v4626
  %6648 = vmatprep.subr.mxu0 0.0
  %6649 = vmatpush2.msra.mxu0 %v4625
  %6650 = vmatprep.subr.mxu0 0.0
  %6651 = vmatpush2.msra.mxu0 %v4624
  %6652 = vmatprep.subr.mxu0 0.0
  %6653 = vmatpush2.msra.mxu0 %v4623
  %6654 = vmatprep.subr.mxu0 0.0
  %6655 = vmatpush2.msra.mxu0 %v4622
  %6656 = vmatprep.subr.mxu0 0.0
  %6657 = vmatpush2.msra.mxu0 %v4621
  %6658 = vmatprep.subr.mxu0 0.0
  %6659 = vmatpush2.msra.mxu0 %v4620
  %6660 = vmatprep.subr.mxu0 0.0
  %6661 = vmatpush2.msra.mxu0 %v4619
  %6662 = vmatprep.subr.mxu0 0.0
  %6663 = vmatpush2.msra.mxu0 %v4618
  %6664 = vmatprep.subr.mxu0 0.0
  %6665 = vmatpush2.msra.mxu0 %v4617
  %6666 = vmatprep.mubr.f32.mxu0 %v5956
  %6667 = vmatmul.mubr.f32.gmra.mxu0 %v5908
  %v6668 = vpop.f32.mrf.mxu0
  %v6669 = vadd.f32 %v6552, %v6668
  %v6670 = vpop.f32.mrf.mxu0
  %6671 = vmatprep.mubr.f32.mxu0 %v5957
  %6672 = vmatmul.mubr.f32.gmra.mxu0 %v5909
  %v6673 = vpop.f32.mrf.mxu0
  %v6674 = vadd.f32 %v6552, %v6673
  %v6675 = vpop.f32.mrf.mxu0
  %6676 = vmatprep.mubr.f32.mxu0 %v5958
  %6677 = vmatmul.mubr.f32.gmra.mxu0 %v5910
  %v6678 = vpop.f32.mrf.mxu0
  %v6679 = vadd.f32 %v6552, %v6678
  %v6680 = vpop.f32.mrf.mxu0
  %6681 = vmatprep.mubr.f32.mxu0 %v5959
  %6682 = vmatmul.mubr.f32.gmra.mxu0 %v5911
  %v6683 = vpop.f32.mrf.mxu0
  %v6684 = vadd.f32 %v6552, %v6683
  %v6685 = vpop.f32.mrf.mxu0
  %6686 = vmatprep.mubr.f32.mxu0 %v5960
  %6687 = vmatmul.mubr.f32.gmra.mxu0 %v5912
  %v6688 = vpop.f32.mrf.mxu0
  %v6689 = vadd.f32 %v6552, %v6688
  %v6690 = vpop.f32.mrf.mxu0
  %6691 = vmatprep.mubr.f32.mxu0 %v5961
  %6692 = vmatmul.mubr.f32.gmra.mxu0 %v5913
  %v6693 = vpop.f32.mrf.mxu0
  %v6694 = vadd.f32 %v6552, %v6693
  %v6695 = vpop.f32.mrf.mxu0
  %6696 = vmatprep.mubr.f32.mxu0 %v5962
  %6697 = vmatmul.mubr.f32.gmra.mxu0 %v5914
  %v6698 = vpop.f32.mrf.mxu0
  %v6699 = vadd.f32 %v6552, %v6698
  %v6700 = vpop.f32.mrf.mxu0
  %6701 = vmatprep.mubr.f32.mxu0 %v5963
  %6702 = vmatmul.mubr.f32.gmra.mxu0 %v5915
  %v6703 = vpop.f32.mrf.mxu0
  %v6704 = vadd.f32 %v6552, %v6703
  %v6705 = vpop.f32.mrf.mxu0
  %6706 = vmatprep.mubr.f32.mxu0 %v5964
  %6707 = vmatmul.mubr.f32.gmra.mxu0 %v5916
  %v6708 = vpop.f32.mrf.mxu0
  %v6709 = vadd.f32 %v6552, %v6708
  %v6710 = vpop.f32.mrf.mxu0
  %6711 = vmatprep.mubr.f32.mxu0 %v5965
  %6712 = vmatmul.mubr.f32.gmra.mxu0 %v5917
  %v6713 = vpop.f32.mrf.mxu0
  %v6714 = vadd.f32 %v6552, %v6713
  %v6715 = vpop.f32.mrf.mxu0
  %6716 = vmatprep.mubr.f32.mxu0 %v5966
  %6717 = vmatmul.mubr.f32.gmra.mxu0 %v5918
  %v6718 = vpop.f32.mrf.mxu0
  %v6719 = vadd.f32 %v6552, %v6718
  %v6720 = vpop.f32.mrf.mxu0
  %6721 = vmatprep.mubr.f32.mxu0 %v5967
  %6722 = vmatmul.mubr.f32.gmra.mxu0 %v5919
  %v6723 = vpop.f32.mrf.mxu0
  %v6724 = vadd.f32 %v6552, %v6723
  %v6725 = vpop.f32.mrf.mxu0
  %6726 = vmatprep.mubr.f32.mxu0 %v5968
  %6727 = vmatmul.mubr.f32.gmra.mxu0 %v5920
  %v6728 = vpop.f32.mrf.mxu0
  %v6729 = vadd.f32 %v6552, %v6728
  %v6730 = vpop.f32.mrf.mxu0
  %6731 = vmatprep.mubr.f32.mxu0 %v5969
  %6732 = vmatmul.mubr.f32.gmra.mxu0 %v5921
  %v6733 = vpop.f32.mrf.mxu0
  %v6734 = vadd.f32 %v6552, %v6733
  %v6735 = vpop.f32.mrf.mxu0
  %6736 = vmatprep.mubr.f32.mxu0 %v5970
  %6737 = vmatmul.mubr.f32.gmra.mxu0 %v5922
  %v6738 = vpop.f32.mrf.mxu0
  %v6739 = vadd.f32 %v6552, %v6738
  %v6740 = vpop.f32.mrf.mxu0
  %6741 = vmatprep.mubr.f32.mxu0 %v5971
  %6742 = vmatmul.mubr.f32.gmra.mxu0 %v5923
  %v6743 = vpop.f32.mrf.mxu0
  %v6744 = vadd.f32 %v6552, %v6743
  %v6745 = vpop.f32.mrf.mxu0
  %6746 = vdwg.mxu0
  %6747 = vmatprep.subr.mxu0 0.0
  %6748 = vmatpush1.msra.mxu0 %v4648
  %6749 = vmatprep.subr.mxu0 0.0
  %6750 = vmatpush1.msra.mxu0 %v4647
  %6751 = vmatprep.subr.mxu0 0.0
  %6752 = vmatpush1.msra.mxu0 %v4646
  %6753 = vmatprep.subr.mxu0 0.0
  %6754 = vmatpush1.msra.mxu0 %v4645
  %6755 = vmatprep.subr.mxu0 0.0
  %6756 = vmatpush1.msra.mxu0 %v4644
  %6757 = vmatprep.subr.mxu0 0.0
  %6758 = vmatpush1.msra.mxu0 %v4643
  %6759 = vmatprep.subr.mxu0 0.0
  %6760 = vmatpush1.msra.mxu0 %v4642
  %6761 = vmatprep.subr.mxu0 0.0
  %6762 = vmatpush1.msra.mxu0 %v4641
  %6763 = vmatprep.subr.mxu0 0.0
  %6764 = vmatpush1.msra.mxu0 %v4640
  %6765 = vmatprep.subr.mxu0 0.0
  %6766 = vmatpush1.msra.mxu0 %v4639
  %6767 = vmatprep.subr.mxu0 0.0
  %6768 = vmatpush1.msra.mxu0 %v4638
  %6769 = vmatprep.subr.mxu0 0.0
  %6770 = vmatpush1.msra.mxu0 %v4637
  %6771 = vmatprep.subr.mxu0 0.0
  %6772 = vmatpush1.msra.mxu0 %v4636
  %6773 = vmatprep.subr.mxu0 0.0
  %6774 = vmatpush1.msra.mxu0 %v4635
  %6775 = vmatprep.subr.mxu0 0.0
  %6776 = vmatpush1.msra.mxu0 %v4634
  %6777 = vmatprep.subr.mxu0 0.0
  %6778 = vmatpush1.msra.mxu0 %v4633
  %6779 = vmatprep.subr.mxu0 0.0
  %6780 = vmatpush2.msra.mxu0 %v4664
  %6781 = vmatprep.subr.mxu0 0.0
  %6782 = vmatpush2.msra.mxu0 %v4663
  %6783 = vmatprep.subr.mxu0 0.0
  %6784 = vmatpush2.msra.mxu0 %v4662
  %6785 = vmatprep.subr.mxu0 0.0
  %6786 = vmatpush2.msra.mxu0 %v4661
  %6787 = vmatprep.subr.mxu0 0.0
  %6788 = vmatpush2.msra.mxu0 %v4660
  %6789 = vmatprep.subr.mxu0 0.0
  %6790 = vmatpush2.msra.mxu0 %v4659
  %6791 = vmatprep.subr.mxu0 0.0
  %6792 = vmatpush2.msra.mxu0 %v4658
  %6793 = vmatprep.subr.mxu0 0.0
  %6794 = vmatpush2.msra.mxu0 %v4657
  %6795 = vmatprep.subr.mxu0 0.0
  %6796 = vmatpush2.msra.mxu0 %v4656
  %6797 = vmatprep.subr.mxu0 0.0
  %6798 = vmatpush2.msra.mxu0 %v4655
  %6799 = vmatprep.subr.mxu0 0.0
  %6800 = vmatpush2.msra.mxu0 %v4654
  %6801 = vmatprep.subr.mxu0 0.0
  %6802 = vmatpush2.msra.mxu0 %v4653
  %6803 = vmatprep.subr.mxu0 0.0
  %6804 = vmatpush2.msra.mxu0 %v4652
  %6805 = vmatprep.subr.mxu0 0.0
  %6806 = vmatpush2.msra.mxu0 %v4651
  %6807 = vmatprep.subr.mxu0 0.0
  %6808 = vmatpush2.msra.mxu0 %v4650
  %6809 = vmatprep.subr.mxu0 0.0
  %6810 = vmatpush2.msra.mxu0 %v4649
  %6811 = vmatprep.mubr.f32.mxu0 %v6052
  %6812 = vmatmul.mubr.f32.gmra.mxu0 %v6004
  %v6813 = vpop.f32.mrf.mxu0
  %v6814 = vadd.f32 %v6669, %v6813
  %v6815 = vpop.f32.mrf.mxu0
  %6816 = vmatprep.mubr.f32.mxu0 %v6053
  %6817 = vmatmul.mubr.f32.gmra.mxu0 %v6005
  %v6818 = vpop.f32.mrf.mxu0
  %v6819 = vadd.f32 %v6674, %v6818
  %v6820 = vpop.f32.mrf.mxu0
  %6821 = vmatprep.mubr.f32.mxu0 %v6054
  %6822 = vmatmul.mubr.f32.gmra.mxu0 %v6006
  %v6823 = vpop.f32.mrf.mxu0
  %v6824 = vadd.f32 %v6679, %v6823
  %v6825 = vpop.f32.mrf.mxu0
  %6826 = vmatprep.mubr.f32.mxu0 %v6055
  %6827 = vmatmul.mubr.f32.gmra.mxu0 %v6007
  %v6828 = vpop.f32.mrf.mxu0
  %v6829 = vadd.f32 %v6684, %v6828
  %v6830 = vpop.f32.mrf.mxu0
  %6831 = vmatprep.mubr.f32.mxu0 %v6056
  %6832 = vmatmul.mubr.f32.gmra.mxu0 %v6008
  %v6833 = vpop.f32.mrf.mxu0
  %v6834 = vadd.f32 %v6689, %v6833
  %v6835 = vpop.f32.mrf.mxu0
  %6836 = vmatprep.mubr.f32.mxu0 %v6057
  %6837 = vmatmul.mubr.f32.gmra.mxu0 %v6009
  %v6838 = vpop.f32.mrf.mxu0
  %v6839 = vadd.f32 %v6694, %v6838
  %v6840 = vpop.f32.mrf.mxu0
  %6841 = vmatprep.mubr.f32.mxu0 %v6058
  %6842 = vmatmul.mubr.f32.gmra.mxu0 %v6010
  %v6843 = vpop.f32.mrf.mxu0
  %v6844 = vadd.f32 %v6699, %v6843
  %v6845 = vpop.f32.mrf.mxu0
  %6846 = vmatprep.mubr.f32.mxu0 %v6059
  %6847 = vmatmul.mubr.f32.gmra.mxu0 %v6011
  %v6848 = vpop.f32.mrf.mxu0
  %v6849 = vadd.f32 %v6704, %v6848
  %v6850 = vpop.f32.mrf.mxu0
  %6851 = vmatprep.mubr.f32.mxu0 %v6060
  %6852 = vmatmul.mubr.f32.gmra.mxu0 %v6012
  %v6853 = vpop.f32.mrf.mxu0
  %v6854 = vadd.f32 %v6709, %v6853
  %v6855 = vpop.f32.mrf.mxu0
  %6856 = vmatprep.mubr.f32.mxu0 %v6061
  %6857 = vmatmul.mubr.f32.gmra.mxu0 %v6013
  %v6858 = vpop.f32.mrf.mxu0
  %v6859 = vadd.f32 %v6714, %v6858
  %v6860 = vpop.f32.mrf.mxu0
  %6861 = vmatprep.mubr.f32.mxu0 %v6062
  %6862 = vmatmul.mubr.f32.gmra.mxu0 %v6014
  %v6863 = vpop.f32.mrf.mxu0
  %v6864 = vadd.f32 %v6719, %v6863
  %v6865 = vpop.f32.mrf.mxu0
  %6866 = vmatprep.mubr.f32.mxu0 %v6063
  %6867 = vmatmul.mubr.f32.gmra.mxu0 %v6015
  %v6868 = vpop.f32.mrf.mxu0
  %v6869 = vadd.f32 %v6724, %v6868
  %v6870 = vpop.f32.mrf.mxu0
  %6871 = vmatprep.mubr.f32.mxu0 %v6064
  %6872 = vmatmul.mubr.f32.gmra.mxu0 %v6016
  %v6873 = vpop.f32.mrf.mxu0
  %v6874 = vadd.f32 %v6729, %v6873
  %v6875 = vpop.f32.mrf.mxu0
  %6876 = vmatprep.mubr.f32.mxu0 %v6065
  %6877 = vmatmul.mubr.f32.gmra.mxu0 %v6017
  %v6878 = vpop.f32.mrf.mxu0
  %v6879 = vadd.f32 %v6734, %v6878
  %v6880 = vpop.f32.mrf.mxu0
  %6881 = vmatprep.mubr.f32.mxu0 %v6066
  %6882 = vmatmul.mubr.f32.gmra.mxu0 %v6018
  %v6883 = vpop.f32.mrf.mxu0
  %v6884 = vadd.f32 %v6739, %v6883
  %v6885 = vpop.f32.mrf.mxu0
  %6886 = vmatprep.mubr.f32.mxu0 %v6067
  %6887 = vmatmul.mubr.f32.gmra.mxu0 %v6019
  %v6888 = vpop.f32.mrf.mxu0
  %v6889 = vadd.f32 %v6744, %v6888
  %v6890 = vpop.f32.mrf.mxu0
  %6891 = vdwg.mxu0
  %6892 = vmatprep.subr.mxu0 0.0
  %6893 = vmatpush1.msra.mxu0 %v4680
  %6894 = vmatprep.subr.mxu0 0.0
  %6895 = vmatpush1.msra.mxu0 %v4679
  %6896 = vmatprep.subr.mxu0 0.0
  %6897 = vmatpush1.msra.mxu0 %v4678
  %6898 = vmatprep.subr.mxu0 0.0
  %6899 = vmatpush1.msra.mxu0 %v4677
  %6900 = vmatprep.subr.mxu0 0.0
  %6901 = vmatpush1.msra.mxu0 %v4676
  %6902 = vmatprep.subr.mxu0 0.0
  %6903 = vmatpush1.msra.mxu0 %v4675
  %6904 = vmatprep.subr.mxu0 0.0
  %6905 = vmatpush1.msra.mxu0 %v4674
  %6906 = vmatprep.subr.mxu0 0.0
  %6907 = vmatpush1.msra.mxu0 %v4673
  %6908 = vmatprep.subr.mxu0 0.0
  %6909 = vmatpush1.msra.mxu0 %v4672
  %6910 = vmatprep.subr.mxu0 0.0
  %6911 = vmatpush1.msra.mxu0 %v4671
  %6912 = vmatprep.subr.mxu0 0.0
  %6913 = vmatpush1.msra.mxu0 %v4670
  %6914 = vmatprep.subr.mxu0 0.0
  %6915 = vmatpush1.msra.mxu0 %v4669
  %6916 = vmatprep.subr.mxu0 0.0
  %6917 = vmatpush1.msra.mxu0 %v4668
  %6918 = vmatprep.subr.mxu0 0.0
  %6919 = vmatpush1.msra.mxu0 %v4667
  %6920 = vmatprep.subr.mxu0 0.0
  %6921 = vmatpush1.msra.mxu0 %v4666
  %6922 = vmatprep.subr.mxu0 0.0
  %6923 = vmatpush1.msra.mxu0 %v4665
  %6924 = vmatprep.subr.mxu0 0.0
  %6925 = vmatpush2.msra.mxu0 %v4696
  %6926 = vmatprep.subr.mxu0 0.0
  %6927 = vmatpush2.msra.mxu0 %v4695
  %6928 = vmatprep.subr.mxu0 0.0
  %6929 = vmatpush2.msra.mxu0 %v4694
  %6930 = vmatprep.subr.mxu0 0.0
  %6931 = vmatpush2.msra.mxu0 %v4693
  %6932 = vmatprep.subr.mxu0 0.0
  %6933 = vmatpush2.msra.mxu0 %v4692
  %6934 = vmatprep.subr.mxu0 0.0
  %6935 = vmatpush2.msra.mxu0 %v4691
  %6936 = vmatprep.subr.mxu0 0.0
  %6937 = vmatpush2.msra.mxu0 %v4690
  %6938 = vmatprep.subr.mxu0 0.0
  %6939 = vmatpush2.msra.mxu0 %v4689
  %6940 = vmatprep.subr.mxu0 0.0
  %6941 = vmatpush2.msra.mxu0 %v4688
  %6942 = vmatprep.subr.mxu0 0.0
  %6943 = vmatpush2.msra.mxu0 %v4687
  %6944 = vmatprep.subr.mxu0 0.0
  %6945 = vmatpush2.msra.mxu0 %v4686
  %6946 = vmatprep.subr.mxu0 0.0
  %6947 = vmatpush2.msra.mxu0 %v4685
  %6948 = vmatprep.subr.mxu0 0.0
  %6949 = vmatpush2.msra.mxu0 %v4684
  %6950 = vmatprep.subr.mxu0 0.0
  %6951 = vmatpush2.msra.mxu0 %v4683
  %6952 = vmatprep.subr.mxu0 0.0
  %6953 = vmatpush2.msra.mxu0 %v4682
  %6954 = vmatprep.subr.mxu0 0.0
  %6955 = vmatpush2.msra.mxu0 %v4681
  %6956 = vmatprep.mubr.f32.mxu0 %v6532
  %6957 = vmatmul.mubr.f32.gmra.mxu0 %v6484
  %v6958 = vpop.f32.mrf.mxu0
  %v6959 = vadd.f32 %v6814, %v6958
  %v6960 = vpop.f32.mrf.mxu0
  %6961 = vmatprep.mubr.f32.mxu0 %v6533
  %6962 = vmatmul.mubr.f32.gmra.mxu0 %v6485
  %v6963 = vpop.f32.mrf.mxu0
  %v6964 = vadd.f32 %v6819, %v6963
  %v6965 = vpop.f32.mrf.mxu0
  %6966 = vmatprep.mubr.f32.mxu0 %v6534
  %6967 = vmatmul.mubr.f32.gmra.mxu0 %v6486
  %v6968 = vpop.f32.mrf.mxu0
  %v6969 = vadd.f32 %v6824, %v6968
  %v6970 = vpop.f32.mrf.mxu0
  %6971 = vmatprep.mubr.f32.mxu0 %v6535
  %6972 = vmatmul.mubr.f32.gmra.mxu0 %v6487
  %v6973 = vpop.f32.mrf.mxu0
  %v6974 = vadd.f32 %v6829, %v6973
  %v6975 = vpop.f32.mrf.mxu0
  %6976 = vmatprep.mubr.f32.mxu0 %v6536
  %6977 = vmatmul.mubr.f32.gmra.mxu0 %v6488
  %v6978 = vpop.f32.mrf.mxu0
  %v6979 = vadd.f32 %v6834, %v6978
  %v6980 = vpop.f32.mrf.mxu0
  %6981 = vmatprep.mubr.f32.mxu0 %v6537
  %6982 = vmatmul.mubr.f32.gmra.mxu0 %v6489
  %v6983 = vpop.f32.mrf.mxu0
  %v6984 = vadd.f32 %v6839, %v6983
  %v6985 = vpop.f32.mrf.mxu0
  %6986 = vmatprep.mubr.f32.mxu0 %v6538
  %6987 = vmatmul.mubr.f32.gmra.mxu0 %v6490
  %v6988 = vpop.f32.mrf.mxu0
  %v6989 = vadd.f32 %v6844, %v6988
  %v6990 = vpop.f32.mrf.mxu0
  %6991 = vmatprep.mubr.f32.mxu0 %v6539
  %6992 = vmatmul.mubr.f32.gmra.mxu0 %v6491
  %v6993 = vpop.f32.mrf.mxu0
  %v6994 = vadd.f32 %v6849, %v6993
  %v6995 = vpop.f32.mrf.mxu0
  %6996 = vmatprep.mubr.f32.mxu0 %v6540
  %6997 = vmatmul.mubr.f32.gmra.mxu0 %v6492
  %v6998 = vpop.f32.mrf.mxu0
  %v6999 = vadd.f32 %v6854, %v6998
  %v7000 = vpop.f32.mrf.mxu0
  %7001 = vmatprep.mubr.f32.mxu0 %v6541
  %7002 = vmatmul.mubr.f32.gmra.mxu0 %v6493
  %v7003 = vpop.f32.mrf.mxu0
  %v7004 = vadd.f32 %v6859, %v7003
  %v7005 = vpop.f32.mrf.mxu0
  %7006 = vmatprep.mubr.f32.mxu0 %v6542
  %7007 = vmatmul.mubr.f32.gmra.mxu0 %v6494
  %v7008 = vpop.f32.mrf.mxu0
  %v7009 = vadd.f32 %v6864, %v7008
  %v7010 = vpop.f32.mrf.mxu0
  %7011 = vmatprep.mubr.f32.mxu0 %v6543
  %7012 = vmatmul.mubr.f32.gmra.mxu0 %v6495
  %v7013 = vpop.f32.mrf.mxu0
  %v7014 = vadd.f32 %v6869, %v7013
  %v7015 = vpop.f32.mrf.mxu0
  %7016 = vmatprep.mubr.f32.mxu0 %v6544
  %7017 = vmatmul.mubr.f32.gmra.mxu0 %v6496
  %v7018 = vpop.f32.mrf.mxu0
  %v7019 = vadd.f32 %v6874, %v7018
  %v7020 = vpop.f32.mrf.mxu0
  %7021 = vmatprep.mubr.f32.mxu0 %v6545
  %7022 = vmatmul.mubr.f32.gmra.mxu0 %v6497
  %v7023 = vpop.f32.mrf.mxu0
  %v7024 = vadd.f32 %v6879, %v7023
  %v7025 = vpop.f32.mrf.mxu0
  %7026 = vmatprep.mubr.f32.mxu0 %v6546
  %7027 = vmatmul.mubr.f32.gmra.mxu0 %v6498
  %v7028 = vpop.f32.mrf.mxu0
  %v7029 = vadd.f32 %v6884, %v7028
  %v7030 = vpop.f32.mrf.mxu0
  %7031 = vmatprep.mubr.f32.mxu0 %v6547
  %7032 = vmatmul.mubr.f32.gmra.mxu0 %v6499
  %v7033 = vpop.f32.mrf.mxu0
  %v7034 = vadd.f32 %v6889, %v7033
  %v7035 = vpop.f32.mrf.mxu0
  %7036 = vdwg.mxu0
  %7037 = vmatprep.subr.mxu0 0.0
  %7038 = vmatpush1.msra.mxu0 0.0
  %7039 = vmatprep.subr.mxu0 0.0
  %7040 = vmatpush1.msra.mxu0 0.0
  %7041 = vmatprep.subr.mxu0 0.0
  %7042 = vmatpush1.msra.mxu0 0.0
  %7043 = vmatprep.subr.mxu0 0.0
  %7044 = vmatpush1.msra.mxu0 0.0
  %7045 = vmatprep.subr.mxu0 0.0
  %7046 = vmatpush1.msra.mxu0 0.0
  %7047 = vmatprep.subr.mxu0 0.0
  %7048 = vmatpush1.msra.mxu0 0.0
  %7049 = vmatprep.subr.mxu0 0.0
  %7050 = vmatpush1.msra.mxu0 0.0
  %7051 = vmatprep.subr.mxu0 0.0
  %7052 = vmatpush1.msra.mxu0 0.0
  %7053 = vmatprep.subr.mxu0 0.0
  %7054 = vmatpush1.msra.mxu0 0.0
  %7055 = vmatprep.subr.mxu0 0.0
  %7056 = vmatpush1.msra.mxu0 0.0
  %7057 = vmatprep.subr.mxu0 0.0
  %7058 = vmatpush1.msra.mxu0 0.0
  %7059 = vmatprep.subr.mxu0 0.0
  %7060 = vmatpush1.msra.mxu0 0.0
  %7061 = vmatprep.subr.mxu0 0.0
  %7062 = vmatpush1.msra.mxu0 %v4700
  %7063 = vmatprep.subr.mxu0 0.0
  %7064 = vmatpush1.msra.mxu0 %v4699
  %7065 = vmatprep.subr.mxu0 0.0
  %7066 = vmatpush1.msra.mxu0 %v4698
  %7067 = vmatprep.subr.mxu0 0.0
  %7068 = vmatpush1.msra.mxu0 %v4697
  %7069 = vmatprep.subr.mxu0 0.0
  %7070 = vmatpush2.msra.mxu0 0.0
  %7071 = vmatprep.subr.mxu0 0.0
  %7072 = vmatpush2.msra.mxu0 0.0
  %7073 = vmatprep.subr.mxu0 0.0
  %7074 = vmatpush2.msra.mxu0 0.0
  %7075 = vmatprep.subr.mxu0 0.0
  %7076 = vmatpush2.msra.mxu0 0.0
  %7077 = vmatprep.subr.mxu0 0.0
  %7078 = vmatpush2.msra.mxu0 0.0
  %7079 = vmatprep.subr.mxu0 0.0
  %7080 = vmatpush2.msra.mxu0 0.0
  %7081 = vmatprep.subr.mxu0 0.0
  %7082 = vmatpush2.msra.mxu0 0.0
  %7083 = vmatprep.subr.mxu0 0.0
  %7084 = vmatpush2.msra.mxu0 0.0
  %7085 = vmatprep.subr.mxu0 0.0
  %7086 = vmatpush2.msra.mxu0 0.0
  %7087 = vmatprep.subr.mxu0 0.0
  %7088 = vmatpush2.msra.mxu0 0.0
  %7089 = vmatprep.subr.mxu0 0.0
  %7090 = vmatpush2.msra.mxu0 0.0
  %7091 = vmatprep.subr.mxu0 0.0
  %7092 = vmatpush2.msra.mxu0 0.0
  %7093 = vmatprep.subr.mxu0 0.0
  %7094 = vmatpush2.msra.mxu0 0.0
  %7095 = vmatprep.subr.mxu0 0.0
  %7096 = vmatpush2.msra.mxu0 0.0
  %7097 = vmatprep.subr.mxu0 0.0
  %7098 = vmatpush2.msra.mxu0 0.0
  %7099 = vmatprep.subr.mxu0 0.0
  %7100 = vmatpush2.msra.mxu0 0.0
  %7101 = vmatprep.mubr.f32.mxu0 0.0
  %7102 = vmatmul.mubr.f32.gmra.mxu0 %v6555
  %v7103 = vpop.f32.mrf.mxu0
  %v7104 = vadd.f32 %v6959, %v7103
  %v7105 = vpop.f32.mrf.mxu0
  %7106 = vmatprep.mubr.f32.mxu0 0.0
  %7107 = vmatmul.mubr.f32.gmra.mxu0 %v6558
  %v7108 = vpop.f32.mrf.mxu0
  %v7109 = vadd.f32 %v6964, %v7108
  %v7110 = vpop.f32.mrf.mxu0
  %7111 = vmatprep.mubr.f32.mxu0 0.0
  %7112 = vmatmul.mubr.f32.gmra.mxu0 %v6561
  %v7113 = vpop.f32.mrf.mxu0
  %v7114 = vadd.f32 %v6969, %v7113
  %v7115 = vpop.f32.mrf.mxu0
  %7116 = vmatprep.mubr.f32.mxu0 0.0
  %7117 = vmatmul.mubr.f32.gmra.mxu0 %v6564
  %v7118 = vpop.f32.mrf.mxu0
  %v7119 = vadd.f32 %v6974, %v7118
  %v7120 = vpop.f32.mrf.mxu0
  %7121 = vmatprep.mubr.f32.mxu0 0.0
  %7122 = vmatmul.mubr.f32.gmra.mxu0 %v6567
  %v7123 = vpop.f32.mrf.mxu0
  %v7124 = vadd.f32 %v6979, %v7123
  %v7125 = vpop.f32.mrf.mxu0
  %7126 = vmatprep.mubr.f32.mxu0 0.0
  %7127 = vmatmul.mubr.f32.gmra.mxu0 %v6570
  %v7128 = vpop.f32.mrf.mxu0
  %v7129 = vadd.f32 %v6984, %v7128
  %v7130 = vpop.f32.mrf.mxu0
  %7131 = vmatprep.mubr.f32.mxu0 0.0
  %7132 = vmatmul.mubr.f32.gmra.mxu0 %v6573
  %v7133 = vpop.f32.mrf.mxu0
  %v7134 = vadd.f32 %v6989, %v7133
  %v7135 = vpop.f32.mrf.mxu0
  %7136 = vmatprep.mubr.f32.mxu0 0.0
  %7137 = vmatmul.mubr.f32.gmra.mxu0 %v6576
  %v7138 = vpop.f32.mrf.mxu0
  %v7139 = vadd.f32 %v6994, %v7138
  %v7140 = vpop.f32.mrf.mxu0
  %7141 = vmatprep.mubr.f32.mxu0 0.0
  %7142 = vmatmul.mubr.f32.gmra.mxu0 %v6579
  %v7143 = vpop.f32.mrf.mxu0
  %v7144 = vadd.f32 %v6999, %v7143
  %v7145 = vpop.f32.mrf.mxu0
  %7146 = vmatprep.mubr.f32.mxu0 0.0
  %7147 = vmatmul.mubr.f32.gmra.mxu0 %v6582
  %v7148 = vpop.f32.mrf.mxu0
  %v7149 = vadd.f32 %v7004, %v7148
  %v7150 = vpop.f32.mrf.mxu0
  %7151 = vmatprep.mubr.f32.mxu0 0.0
  %7152 = vmatmul.mubr.f32.gmra.mxu0 %v6585
  %v7153 = vpop.f32.mrf.mxu0
  %v7154 = vadd.f32 %v7009, %v7153
  %v7155 = vpop.f32.mrf.mxu0
  %7156 = vmatprep.mubr.f32.mxu0 0.0
  %7157 = vmatmul.mubr.f32.gmra.mxu0 %v6588
  %v7158 = vpop.f32.mrf.mxu0
  %v7159 = vadd.f32 %v7014, %v7158
  %v7160 = vpop.f32.mrf.mxu0
  %7161 = vmatprep.mubr.f32.mxu0 0.0
  %7162 = vmatmul.mubr.f32.gmra.mxu0 %v6591
  %v7163 = vpop.f32.mrf.mxu0
  %v7164 = vadd.f32 %v7019, %v7163
  %v7165 = vpop.f32.mrf.mxu0
  %7166 = vmatprep.mubr.f32.mxu0 0.0
  %7167 = vmatmul.mubr.f32.gmra.mxu0 %v6594
  %v7168 = vpop.f32.mrf.mxu0
  %v7169 = vadd.f32 %v7024, %v7168
  %v7170 = vpop.f32.mrf.mxu0
  %7171 = vmatprep.mubr.f32.mxu0 0.0
  %7172 = vmatmul.mubr.f32.gmra.mxu0 %v6597
  %v7173 = vpop.f32.mrf.mxu0
  %v7174 = vadd.f32 %v7029, %v7173
  %v7175 = vpop.f32.mrf.mxu0
  %7176 = vmatprep.mubr.f32.mxu0 0.0
  %7177 = vmatmul.mubr.f32.gmra.mxu0 %v6600
  %v7178 = vpop.f32.mrf.mxu0
  %v7179 = vadd.f32 %v7034, %v7178
  %v7180 = vpop.f32.mrf.mxu0
  %7181 = vdwg.mxu0
  %v7182 = vmax.f32 %v7104, 0.0
  %v7183 = vmax.f32 %v7109, 0.0
  %v7184 = vmax.f32 %v7114, 0.0
  %v7185 = vmax.f32 %v7119, 0.0
  %v7186 = vmax.f32 %v7124, 0.0
  %v7187 = vmax.f32 %v7129, 0.0
  %v7188 = vmax.f32 %v7134, 0.0
  %v7189 = vmax.f32 %v7139, 0.0
  %v7190 = vmax.f32 %v7144, 0.0
  %v7191 = vmax.f32 %v7149, 0.0
  %v7192 = vmax.f32 %v7154, 0.0
  %v7193 = vmax.f32 %v7159, 0.0
  %v7194 = vmax.f32 %v7164, 0.0
  %v7195 = vmax.f32 %v7169, 0.0
  %v7196 = vmax.f32 %v7174, 0.0
  %v7197 = vmax.f32 %v7179, 0.0
  %v7199 = vrot.slane %v7182, 1
  %7200 = vrot.lane.b32.xlu0 %v7199, 16
  %v7201 = vpop.permute.xlu0 %7200
  %v7203 = vrot.slane %v7182, 2
  %7204 = vrot.lane.b32.xlu0 %v7203, 32
  %v7205 = vpop.permute.xlu0 %7204
  %v7207 = vrot.slane %v7182, 3
  %7208 = vrot.lane.b32.xlu0 %v7207, 48
  %v7209 = vpop.permute.xlu0 %7208
  %v7211 = vrot.slane %v7182, 4
  %7212 = vrot.lane.b32.xlu0 %v7211, 64
  %v7213 = vpop.permute.xlu0 %7212
  %v7215 = vrot.slane %v7182, 5
  %7216 = vrot.lane.b32.xlu0 %v7215, 80
  %v7217 = vpop.permute.xlu0 %7216
  %v7219 = vrot.slane %v7182, 6
  %7220 = vrot.lane.b32.xlu0 %v7219, 96
  %v7221 = vpop.permute.xlu0 %7220
  %v7223 = vrot.slane %v7182, 7
  %7224 = vrot.lane.b32.xlu0 %v7223, 112
  %v7225 = vpop.permute.xlu0 %7224
  %v7228 = vrot.slane %v7183, 1
  %7229 = vrot.lane.b32.xlu0 %v7228, 16
  %v7230 = vpop.permute.xlu0 %7229
  %v7232 = vrot.slane %v7183, 2
  %7233 = vrot.lane.b32.xlu0 %v7232, 32
  %v7234 = vpop.permute.xlu0 %7233
  %v7236 = vrot.slane %v7183, 3
  %7237 = vrot.lane.b32.xlu0 %v7236, 48
  %v7238 = vpop.permute.xlu0 %7237
  %v7240 = vrot.slane %v7183, 4
  %7241 = vrot.lane.b32.xlu0 %v7240, 64
  %v7242 = vpop.permute.xlu0 %7241
  %v7244 = vrot.slane %v7183, 5
  %7245 = vrot.lane.b32.xlu0 %v7244, 80
  %v7246 = vpop.permute.xlu0 %7245
  %v7248 = vrot.slane %v7183, 6
  %7249 = vrot.lane.b32.xlu0 %v7248, 96
  %v7250 = vpop.permute.xlu0 %7249
  %v7252 = vrot.slane %v7183, 7
  %7253 = vrot.lane.b32.xlu0 %v7252, 112
  %v7254 = vpop.permute.xlu0 %7253
  %vm7256 = vcmask 130048
  %v7257 = vsel %vm7256, %v7182, %v7201
  %v7258 = vsel %vm41, %v7257, %v7205
  %v7259 = vsel %vm706, %v7258, %v7209
  %v7260 = vsel %vm5891, %v7259, %v7213
  %vm7261 = vcmask 654336
  %v7262 = vsel %vm7261, %v7260, %v7217
  %v7263 = vsel %vm1213, %v7262, %v7221
  %vm7264 = vcmask 916480
  %v7265 = vsel %vm7264, %v7263, %v7225
  %v7266 = vsel %vm7256, %v7183, %v7230
  %v7267 = vsel %vm41, %v7266, %v7234
  %v7268 = vsel %vm706, %v7267, %v7238
  %v7269 = vsel %vm5891, %v7268, %v7242
  %v7270 = vsel %vm7261, %v7269, %v7246
  %v7271 = vsel %vm1213, %v7270, %v7250
  %v7272 = vsel %vm7264, %v7271, %v7254
  %v7274 = vrot.slane %v7184, 1
  %7275 = vrot.lane.b32.xlu0 %v7274, 16
  %v7276 = vpop.permute.xlu0 %7275
  %v7278 = vrot.slane %v7184, 2
  %7279 = vrot.lane.b32.xlu0 %v7278, 32
  %v7280 = vpop.permute.xlu0 %7279
  %v7282 = vrot.slane %v7184, 3
  %7283 = vrot.lane.b32.xlu0 %v7282, 48
  %v7284 = vpop.permute.xlu0 %7283
  %v7286 = vrot.slane %v7184, 4
  %7287 = vrot.lane.b32.xlu0 %v7286, 64
  %v7288 = vpop.permute.xlu0 %7287
  %v7290 = vrot.slane %v7184, 5
  %7291 = vrot.lane.b32.xlu0 %v7290, 80
  %v7292 = vpop.permute.xlu0 %7291
  %v7294 = vrot.slane %v7184, 6
  %7295 = vrot.lane.b32.xlu0 %v7294, 96
  %v7296 = vpop.permute.xlu0 %7295
  %v7298 = vrot.slane %v7184, 7
  %7299 = vrot.lane.b32.xlu0 %v7298, 112
  %v7300 = vpop.permute.xlu0 %7299
  %v7303 = vrot.slane %v7185, 1
  %7304 = vrot.lane.b32.xlu0 %v7303, 16
  %v7305 = vpop.permute.xlu0 %7304
  %v7307 = vrot.slane %v7185, 2
  %7308 = vrot.lane.b32.xlu0 %v7307, 32
  %v7309 = vpop.permute.xlu0 %7308
  %v7311 = vrot.slane %v7185, 3
  %7312 = vrot.lane.b32.xlu0 %v7311, 48
  %v7313 = vpop.permute.xlu0 %7312
  %v7315 = vrot.slane %v7185, 4
  %7316 = vrot.lane.b32.xlu0 %v7315, 64
  %v7317 = vpop.permute.xlu0 %7316
  %v7319 = vrot.slane %v7185, 5
  %7320 = vrot.lane.b32.xlu0 %v7319, 80
  %v7321 = vpop.permute.xlu0 %7320
  %v7323 = vrot.slane %v7185, 6
  %7324 = vrot.lane.b32.xlu0 %v7323, 96
  %v7325 = vpop.permute.xlu0 %7324
  %v7327 = vrot.slane %v7185, 7
  %7328 = vrot.lane.b32.xlu0 %v7327, 112
  %v7329 = vpop.permute.xlu0 %7328
  %v7331 = vsel %vm7256, %v7184, %v7276
  %v7332 = vsel %vm41, %v7331, %v7280
  %v7333 = vsel %vm706, %v7332, %v7284
  %v7334 = vsel %vm5891, %v7333, %v7288
  %v7335 = vsel %vm7261, %v7334, %v7292
  %v7336 = vsel %vm1213, %v7335, %v7296
  %v7337 = vsel %vm7264, %v7336, %v7300
  %v7338 = vsel %vm7256, %v7185, %v7305
  %v7339 = vsel %vm41, %v7338, %v7309
  %v7340 = vsel %vm706, %v7339, %v7313
  %v7341 = vsel %vm5891, %v7340, %v7317
  %v7342 = vsel %vm7261, %v7341, %v7321
  %v7343 = vsel %vm1213, %v7342, %v7325
  %v7344 = vsel %vm7264, %v7343, %v7329
  %v7346 = vrot.slane %v7186, 1
  %7347 = vrot.lane.b32.xlu0 %v7346, 16
  %v7348 = vpop.permute.xlu0 %7347
  %v7350 = vrot.slane %v7186, 2
  %7351 = vrot.lane.b32.xlu0 %v7350, 32
  %v7352 = vpop.permute.xlu0 %7351
  %v7354 = vrot.slane %v7186, 3
  %7355 = vrot.lane.b32.xlu0 %v7354, 48
  %v7356 = vpop.permute.xlu0 %7355
  %v7358 = vrot.slane %v7186, 4
  %7359 = vrot.lane.b32.xlu0 %v7358, 64
  %v7360 = vpop.permute.xlu0 %7359
  %v7362 = vrot.slane %v7186, 5
  %7363 = vrot.lane.b32.xlu0 %v7362, 80
  %v7364 = vpop.permute.xlu0 %7363
  %v7366 = vrot.slane %v7186, 6
  %7367 = vrot.lane.b32.xlu0 %v7366, 96
  %v7368 = vpop.permute.xlu0 %7367
  %v7370 = vrot.slane %v7186, 7
  %7371 = vrot.lane.b32.xlu0 %v7370, 112
  %v7372 = vpop.permute.xlu0 %7371
  %v7375 = vrot.slane %v7187, 1
  %7376 = vrot.lane.b32.xlu0 %v7375, 16
  %v7377 = vpop.permute.xlu0 %7376
  %v7379 = vrot.slane %v7187, 2
  %7380 = vrot.lane.b32.xlu0 %v7379, 32
  %v7381 = vpop.permute.xlu0 %7380
  %v7383 = vrot.slane %v7187, 3
  %7384 = vrot.lane.b32.xlu0 %v7383, 48
  %v7385 = vpop.permute.xlu0 %7384
  %v7387 = vrot.slane %v7187, 4
  %7388 = vrot.lane.b32.xlu0 %v7387, 64
  %v7389 = vpop.permute.xlu0 %7388
  %v7391 = vrot.slane %v7187, 5
  %7392 = vrot.lane.b32.xlu0 %v7391, 80
  %v7393 = vpop.permute.xlu0 %7392
  %v7395 = vrot.slane %v7187, 6
  %7396 = vrot.lane.b32.xlu0 %v7395, 96
  %v7397 = vpop.permute.xlu0 %7396
  %v7399 = vrot.slane %v7187, 7
  %7400 = vrot.lane.b32.xlu0 %v7399, 112
  %v7401 = vpop.permute.xlu0 %7400
  %v7403 = vsel %vm7256, %v7186, %v7348
  %v7404 = vsel %vm41, %v7403, %v7352
  %v7405 = vsel %vm706, %v7404, %v7356
  %v7406 = vsel %vm5891, %v7405, %v7360
  %v7407 = vsel %vm7261, %v7406, %v7364
  %v7408 = vsel %vm1213, %v7407, %v7368
  %v7409 = vsel %vm7264, %v7408, %v7372
  %v7410 = vsel %vm7256, %v7187, %v7377
  %v7411 = vsel %vm41, %v7410, %v7381
  %v7412 = vsel %vm706, %v7411, %v7385
  %v7413 = vsel %vm5891, %v7412, %v7389
  %v7414 = vsel %vm7261, %v7413, %v7393
  %v7415 = vsel %vm1213, %v7414, %v7397
  %v7416 = vsel %vm7264, %v7415, %v7401
  %v7418 = vrot.slane %v7188, 1
  %7419 = vrot.lane.b32.xlu0 %v7418, 16
  %v7420 = vpop.permute.xlu0 %7419
  %v7422 = vrot.slane %v7188, 2
  %7423 = vrot.lane.b32.xlu0 %v7422, 32
  %v7424 = vpop.permute.xlu0 %7423
  %v7426 = vrot.slane %v7188, 3
  %7427 = vrot.lane.b32.xlu0 %v7426, 48
  %v7428 = vpop.permute.xlu0 %7427
  %v7430 = vrot.slane %v7188, 4
  %7431 = vrot.lane.b32.xlu0 %v7430, 64
  %v7432 = vpop.permute.xlu0 %7431
  %v7434 = vrot.slane %v7188, 5
  %7435 = vrot.lane.b32.xlu0 %v7434, 80
  %v7436 = vpop.permute.xlu0 %7435
  %v7438 = vrot.slane %v7188, 6
  %7439 = vrot.lane.b32.xlu0 %v7438, 96
  %v7440 = vpop.permute.xlu0 %7439
  %v7442 = vrot.slane %v7188, 7
  %7443 = vrot.lane.b32.xlu0 %v7442, 112
  %v7444 = vpop.permute.xlu0 %7443
  %v7447 = vrot.slane %v7189, 1
  %7448 = vrot.lane.b32.xlu0 %v7447, 16
  %v7449 = vpop.permute.xlu0 %7448
  %v7451 = vrot.slane %v7189, 2
  %7452 = vrot.lane.b32.xlu0 %v7451, 32
  %v7453 = vpop.permute.xlu0 %7452
  %v7455 = vrot.slane %v7189, 3
  %7456 = vrot.lane.b32.xlu0 %v7455, 48
  %v7457 = vpop.permute.xlu0 %7456
  %v7459 = vrot.slane %v7189, 4
  %7460 = vrot.lane.b32.xlu0 %v7459, 64
  %v7461 = vpop.permute.xlu0 %7460
  %v7463 = vrot.slane %v7189, 5
  %7464 = vrot.lane.b32.xlu0 %v7463, 80
  %v7465 = vpop.permute.xlu0 %7464
  %v7467 = vrot.slane %v7189, 6
  %7468 = vrot.lane.b32.xlu0 %v7467, 96
  %v7469 = vpop.permute.xlu0 %7468
  %v7471 = vrot.slane %v7189, 7
  %7472 = vrot.lane.b32.xlu0 %v7471, 112
  %v7473 = vpop.permute.xlu0 %7472
  %v7475 = vsel %vm7256, %v7188, %v7420
  %v7476 = vsel %vm41, %v7475, %v7424
  %v7477 = vsel %vm706, %v7476, %v7428
  %v7478 = vsel %vm5891, %v7477, %v7432
  %v7479 = vsel %vm7261, %v7478, %v7436
  %v7480 = vsel %vm1213, %v7479, %v7440
  %v7481 = vsel %vm7264, %v7480, %v7444
  %v7482 = vsel %vm7256, %v7189, %v7449
  %v7483 = vsel %vm41, %v7482, %v7453
  %v7484 = vsel %vm706, %v7483, %v7457
  %v7485 = vsel %vm5891, %v7484, %v7461
  %v7486 = vsel %vm7261, %v7485, %v7465
  %v7487 = vsel %vm1213, %v7486, %v7469
  %v7488 = vsel %vm7264, %v7487, %v7473
  %v7490 = vrot.slane %v7190, 1
  %7491 = vrot.lane.b32.xlu0 %v7490, 16
  %v7492 = vpop.permute.xlu0 %7491
  %v7494 = vrot.slane %v7190, 2
  %7495 = vrot.lane.b32.xlu0 %v7494, 32
  %v7496 = vpop.permute.xlu0 %7495
  %v7498 = vrot.slane %v7190, 3
  %7499 = vrot.lane.b32.xlu0 %v7498, 48
  %v7500 = vpop.permute.xlu0 %7499
  %v7502 = vrot.slane %v7190, 4
  %7503 = vrot.lane.b32.xlu0 %v7502, 64
  %v7504 = vpop.permute.xlu0 %7503
  %v7506 = vrot.slane %v7190, 5
  %7507 = vrot.lane.b32.xlu0 %v7506, 80
  %v7508 = vpop.permute.xlu0 %7507
  %v7510 = vrot.slane %v7190, 6
  %7511 = vrot.lane.b32.xlu0 %v7510, 96
  %v7512 = vpop.permute.xlu0 %7511
  %v7514 = vrot.slane %v7190, 7
  %7515 = vrot.lane.b32.xlu0 %v7514, 112
  %v7516 = vpop.permute.xlu0 %7515
  %v7519 = vrot.slane %v7191, 1
  %7520 = vrot.lane.b32.xlu0 %v7519, 16
  %v7521 = vpop.permute.xlu0 %7520
  %v7523 = vrot.slane %v7191, 2
  %7524 = vrot.lane.b32.xlu0 %v7523, 32
  %v7525 = vpop.permute.xlu0 %7524
  %v7527 = vrot.slane %v7191, 3
  %7528 = vrot.lane.b32.xlu0 %v7527, 48
  %v7529 = vpop.permute.xlu0 %7528
  %v7531 = vrot.slane %v7191, 4
  %7532 = vrot.lane.b32.xlu0 %v7531, 64
  %v7533 = vpop.permute.xlu0 %7532
  %v7535 = vrot.slane %v7191, 5
  %7536 = vrot.lane.b32.xlu0 %v7535, 80
  %v7537 = vpop.permute.xlu0 %7536
  %v7539 = vrot.slane %v7191, 6
  %7540 = vrot.lane.b32.xlu0 %v7539, 96
  %v7541 = vpop.permute.xlu0 %7540
  %v7543 = vrot.slane %v7191, 7
  %7544 = vrot.lane.b32.xlu0 %v7543, 112
  %v7545 = vpop.permute.xlu0 %7544
  %v7547 = vsel %vm7256, %v7190, %v7492
  %v7548 = vsel %vm41, %v7547, %v7496
  %v7549 = vsel %vm706, %v7548, %v7500
  %v7550 = vsel %vm5891, %v7549, %v7504
  %v7551 = vsel %vm7261, %v7550, %v7508
  %v7552 = vsel %vm1213, %v7551, %v7512
  %v7553 = vsel %vm7264, %v7552, %v7516
  %v7554 = vsel %vm7256, %v7191, %v7521
  %v7555 = vsel %vm41, %v7554, %v7525
  %v7556 = vsel %vm706, %v7555, %v7529
  %v7557 = vsel %vm5891, %v7556, %v7533
  %v7558 = vsel %vm7261, %v7557, %v7537
  %v7559 = vsel %vm1213, %v7558, %v7541
  %v7560 = vsel %vm7264, %v7559, %v7545
  %v7562 = vrot.slane %v7192, 1
  %7563 = vrot.lane.b32.xlu0 %v7562, 16
  %v7564 = vpop.permute.xlu0 %7563
  %v7566 = vrot.slane %v7192, 2
  %7567 = vrot.lane.b32.xlu0 %v7566, 32
  %v7568 = vpop.permute.xlu0 %7567
  %v7570 = vrot.slane %v7192, 3
  %7571 = vrot.lane.b32.xlu0 %v7570, 48
  %v7572 = vpop.permute.xlu0 %7571
  %v7574 = vrot.slane %v7192, 4
  %7575 = vrot.lane.b32.xlu0 %v7574, 64
  %v7576 = vpop.permute.xlu0 %7575
  %v7578 = vrot.slane %v7192, 5
  %7579 = vrot.lane.b32.xlu0 %v7578, 80
  %v7580 = vpop.permute.xlu0 %7579
  %v7582 = vrot.slane %v7192, 6
  %7583 = vrot.lane.b32.xlu0 %v7582, 96
  %v7584 = vpop.permute.xlu0 %7583
  %v7586 = vrot.slane %v7192, 7
  %7587 = vrot.lane.b32.xlu0 %v7586, 112
  %v7588 = vpop.permute.xlu0 %7587
  %v7591 = vrot.slane %v7193, 1
  %7592 = vrot.lane.b32.xlu0 %v7591, 16
  %v7593 = vpop.permute.xlu0 %7592
  %v7595 = vrot.slane %v7193, 2
  %7596 = vrot.lane.b32.xlu0 %v7595, 32
  %v7597 = vpop.permute.xlu0 %7596
  %v7599 = vrot.slane %v7193, 3
  %7600 = vrot.lane.b32.xlu0 %v7599, 48
  %v7601 = vpop.permute.xlu0 %7600
  %v7603 = vrot.slane %v7193, 4
  %7604 = vrot.lane.b32.xlu0 %v7603, 64
  %v7605 = vpop.permute.xlu0 %7604
  %v7607 = vrot.slane %v7193, 5
  %7608 = vrot.lane.b32.xlu0 %v7607, 80
  %v7609 = vpop.permute.xlu0 %7608
  %v7611 = vrot.slane %v7193, 6
  %7612 = vrot.lane.b32.xlu0 %v7611, 96
  %v7613 = vpop.permute.xlu0 %7612
  %v7615 = vrot.slane %v7193, 7
  %7616 = vrot.lane.b32.xlu0 %v7615, 112
  %v7617 = vpop.permute.xlu0 %7616
  %v7619 = vsel %vm7256, %v7192, %v7564
  %v7620 = vsel %vm41, %v7619, %v7568
  %v7621 = vsel %vm706, %v7620, %v7572
  %v7622 = vsel %vm5891, %v7621, %v7576
  %v7623 = vsel %vm7261, %v7622, %v7580
  %v7624 = vsel %vm1213, %v7623, %v7584
  %v7625 = vsel %vm7264, %v7624, %v7588
  %v7626 = vsel %vm7256, %v7193, %v7593
  %v7627 = vsel %vm41, %v7626, %v7597
  %v7628 = vsel %vm706, %v7627, %v7601
  %v7629 = vsel %vm5891, %v7628, %v7605
  %v7630 = vsel %vm7261, %v7629, %v7609
  %v7631 = vsel %vm1213, %v7630, %v7613
  %v7632 = vsel %vm7264, %v7631, %v7617
  %v7634 = vrot.slane %v7194, 1
  %7635 = vrot.lane.b32.xlu0 %v7634, 16
  %v7636 = vpop.permute.xlu0 %7635
  %v7638 = vrot.slane %v7194, 2
  %7639 = vrot.lane.b32.xlu0 %v7638, 32
  %v7640 = vpop.permute.xlu0 %7639
  %v7642 = vrot.slane %v7194, 3
  %7643 = vrot.lane.b32.xlu0 %v7642, 48
  %v7644 = vpop.permute.xlu0 %7643
  %v7646 = vrot.slane %v7194, 4
  %7647 = vrot.lane.b32.xlu0 %v7646, 64
  %v7648 = vpop.permute.xlu0 %7647
  %v7650 = vrot.slane %v7194, 5
  %7651 = vrot.lane.b32.xlu0 %v7650, 80
  %v7652 = vpop.permute.xlu0 %7651
  %v7654 = vrot.slane %v7194, 6
  %7655 = vrot.lane.b32.xlu0 %v7654, 96
  %v7656 = vpop.permute.xlu0 %7655
  %v7658 = vrot.slane %v7194, 7
  %7659 = vrot.lane.b32.xlu0 %v7658, 112
  %v7660 = vpop.permute.xlu0 %7659
  %v7663 = vrot.slane %v7195, 1
  %7664 = vrot.lane.b32.xlu0 %v7663, 16
  %v7665 = vpop.permute.xlu0 %7664
  %v7667 = vrot.slane %v7195, 2
  %7668 = vrot.lane.b32.xlu0 %v7667, 32
  %v7669 = vpop.permute.xlu0 %7668
  %v7671 = vrot.slane %v7195, 3
  %7672 = vrot.lane.b32.xlu0 %v7671, 48
  %v7673 = vpop.permute.xlu0 %7672
  %v7675 = vrot.slane %v7195, 4
  %7676 = vrot.lane.b32.xlu0 %v7675, 64
  %v7677 = vpop.permute.xlu0 %7676
  %v7679 = vrot.slane %v7195, 5
  %7680 = vrot.lane.b32.xlu0 %v7679, 80
  %v7681 = vpop.permute.xlu0 %7680
  %v7683 = vrot.slane %v7195, 6
  %7684 = vrot.lane.b32.xlu0 %v7683, 96
  %v7685 = vpop.permute.xlu0 %7684
  %v7687 = vrot.slane %v7195, 7
  %7688 = vrot.lane.b32.xlu0 %v7687, 112
  %v7689 = vpop.permute.xlu0 %7688
  %v7691 = vsel %vm7256, %v7194, %v7636
  %v7692 = vsel %vm41, %v7691, %v7640
  %v7693 = vsel %vm706, %v7692, %v7644
  %v7694 = vsel %vm5891, %v7693, %v7648
  %v7695 = vsel %vm7261, %v7694, %v7652
  %v7696 = vsel %vm1213, %v7695, %v7656
  %v7697 = vsel %vm7264, %v7696, %v7660
  %v7698 = vsel %vm7256, %v7195, %v7665
  %v7699 = vsel %vm41, %v7698, %v7669
  %v7700 = vsel %vm706, %v7699, %v7673
  %v7701 = vsel %vm5891, %v7700, %v7677
  %v7702 = vsel %vm7261, %v7701, %v7681
  %v7703 = vsel %vm1213, %v7702, %v7685
  %v7704 = vsel %vm7264, %v7703, %v7689
  %v7706 = vrot.slane %v7196, 1
  %7707 = vrot.lane.b32.xlu0 %v7706, 16
  %v7708 = vpop.permute.xlu0 %7707
  %v7710 = vrot.slane %v7196, 2
  %7711 = vrot.lane.b32.xlu0 %v7710, 32
  %v7712 = vpop.permute.xlu0 %7711
  %v7714 = vrot.slane %v7196, 3
  %7715 = vrot.lane.b32.xlu0 %v7714, 48
  %v7716 = vpop.permute.xlu0 %7715
  %v7718 = vrot.slane %v7196, 4
  %7719 = vrot.lane.b32.xlu0 %v7718, 64
  %v7720 = vpop.permute.xlu0 %7719
  %v7722 = vrot.slane %v7196, 5
  %7723 = vrot.lane.b32.xlu0 %v7722, 80
  %v7724 = vpop.permute.xlu0 %7723
  %v7726 = vrot.slane %v7196, 6
  %7727 = vrot.lane.b32.xlu0 %v7726, 96
  %v7728 = vpop.permute.xlu0 %7727
  %v7730 = vrot.slane %v7196, 7
  %7731 = vrot.lane.b32.xlu0 %v7730, 112
  %v7732 = vpop.permute.xlu0 %7731
  %v7735 = vrot.slane %v7197, 1
  %7736 = vrot.lane.b32.xlu0 %v7735, 16
  %v7737 = vpop.permute.xlu0 %7736
  %v7739 = vrot.slane %v7197, 2
  %7740 = vrot.lane.b32.xlu0 %v7739, 32
  %v7741 = vpop.permute.xlu0 %7740
  %v7743 = vrot.slane %v7197, 3
  %7744 = vrot.lane.b32.xlu0 %v7743, 48
  %v7745 = vpop.permute.xlu0 %7744
  %v7747 = vrot.slane %v7197, 4
  %7748 = vrot.lane.b32.xlu0 %v7747, 64
  %v7749 = vpop.permute.xlu0 %7748
  %v7751 = vrot.slane %v7197, 5
  %7752 = vrot.lane.b32.xlu0 %v7751, 80
  %v7753 = vpop.permute.xlu0 %7752
  %v7755 = vrot.slane %v7197, 6
  %7756 = vrot.lane.b32.xlu0 %v7755, 96
  %v7757 = vpop.permute.xlu0 %7756
  %v7759 = vrot.slane %v7197, 7
  %7760 = vrot.lane.b32.xlu0 %v7759, 112
  %v7761 = vpop.permute.xlu0 %7760
  %v7763 = vsel %vm7256, %v7196, %v7708
  %v7764 = vsel %vm41, %v7763, %v7712
  %v7765 = vsel %vm706, %v7764, %v7716
  %v7766 = vsel %vm5891, %v7765, %v7720
  %v7767 = vsel %vm7261, %v7766, %v7724
  %v7768 = vsel %vm1213, %v7767, %v7728
  %v7769 = vsel %vm7264, %v7768, %v7732
  %v7770 = vsel %vm7256, %v7197, %v7737
  %v7771 = vsel %vm41, %v7770, %v7741
  %v7772 = vsel %vm706, %v7771, %v7745
  %v7773 = vsel %vm5891, %v7772, %v7749
  %v7774 = vsel %vm7261, %v7773, %v7753
  %v7775 = vsel %vm1213, %v7774, %v7757
  %v7776 = vsel %vm7264, %v7775, %v7761
  %v7785 = vrot.slane %v7553, 7
  %v7786 = vrot.slane %v7560, 7
  %v7787 = vrot.slane %v7625, 7
  %v7788 = vrot.slane %v7632, 7
  %v7789 = vrot.slane %v7697, 7
  %v7790 = vrot.slane %v7704, 7
  %v7791 = vrot.slane %v7769, 7
  %v7792 = vrot.slane %v7776, 7
  %vm7801 = vcmask 1040384
  %v7802 = vsel %vm7801, %v7265, %v7785
  %v7803 = vsel %vm7801, %v7272, %v7786
  %v7804 = vsel %vm7801, %v7337, %v7787
  %v7805 = vsel %vm7801, %v7344, %v7788
  %v7806 = vsel %vm7801, %v7409, %v7789
  %v7807 = vsel %vm7801, %v7416, %v7790
  %v7808 = vsel %vm7801, %v7481, %v7791
  %v7809 = vsel %vm7801, %v7488, %v7792
  %7810 = vrot.lane.b32.xlu0 %v7182, 112
  %v7811 = vpop.permute.xlu0 %7810
  %7814 = vrot.lane.b32.xlu0 %v7203, 16
  %v7815 = vpop.permute.xlu0 %7814
  %7817 = vrot.lane.b32.xlu0 %v7207, 32
  %v7818 = vpop.permute.xlu0 %7817
  %7820 = vrot.lane.b32.xlu0 %v7211, 48
  %v7821 = vpop.permute.xlu0 %7820
  %7823 = vrot.lane.b32.xlu0 %v7215, 64
  %v7824 = vpop.permute.xlu0 %7823
  %7826 = vrot.lane.b32.xlu0 %v7219, 80
  %v7827 = vpop.permute.xlu0 %7826
  %7829 = vrot.lane.b32.xlu0 %v7223, 96
  %v7830 = vpop.permute.xlu0 %7829
  %7832 = vrot.lane.b32.xlu0 %v7183, 112
  %v7833 = vpop.permute.xlu0 %7832
  %7836 = vrot.lane.b32.xlu0 %v7232, 16
  %v7837 = vpop.permute.xlu0 %7836
  %7839 = vrot.lane.b32.xlu0 %v7236, 32
  %v7840 = vpop.permute.xlu0 %7839
  %7842 = vrot.lane.b32.xlu0 %v7240, 48
  %v7843 = vpop.permute.xlu0 %7842
  %7845 = vrot.lane.b32.xlu0 %v7244, 64
  %v7846 = vpop.permute.xlu0 %7845
  %7848 = vrot.lane.b32.xlu0 %v7248, 80
  %v7849 = vpop.permute.xlu0 %7848
  %7851 = vrot.lane.b32.xlu0 %v7252, 96
  %v7852 = vpop.permute.xlu0 %7851
  %v7854 = vsel %vm7256, %v7811, %v7199
  %v7855 = vsel %vm41, %v7854, %v7815
  %v7856 = vsel %vm706, %v7855, %v7818
  %v7857 = vsel %vm5891, %v7856, %v7821
  %v7858 = vsel %vm7261, %v7857, %v7824
  %v7859 = vsel %vm1213, %v7858, %v7827
  %v7860 = vsel %vm7264, %v7859, %v7830
  %v7861 = vsel %vm7256, %v7833, %v7228
  %v7862 = vsel %vm41, %v7861, %v7837
  %v7863 = vsel %vm706, %v7862, %v7840
  %v7864 = vsel %vm5891, %v7863, %v7843
  %v7865 = vsel %vm7261, %v7864, %v7846
  %v7866 = vsel %vm1213, %v7865, %v7849
  %v7867 = vsel %vm7264, %v7866, %v7852
  %7868 = vrot.lane.b32.xlu0 %v7184, 112
  %v7869 = vpop.permute.xlu0 %7868
  %7872 = vrot.lane.b32.xlu0 %v7278, 16
  %v7873 = vpop.permute.xlu0 %7872
  %7875 = vrot.lane.b32.xlu0 %v7282, 32
  %v7876 = vpop.permute.xlu0 %7875
  %7878 = vrot.lane.b32.xlu0 %v7286, 48
  %v7879 = vpop.permute.xlu0 %7878
  %7881 = vrot.lane.b32.xlu0 %v7290, 64
  %v7882 = vpop.permute.xlu0 %7881
  %7884 = vrot.lane.b32.xlu0 %v7294, 80
  %v7885 = vpop.permute.xlu0 %7884
  %7887 = vrot.lane.b32.xlu0 %v7298, 96
  %v7888 = vpop.permute.xlu0 %7887
  %7890 = vrot.lane.b32.xlu0 %v7185, 112
  %v7891 = vpop.permute.xlu0 %7890
  %7894 = vrot.lane.b32.xlu0 %v7307, 16
  %v7895 = vpop.permute.xlu0 %7894
  %7897 = vrot.lane.b32.xlu0 %v7311, 32
  %v7898 = vpop.permute.xlu0 %7897
  %7900 = vrot.lane.b32.xlu0 %v7315, 48
  %v7901 = vpop.permute.xlu0 %7900
  %7903 = vrot.lane.b32.xlu0 %v7319, 64
  %v7904 = vpop.permute.xlu0 %7903
  %7906 = vrot.lane.b32.xlu0 %v7323, 80
  %v7907 = vpop.permute.xlu0 %7906
  %7909 = vrot.lane.b32.xlu0 %v7327, 96
  %v7910 = vpop.permute.xlu0 %7909
  %v7912 = vsel %vm7256, %v7869, %v7274
  %v7913 = vsel %vm41, %v7912, %v7873
  %v7914 = vsel %vm706, %v7913, %v7876
  %v7915 = vsel %vm5891, %v7914, %v7879
  %v7916 = vsel %vm7261, %v7915, %v7882
  %v7917 = vsel %vm1213, %v7916, %v7885
  %v7918 = vsel %vm7264, %v7917, %v7888
  %v7919 = vsel %vm7256, %v7891, %v7303
  %v7920 = vsel %vm41, %v7919, %v7895
  %v7921 = vsel %vm706, %v7920, %v7898
  %v7922 = vsel %vm5891, %v7921, %v7901
  %v7923 = vsel %vm7261, %v7922, %v7904
  %v7924 = vsel %vm1213, %v7923, %v7907
  %v7925 = vsel %vm7264, %v7924, %v7910
  %7926 = vrot.lane.b32.xlu0 %v7186, 112
  %v7927 = vpop.permute.xlu0 %7926
  %7930 = vrot.lane.b32.xlu0 %v7350, 16
  %v7931 = vpop.permute.xlu0 %7930
  %7933 = vrot.lane.b32.xlu0 %v7354, 32
  %v7934 = vpop.permute.xlu0 %7933
  %7936 = vrot.lane.b32.xlu0 %v7358, 48
  %v7937 = vpop.permute.xlu0 %7936
  %7939 = vrot.lane.b32.xlu0 %v7362, 64
  %v7940 = vpop.permute.xlu0 %7939
  %7942 = vrot.lane.b32.xlu0 %v7366, 80
  %v7943 = vpop.permute.xlu0 %7942
  %7945 = vrot.lane.b32.xlu0 %v7370, 96
  %v7946 = vpop.permute.xlu0 %7945
  %7948 = vrot.lane.b32.xlu0 %v7187, 112
  %v7949 = vpop.permute.xlu0 %7948
  %7952 = vrot.lane.b32.xlu0 %v7379, 16
  %v7953 = vpop.permute.xlu0 %7952
  %7955 = vrot.lane.b32.xlu0 %v7383, 32
  %v7956 = vpop.permute.xlu0 %7955
  %7958 = vrot.lane.b32.xlu0 %v7387, 48
  %v7959 = vpop.permute.xlu0 %7958
  %7961 = vrot.lane.b32.xlu0 %v7391, 64
  %v7962 = vpop.permute.xlu0 %7961
  %7964 = vrot.lane.b32.xlu0 %v7395, 80
  %v7965 = vpop.permute.xlu0 %7964
  %7967 = vrot.lane.b32.xlu0 %v7399, 96
  %v7968 = vpop.permute.xlu0 %7967
  %v7970 = vsel %vm7256, %v7927, %v7346
  %v7971 = vsel %vm41, %v7970, %v7931
  %v7972 = vsel %vm706, %v7971, %v7934
  %v7973 = vsel %vm5891, %v7972, %v7937
  %v7974 = vsel %vm7261, %v7973, %v7940
  %v7975 = vsel %vm1213, %v7974, %v7943
  %v7976 = vsel %vm7264, %v7975, %v7946
  %v7977 = vsel %vm7256, %v7949, %v7375
  %v7978 = vsel %vm41, %v7977, %v7953
  %v7979 = vsel %vm706, %v7978, %v7956
  %v7980 = vsel %vm5891, %v7979, %v7959
  %v7981 = vsel %vm7261, %v7980, %v7962
  %v7982 = vsel %vm1213, %v7981, %v7965
  %v7983 = vsel %vm7264, %v7982, %v7968
  %7984 = vrot.lane.b32.xlu0 %v7188, 112
  %v7985 = vpop.permute.xlu0 %7984
  %7988 = vrot.lane.b32.xlu0 %v7422, 16
  %v7989 = vpop.permute.xlu0 %7988
  %7991 = vrot.lane.b32.xlu0 %v7426, 32
  %v7992 = vpop.permute.xlu0 %7991
  %7994 = vrot.lane.b32.xlu0 %v7430, 48
  %v7995 = vpop.permute.xlu0 %7994
  %7997 = vrot.lane.b32.xlu0 %v7434, 64
  %v7998 = vpop.permute.xlu0 %7997
  %8000 = vrot.lane.b32.xlu0 %v7438, 80
  %v8001 = vpop.permute.xlu0 %8000
  %8003 = vrot.lane.b32.xlu0 %v7442, 96
  %v8004 = vpop.permute.xlu0 %8003
  %8006 = vrot.lane.b32.xlu0 %v7189, 112
  %v8007 = vpop.permute.xlu0 %8006
  %8010 = vrot.lane.b32.xlu0 %v7451, 16
  %v8011 = vpop.permute.xlu0 %8010
  %8013 = vrot.lane.b32.xlu0 %v7455, 32
  %v8014 = vpop.permute.xlu0 %8013
  %8016 = vrot.lane.b32.xlu0 %v7459, 48
  %v8017 = vpop.permute.xlu0 %8016
  %8019 = vrot.lane.b32.xlu0 %v7463, 64
  %v8020 = vpop.permute.xlu0 %8019
  %8022 = vrot.lane.b32.xlu0 %v7467, 80
  %v8023 = vpop.permute.xlu0 %8022
  %8025 = vrot.lane.b32.xlu0 %v7471, 96
  %v8026 = vpop.permute.xlu0 %8025
  %v8028 = vsel %vm7256, %v7985, %v7418
  %v8029 = vsel %vm41, %v8028, %v7989
  %v8030 = vsel %vm706, %v8029, %v7992
  %v8031 = vsel %vm5891, %v8030, %v7995
  %v8032 = vsel %vm7261, %v8031, %v7998
  %v8033 = vsel %vm1213, %v8032, %v8001
  %v8034 = vsel %vm7264, %v8033, %v8004
  %v8035 = vsel %vm7256, %v8007, %v7447
  %v8036 = vsel %vm41, %v8035, %v8011
  %v8037 = vsel %vm706, %v8036, %v8014
  %v8038 = vsel %vm5891, %v8037, %v8017
  %v8039 = vsel %vm7261, %v8038, %v8020
  %v8040 = vsel %vm1213, %v8039, %v8023
  %v8041 = vsel %vm7264, %v8040, %v8026
  %8042 = vrot.lane.b32.xlu0 %v7190, 112
  %v8043 = vpop.permute.xlu0 %8042
  %8046 = vrot.lane.b32.xlu0 %v7494, 16
  %v8047 = vpop.permute.xlu0 %8046
  %8049 = vrot.lane.b32.xlu0 %v7498, 32
  %v8050 = vpop.permute.xlu0 %8049
  %8052 = vrot.lane.b32.xlu0 %v7502, 48
  %v8053 = vpop.permute.xlu0 %8052
  %8055 = vrot.lane.b32.xlu0 %v7506, 64
  %v8056 = vpop.permute.xlu0 %8055
  %8058 = vrot.lane.b32.xlu0 %v7510, 80
  %v8059 = vpop.permute.xlu0 %8058
  %8061 = vrot.lane.b32.xlu0 %v7514, 96
  %v8062 = vpop.permute.xlu0 %8061
  %8064 = vrot.lane.b32.xlu0 %v7191, 112
  %v8065 = vpop.permute.xlu0 %8064
  %8068 = vrot.lane.b32.xlu0 %v7523, 16
  %v8069 = vpop.permute.xlu0 %8068
  %8071 = vrot.lane.b32.xlu0 %v7527, 32
  %v8072 = vpop.permute.xlu0 %8071
  %8074 = vrot.lane.b32.xlu0 %v7531, 48
  %v8075 = vpop.permute.xlu0 %8074
  %8077 = vrot.lane.b32.xlu0 %v7535, 64
  %v8078 = vpop.permute.xlu0 %8077
  %8080 = vrot.lane.b32.xlu0 %v7539, 80
  %v8081 = vpop.permute.xlu0 %8080
  %8083 = vrot.lane.b32.xlu0 %v7543, 96
  %v8084 = vpop.permute.xlu0 %8083
  %v8086 = vsel %vm7256, %v8043, %v7490
  %v8087 = vsel %vm41, %v8086, %v8047
  %v8088 = vsel %vm706, %v8087, %v8050
  %v8089 = vsel %vm5891, %v8088, %v8053
  %v8090 = vsel %vm7261, %v8089, %v8056
  %v8091 = vsel %vm1213, %v8090, %v8059
  %v8092 = vsel %vm7264, %v8091, %v8062
  %v8093 = vsel %vm7256, %v8065, %v7519
  %v8094 = vsel %vm41, %v8093, %v8069
  %v8095 = vsel %vm706, %v8094, %v8072
  %v8096 = vsel %vm5891, %v8095, %v8075
  %v8097 = vsel %vm7261, %v8096, %v8078
  %v8098 = vsel %vm1213, %v8097, %v8081
  %v8099 = vsel %vm7264, %v8098, %v8084
  %8100 = vrot.lane.b32.xlu0 %v7192, 112
  %v8101 = vpop.permute.xlu0 %8100
  %8104 = vrot.lane.b32.xlu0 %v7566, 16
  %v8105 = vpop.permute.xlu0 %8104
  %8107 = vrot.lane.b32.xlu0 %v7570, 32
  %v8108 = vpop.permute.xlu0 %8107
  %8110 = vrot.lane.b32.xlu0 %v7574, 48
  %v8111 = vpop.permute.xlu0 %8110
  %8113 = vrot.lane.b32.xlu0 %v7578, 64
  %v8114 = vpop.permute.xlu0 %8113
  %8116 = vrot.lane.b32.xlu0 %v7582, 80
  %v8117 = vpop.permute.xlu0 %8116
  %8119 = vrot.lane.b32.xlu0 %v7586, 96
  %v8120 = vpop.permute.xlu0 %8119
  %8122 = vrot.lane.b32.xlu0 %v7193, 112
  %v8123 = vpop.permute.xlu0 %8122
  %8126 = vrot.lane.b32.xlu0 %v7595, 16
  %v8127 = vpop.permute.xlu0 %8126
  %8129 = vrot.lane.b32.xlu0 %v7599, 32
  %v8130 = vpop.permute.xlu0 %8129
  %8132 = vrot.lane.b32.xlu0 %v7603, 48
  %v8133 = vpop.permute.xlu0 %8132
  %8135 = vrot.lane.b32.xlu0 %v7607, 64
  %v8136 = vpop.permute.xlu0 %8135
  %8138 = vrot.lane.b32.xlu0 %v7611, 80
  %v8139 = vpop.permute.xlu0 %8138
  %8141 = vrot.lane.b32.xlu0 %v7615, 96
  %v8142 = vpop.permute.xlu0 %8141
  %v8144 = vsel %vm7256, %v8101, %v7562
  %v8145 = vsel %vm41, %v8144, %v8105
  %v8146 = vsel %vm706, %v8145, %v8108
  %v8147 = vsel %vm5891, %v8146, %v8111
  %v8148 = vsel %vm7261, %v8147, %v8114
  %v8149 = vsel %vm1213, %v8148, %v8117
  %v8150 = vsel %vm7264, %v8149, %v8120
  %v8151 = vsel %vm7256, %v8123, %v7591
  %v8152 = vsel %vm41, %v8151, %v8127
  %v8153 = vsel %vm706, %v8152, %v8130
  %v8154 = vsel %vm5891, %v8153, %v8133
  %v8155 = vsel %vm7261, %v8154, %v8136
  %v8156 = vsel %vm1213, %v8155, %v8139
  %v8157 = vsel %vm7264, %v8156, %v8142
  %8158 = vrot.lane.b32.xlu0 %v7194, 112
  %v8159 = vpop.permute.xlu0 %8158
  %8162 = vrot.lane.b32.xlu0 %v7638, 16
  %v8163 = vpop.permute.xlu0 %8162
  %8165 = vrot.lane.b32.xlu0 %v7642, 32
  %v8166 = vpop.permute.xlu0 %8165
  %8168 = vrot.lane.b32.xlu0 %v7646, 48
  %v8169 = vpop.permute.xlu0 %8168
  %8171 = vrot.lane.b32.xlu0 %v7650, 64
  %v8172 = vpop.permute.xlu0 %8171
  %8174 = vrot.lane.b32.xlu0 %v7654, 80
  %v8175 = vpop.permute.xlu0 %8174
  %8177 = vrot.lane.b32.xlu0 %v7658, 96
  %v8178 = vpop.permute.xlu0 %8177
  %8180 = vrot.lane.b32.xlu0 %v7195, 112
  %v8181 = vpop.permute.xlu0 %8180
  %8184 = vrot.lane.b32.xlu0 %v7667, 16
  %v8185 = vpop.permute.xlu0 %8184
  %8187 = vrot.lane.b32.xlu0 %v7671, 32
  %v8188 = vpop.permute.xlu0 %8187
  %8190 = vrot.lane.b32.xlu0 %v7675, 48
  %v8191 = vpop.permute.xlu0 %8190
  %8193 = vrot.lane.b32.xlu0 %v7679, 64
  %v8194 = vpop.permute.xlu0 %8193
  %8196 = vrot.lane.b32.xlu0 %v7683, 80
  %v8197 = vpop.permute.xlu0 %8196
  %8199 = vrot.lane.b32.xlu0 %v7687, 96
  %v8200 = vpop.permute.xlu0 %8199
  %v8202 = vsel %vm7256, %v8159, %v7634
  %v8203 = vsel %vm41, %v8202, %v8163
  %v8204 = vsel %vm706, %v8203, %v8166
  %v8205 = vsel %vm5891, %v8204, %v8169
  %v8206 = vsel %vm7261, %v8205, %v8172
  %v8207 = vsel %vm1213, %v8206, %v8175
  %v8208 = vsel %vm7264, %v8207, %v8178
  %v8209 = vsel %vm7256, %v8181, %v7663
  %v8210 = vsel %vm41, %v8209, %v8185
  %v8211 = vsel %vm706, %v8210, %v8188
  %v8212 = vsel %vm5891, %v8211, %v8191
  %v8213 = vsel %vm7261, %v8212, %v8194
  %v8214 = vsel %vm1213, %v8213, %v8197
  %v8215 = vsel %vm7264, %v8214, %v8200
  %8216 = vrot.lane.b32.xlu0 %v7196, 112
  %v8217 = vpop.permute.xlu0 %8216
  %8220 = vrot.lane.b32.xlu0 %v7710, 16
  %v8221 = vpop.permute.xlu0 %8220
  %8223 = vrot.lane.b32.xlu0 %v7714, 32
  %v8224 = vpop.permute.xlu0 %8223
  %8226 = vrot.lane.b32.xlu0 %v7718, 48
  %v8227 = vpop.permute.xlu0 %8226
  %8229 = vrot.lane.b32.xlu0 %v7722, 64
  %v8230 = vpop.permute.xlu0 %8229
  %8232 = vrot.lane.b32.xlu0 %v7726, 80
  %v8233 = vpop.permute.xlu0 %8232
  %8235 = vrot.lane.b32.xlu0 %v7730, 96
  %v8236 = vpop.permute.xlu0 %8235
  %8238 = vrot.lane.b32.xlu0 %v7197, 112
  %v8239 = vpop.permute.xlu0 %8238
  %8242 = vrot.lane.b32.xlu0 %v7739, 16
  %v8243 = vpop.permute.xlu0 %8242
  %8245 = vrot.lane.b32.xlu0 %v7743, 32
  %v8246 = vpop.permute.xlu0 %8245
  %8248 = vrot.lane.b32.xlu0 %v7747, 48
  %v8249 = vpop.permute.xlu0 %8248
  %8251 = vrot.lane.b32.xlu0 %v7751, 64
  %v8252 = vpop.permute.xlu0 %8251
  %8254 = vrot.lane.b32.xlu0 %v7755, 80
  %v8255 = vpop.permute.xlu0 %8254
  %8257 = vrot.lane.b32.xlu0 %v7759, 96
  %v8258 = vpop.permute.xlu0 %8257
  %v8260 = vsel %vm7256, %v8217, %v7706
  %v8261 = vsel %vm41, %v8260, %v8221
  %v8262 = vsel %vm706, %v8261, %v8224
  %v8263 = vsel %vm5891, %v8262, %v8227
  %v8264 = vsel %vm7261, %v8263, %v8230
  %v8265 = vsel %vm1213, %v8264, %v8233
  %v8266 = vsel %vm7264, %v8265, %v8236
  %v8267 = vsel %vm7256, %v8239, %v7735
  %v8268 = vsel %vm41, %v8267, %v8243
  %v8269 = vsel %vm706, %v8268, %v8246
  %v8270 = vsel %vm5891, %v8269, %v8249
  %v8271 = vsel %vm7261, %v8270, %v8252
  %v8272 = vsel %vm1213, %v8271, %v8255
  %v8273 = vsel %vm7264, %v8272, %v8258
  %v8282 = vrot.slane %v8092, 7
  %v8283 = vrot.slane %v8099, 7
  %v8284 = vrot.slane %v8150, 7
  %v8285 = vrot.slane %v8157, 7
  %v8286 = vrot.slane %v8208, 7
  %v8287 = vrot.slane %v8215, 7
  %v8288 = vrot.slane %v8266, 7
  %v8289 = vrot.slane %v8273, 7
  %v8298 = vsel %vm7801, %v7860, %v8282
  %v8299 = vsel %vm7801, %v7867, %v8283
  %v8300 = vsel %vm7801, %v7918, %v8284
  %v8301 = vsel %vm7801, %v7925, %v8285
  %v8302 = vsel %vm7801, %v7976, %v8286
  %v8303 = vsel %vm7801, %v7983, %v8287
  %v8304 = vsel %vm7801, %v8034, %v8288
  %v8305 = vsel %vm7801, %v8041, %v8289
  %v8306 = vld [vmem:[%s6] sm:$0xff]
  %v8307 = vld [vmem:[%s6 + $0x8] sm:$0xff]
  %v8308 = vld [vmem:[%s6 + $0x10] sm:$0xff]
  %v8309 = vld [vmem:[%s6 + $0x18] sm:$0xff]
  %v8310 = vld [vmem:[%s6 + $0x20] sm:$0xff]
  %v8311 = vld [vmem:[%s6 + $0x28] sm:$0xff]
  %v8312 = vld [vmem:[%s6 + $0x30] sm:$0xff]
  %v8313 = vld [vmem:[%s6 + $0x38] sm:$0xff]
  %v8314 = vld [vmem:[%s6 + $0x40] sm:$0xff]
  %v8315 = vld [vmem:[%s6 + $0x48] sm:$0xff]
  %v8316 = vld [vmem:[%s6 + $0x50] sm:$0xff]
  %v8317 = vld [vmem:[%s6 + $0x58] sm:$0xff]
  %v8318 = vld [vmem:[%s6 + $0x60] sm:$0xff]
  %v8319 = vld [vmem:[%s6 + $0x68] sm:$0xff]
  %v8320 = vld [vmem:[%s6 + $0x70] sm:$0xff]
  %v8321 = vld [vmem:[%s6 + $0x78] sm:$0xff]
  %v8322 = vld [vmem:[%s6 + $0x80] sm:$0xff]
  %v8323 = vld [vmem:[%s6 + $0x88] sm:$0xff]
  %v8324 = vld [vmem:[%s6 + $0x90] sm:$0xff]
  %v8325 = vld [vmem:[%s6 + $0x98] sm:$0xff]
  %v8326 = vld [vmem:[%s6 + $0xa0] sm:$0xff]
  %v8327 = vld [vmem:[%s6 + $0xa8] sm:$0xff]
  %v8328 = vld [vmem:[%s6 + $0xb0] sm:$0xff]
  %v8329 = vld [vmem:[%s6 + $0xb8] sm:$0xff]
  %v8330 = vld [vmem:[%s6 + $0xc0] sm:$0xff]
  %v8331 = vld [vmem:[%s6 + $0xc8] sm:$0xff]
  %v8332 = vld [vmem:[%s6 + $0xd0] sm:$0xff]
  %v8333 = vld [vmem:[%s6 + $0xd8] sm:$0xff]
  %v8334 = vld [vmem:[%s6 + $0xe0] sm:$0xff]
  %v8335 = vld [vmem:[%s6 + $0xe8] sm:$0xff]
  %v8336 = vld [vmem:[%s6 + $0xf0] sm:$0xff]
  %v8337 = vld [vmem:[%s6 + $0xf8] sm:$0xff]
  %v8338 = vld [vmem:[%s6 + $0x100] sm:$0xff]
  %v8339 = vld [vmem:[%s6 + $0x108] sm:$0xff]
  %v8340 = vld [vmem:[%s6 + $0x110] sm:$0xff]
  %v8341 = vld [vmem:[%s6 + $0x118] sm:$0xff]
  %v8342 = vld [vmem:[%s6 + $0x120] sm:$0xff]
  %v8343 = vld [vmem:[%s6 + $0x128] sm:$0xff]
  %v8344 = vld [vmem:[%s6 + $0x130] sm:$0xff]
  %v8345 = vld [vmem:[%s6 + $0x138] sm:$0xff]
  %v8346 = vld [vmem:[%s6 + $0x140] sm:$0xff]
  %v8347 = vld [vmem:[%s6 + $0x148] sm:$0xff]
  %v8348 = vld [vmem:[%s6 + $0x150] sm:$0xff]
  %v8349 = vld [vmem:[%s6 + $0x158] sm:$0xff]
  %v8350 = vld [vmem:[%s6 + $0x160] sm:$0xff]
  %v8351 = vld [vmem:[%s6 + $0x168] sm:$0xff]
  %v8352 = vld [vmem:[%s6 + $0x170] sm:$0xff]
  %v8353 = vld [vmem:[%s6 + $0x178] sm:$0xff]
  %v8354 = vld [vmem:[%s6 + $0x180] sm:$0xff]
  %v8355 = vld [vmem:[%s6 + $0x188] sm:$0xff]
  %v8356 = vld [vmem:[%s6 + $0x190] sm:$0xff]
  %v8357 = vld [vmem:[%s6 + $0x198] sm:$0xff]
  %v8358 = vld [vmem:[%s6 + $0x1a0] sm:$0xff]
  %v8359 = vld [vmem:[%s6 + $0x1a8] sm:$0xff]
  %v8360 = vld [vmem:[%s6 + $0x1b0] sm:$0xff]
  %v8361 = vld [vmem:[%s6 + $0x1b8] sm:$0xff]
  %v8362 = vld [vmem:[%s6 + $0x1c0] sm:$0xff]
  %v8363 = vld [vmem:[%s6 + $0x1c8] sm:$0xff]
  %v8364 = vld [vmem:[%s6 + $0x1d0] sm:$0xff]
  %v8365 = vld [vmem:[%s6 + $0x1d8] sm:$0xff]
  %v8366 = vld [vmem:[%s6 + $0x1e0] sm:$0xff]
  %v8367 = vld [vmem:[%s6 + $0x1e8] sm:$0xff]
  %v8368 = vld [vmem:[%s6 + $0x1f0] sm:$0xff]
  %v8369 = vld [vmem:[%s6 + $0x1f8] sm:$0xff]
  %v8370 = vld [vmem:[%s6 + $0x200] sm:$0xff]
  %v8371 = vld [vmem:[%s6 + $0x208] sm:$0xff]
  %v8372 = vld [vmem:[%s6 + $0x210] sm:$0xff]
  %v8373 = vld [vmem:[%s6 + $0x218] sm:$0xff]
  %v8374 = vld [vmem:[%s6 + $0x220] sm:$0xff]
  %v8375 = vld [vmem:[%s6 + $0x228] sm:$0xff]
  %v8376 = vld [vmem:[%s6 + $0x230] sm:$0xff]
  %v8377 = vld [vmem:[%s6 + $0x238] sm:$0xff]
  %v8378 = vld [vmem:[%s6 + $0x240] sm:$0xff]
  %v8379 = vld [vmem:[%s6 + $0x248] sm:$0xff]
  %v8380 = vld [vmem:[%s6 + $0x250] sm:$0xff]
  %v8381 = vld [vmem:[%s6 + $0x258] sm:$0xff]
  %v8382 = vld [vmem:[%s6 + $0x260] sm:$0xff]
  %v8383 = vld [vmem:[%s6 + $0x268] sm:$0xff]
  %v8384 = vld [vmem:[%s6 + $0x270] sm:$0xff]
  %v8385 = vld [vmem:[%s6 + $0x278] sm:$0xff]
  %v8386 = vld [vmem:[%s6 + $0x280] sm:$0xff]
  %v8387 = vld [vmem:[%s6 + $0x288] sm:$0xff]
  %v8388 = vld [vmem:[%s6 + $0x290] sm:$0xff]
  %v8389 = vld [vmem:[%s6 + $0x298] sm:$0xff]
  %v8390 = vld [vmem:[%s6 + $0x2a0] sm:$0xff]
  %v8391 = vld [vmem:[%s6 + $0x2a8] sm:$0xff]
  %v8392 = vld [vmem:[%s6 + $0x2b0] sm:$0xff]
  %v8393 = vld [vmem:[%s6 + $0x2b8] sm:$0xff]
  %v8394 = vld [vmem:[%s6 + $0x2c0] sm:$0xff]
  %v8395 = vld [vmem:[%s6 + $0x2c8] sm:$0xff]
  %v8396 = vld [vmem:[%s6 + $0x2d0] sm:$0xff]
  %v8397 = vld [vmem:[%s6 + $0x2d8] sm:$0xff]
  %v8398 = vld [vmem:[%s6 + $0x2e0] sm:$0xff]
  %v8399 = vld [vmem:[%s6 + $0x2e8] sm:$0xff]
  %v8400 = vld [vmem:[%s6 + $0x2f0] sm:$0xff]
  %v8401 = vld [vmem:[%s6 + $0x2f8] sm:$0xff]
  %v8402 = vld [vmem:[%s6 + $0x300] sm:$0xff]
  %v8403 = vld [vmem:[%s6 + $0x308] sm:$0xff]
  %v8404 = vld [vmem:[%s6 + $0x310] sm:$0xff]
  %v8405 = vld [vmem:[%s6 + $0x318] sm:$0xff]
  %v8406 = vld [vmem:[%s6 + $0x320] sm:$0xff]
  %v8407 = vld [vmem:[%s6 + $0x328] sm:$0xff]
  %v8408 = vld [vmem:[%s6 + $0x330] sm:$0xff]
  %v8409 = vld [vmem:[%s6 + $0x338] sm:$0xff]
  %v8410 = vld [vmem:[%s6 + $0x340] sm:$0xff]
  %v8411 = vld [vmem:[%s6 + $0x348] sm:$0xff]
  %v8412 = vld [vmem:[%s6 + $0x350] sm:$0xff]
  %v8413 = vld [vmem:[%s6 + $0x358] sm:$0xff]
  %v8414 = vld [vmem:[%s6 + $0x360] sm:$0xff]
  %v8415 = vld [vmem:[%s6 + $0x368] sm:$0xff]
  %v8416 = vld [vmem:[%s6 + $0x370] sm:$0xff]
  %v8417 = vld [vmem:[%s6 + $0x378] sm:$0xff]
  %v8418 = vld [vmem:[%s6 + $0x380] sm:$0xff]
  %v8419 = vld [vmem:[%s6 + $0x388] sm:$0xff]
  %v8420 = vld [vmem:[%s6 + $0x390] sm:$0xff]
  %v8421 = vld [vmem:[%s6 + $0x398] sm:$0xff]
  %v8422 = vld [vmem:[%s6 + $0x3a0] sm:$0xff]
  %v8423 = vld [vmem:[%s6 + $0x3a8] sm:$0xff]
  %v8424 = vld [vmem:[%s6 + $0x3b0] sm:$0xff]
  %v8425 = vld [vmem:[%s6 + $0x3b8] sm:$0xff]
  %v8426 = vld [vmem:[%s6 + $0x3c0] sm:$0xff]
  %v8427 = vld [vmem:[%s6 + $0x3c8] sm:$0xff]
  %v8428 = vld [vmem:[%s6 + $0x3d0] sm:$0xff]
  %v8429 = vld [vmem:[%s6 + $0x3d8] sm:$0xff]
  %v8430 = vld [vmem:[%s6 + $0x3e0] sm:$0xff]
  %v8431 = vld [vmem:[%s6 + $0x3e8] sm:$0xff]
  %v8432 = vld [vmem:[%s6 + $0x3f0] sm:$0xff]
  %v8433 = vld [vmem:[%s6 + $0x3f8] sm:$0xff]
  %8434 = vmatprep.subr.mxu0 0.0
  %8435 = vmatpush1.msra.mxu0 %v8321
  %8436 = vmatprep.subr.mxu0 0.0
  %8437 = vmatpush1.msra.mxu0 %v8320
  %8438 = vmatprep.subr.mxu0 0.0
  %8439 = vmatpush1.msra.mxu0 %v8319
  %8440 = vmatprep.subr.mxu0 0.0
  %8441 = vmatpush1.msra.mxu0 %v8318
  %8442 = vmatprep.subr.mxu0 0.0
  %8443 = vmatpush1.msra.mxu0 %v8317
  %8444 = vmatprep.subr.mxu0 0.0
  %8445 = vmatpush1.msra.mxu0 %v8316
  %8446 = vmatprep.subr.mxu0 0.0
  %8447 = vmatpush1.msra.mxu0 %v8315
  %8448 = vmatprep.subr.mxu0 0.0
  %8449 = vmatpush1.msra.mxu0 %v8314
  %8450 = vmatprep.subr.mxu0 0.0
  %8451 = vmatpush1.msra.mxu0 %v8313
  %8452 = vmatprep.subr.mxu0 0.0
  %8453 = vmatpush1.msra.mxu0 %v8312
  %8454 = vmatprep.subr.mxu0 0.0
  %8455 = vmatpush1.msra.mxu0 %v8311
  %8456 = vmatprep.subr.mxu0 0.0
  %8457 = vmatpush1.msra.mxu0 %v8310
  %8458 = vmatprep.subr.mxu0 0.0
  %8459 = vmatpush1.msra.mxu0 %v8309
  %8460 = vmatprep.subr.mxu0 0.0
  %8461 = vmatpush1.msra.mxu0 %v8308
  %8462 = vmatprep.subr.mxu0 0.0
  %8463 = vmatpush1.msra.mxu0 %v8307
  %8464 = vmatprep.subr.mxu0 0.0
  %8465 = vmatpush1.msra.mxu0 %v8306
  %8466 = vmatprep.subr.mxu0 0.0
  %8467 = vmatpush2.msra.mxu0 %v8337
  %8468 = vmatprep.subr.mxu0 0.0
  %8469 = vmatpush2.msra.mxu0 %v8336
  %8470 = vmatprep.subr.mxu0 0.0
  %8471 = vmatpush2.msra.mxu0 %v8335
  %8472 = vmatprep.subr.mxu0 0.0
  %8473 = vmatpush2.msra.mxu0 %v8334
  %8474 = vmatprep.subr.mxu0 0.0
  %8475 = vmatpush2.msra.mxu0 %v8333
  %8476 = vmatprep.subr.mxu0 0.0
  %8477 = vmatpush2.msra.mxu0 %v8332
  %8478 = vmatprep.subr.mxu0 0.0
  %8479 = vmatpush2.msra.mxu0 %v8331
  %8480 = vmatprep.subr.mxu0 0.0
  %8481 = vmatpush2.msra.mxu0 %v8330
  %8482 = vmatprep.subr.mxu0 0.0
  %8483 = vmatpush2.msra.mxu0 %v8329
  %8484 = vmatprep.subr.mxu0 0.0
  %8485 = vmatpush2.msra.mxu0 %v8328
  %8486 = vmatprep.subr.mxu0 0.0
  %8487 = vmatpush2.msra.mxu0 %v8327
  %8488 = vmatprep.subr.mxu0 0.0
  %8489 = vmatpush2.msra.mxu0 %v8326
  %8490 = vmatprep.subr.mxu0 0.0
  %8491 = vmatpush2.msra.mxu0 %v8325
  %8492 = vmatprep.subr.mxu0 0.0
  %8493 = vmatpush2.msra.mxu0 %v8324
  %8494 = vmatprep.subr.mxu0 0.0
  %8495 = vmatpush2.msra.mxu0 %v8323
  %8496 = vmatprep.subr.mxu0 0.0
  %8497 = vmatpush2.msra.mxu0 %v8322
  %8498 = vmatprep.mubr.f32.mxu0 %v7803
  %8499 = vmatmul.mubr.f32.gmra.mxu0 %v7802
  %v8500 = vpop.f32.mrf.mxu0
  %v8501 = vadd.f32 0.0, %v8500
  %v8502 = vpop.f32.mrf.mxu0
  %8503 = vdwg.mxu0
  %8504 = vmatprep.subr.mxu0 0.0
  %8505 = vmatpush1.msra.mxu0 %v8353
  %8506 = vmatprep.subr.mxu0 0.0
  %8507 = vmatpush1.msra.mxu0 %v8352
  %8508 = vmatprep.subr.mxu0 0.0
  %8509 = vmatpush1.msra.mxu0 %v8351
  %8510 = vmatprep.subr.mxu0 0.0
  %8511 = vmatpush1.msra.mxu0 %v8350
  %8512 = vmatprep.subr.mxu0 0.0
  %8513 = vmatpush1.msra.mxu0 %v8349
  %8514 = vmatprep.subr.mxu0 0.0
  %8515 = vmatpush1.msra.mxu0 %v8348
  %8516 = vmatprep.subr.mxu0 0.0
  %8517 = vmatpush1.msra.mxu0 %v8347
  %8518 = vmatprep.subr.mxu0 0.0
  %8519 = vmatpush1.msra.mxu0 %v8346
  %8520 = vmatprep.subr.mxu0 0.0
  %8521 = vmatpush1.msra.mxu0 %v8345
  %8522 = vmatprep.subr.mxu0 0.0
  %8523 = vmatpush1.msra.mxu0 %v8344
  %8524 = vmatprep.subr.mxu0 0.0
  %8525 = vmatpush1.msra.mxu0 %v8343
  %8526 = vmatprep.subr.mxu0 0.0
  %8527 = vmatpush1.msra.mxu0 %v8342
  %8528 = vmatprep.subr.mxu0 0.0
  %8529 = vmatpush1.msra.mxu0 %v8341
  %8530 = vmatprep.subr.mxu0 0.0
  %8531 = vmatpush1.msra.mxu0 %v8340
  %8532 = vmatprep.subr.mxu0 0.0
  %8533 = vmatpush1.msra.mxu0 %v8339
  %8534 = vmatprep.subr.mxu0 0.0
  %8535 = vmatpush1.msra.mxu0 %v8338
  %8536 = vmatprep.subr.mxu0 0.0
  %8537 = vmatpush2.msra.mxu0 %v8369
  %8538 = vmatprep.subr.mxu0 0.0
  %8539 = vmatpush2.msra.mxu0 %v8368
  %8540 = vmatprep.subr.mxu0 0.0
  %8541 = vmatpush2.msra.mxu0 %v8367
  %8542 = vmatprep.subr.mxu0 0.0
  %8543 = vmatpush2.msra.mxu0 %v8366
  %8544 = vmatprep.subr.mxu0 0.0
  %8545 = vmatpush2.msra.mxu0 %v8365
  %8546 = vmatprep.subr.mxu0 0.0
  %8547 = vmatpush2.msra.mxu0 %v8364
  %8548 = vmatprep.subr.mxu0 0.0
  %8549 = vmatpush2.msra.mxu0 %v8363
  %8550 = vmatprep.subr.mxu0 0.0
  %8551 = vmatpush2.msra.mxu0 %v8362
  %8552 = vmatprep.subr.mxu0 0.0
  %8553 = vmatpush2.msra.mxu0 %v8361
  %8554 = vmatprep.subr.mxu0 0.0
  %8555 = vmatpush2.msra.mxu0 %v8360
  %8556 = vmatprep.subr.mxu0 0.0
  %8557 = vmatpush2.msra.mxu0 %v8359
  %8558 = vmatprep.subr.mxu0 0.0
  %8559 = vmatpush2.msra.mxu0 %v8358
  %8560 = vmatprep.subr.mxu0 0.0
  %8561 = vmatpush2.msra.mxu0 %v8357
  %8562 = vmatprep.subr.mxu0 0.0
  %8563 = vmatpush2.msra.mxu0 %v8356
  %8564 = vmatprep.subr.mxu0 0.0
  %8565 = vmatpush2.msra.mxu0 %v8355
  %8566 = vmatprep.subr.mxu0 0.0
  %8567 = vmatpush2.msra.mxu0 %v8354
  %8568 = vmatprep.mubr.f32.mxu0 %v7805
  %8569 = vmatmul.mubr.f32.gmra.mxu0 %v7804
  %v8570 = vpop.f32.mrf.mxu0
  %v8571 = vadd.f32 %v8501, %v8570
  %v8572 = vpop.f32.mrf.mxu0
  %8573 = vdwg.mxu0
  %8574 = vmatprep.subr.mxu0 0.0
  %8575 = vmatpush1.msra.mxu0 %v8385
  %8576 = vmatprep.subr.mxu0 0.0
  %8577 = vmatpush1.msra.mxu0 %v8384
  %8578 = vmatprep.subr.mxu0 0.0
  %8579 = vmatpush1.msra.mxu0 %v8383
  %8580 = vmatprep.subr.mxu0 0.0
  %8581 = vmatpush1.msra.mxu0 %v8382
  %8582 = vmatprep.subr.mxu0 0.0
  %8583 = vmatpush1.msra.mxu0 %v8381
  %8584 = vmatprep.subr.mxu0 0.0
  %8585 = vmatpush1.msra.mxu0 %v8380
  %8586 = vmatprep.subr.mxu0 0.0
  %8587 = vmatpush1.msra.mxu0 %v8379
  %8588 = vmatprep.subr.mxu0 0.0
  %8589 = vmatpush1.msra.mxu0 %v8378
  %8590 = vmatprep.subr.mxu0 0.0
  %8591 = vmatpush1.msra.mxu0 %v8377
  %8592 = vmatprep.subr.mxu0 0.0
  %8593 = vmatpush1.msra.mxu0 %v8376
  %8594 = vmatprep.subr.mxu0 0.0
  %8595 = vmatpush1.msra.mxu0 %v8375
  %8596 = vmatprep.subr.mxu0 0.0
  %8597 = vmatpush1.msra.mxu0 %v8374
  %8598 = vmatprep.subr.mxu0 0.0
  %8599 = vmatpush1.msra.mxu0 %v8373
  %8600 = vmatprep.subr.mxu0 0.0
  %8601 = vmatpush1.msra.mxu0 %v8372
  %8602 = vmatprep.subr.mxu0 0.0
  %8603 = vmatpush1.msra.mxu0 %v8371
  %8604 = vmatprep.subr.mxu0 0.0
  %8605 = vmatpush1.msra.mxu0 %v8370
  %8606 = vmatprep.subr.mxu0 0.0
  %8607 = vmatpush2.msra.mxu0 %v8401
  %8608 = vmatprep.subr.mxu0 0.0
  %8609 = vmatpush2.msra.mxu0 %v8400
  %8610 = vmatprep.subr.mxu0 0.0
  %8611 = vmatpush2.msra.mxu0 %v8399
  %8612 = vmatprep.subr.mxu0 0.0
  %8613 = vmatpush2.msra.mxu0 %v8398
  %8614 = vmatprep.subr.mxu0 0.0
  %8615 = vmatpush2.msra.mxu0 %v8397
  %8616 = vmatprep.subr.mxu0 0.0
  %8617 = vmatpush2.msra.mxu0 %v8396
  %8618 = vmatprep.subr.mxu0 0.0
  %8619 = vmatpush2.msra.mxu0 %v8395
  %8620 = vmatprep.subr.mxu0 0.0
  %8621 = vmatpush2.msra.mxu0 %v8394
  %8622 = vmatprep.subr.mxu0 0.0
  %8623 = vmatpush2.msra.mxu0 %v8393
  %8624 = vmatprep.subr.mxu0 0.0
  %8625 = vmatpush2.msra.mxu0 %v8392
  %8626 = vmatprep.subr.mxu0 0.0
  %8627 = vmatpush2.msra.mxu0 %v8391
  %8628 = vmatprep.subr.mxu0 0.0
  %8629 = vmatpush2.msra.mxu0 %v8390
  %8630 = vmatprep.subr.mxu0 0.0
  %8631 = vmatpush2.msra.mxu0 %v8389
  %8632 = vmatprep.subr.mxu0 0.0
  %8633 = vmatpush2.msra.mxu0 %v8388
  %8634 = vmatprep.subr.mxu0 0.0
  %8635 = vmatpush2.msra.mxu0 %v8387
  %8636 = vmatprep.subr.mxu0 0.0
  %8637 = vmatpush2.msra.mxu0 %v8386
  %8638 = vmatprep.mubr.f32.mxu0 %v7807
  %8639 = vmatmul.mubr.f32.gmra.mxu0 %v7806
  %v8640 = vpop.f32.mrf.mxu0
  %v8641 = vadd.f32 %v8571, %v8640
  %v8642 = vpop.f32.mrf.mxu0
  %8643 = vdwg.mxu0
  %8644 = vmatprep.subr.mxu0 0.0
  %8645 = vmatpush1.msra.mxu0 %v8417
  %8646 = vmatprep.subr.mxu0 0.0
  %8647 = vmatpush1.msra.mxu0 %v8416
  %8648 = vmatprep.subr.mxu0 0.0
  %8649 = vmatpush1.msra.mxu0 %v8415
  %8650 = vmatprep.subr.mxu0 0.0
  %8651 = vmatpush1.msra.mxu0 %v8414
  %8652 = vmatprep.subr.mxu0 0.0
  %8653 = vmatpush1.msra.mxu0 %v8413
  %8654 = vmatprep.subr.mxu0 0.0
  %8655 = vmatpush1.msra.mxu0 %v8412
  %8656 = vmatprep.subr.mxu0 0.0
  %8657 = vmatpush1.msra.mxu0 %v8411
  %8658 = vmatprep.subr.mxu0 0.0
  %8659 = vmatpush1.msra.mxu0 %v8410
  %8660 = vmatprep.subr.mxu0 0.0
  %8661 = vmatpush1.msra.mxu0 %v8409
  %8662 = vmatprep.subr.mxu0 0.0
  %8663 = vmatpush1.msra.mxu0 %v8408
  %8664 = vmatprep.subr.mxu0 0.0
  %8665 = vmatpush1.msra.mxu0 %v8407
  %8666 = vmatprep.subr.mxu0 0.0
  %8667 = vmatpush1.msra.mxu0 %v8406
  %8668 = vmatprep.subr.mxu0 0.0
  %8669 = vmatpush1.msra.mxu0 %v8405
  %8670 = vmatprep.subr.mxu0 0.0
  %8671 = vmatpush1.msra.mxu0 %v8404
  %8672 = vmatprep.subr.mxu0 0.0
  %8673 = vmatpush1.msra.mxu0 %v8403
  %8674 = vmatprep.subr.mxu0 0.0
  %8675 = vmatpush1.msra.mxu0 %v8402
  %8676 = vmatprep.subr.mxu0 0.0
  %8677 = vmatpush2.msra.mxu0 %v8433
  %8678 = vmatprep.subr.mxu0 0.0
  %8679 = vmatpush2.msra.mxu0 %v8432
  %8680 = vmatprep.subr.mxu0 0.0
  %8681 = vmatpush2.msra.mxu0 %v8431
  %8682 = vmatprep.subr.mxu0 0.0
  %8683 = vmatpush2.msra.mxu0 %v8430
  %8684 = vmatprep.subr.mxu0 0.0
  %8685 = vmatpush2.msra.mxu0 %v8429
  %8686 = vmatprep.subr.mxu0 0.0
  %8687 = vmatpush2.msra.mxu0 %v8428
  %8688 = vmatprep.subr.mxu0 0.0
  %8689 = vmatpush2.msra.mxu0 %v8427
  %8690 = vmatprep.subr.mxu0 0.0
  %8691 = vmatpush2.msra.mxu0 %v8426
  %8692 = vmatprep.subr.mxu0 0.0
  %8693 = vmatpush2.msra.mxu0 %v8425
  %8694 = vmatprep.subr.mxu0 0.0
  %8695 = vmatpush2.msra.mxu0 %v8424
  %8696 = vmatprep.subr.mxu0 0.0
  %8697 = vmatpush2.msra.mxu0 %v8423
  %8698 = vmatprep.subr.mxu0 0.0
  %8699 = vmatpush2.msra.mxu0 %v8422
  %8700 = vmatprep.subr.mxu0 0.0
  %8701 = vmatpush2.msra.mxu0 %v8421
  %8702 = vmatprep.subr.mxu0 0.0
  %8703 = vmatpush2.msra.mxu0 %v8420
  %8704 = vmatprep.subr.mxu0 0.0
  %8705 = vmatpush2.msra.mxu0 %v8419
  %8706 = vmatprep.subr.mxu0 0.0
  %8707 = vmatpush2.msra.mxu0 %v8418
  %8708 = vmatprep.mubr.f32.mxu0 %v7809
  %8709 = vmatmul.mubr.f32.gmra.mxu0 %v7808
  %v8710 = vpop.f32.mrf.mxu0
  %v8711 = vadd.f32 %v8641, %v8710
  %v8712 = vpop.f32.mrf.mxu0
  %8713 = vdwg.mxu0
  %v8714 = vld [vmem:[%s7] sm:$0xff]
  %v8715 = vld [vmem:[%s7 + $0x8] sm:$0xff]
  %v8716 = vld [vmem:[%s7 + $0x10] sm:$0xff]
  %v8717 = vld [vmem:[%s7 + $0x18] sm:$0xff]
  %v8718 = vld [vmem:[%s7 + $0x20] sm:$0xff]
  %v8719 = vld [vmem:[%s7 + $0x28] sm:$0xff]
  %v8720 = vld [vmem:[%s7 + $0x30] sm:$0xff]
  %v8721 = vld [vmem:[%s7 + $0x38] sm:$0xff]
  %v8722 = vld [vmem:[%s7 + $0x40] sm:$0xff]
  %v8723 = vld [vmem:[%s7 + $0x48] sm:$0xff]
  %v8724 = vld [vmem:[%s7 + $0x50] sm:$0xff]
  %v8725 = vld [vmem:[%s7 + $0x58] sm:$0xff]
  %v8726 = vld [vmem:[%s7 + $0x60] sm:$0xff]
  %v8727 = vld [vmem:[%s7 + $0x68] sm:$0xff]
  %v8728 = vld [vmem:[%s7 + $0x70] sm:$0xff]
  %v8729 = vld [vmem:[%s7 + $0x78] sm:$0xff]
  %v8730 = vld [vmem:[%s7 + $0x80] sm:$0xff]
  %v8731 = vld [vmem:[%s7 + $0x88] sm:$0xff]
  %v8732 = vld [vmem:[%s7 + $0x90] sm:$0xff]
  %v8733 = vld [vmem:[%s7 + $0x98] sm:$0xff]
  %v8734 = vld [vmem:[%s7 + $0xa0] sm:$0xff]
  %v8735 = vld [vmem:[%s7 + $0xa8] sm:$0xff]
  %v8736 = vld [vmem:[%s7 + $0xb0] sm:$0xff]
  %v8737 = vld [vmem:[%s7 + $0xb8] sm:$0xff]
  %v8738 = vld [vmem:[%s7 + $0xc0] sm:$0xff]
  %v8739 = vld [vmem:[%s7 + $0xc8] sm:$0xff]
  %v8740 = vld [vmem:[%s7 + $0xd0] sm:$0xff]
  %v8741 = vld [vmem:[%s7 + $0xd8] sm:$0xff]
  %v8742 = vld [vmem:[%s7 + $0xe0] sm:$0xff]
  %v8743 = vld [vmem:[%s7 + $0xe8] sm:$0xff]
  %v8744 = vld [vmem:[%s7 + $0xf0] sm:$0xff]
  %v8745 = vld [vmem:[%s7 + $0xf8] sm:$0xff]
  %v8746 = vld [vmem:[%s7 + $0x100] sm:$0xff]
  %v8747 = vld [vmem:[%s7 + $0x108] sm:$0xff]
  %v8748 = vld [vmem:[%s7 + $0x110] sm:$0xff]
  %v8749 = vld [vmem:[%s7 + $0x118] sm:$0xff]
  %v8750 = vld [vmem:[%s7 + $0x120] sm:$0xff]
  %v8751 = vld [vmem:[%s7 + $0x128] sm:$0xff]
  %v8752 = vld [vmem:[%s7 + $0x130] sm:$0xff]
  %v8753 = vld [vmem:[%s7 + $0x138] sm:$0xff]
  %v8754 = vld [vmem:[%s7 + $0x140] sm:$0xff]
  %v8755 = vld [vmem:[%s7 + $0x148] sm:$0xff]
  %v8756 = vld [vmem:[%s7 + $0x150] sm:$0xff]
  %v8757 = vld [vmem:[%s7 + $0x158] sm:$0xff]
  %v8758 = vld [vmem:[%s7 + $0x160] sm:$0xff]
  %v8759 = vld [vmem:[%s7 + $0x168] sm:$0xff]
  %v8760 = vld [vmem:[%s7 + $0x170] sm:$0xff]
  %v8761 = vld [vmem:[%s7 + $0x178] sm:$0xff]
  %v8762 = vld [vmem:[%s7 + $0x180] sm:$0xff]
  %v8763 = vld [vmem:[%s7 + $0x188] sm:$0xff]
  %v8764 = vld [vmem:[%s7 + $0x190] sm:$0xff]
  %v8765 = vld [vmem:[%s7 + $0x198] sm:$0xff]
  %v8766 = vld [vmem:[%s7 + $0x1a0] sm:$0xff]
  %v8767 = vld [vmem:[%s7 + $0x1a8] sm:$0xff]
  %v8768 = vld [vmem:[%s7 + $0x1b0] sm:$0xff]
  %v8769 = vld [vmem:[%s7 + $0x1b8] sm:$0xff]
  %v8770 = vld [vmem:[%s7 + $0x1c0] sm:$0xff]
  %v8771 = vld [vmem:[%s7 + $0x1c8] sm:$0xff]
  %v8772 = vld [vmem:[%s7 + $0x1d0] sm:$0xff]
  %v8773 = vld [vmem:[%s7 + $0x1d8] sm:$0xff]
  %v8774 = vld [vmem:[%s7 + $0x1e0] sm:$0xff]
  %v8775 = vld [vmem:[%s7 + $0x1e8] sm:$0xff]
  %v8776 = vld [vmem:[%s7 + $0x1f0] sm:$0xff]
  %v8777 = vld [vmem:[%s7 + $0x1f8] sm:$0xff]
  %v8778 = vld [vmem:[%s7 + $0x200] sm:$0xff]
  %v8779 = vld [vmem:[%s7 + $0x208] sm:$0xff]
  %v8780 = vld [vmem:[%s7 + $0x210] sm:$0xff]
  %v8781 = vld [vmem:[%s7 + $0x218] sm:$0xff]
  %v8782 = vld [vmem:[%s7 + $0x220] sm:$0xff]
  %v8783 = vld [vmem:[%s7 + $0x228] sm:$0xff]
  %v8784 = vld [vmem:[%s7 + $0x230] sm:$0xff]
  %v8785 = vld [vmem:[%s7 + $0x238] sm:$0xff]
  %v8786 = vld [vmem:[%s7 + $0x240] sm:$0xff]
  %v8787 = vld [vmem:[%s7 + $0x248] sm:$0xff]
  %v8788 = vld [vmem:[%s7 + $0x250] sm:$0xff]
  %v8789 = vld [vmem:[%s7 + $0x258] sm:$0xff]
  %v8790 = vld [vmem:[%s7 + $0x260] sm:$0xff]
  %v8791 = vld [vmem:[%s7 + $0x268] sm:$0xff]
  %v8792 = vld [vmem:[%s7 + $0x270] sm:$0xff]
  %v8793 = vld [vmem:[%s7 + $0x278] sm:$0xff]
  %v8794 = vld [vmem:[%s7 + $0x280] sm:$0xff]
  %v8795 = vld [vmem:[%s7 + $0x288] sm:$0xff]
  %v8796 = vld [vmem:[%s7 + $0x290] sm:$0xff]
  %v8797 = vld [vmem:[%s7 + $0x298] sm:$0xff]
  %v8798 = vld [vmem:[%s7 + $0x2a0] sm:$0xff]
  %v8799 = vld [vmem:[%s7 + $0x2a8] sm:$0xff]
  %v8800 = vld [vmem:[%s7 + $0x2b0] sm:$0xff]
  %v8801 = vld [vmem:[%s7 + $0x2b8] sm:$0xff]
  %v8802 = vld [vmem:[%s7 + $0x2c0] sm:$0xff]
  %v8803 = vld [vmem:[%s7 + $0x2c8] sm:$0xff]
  %v8804 = vld [vmem:[%s7 + $0x2d0] sm:$0xff]
  %v8805 = vld [vmem:[%s7 + $0x2d8] sm:$0xff]
  %v8806 = vld [vmem:[%s7 + $0x2e0] sm:$0xff]
  %v8807 = vld [vmem:[%s7 + $0x2e8] sm:$0xff]
  %v8808 = vld [vmem:[%s7 + $0x2f0] sm:$0xff]
  %v8809 = vld [vmem:[%s7 + $0x2f8] sm:$0xff]
  %v8810 = vld [vmem:[%s7 + $0x300] sm:$0xff]
  %v8811 = vld [vmem:[%s7 + $0x308] sm:$0xff]
  %v8812 = vld [vmem:[%s7 + $0x310] sm:$0xff]
  %v8813 = vld [vmem:[%s7 + $0x318] sm:$0xff]
  %v8814 = vld [vmem:[%s7 + $0x320] sm:$0xff]
  %v8815 = vld [vmem:[%s7 + $0x328] sm:$0xff]
  %v8816 = vld [vmem:[%s7 + $0x330] sm:$0xff]
  %v8817 = vld [vmem:[%s7 + $0x338] sm:$0xff]
  %v8818 = vld [vmem:[%s7 + $0x340] sm:$0xff]
  %v8819 = vld [vmem:[%s7 + $0x348] sm:$0xff]
  %v8820 = vld [vmem:[%s7 + $0x350] sm:$0xff]
  %v8821 = vld [vmem:[%s7 + $0x358] sm:$0xff]
  %v8822 = vld [vmem:[%s7 + $0x360] sm:$0xff]
  %v8823 = vld [vmem:[%s7 + $0x368] sm:$0xff]
  %v8824 = vld [vmem:[%s7 + $0x370] sm:$0xff]
  %v8825 = vld [vmem:[%s7 + $0x378] sm:$0xff]
  %v8826 = vld [vmem:[%s7 + $0x380] sm:$0xff]
  %v8827 = vld [vmem:[%s7 + $0x388] sm:$0xff]
  %v8828 = vld [vmem:[%s7 + $0x390] sm:$0xff]
  %v8829 = vld [vmem:[%s7 + $0x398] sm:$0xff]
  %v8830 = vld [vmem:[%s7 + $0x3a0] sm:$0xff]
  %v8831 = vld [vmem:[%s7 + $0x3a8] sm:$0xff]
  %v8832 = vld [vmem:[%s7 + $0x3b0] sm:$0xff]
  %v8833 = vld [vmem:[%s7 + $0x3b8] sm:$0xff]
  %v8834 = vld [vmem:[%s7 + $0x3c0] sm:$0xff]
  %v8835 = vld [vmem:[%s7 + $0x3c8] sm:$0xff]
  %v8836 = vld [vmem:[%s7 + $0x3d0] sm:$0xff]
  %v8837 = vld [vmem:[%s7 + $0x3d8] sm:$0xff]
  %v8838 = vld [vmem:[%s7 + $0x3e0] sm:$0xff]
  %v8839 = vld [vmem:[%s7 + $0x3e8] sm:$0xff]
  %v8840 = vld [vmem:[%s7 + $0x3f0] sm:$0xff]
  %v8841 = vld [vmem:[%s7 + $0x3f8] sm:$0xff]
  %8842 = vmatprep.subr.mxu0 0.0
  %8843 = vmatpush1.msra.mxu0 %v8729
  %8844 = vmatprep.subr.mxu0 0.0
  %8845 = vmatpush1.msra.mxu0 %v8728
  %8846 = vmatprep.subr.mxu0 0.0
  %8847 = vmatpush1.msra.mxu0 %v8727
  %8848 = vmatprep.subr.mxu0 0.0
  %8849 = vmatpush1.msra.mxu0 %v8726
  %8850 = vmatprep.subr.mxu0 0.0
  %8851 = vmatpush1.msra.mxu0 %v8725
  %8852 = vmatprep.subr.mxu0 0.0
  %8853 = vmatpush1.msra.mxu0 %v8724
  %8854 = vmatprep.subr.mxu0 0.0
  %8855 = vmatpush1.msra.mxu0 %v8723
  %8856 = vmatprep.subr.mxu0 0.0
  %8857 = vmatpush1.msra.mxu0 %v8722
  %8858 = vmatprep.subr.mxu0 0.0
  %8859 = vmatpush1.msra.mxu0 %v8721
  %8860 = vmatprep.subr.mxu0 0.0
  %8861 = vmatpush1.msra.mxu0 %v8720
  %8862 = vmatprep.subr.mxu0 0.0
  %8863 = vmatpush1.msra.mxu0 %v8719
  %8864 = vmatprep.subr.mxu0 0.0
  %8865 = vmatpush1.msra.mxu0 %v8718
  %8866 = vmatprep.subr.mxu0 0.0
  %8867 = vmatpush1.msra.mxu0 %v8717
  %8868 = vmatprep.subr.mxu0 0.0
  %8869 = vmatpush1.msra.mxu0 %v8716
  %8870 = vmatprep.subr.mxu0 0.0
  %8871 = vmatpush1.msra.mxu0 %v8715
  %8872 = vmatprep.subr.mxu0 0.0
  %8873 = vmatpush1.msra.mxu0 %v8714
  %8874 = vmatprep.subr.mxu0 0.0
  %8875 = vmatpush2.msra.mxu0 %v8745
  %8876 = vmatprep.subr.mxu0 0.0
  %8877 = vmatpush2.msra.mxu0 %v8744
  %8878 = vmatprep.subr.mxu0 0.0
  %8879 = vmatpush2.msra.mxu0 %v8743
  %8880 = vmatprep.subr.mxu0 0.0
  %8881 = vmatpush2.msra.mxu0 %v8742
  %8882 = vmatprep.subr.mxu0 0.0
  %8883 = vmatpush2.msra.mxu0 %v8741
  %8884 = vmatprep.subr.mxu0 0.0
  %8885 = vmatpush2.msra.mxu0 %v8740
  %8886 = vmatprep.subr.mxu0 0.0
  %8887 = vmatpush2.msra.mxu0 %v8739
  %8888 = vmatprep.subr.mxu0 0.0
  %8889 = vmatpush2.msra.mxu0 %v8738
  %8890 = vmatprep.subr.mxu0 0.0
  %8891 = vmatpush2.msra.mxu0 %v8737
  %8892 = vmatprep.subr.mxu0 0.0
  %8893 = vmatpush2.msra.mxu0 %v8736
  %8894 = vmatprep.subr.mxu0 0.0
  %8895 = vmatpush2.msra.mxu0 %v8735
  %8896 = vmatprep.subr.mxu0 0.0
  %8897 = vmatpush2.msra.mxu0 %v8734
  %8898 = vmatprep.subr.mxu0 0.0
  %8899 = vmatpush2.msra.mxu0 %v8733
  %8900 = vmatprep.subr.mxu0 0.0
  %8901 = vmatpush2.msra.mxu0 %v8732
  %8902 = vmatprep.subr.mxu0 0.0
  %8903 = vmatpush2.msra.mxu0 %v8731
  %8904 = vmatprep.subr.mxu0 0.0
  %8905 = vmatpush2.msra.mxu0 %v8730
  %8906 = vmatprep.mubr.f32.mxu0 %v8299
  %8907 = vmatmul.mubr.f32.gmra.mxu0 %v8298
  %v8908 = vpop.f32.mrf.mxu0
  %v8909 = vadd.f32 0.0, %v8908
  %v8910 = vpop.f32.mrf.mxu0
  %8911 = vdwg.mxu0
  %8912 = vmatprep.subr.mxu0 0.0
  %8913 = vmatpush1.msra.mxu0 %v8761
  %8914 = vmatprep.subr.mxu0 0.0
  %8915 = vmatpush1.msra.mxu0 %v8760
  %8916 = vmatprep.subr.mxu0 0.0
  %8917 = vmatpush1.msra.mxu0 %v8759
  %8918 = vmatprep.subr.mxu0 0.0
  %8919 = vmatpush1.msra.mxu0 %v8758
  %8920 = vmatprep.subr.mxu0 0.0
  %8921 = vmatpush1.msra.mxu0 %v8757
  %8922 = vmatprep.subr.mxu0 0.0
  %8923 = vmatpush1.msra.mxu0 %v8756
  %8924 = vmatprep.subr.mxu0 0.0
  %8925 = vmatpush1.msra.mxu0 %v8755
  %8926 = vmatprep.subr.mxu0 0.0
  %8927 = vmatpush1.msra.mxu0 %v8754
  %8928 = vmatprep.subr.mxu0 0.0
  %8929 = vmatpush1.msra.mxu0 %v8753
  %8930 = vmatprep.subr.mxu0 0.0
  %8931 = vmatpush1.msra.mxu0 %v8752
  %8932 = vmatprep.subr.mxu0 0.0
  %8933 = vmatpush1.msra.mxu0 %v8751
  %8934 = vmatprep.subr.mxu0 0.0
  %8935 = vmatpush1.msra.mxu0 %v8750
  %8936 = vmatprep.subr.mxu0 0.0
  %8937 = vmatpush1.msra.mxu0 %v8749
  %8938 = vmatprep.subr.mxu0 0.0
  %8939 = vmatpush1.msra.mxu0 %v8748
  %8940 = vmatprep.subr.mxu0 0.0
  %8941 = vmatpush1.msra.mxu0 %v8747
  %8942 = vmatprep.subr.mxu0 0.0
  %8943 = vmatpush1.msra.mxu0 %v8746
  %8944 = vmatprep.subr.mxu0 0.0
  %8945 = vmatpush2.msra.mxu0 %v8777
  %8946 = vmatprep.subr.mxu0 0.0
  %8947 = vmatpush2.msra.mxu0 %v8776
  %8948 = vmatprep.subr.mxu0 0.0
  %8949 = vmatpush2.msra.mxu0 %v8775
  %8950 = vmatprep.subr.mxu0 0.0
  %8951 = vmatpush2.msra.mxu0 %v8774
  %8952 = vmatprep.subr.mxu0 0.0
  %8953 = vmatpush2.msra.mxu0 %v8773
  %8954 = vmatprep.subr.mxu0 0.0
  %8955 = vmatpush2.msra.mxu0 %v8772
  %8956 = vmatprep.subr.mxu0 0.0
  %8957 = vmatpush2.msra.mxu0 %v8771
  %8958 = vmatprep.subr.mxu0 0.0
  %8959 = vmatpush2.msra.mxu0 %v8770
  %8960 = vmatprep.subr.mxu0 0.0
  %8961 = vmatpush2.msra.mxu0 %v8769
  %8962 = vmatprep.subr.mxu0 0.0
  %8963 = vmatpush2.msra.mxu0 %v8768
  %8964 = vmatprep.subr.mxu0 0.0
  %8965 = vmatpush2.msra.mxu0 %v8767
  %8966 = vmatprep.subr.mxu0 0.0
  %8967 = vmatpush2.msra.mxu0 %v8766
  %8968 = vmatprep.subr.mxu0 0.0
  %8969 = vmatpush2.msra.mxu0 %v8765
  %8970 = vmatprep.subr.mxu0 0.0
  %8971 = vmatpush2.msra.mxu0 %v8764
  %8972 = vmatprep.subr.mxu0 0.0
  %8973 = vmatpush2.msra.mxu0 %v8763
  %8974 = vmatprep.subr.mxu0 0.0
  %8975 = vmatpush2.msra.mxu0 %v8762
  %8976 = vmatprep.mubr.f32.mxu0 %v8301
  %8977 = vmatmul.mubr.f32.gmra.mxu0 %v8300
  %v8978 = vpop.f32.mrf.mxu0
  %v8979 = vadd.f32 %v8909, %v8978
  %v8980 = vpop.f32.mrf.mxu0
  %8981 = vdwg.mxu0
  %8982 = vmatprep.subr.mxu0 0.0
  %8983 = vmatpush1.msra.mxu0 %v8793
  %8984 = vmatprep.subr.mxu0 0.0
  %8985 = vmatpush1.msra.mxu0 %v8792
  %8986 = vmatprep.subr.mxu0 0.0
  %8987 = vmatpush1.msra.mxu0 %v8791
  %8988 = vmatprep.subr.mxu0 0.0
  %8989 = vmatpush1.msra.mxu0 %v8790
  %8990 = vmatprep.subr.mxu0 0.0
  %8991 = vmatpush1.msra.mxu0 %v8789
  %8992 = vmatprep.subr.mxu0 0.0
  %8993 = vmatpush1.msra.mxu0 %v8788
  %8994 = vmatprep.subr.mxu0 0.0
  %8995 = vmatpush1.msra.mxu0 %v8787
  %8996 = vmatprep.subr.mxu0 0.0
  %8997 = vmatpush1.msra.mxu0 %v8786
  %8998 = vmatprep.subr.mxu0 0.0
  %8999 = vmatpush1.msra.mxu0 %v8785
  %9000 = vmatprep.subr.mxu0 0.0
  %9001 = vmatpush1.msra.mxu0 %v8784
  %9002 = vmatprep.subr.mxu0 0.0
  %9003 = vmatpush1.msra.mxu0 %v8783
  %9004 = vmatprep.subr.mxu0 0.0
  %9005 = vmatpush1.msra.mxu0 %v8782
  %9006 = vmatprep.subr.mxu0 0.0
  %9007 = vmatpush1.msra.mxu0 %v8781
  %9008 = vmatprep.subr.mxu0 0.0
  %9009 = vmatpush1.msra.mxu0 %v8780
  %9010 = vmatprep.subr.mxu0 0.0
  %9011 = vmatpush1.msra.mxu0 %v8779
  %9012 = vmatprep.subr.mxu0 0.0
  %9013 = vmatpush1.msra.mxu0 %v8778
  %9014 = vmatprep.subr.mxu0 0.0
  %9015 = vmatpush2.msra.mxu0 %v8809
  %9016 = vmatprep.subr.mxu0 0.0
  %9017 = vmatpush2.msra.mxu0 %v8808
  %9018 = vmatprep.subr.mxu0 0.0
  %9019 = vmatpush2.msra.mxu0 %v8807
  %9020 = vmatprep.subr.mxu0 0.0
  %9021 = vmatpush2.msra.mxu0 %v8806
  %9022 = vmatprep.subr.mxu0 0.0
  %9023 = vmatpush2.msra.mxu0 %v8805
  %9024 = vmatprep.subr.mxu0 0.0
  %9025 = vmatpush2.msra.mxu0 %v8804
  %9026 = vmatprep.subr.mxu0 0.0
  %9027 = vmatpush2.msra.mxu0 %v8803
  %9028 = vmatprep.subr.mxu0 0.0
  %9029 = vmatpush2.msra.mxu0 %v8802
  %9030 = vmatprep.subr.mxu0 0.0
  %9031 = vmatpush2.msra.mxu0 %v8801
  %9032 = vmatprep.subr.mxu0 0.0
  %9033 = vmatpush2.msra.mxu0 %v8800
  %9034 = vmatprep.subr.mxu0 0.0
  %9035 = vmatpush2.msra.mxu0 %v8799
  %9036 = vmatprep.subr.mxu0 0.0
  %9037 = vmatpush2.msra.mxu0 %v8798
  %9038 = vmatprep.subr.mxu0 0.0
  %9039 = vmatpush2.msra.mxu0 %v8797
  %9040 = vmatprep.subr.mxu0 0.0
  %9041 = vmatpush2.msra.mxu0 %v8796
  %9042 = vmatprep.subr.mxu0 0.0
  %9043 = vmatpush2.msra.mxu0 %v8795
  %9044 = vmatprep.subr.mxu0 0.0
  %9045 = vmatpush2.msra.mxu0 %v8794
  %9046 = vmatprep.mubr.f32.mxu0 %v8303
  %9047 = vmatmul.mubr.f32.gmra.mxu0 %v8302
  %v9048 = vpop.f32.mrf.mxu0
  %v9049 = vadd.f32 %v8979, %v9048
  %v9050 = vpop.f32.mrf.mxu0
  %9051 = vdwg.mxu0
  %9052 = vmatprep.subr.mxu0 0.0
  %9053 = vmatpush1.msra.mxu0 %v8825
  %9054 = vmatprep.subr.mxu0 0.0
  %9055 = vmatpush1.msra.mxu0 %v8824
  %9056 = vmatprep.subr.mxu0 0.0
  %9057 = vmatpush1.msra.mxu0 %v8823
  %9058 = vmatprep.subr.mxu0 0.0
  %9059 = vmatpush1.msra.mxu0 %v8822
  %9060 = vmatprep.subr.mxu0 0.0
  %9061 = vmatpush1.msra.mxu0 %v8821
  %9062 = vmatprep.subr.mxu0 0.0
  %9063 = vmatpush1.msra.mxu0 %v8820
  %9064 = vmatprep.subr.mxu0 0.0
  %9065 = vmatpush1.msra.mxu0 %v8819
  %9066 = vmatprep.subr.mxu0 0.0
  %9067 = vmatpush1.msra.mxu0 %v8818
  %9068 = vmatprep.subr.mxu0 0.0
  %9069 = vmatpush1.msra.mxu0 %v8817
  %9070 = vmatprep.subr.mxu0 0.0
  %9071 = vmatpush1.msra.mxu0 %v8816
  %9072 = vmatprep.subr.mxu0 0.0
  %9073 = vmatpush1.msra.mxu0 %v8815
  %9074 = vmatprep.subr.mxu0 0.0
  %9075 = vmatpush1.msra.mxu0 %v8814
  %9076 = vmatprep.subr.mxu0 0.0
  %9077 = vmatpush1.msra.mxu0 %v8813
  %9078 = vmatprep.subr.mxu0 0.0
  %9079 = vmatpush1.msra.mxu0 %v8812
  %9080 = vmatprep.subr.mxu0 0.0
  %9081 = vmatpush1.msra.mxu0 %v8811
  %9082 = vmatprep.subr.mxu0 0.0
  %9083 = vmatpush1.msra.mxu0 %v8810
  %9084 = vmatprep.subr.mxu0 0.0
  %9085 = vmatpush2.msra.mxu0 %v8841
  %9086 = vmatprep.subr.mxu0 0.0
  %9087 = vmatpush2.msra.mxu0 %v8840
  %9088 = vmatprep.subr.mxu0 0.0
  %9089 = vmatpush2.msra.mxu0 %v8839
  %9090 = vmatprep.subr.mxu0 0.0
  %9091 = vmatpush2.msra.mxu0 %v8838
  %9092 = vmatprep.subr.mxu0 0.0
  %9093 = vmatpush2.msra.mxu0 %v8837
  %9094 = vmatprep.subr.mxu0 0.0
  %9095 = vmatpush2.msra.mxu0 %v8836
  %9096 = vmatprep.subr.mxu0 0.0
  %9097 = vmatpush2.msra.mxu0 %v8835
  %9098 = vmatprep.subr.mxu0 0.0
  %9099 = vmatpush2.msra.mxu0 %v8834
  %9100 = vmatprep.subr.mxu0 0.0
  %9101 = vmatpush2.msra.mxu0 %v8833
  %9102 = vmatprep.subr.mxu0 0.0
  %9103 = vmatpush2.msra.mxu0 %v8832
  %9104 = vmatprep.subr.mxu0 0.0
  %9105 = vmatpush2.msra.mxu0 %v8831
  %9106 = vmatprep.subr.mxu0 0.0
  %9107 = vmatpush2.msra.mxu0 %v8830
  %9108 = vmatprep.subr.mxu0 0.0
  %9109 = vmatpush2.msra.mxu0 %v8829
  %9110 = vmatprep.subr.mxu0 0.0
  %9111 = vmatpush2.msra.mxu0 %v8828
  %9112 = vmatprep.subr.mxu0 0.0
  %9113 = vmatpush2.msra.mxu0 %v8827
  %9114 = vmatprep.subr.mxu0 0.0
  %9115 = vmatpush2.msra.mxu0 %v8826
  %9116 = vmatprep.mubr.f32.mxu0 %v8305
  %9117 = vmatmul.mubr.f32.gmra.mxu0 %v8304
  %v9118 = vpop.f32.mrf.mxu0
  %v9119 = vadd.f32 %v9049, %v9118
  %v9120 = vpop.f32.mrf.mxu0
  %9121 = vdwg.mxu0
  %v9122 = vld [vmem:[%s1] sm:$0x3]
  %v9123 = vld [vmem:[%s8] sm:$0xff]
  %v9125 = vcombine.high %v9123, %v9123
  %vm9126 = vcmask 31744
  %v9128 = vsel %vm9126, %v9122, 0
  %vm9130 = vcmask 1043456
  %v9131 = vsel %vm9130, %v9123, 0
  %v9133 = vsel %vm9130, %v9125, 0
  %9135 = vmatprep.subr.mxu0 0.0
  %9136 = vmatpush1.msra.mxu0 0.0
  %9137 = vmatprep.subr.mxu0 0.0
  %9138 = vmatpush1.msra.mxu0 0.0
  %9139 = vmatprep.subr.mxu0 0.0
  %9140 = vmatpush1.msra.mxu0 0.0
  %9141 = vmatprep.subr.mxu0 0.0
  %9142 = vmatpush1.msra.mxu0 0.0
  %9143 = vmatprep.subr.mxu0 0.0
  %9144 = vmatpush1.msra.mxu0 0.0
  %9145 = vmatprep.subr.mxu0 0.0
  %9146 = vmatpush1.msra.mxu0 0.0
  %9147 = vmatprep.subr.mxu0 0.0
  %9148 = vmatpush1.msra.mxu0 0.0
  %9149 = vmatprep.subr.mxu0 0.0
  %9150 = vmatpush1.msra.mxu0 0.0
  %9151 = vmatprep.subr.mxu0 0.0
  %9152 = vmatpush1.msra.mxu0 0.0
  %9153 = vmatprep.subr.mxu0 0.0
  %9154 = vmatpush1.msra.mxu0 0.0
  %9155 = vmatprep.subr.mxu0 0.0
  %9156 = vmatpush1.msra.mxu0 0.0
  %9157 = vmatprep.subr.mxu0 0.0
  %9158 = vmatpush1.msra.mxu0 0.0
  %9159 = vmatprep.subr.mxu0 0.0
  %9160 = vmatpush1.msra.mxu0 0.0
  %9161 = vmatprep.subr.mxu0 0.0
  %9162 = vmatpush1.msra.mxu0 0.0
  %9163 = vmatprep.subr.mxu0 0.0
  %9164 = vmatpush1.msra.mxu0 0.0
  %9165 = vmatprep.subr.mxu0 %v9133
  %9166 = vmatpush1.msra.mxu0 %v9131
  %9167 = vmatprep.subr.mxu0 0.0
  %9168 = vmatpush2.msra.mxu0 0.0
  %9169 = vmatprep.subr.mxu0 0.0
  %9170 = vmatpush2.msra.mxu0 0.0
  %9171 = vmatprep.subr.mxu0 0.0
  %9172 = vmatpush2.msra.mxu0 0.0
  %9173 = vmatprep.subr.mxu0 0.0
  %9174 = vmatpush2.msra.mxu0 0.0
  %9175 = vmatprep.subr.mxu0 0.0
  %9176 = vmatpush2.msra.mxu0 0.0
  %9177 = vmatprep.subr.mxu0 0.0
  %9178 = vmatpush2.msra.mxu0 0.0
  %9179 = vmatprep.subr.mxu0 0.0
  %9180 = vmatpush2.msra.mxu0 0.0
  %9181 = vmatprep.subr.mxu0 0.0
  %9182 = vmatpush2.msra.mxu0 0.0
  %9183 = vmatprep.subr.mxu0 0.0
  %9184 = vmatpush2.msra.mxu0 0.0
  %9185 = vmatprep.subr.mxu0 0.0
  %9186 = vmatpush2.msra.mxu0 0.0
  %9187 = vmatprep.subr.mxu0 0.0
  %9188 = vmatpush2.msra.mxu0 0.0
  %9189 = vmatprep.subr.mxu0 0.0
  %9190 = vmatpush2.msra.mxu0 0.0
  %9191 = vmatprep.subr.mxu0 0.0
  %9192 = vmatpush2.msra.mxu0 0.0
  %9193 = vmatprep.subr.mxu0 0.0
  %9194 = vmatpush2.msra.mxu0 0.0
  %9195 = vmatprep.subr.mxu0 0.0
  %9196 = vmatpush2.msra.mxu0 0.0
  %9197 = vmatprep.subr.mxu0 0.0
  %9198 = vmatpush2.msra.mxu0 0.0
  %9199 = vmatprep.mubr.f32.mxu0 0.0
  %9200 = vmatmul.mubr.f32.gmra.mxu0 %v9128
  %v9201 = vpop.f32.mrf.mxu0
  %v9202 = vadd.f32 0.0, %v9201
  %v9203 = vpop.f32.mrf.mxu0
  %v9204 = vadd.f32 0.0, %v9203
  %9205 = vdwg.mxu0
  %v9206 = vadd.f32 %v8711, %v9202
  %v9207 = vadd.f32 %v9119, %v9204
  %v9208 = vld [vmem:[%s9] sm:$0x3]
  %v9210 = vlaneseq
  %v9211 = vshrl.u32 %v9210, 7
  %v9212 = vsub.s32 0, %v9211
  %v9213 = vrot.slane %v9208, %v9212
  %v9214 = vlaneseq
  %v9215 = vshrl.u32 %v9214, 7
  %v9216 = vsub.s32 1, %v9215
  %v9217 = vrot.slane %v9208, %v9216
  %v9220 = vadd.f32 %v9206, %v9213
  %v9221 = vadd.f32 %v9207, %v9217
  %v9222 = vmax.f32 %v9220, 0.0
  %v9223 = vmax.f32 %v9221, 0.0
  %v9224 = vld [vmem:[%s10] sm:$0xff]
  %v9225 = vld [vmem:[%s10 + $0x8] sm:$0xff]
  %v9226 = vld [vmem:[%s10 + $0x10] sm:$0xff]
  %v9227 = vld [vmem:[%s10 + $0x18] sm:$0xff]
  %v9228 = vld [vmem:[%s10 + $0x20] sm:$0xff]
  %v9229 = vld [vmem:[%s10 + $0x28] sm:$0xff]
  %v9230 = vld [vmem:[%s10 + $0x30] sm:$0xff]
  %v9231 = vld [vmem:[%s10 + $0x38] sm:$0xff]
  %v9232 = vld [vmem:[%s10 + $0x40] sm:$0xff]
  %v9233 = vld [vmem:[%s10 + $0x48] sm:$0xff]
  %v9234 = vld [vmem:[%s10 + $0x50] sm:$0xff]
  %v9235 = vld [vmem:[%s10 + $0x58] sm:$0xff]
  %v9236 = vld [vmem:[%s10 + $0x60] sm:$0xff]
  %v9237 = vld [vmem:[%s10 + $0x68] sm:$0xff]
  %v9238 = vld [vmem:[%s10 + $0x70] sm:$0xff]
  %v9239 = vld [vmem:[%s10 + $0x78] sm:$0xff]
  %v9240 = vld [vmem:[%s10 + $0x80] sm:$0xff]
  %v9241 = vld [vmem:[%s10 + $0x88] sm:$0xff]
  %v9242 = vld [vmem:[%s10 + $0x90] sm:$0xff]
  %v9243 = vld [vmem:[%s10 + $0x98] sm:$0xff]
  %v9244 = vld [vmem:[%s10 + $0xa0] sm:$0xff]
  %v9245 = vld [vmem:[%s10 + $0xa8] sm:$0xff]
  %v9246 = vld [vmem:[%s10 + $0xb0] sm:$0xff]
  %v9247 = vld [vmem:[%s10 + $0xb8] sm:$0xff]
  %v9248 = vld [vmem:[%s10 + $0xc0] sm:$0xff]
  %v9249 = vld [vmem:[%s10 + $0xc8] sm:$0xff]
  %v9250 = vld [vmem:[%s10 + $0xd0] sm:$0xff]
  %v9251 = vld [vmem:[%s10 + $0xd8] sm:$0xff]
  %v9252 = vld [vmem:[%s10 + $0xe0] sm:$0xff]
  %v9253 = vld [vmem:[%s10 + $0xe8] sm:$0xff]
  %v9254 = vld [vmem:[%s10 + $0xf0] sm:$0xff]
  %v9255 = vld [vmem:[%s10 + $0xf8] sm:$0xff]
  %v9256 = vld [vmem:[%s11] sm:$0x1]
  %v9258 = vlaneseq
  %v9259 = vshrl.u32 %v9258, 7
  %v9260 = vsub.s32 0, %v9259
  %v9261 = vrot.slane %v9256, %v9260
  %9263 = vmatprep.subr.mxu0 0.0
  %9264 = vmatpush1.msra.mxu0 %v9239
  %9265 = vmatprep.subr.mxu0 0.0
  %9266 = vmatpush1.msra.mxu0 %v9238
  %9267 = vmatprep.subr.mxu0 0.0
  %9268 = vmatpush1.msra.mxu0 %v9237
  %9269 = vmatprep.subr.mxu0 0.0
  %9270 = vmatpush1.msra.mxu0 %v9236
  %9271 = vmatprep.subr.mxu0 0.0
  %9272 = vmatpush1.msra.mxu0 %v9235
  %9273 = vmatprep.subr.mxu0 0.0
  %9274 = vmatpush1.msra.mxu0 %v9234
  %9275 = vmatprep.subr.mxu0 0.0
  %9276 = vmatpush1.msra.mxu0 %v9233
  %9277 = vmatprep.subr.mxu0 0.0
  %9278 = vmatpush1.msra.mxu0 %v9232
  %9279 = vmatprep.subr.mxu0 0.0
  %9280 = vmatpush1.msra.mxu0 %v9231
  %9281 = vmatprep.subr.mxu0 0.0
  %9282 = vmatpush1.msra.mxu0 %v9230
  %9283 = vmatprep.subr.mxu0 0.0
  %9284 = vmatpush1.msra.mxu0 %v9229
  %9285 = vmatprep.subr.mxu0 0.0
  %9286 = vmatpush1.msra.mxu0 %v9228
  %9287 = vmatprep.subr.mxu0 0.0
  %9288 = vmatpush1.msra.mxu0 %v9227
  %9289 = vmatprep.subr.mxu0 0.0
  %9290 = vmatpush1.msra.mxu0 %v9226
  %9291 = vmatprep.subr.mxu0 0.0
  %9292 = vmatpush1.msra.mxu0 %v9225
  %9293 = vmatprep.subr.mxu0 0.0
  %9294 = vmatpush1.msra.mxu0 %v9224
  %9295 = vmatprep.subr.mxu0 0.0
  %9296 = vmatpush2.msra.mxu0 %v9255
  %9297 = vmatprep.subr.mxu0 0.0
  %9298 = vmatpush2.msra.mxu0 %v9254
  %9299 = vmatprep.subr.mxu0 0.0
  %9300 = vmatpush2.msra.mxu0 %v9253
  %9301 = vmatprep.subr.mxu0 0.0
  %9302 = vmatpush2.msra.mxu0 %v9252
  %9303 = vmatprep.subr.mxu0 0.0
  %9304 = vmatpush2.msra.mxu0 %v9251
  %9305 = vmatprep.subr.mxu0 0.0
  %9306 = vmatpush2.msra.mxu0 %v9250
  %9307 = vmatprep.subr.mxu0 0.0
  %9308 = vmatpush2.msra.mxu0 %v9249
  %9309 = vmatprep.subr.mxu0 0.0
  %9310 = vmatpush2.msra.mxu0 %v9248
  %9311 = vmatprep.subr.mxu0 0.0
  %9312 = vmatpush2.msra.mxu0 %v9247
  %9313 = vmatprep.subr.mxu0 0.0
  %9314 = vmatpush2.msra.mxu0 %v9246
  %9315 = vmatprep.subr.mxu0 0.0
  %9316 = vmatpush2.msra.mxu0 %v9245
  %9317 = vmatprep.subr.mxu0 0.0
  %9318 = vmatpush2.msra.mxu0 %v9244
  %9319 = vmatprep.subr.mxu0 0.0
  %9320 = vmatpush2.msra.mxu0 %v9243
  %9321 = vmatprep.subr.mxu0 0.0
  %9322 = vmatpush2.msra.mxu0 %v9242
  %9323 = vmatprep.subr.mxu0 0.0
  %9324 = vmatpush2.msra.mxu0 %v9241
  %9325 = vmatprep.subr.mxu0 0.0
  %9326 = vmatpush2.msra.mxu0 %v9240
  %9327 = vmatprep.mubr.f32.mxu0 %v9223
  %9328 = vmatmul.mubr.f32.gmra.mxu0 %v9222
  %v9329 = vpop.f32.mrf.mxu0
  %v9330 = vadd.f32 %v9261, %v9329
  %v9331 = vpop.f32.mrf.mxu0
  %9332 = vdwg.mxu0
  %vm9333 = vcmask 9216
  %9334 = vst.msk [vmem:[%s12] sm:$0x3] %vm9333, %v9330
  // Predicated region
  $region50: #{critic_forward.1} parent=0 // pred_check
    _
  $region51: #{critic_forward.1} parent=0 // pred_check_branch
    %9336 = sbr.rel (0) target = $region53
  $region52: #{critic_forward.1} parent=0 // pred_region
    _
  $region53: #{critic_forward.1} parent=0 // pred_fallthru
    _
  // Predicated region
  $region54: #{critic_forward.1} parent=0 // pred_check
    _
  $region55: #{critic_forward.1} parent=0 // pred_check_branch
    %9338 = sbr.rel (0) target = $region57
  $region56: #{critic_forward.1} parent=0 // pred_region
    _
  $region57: #{critic_forward.1} parent=0 // pred_fallthru
    _

</llo_original>
